<compile_context>
chip_gen: v7x
topology: tpu7x:2x2x1
jax: 0.10.0
libtpu: 0.0.40
codegen_flags: <defaults>
</compile_context>

<pallas_src>
import math
import functools

import jax
import jax.numpy as jnp
from jax.experimental import pallas as pl
from jax.experimental.pallas import tpu as pltpu


# ----------------------------- helpers -----------------------------

def _layer_norm_f32(x, w, b, eps=1e-5):
    # x: (M, D) float32; w, b: (1, D) float32.  Biased variance (matches torch).
    mu = jnp.mean(x, axis=-1, keepdims=True)
    xc = x - mu
    var = jnp.mean(xc * xc, axis=-1, keepdims=True)
    return xc * jax.lax.rsqrt(var + eps) * w + b


def _layer_compute(x,
                   wq_ref, bq_ref, wk_ref, bk_ref, wv_ref, bv_ref,
                   wo_ref, bo_ref, ln1_w_ref, ln1_b_ref,
                   w1_ref, b1_ref, w2_ref, b2_ref,
                   ln2_w_ref, ln2_b_ref,
                   o_ref, *, num_heads):
    # x: (BB, S, D) float32 (already includes positional encoding if needed)
    BB, S, D = x.shape
    H = num_heads
    hd = D // H
    M = BB * S

    xf = x.reshape(M, D)                       # residual stream, f32
    xf_bf = xf.astype(jnp.bfloat16)

    # --- full-width Q/K/V projections over all BB*S rows (MXU-friendly M) ---
    # 1/sqrt(hd) is pre-folded into wq / bq by the wrapper.
    def proj(w_ref, b_ref):
        y = jnp.dot(xf_bf, w_ref[...], preferred_element_type=jnp.float32)
        return (y + b_ref[...]).astype(jnp.bfloat16).reshape(BB, S, D)

    q = proj(wq_ref, bq_ref)                   # (BB, S, D) bf16 (scaled q)
    k = proj(wk_ref, bk_ref)
    v = proj(wv_ref, bv_ref)

    # --- self attention, batched over the BB batch elements.
    # Per-head context is folded straight into the output projection via the
    # per-head (hd, D) weight slice -> no concatenate of heads.
    attn = jnp.zeros((M, D), jnp.float32)
    for h in range(H):                         # static unroll over heads
        lo = h * hd
        qh = q[:, :, lo:lo + hd]
        kh = k[:, :, lo:lo + hd]
        vh = v[:, :, lo:lo + hd]
        s = jnp.einsum('bqd,bkd->bqk', qh, kh,
                       preferred_element_type=jnp.float32)       # (BB, S, S)
        s = s - jnp.max(s, axis=-1, keepdims=True)
        p = jnp.exp(s)
        p = p * pl.reciprocal(jnp.sum(p, axis=-1, keepdims=True), approx=True)
        ctx = jnp.einsum('bqk,bkd->bqd', p.astype(jnp.bfloat16), vh,
                         preferred_element_type=jnp.float32)     # (BB, S, hd)
        attn = attn + jnp.dot(ctx.reshape(M, hd).astype(jnp.bfloat16),
                              wo_ref[h], preferred_element_type=jnp.float32)
    attn = attn + bo_ref[...]

    # post-norm residual #1 (stats in f32)
    y = _layer_norm_f32(xf + attn, ln1_w_ref[...], ln1_b_ref[...])

    # --- feed-forward: linear(2D) -> ReLU -> linear(D), bf16 matmuls / f32 acc ---
    y_bf = y.astype(jnp.bfloat16)
    hid = jnp.dot(y_bf, w1_ref[...], preferred_element_type=jnp.float32) + b1_ref[...]
    hid = jnp.maximum(hid, 0.0).astype(jnp.bfloat16)
    ff = jnp.dot(hid, w2_ref[...], preferred_element_type=jnp.float32) + b2_ref[...]

    # post-norm residual #2
    z = _layer_norm_f32(y + ff, ln2_w_ref[...], ln2_b_ref[...])
    o_ref[...] = z.reshape(BB, S, D).astype(o_ref.dtype)


def _encoder_layer_kernel(x_ref,
                          wq_ref, bq_ref, wk_ref, bk_ref, wv_ref, bv_ref,
                          wo_ref, bo_ref, ln1_w_ref, ln1_b_ref,
                          w1_ref, b1_ref, w2_ref, b2_ref,
                          ln2_w_ref, ln2_b_ref,
                          o_ref, *, num_heads):
    _layer_compute(x_ref[...].astype(jnp.float32),
                   wq_ref, bq_ref, wk_ref, bk_ref, wv_ref, bv_ref,
                   wo_ref, bo_ref, ln1_w_ref, ln1_b_ref,
                   w1_ref, b1_ref, w2_ref, b2_ref,
                   ln2_w_ref, ln2_b_ref, o_ref, num_heads=num_heads)


def _encoder_layer_pe_kernel(x_ref, pe_ref,
                             wq_ref, bq_ref, wk_ref, bk_ref, wv_ref, bv_ref,
                             wo_ref, bo_ref, ln1_w_ref, ln1_b_ref,
                             w1_ref, b1_ref, w2_ref, b2_ref,
                             ln2_w_ref, ln2_b_ref,
                             o_ref, *, num_heads):
    # positional-encoding add fused into the first layer (broadcast over batch)
    x = x_ref[...].astype(jnp.float32) + pe_ref[...]
    _layer_compute(x,
                   wq_ref, bq_ref, wk_ref, bk_ref, wv_ref, bv_ref,
                   wo_ref, bo_ref, ln1_w_ref, ln1_b_ref,
                   w1_ref, b1_ref, w2_ref, b2_ref,
                   ln2_w_ref, ln2_b_ref, o_ref, num_heads=num_heads)


# ----------------------------- pallas_call wrapper -----------------------------

def _full_block_spec(arr):
    zeros = (0,) * arr.ndim
    return pl.BlockSpec(arr.shape, lambda b: zeros)


def encoder_layer(x, p, num_heads, pe=None, block_b=None):
    """One post-norm transformer encoder layer.  x: (B, S, D) float32."""
    B, S, D = x.shape

    if block_b is None:
        # largest divisor of B such that block_b*S stays near ~256 MXU rows
        desired = max(1, 256 // S) if S < 256 else 1
        block_b = 1
        for cand in range(1, B + 1):
            if B % cand == 0 and cand <= desired:
                block_b = cand
    BB = block_b
    assert B % BB == 0, "block_b must divide batch"

    add_pe = pe is not None
    weights = [p['wq'], p['bq'], p['wk'], p['bk'], p['wv'], p['bv'],
               p['wo'], p['bo'], p['ln1_w'], p['ln1_b'],
               p['w1'], p['b1'], p['w2'], p['b2'],
               p['ln2_w'], p['ln2_b']]

    in_specs = [pl.BlockSpec((BB, S, D), lambda b: (b, 0, 0))]
    args = [x]
    if add_pe:
        in_specs.append(pl.BlockSpec((S, D), lambda b: (0, 0)))
        args.append(pe)
    in_specs += [_full_block_spec(w) for w in weights]
    args += weights

    H = num_heads
    flops = 16 * B * S * D * D + 4 * B * S * S * D
    transcendentals = B * H * S * S + 8 * B * S
    bytes_accessed = (2 * B * S * D * 4
                      + sum(int(w.size) * w.dtype.itemsize for w in weights))

    kernel_fn = _encoder_layer_pe_kernel if add_pe else _encoder_layer_kernel
    kernel = functools.partial(kernel_fn, num_heads=num_heads)

    return pl.pallas_call(
        kernel,
        out_shape=jax.ShapeDtypeStruct((B, S, D), x.dtype),
        grid=(B // BB,),
        in_specs=in_specs,
        out_specs=pl.BlockSpec((BB, S, D), lambda b: (b, 0, 0)),
        compiler_params=pltpu.CompilerParams(
            dimension_semantics=("parallel",),
            vmem_limit_bytes=32 * 1024 * 1024),
        cost_estimate=pl.CostEstimate(
            flops=flops,
            transcendentals=transcendentals,
            bytes_accessed=bytes_accessed),
    )(*args)


# ----------------------------- params / pe / forward -----------------------------

def positional_encoding_table(max_len, d_model):
    position = jnp.arange(max_len, dtype=jnp.float32)[:, None]
    div_term = jnp.exp(jnp.arange(0, d_model, 2, dtype=jnp.float32)
                       * (-math.log(10000.0) / d_model))
    pe = jnp.zeros((max_len, d_model), jnp.float32)
    pe = pe.at[:, 0::2].set(jnp.sin(position * div_term))
    pe = pe.at[:, 1::2].set(jnp.cos(position * div_term))
    return pe


def init_params(key, d_model, num_layers):
    """Logical (f32, x @ W + b layout) parameters for each encoder layer."""
    def nrm(k, shape, s=0.02):
        return jax.random.normal(k, shape, jnp.float32) * s

    layers = []
    for _ in range(num_layers):
        key, k0, k1, k2, k3, k4, k5, k6, k7 = jax.random.split(key, 9)
        layers.append({
            'wq': nrm(k0, (d_model, d_model)),
            'bq': jnp.zeros((1, d_model), jnp.float32),
            'wk': nrm(k1, (d_model, d_model)),
            'bk': jnp.zeros((1, d_model), jnp.float32),
            'wv': nrm(k2, (d_model, d_model)),
            'bv': jnp.zeros((1, d_model), jnp.float32),
            'wo': nrm(k3, (d_model, d_model)),
            'bo': jnp.zeros((1, d_model), jnp.float32),
            'ln1_w': jnp.ones((1, d_model), jnp.float32),
            'ln1_b': jnp.zeros((1, d_model), jnp.float32),
            'w1': nrm(k4, (d_model, 2 * d_model)),
            'b1': nrm(k5, (1, 2 * d_model)),
            'w2': nrm(k6, (2 * d_model, d_model)),
            'b2': nrm(k7, (1, d_model)),
            'ln2_w': jnp.ones((1, d_model), jnp.float32),
            'ln2_b': jnp.zeros((1, d_model), jnp.float32),
        })
    return layers


def prepare_layer_params(p, num_heads, compute_dtype=jnp.bfloat16):
    """Fold softmax scale into Wq/bq, slice the output projection per head,
    and cast matmul weights to the MXU compute dtype (bf16)."""
    D = p['wq'].shape[0]
    assert D % num_heads == 0
    hd = D // num_heads
    scale = 1.0 / math.sqrt(hd)
    return {
        'wq': (p['wq'] * scale).astype(compute_dtype),
        'bq': p['bq'] * scale,
        'wk': p['wk'].astype(compute_dtype),
        'bk': p['bk'],
        'wv': p['wv'].astype(compute_dtype),
        'bv': p['bv'],
        # output projection stored as (H, hd, D): head index is a leading axis
        'wo': p['wo'].reshape(num_heads, hd, D).astype(compute_dtype),
        'bo': p['bo'],
        'ln1_w': p['ln1_w'], 'ln1_b': p['ln1_b'],
        'w1': p['w1'].astype(compute_dtype), 'b1': p['b1'],
        'w2': p['w2'].astype(compute_dtype), 'b2': p['b2'],
        'ln2_w': p['ln2_w'], 'ln2_b': p['ln2_b'],
    }


def transformer_encoder(x, layer_params, pe, num_heads, block_b=None):
    S = x.shape[1]
    pe_s = pe[:S]
    if not layer_params:
        return x + pe_s[None]
    for i, p in enumerate(layer_params):
        x = encoder_layer(x, p, num_heads,
                          pe=pe_s if i == 0 else None,
                          block_b=block_b)
    return x


if __name__ == "__main__":
    # small but lane-dense shapes: x is [batch, seq, d_model] (batch_first=True)
    B, S, D, H, L = 8, 64, 128, 4, 2

    key = jax.random.PRNGKey(0)
    kx, kp = jax.random.split(key)
    x = jax.random.normal(kx, (B, S, D), jnp.float32)
    params = [prepare_layer_params(p, H) for p in init_params(kp, D, L)]
    pe = positional_encoding_table(5000, D)

    out = transformer_encoder(x, params, pe, H)
    out = jax.block_until_ready(out)
    assert out.shape == (B, S, D) and out.dtype == jnp.float32
    assert bool(jnp.all(jnp.isfinite(out)))
    print("KERNEL_OK")
</pallas_src>

<mosaic_0001>
module attributes {stable_mosaic.version = 11 : i64} {
  func.func @_encoder_layer_pe_kernel(%arg0: i32, %arg1: memref<4x64x128xf32, #tpu.memory_space<vmem>>, %arg2: memref<64x128xf32, #tpu.memory_space<vmem>>, %arg3: memref<128x128xbf16, #tpu.memory_space<vmem>>, %arg4: memref<1x128xf32, #tpu.memory_space<vmem>>, %arg5: memref<128x128xbf16, #tpu.memory_space<vmem>>, %arg6: memref<1x128xf32, #tpu.memory_space<vmem>>, %arg7: memref<128x128xbf16, #tpu.memory_space<vmem>>, %arg8: memref<1x128xf32, #tpu.memory_space<vmem>>, %arg9: memref<4x32x128xbf16, #tpu.memory_space<vmem>>, %arg10: memref<1x128xf32, #tpu.memory_space<vmem>>, %arg11: memref<1x128xf32, #tpu.memory_space<vmem>>, %arg12: memref<1x128xf32, #tpu.memory_space<vmem>>, %arg13: memref<128x256xbf16, #tpu.memory_space<vmem>>, %arg14: memref<1x256xf32, #tpu.memory_space<vmem>>, %arg15: memref<256x128xbf16, #tpu.memory_space<vmem>>, %arg16: memref<1x128xf32, #tpu.memory_space<vmem>>, %arg17: memref<1x128xf32, #tpu.memory_space<vmem>>, %arg18: memref<1x128xf32, #tpu.memory_space<vmem>>, %arg19: memref<4x64x128xf32, #tpu.memory_space<vmem>>) attributes {dimension_semantics = [#tpu.dimension_semantics<parallel>], iteration_bounds = array<i64: 2>, scalar_prefetch = 0 : i64, scratch_operands = 0 : i64, tpu.core_type = #tpu.core_type<tc>, window_params = [{transform_indices = @transform_0, window_bounds = array<i64: 4, 64, 128>}, {pipeline_mode = #tpu.pipeline_mode<synchronous>, transform_indices = @transform_1, window_bounds = array<i64: 64, 128>}, {pipeline_mode = #tpu.pipeline_mode<synchronous>, transform_indices = @transform_2, window_bounds = array<i64: 128, 128>}, {pipeline_mode = #tpu.pipeline_mode<synchronous>, transform_indices = @transform_3, window_bounds = array<i64: 1, 128>}, {pipeline_mode = #tpu.pipeline_mode<synchronous>, transform_indices = @transform_4, window_bounds = array<i64: 128, 128>}, {pipeline_mode = #tpu.pipeline_mode<synchronous>, transform_indices = @transform_5, window_bounds = array<i64: 1, 128>}, {pipeline_mode = #tpu.pipeline_mode<synchronous>, transform_indices = @transform_6, window_bounds = array<i64: 128, 128>}, {pipeline_mode = #tpu.pipeline_mode<synchronous>, transform_indices = @transform_7, window_bounds = array<i64: 1, 128>}, {pipeline_mode = #tpu.pipeline_mode<synchronous>, transform_indices = @transform_8, window_bounds = array<i64: 4, 32, 128>}, {pipeline_mode = #tpu.pipeline_mode<synchronous>, transform_indices = @transform_9, window_bounds = array<i64: 1, 128>}, {pipeline_mode = #tpu.pipeline_mode<synchronous>, transform_indices = @transform_10, window_bounds = array<i64: 1, 128>}, {pipeline_mode = #tpu.pipeline_mode<synchronous>, transform_indices = @transform_11, window_bounds = array<i64: 1, 128>}, {pipeline_mode = #tpu.pipeline_mode<synchronous>, transform_indices = @transform_12, window_bounds = array<i64: 128, 256>}, {pipeline_mode = #tpu.pipeline_mode<synchronous>, transform_indices = @transform_13, window_bounds = array<i64: 1, 256>}, {pipeline_mode = #tpu.pipeline_mode<synchronous>, transform_indices = @transform_14, window_bounds = array<i64: 256, 128>}, {pipeline_mode = #tpu.pipeline_mode<synchronous>, transform_indices = @transform_15, window_bounds = array<i64: 1, 128>}, {pipeline_mode = #tpu.pipeline_mode<synchronous>, transform_indices = @transform_16, window_bounds = array<i64: 1, 128>}, {pipeline_mode = #tpu.pipeline_mode<synchronous>, transform_indices = @transform_17, window_bounds = array<i64: 1, 128>}, {transform_indices = @transform_18, window_bounds = array<i64: 4, 64, 128>}]} {
    %c0 = arith.constant 0 : index
    %c0_0 = arith.constant 0 : index
    %c0_1 = arith.constant 0 : index
    %0 = vector.load %arg1[%c0, %c0_0, %c0_1] : memref<4x64x128xf32, #tpu.memory_space<vmem>>, vector<4x64x128xf32>
    %c0_2 = arith.constant 0 : index
    %c0_3 = arith.constant 0 : index
    %1 = vector.load %arg2[%c0_2, %c0_3] : memref<64x128xf32, #tpu.memory_space<vmem>>, vector<64x128xf32>
    %2 = vector.shape_cast %1 : vector<64x128xf32> to vector<1x64x128xf32>
    %3 = vector.broadcast %2 : vector<1x64x128xf32> to vector<4x64x128xf32>
    %4 = arith.addf %0, %3 : vector<4x64x128xf32>
    %5 = vector.shape_cast %4 : vector<4x64x128xf32> to vector<256x128xf32>
    %6 = arith.truncf %5 : vector<256x128xf32> to vector<256x128xbf16>
    %c0_4 = arith.constant 0 : index
    %c0_5 = arith.constant 0 : index
    %7 = vector.load %arg3[%c0_4, %c0_5] : memref<128x128xbf16, #tpu.memory_space<vmem>>, vector<128x128xbf16>
    %cst = arith.constant dense<0.000000e+00> : vector<256x128xf32>
    %8 = tpu.matmul %6, %7, %cst {dimension_numbers = #tpu.dot_dimension_numbers<[1], [0], [0], [1], [0, 0, 1, 1], [], []>} : vector<256x128xbf16>, vector<128x128xbf16>, vector<256x128xf32> -> vector<256x128xf32>
    %c0_6 = arith.constant 0 : index
    %c0_7 = arith.constant 0 : index
    %9 = vector.load %arg4[%c0_6, %c0_7] : memref<1x128xf32, #tpu.memory_space<vmem>>, vector<1x128xf32>
    %10 = vector.broadcast %9 : vector<1x128xf32> to vector<256x128xf32>
    %11 = arith.addf %8, %10 : vector<256x128xf32>
    %12 = arith.truncf %11 : vector<256x128xf32> to vector<256x128xbf16>
    %13 = vector.shape_cast %12 : vector<256x128xbf16> to vector<4x64x128xbf16>
    %c0_8 = arith.constant 0 : index
    %c0_9 = arith.constant 0 : index
    %14 = vector.load %arg5[%c0_8, %c0_9] : memref<128x128xbf16, #tpu.memory_space<vmem>>, vector<128x128xbf16>
    %cst_10 = arith.constant dense<0.000000e+00> : vector<256x128xf32>
    %15 = tpu.matmul %6, %14, %cst_10 {dimension_numbers = #tpu.dot_dimension_numbers<[1], [0], [0], [1], [0, 0, 1, 1], [], []>} : vector<256x128xbf16>, vector<128x128xbf16>, vector<256x128xf32> -> vector<256x128xf32>
    %c0_11 = arith.constant 0 : index
    %c0_12 = arith.constant 0 : index
    %16 = vector.load %arg6[%c0_11, %c0_12] : memref<1x128xf32, #tpu.memory_space<vmem>>, vector<1x128xf32>
    %17 = vector.broadcast %16 : vector<1x128xf32> to vector<256x128xf32>
    %18 = arith.addf %15, %17 : vector<256x128xf32>
    %19 = arith.truncf %18 : vector<256x128xf32> to vector<256x128xbf16>
    %20 = vector.shape_cast %19 : vector<256x128xbf16> to vector<4x64x128xbf16>
    %c0_13 = arith.constant 0 : index
    %c0_14 = arith.constant 0 : index
    %21 = vector.load %arg7[%c0_13, %c0_14] : memref<128x128xbf16, #tpu.memory_space<vmem>>, vector<128x128xbf16>
    %cst_15 = arith.constant dense<0.000000e+00> : vector<256x128xf32>
    %22 = tpu.matmul %6, %21, %cst_15 {dimension_numbers = #tpu.dot_dimension_numbers<[1], [0], [0], [1], [0, 0, 1, 1], [], []>} : vector<256x128xbf16>, vector<128x128xbf16>, vector<256x128xf32> -> vector<256x128xf32>
    %c0_16 = arith.constant 0 : index
    %c0_17 = arith.constant 0 : index
    %23 = vector.load %arg8[%c0_16, %c0_17] : memref<1x128xf32, #tpu.memory_space<vmem>>, vector<1x128xf32>
    %24 = vector.broadcast %23 : vector<1x128xf32> to vector<256x128xf32>
    %25 = arith.addf %22, %24 : vector<256x128xf32>
    %26 = arith.truncf %25 : vector<256x128xf32> to vector<256x128xbf16>
    %27 = vector.shape_cast %26 : vector<256x128xbf16> to vector<4x64x128xbf16>
    %cst_18 = arith.constant 0.000000e+00 : f32
    %28 = vector.broadcast %cst_18 : f32 to vector<256x128xf32>
    %29 = vector.extract_strided_slice %13 {offsets = [0, 0, 0], sizes = [4, 64, 32], strides = [1, 1, 1]} : vector<4x64x128xbf16> to vector<4x64x32xbf16>
    %30 = vector.extract_strided_slice %20 {offsets = [0, 0, 0], sizes = [4, 64, 32], strides = [1, 1, 1]} : vector<4x64x128xbf16> to vector<4x64x32xbf16>
    %31 = vector.extract_strided_slice %27 {offsets = [0, 0, 0], sizes = [4, 64, 32], strides = [1, 1, 1]} : vector<4x64x128xbf16> to vector<4x64x32xbf16>
    "tpu.trace_start"() <{level = 10 : i32, message = "bqd,bkd->bqk"}> : () -> ()
    %cst_19 = arith.constant dense<0.000000e+00> : vector<4x64x64xf32>
    %32 = tpu.matmul %29, %30, %cst_19 {dimension_numbers = #tpu.dot_dimension_numbers<[2], [2], [1], [1], [0, 0, 0, 1, 1, 1], [0], [0]>} : vector<4x64x32xbf16>, vector<4x64x32xbf16>, vector<4x64x64xf32> -> vector<4x64x64xf32>
    "tpu.trace_stop"() : () -> ()
    %cst_20 = arith.constant dense<0xFF800000> : vector<4x64xf32>
    %33 = vector.multi_reduction <maximumf>, %32, %cst_20 [2] : vector<4x64x64xf32> to vector<4x64xf32>
    %34 = vector.shape_cast %33 : vector<4x64xf32> to vector<4x64x1xf32>
    %35 = vector.broadcast %34 : vector<4x64x1xf32> to vector<4x64x64xf32>
    %36 = arith.subf %32, %35 : vector<4x64x64xf32>
    %37 = math.exp %36 : vector<4x64x64xf32>
    %cst_21 = arith.constant dense<0.000000e+00> : vector<4x64xf32>
    %38 = vector.multi_reduction <add>, %37, %cst_21 [2] : vector<4x64x64xf32> to vector<4x64xf32>
    %39 = vector.shape_cast %38 : vector<4x64xf32> to vector<4x64x1xf32>
    %40 = tpu.reciprocal %39 {approx = true} : vector<4x64x1xf32> -> vector<4x64x1xf32>
    %41 = vector.broadcast %40 : vector<4x64x1xf32> to vector<4x64x64xf32>
    %42 = arith.mulf %37, %41 : vector<4x64x64xf32>
    %43 = arith.truncf %42 : vector<4x64x64xf32> to vector<4x64x64xbf16>
    "tpu.trace_start"() <{level = 10 : i32, message = "bqk,bkd->bqd"}> : () -> ()
    %cst_22 = arith.constant dense<0.000000e+00> : vector<4x64x32xf32>
    %44 = tpu.matmul %43, %31, %cst_22 {dimension_numbers = #tpu.dot_dimension_numbers<[2], [1], [1], [2], [0, 0, 0, 1, 1, 2], [0], [0]>} : vector<4x64x64xbf16>, vector<4x64x32xbf16>, vector<4x64x32xf32> -> vector<4x64x32xf32>
    "tpu.trace_stop"() : () -> ()
    %45 = vector.shape_cast %44 : vector<4x64x32xf32> to vector<256x32xf32>
    %46 = arith.truncf %45 : vector<256x32xf32> to vector<256x32xbf16>
    %c0_23 = arith.constant 0 : index
    %c0_24 = arith.constant 0 : index
    %c0_25 = arith.constant 0 : index
    %47 = vector.load %arg9[%c0_23, %c0_24, %c0_25] : memref<4x32x128xbf16, #tpu.memory_space<vmem>>, vector<1x32x128xbf16>
    %48 = vector.shape_cast %47 : vector<1x32x128xbf16> to vector<32x128xbf16>
    %cst_26 = arith.constant dense<0.000000e+00> : vector<256x128xf32>
    %49 = tpu.matmul %46, %48, %cst_26 {dimension_numbers = #tpu.dot_dimension_numbers<[1], [0], [0], [1], [0, 0, 1, 1], [], []>} : vector<256x32xbf16>, vector<32x128xbf16>, vector<256x128xf32> -> vector<256x128xf32>
    %50 = arith.addf %28, %49 : vector<256x128xf32>
    %51 = vector.extract_strided_slice %13 {offsets = [0, 0, 32], sizes = [4, 64, 32], strides = [1, 1, 1]} : vector<4x64x128xbf16> to vector<4x64x32xbf16>
    %52 = vector.extract_strided_slice %20 {offsets = [0, 0, 32], sizes = [4, 64, 32], strides = [1, 1, 1]} : vector<4x64x128xbf16> to vector<4x64x32xbf16>
    %53 = vector.extract_strided_slice %27 {offsets = [0, 0, 32], sizes = [4, 64, 32], strides = [1, 1, 1]} : vector<4x64x128xbf16> to vector<4x64x32xbf16>
    "tpu.trace_start"() <{level = 10 : i32, message = "bqd,bkd->bqk"}> : () -> ()
    %cst_27 = arith.constant dense<0.000000e+00> : vector<4x64x64xf32>
    %54 = tpu.matmul %51, %52, %cst_27 {dimension_numbers = #tpu.dot_dimension_numbers<[2], [2], [1], [1], [0, 0, 0, 1, 1, 1], [0], [0]>} : vector<4x64x32xbf16>, vector<4x64x32xbf16>, vector<4x64x64xf32> -> vector<4x64x64xf32>
    "tpu.trace_stop"() : () -> ()
    %cst_28 = arith.constant dense<0xFF800000> : vector<4x64xf32>
    %55 = vector.multi_reduction <maximumf>, %54, %cst_28 [2] : vector<4x64x64xf32> to vector<4x64xf32>
    %56 = vector.shape_cast %55 : vector<4x64xf32> to vector<4x64x1xf32>
    %57 = vector.broadcast %56 : vector<4x64x1xf32> to vector<4x64x64xf32>
    %58 = arith.subf %54, %57 : vector<4x64x64xf32>
    %59 = math.exp %58 : vector<4x64x64xf32>
    %cst_29 = arith.constant dense<0.000000e+00> : vector<4x64xf32>
    %60 = vector.multi_reduction <add>, %59, %cst_29 [2] : vector<4x64x64xf32> to vector<4x64xf32>
    %61 = vector.shape_cast %60 : vector<4x64xf32> to vector<4x64x1xf32>
    %62 = tpu.reciprocal %61 {approx = true} : vector<4x64x1xf32> -> vector<4x64x1xf32>
    %63 = vector.broadcast %62 : vector<4x64x1xf32> to vector<4x64x64xf32>
    %64 = arith.mulf %59, %63 : vector<4x64x64xf32>
    %65 = arith.truncf %64 : vector<4x64x64xf32> to vector<4x64x64xbf16>
    "tpu.trace_start"() <{level = 10 : i32, message = "bqk,bkd->bqd"}> : () -> ()
    %cst_30 = arith.constant dense<0.000000e+00> : vector<4x64x32xf32>
    %66 = tpu.matmul %65, %53, %cst_30 {dimension_numbers = #tpu.dot_dimension_numbers<[2], [1], [1], [2], [0, 0, 0, 1, 1, 2], [0], [0]>} : vector<4x64x64xbf16>, vector<4x64x32xbf16>, vector<4x64x32xf32> -> vector<4x64x32xf32>
    "tpu.trace_stop"() : () -> ()
    %67 = vector.shape_cast %66 : vector<4x64x32xf32> to vector<256x32xf32>
    %68 = arith.truncf %67 : vector<256x32xf32> to vector<256x32xbf16>
    %c1 = arith.constant 1 : index
    %c0_31 = arith.constant 0 : index
    %c0_32 = arith.constant 0 : index
    %69 = vector.load %arg9[%c1, %c0_31, %c0_32] : memref<4x32x128xbf16, #tpu.memory_space<vmem>>, vector<1x32x128xbf16>
    %70 = vector.shape_cast %69 : vector<1x32x128xbf16> to vector<32x128xbf16>
    %cst_33 = arith.constant dense<0.000000e+00> : vector<256x128xf32>
    %71 = tpu.matmul %68, %70, %cst_33 {dimension_numbers = #tpu.dot_dimension_numbers<[1], [0], [0], [1], [0, 0, 1, 1], [], []>} : vector<256x32xbf16>, vector<32x128xbf16>, vector<256x128xf32> -> vector<256x128xf32>
    %72 = arith.addf %50, %71 : vector<256x128xf32>
    %73 = vector.extract_strided_slice %13 {offsets = [0, 0, 64], sizes = [4, 64, 32], strides = [1, 1, 1]} : vector<4x64x128xbf16> to vector<4x64x32xbf16>
    %74 = vector.extract_strided_slice %20 {offsets = [0, 0, 64], sizes = [4, 64, 32], strides = [1, 1, 1]} : vector<4x64x128xbf16> to vector<4x64x32xbf16>
    %75 = vector.extract_strided_slice %27 {offsets = [0, 0, 64], sizes = [4, 64, 32], strides = [1, 1, 1]} : vector<4x64x128xbf16> to vector<4x64x32xbf16>
    "tpu.trace_start"() <{level = 10 : i32, message = "bqd,bkd->bqk"}> : () -> ()
    %cst_34 = arith.constant dense<0.000000e+00> : vector<4x64x64xf32>
    %76 = tpu.matmul %73, %74, %cst_34 {dimension_numbers = #tpu.dot_dimension_numbers<[2], [2], [1], [1], [0, 0, 0, 1, 1, 1], [0], [0]>} : vector<4x64x32xbf16>, vector<4x64x32xbf16>, vector<4x64x64xf32> -> vector<4x64x64xf32>
    "tpu.trace_stop"() : () -> ()
    %cst_35 = arith.constant dense<0xFF800000> : vector<4x64xf32>
    %77 = vector.multi_reduction <maximumf>, %76, %cst_35 [2] : vector<4x64x64xf32> to vector<4x64xf32>
    %78 = vector.shape_cast %77 : vector<4x64xf32> to vector<4x64x1xf32>
    %79 = vector.broadcast %78 : vector<4x64x1xf32> to vector<4x64x64xf32>
    %80 = arith.subf %76, %79 : vector<4x64x64xf32>
    %81 = math.exp %80 : vector<4x64x64xf32>
    %cst_36 = arith.constant dense<0.000000e+00> : vector<4x64xf32>
    %82 = vector.multi_reduction <add>, %81, %cst_36 [2] : vector<4x64x64xf32> to vector<4x64xf32>
    %83 = vector.shape_cast %82 : vector<4x64xf32> to vector<4x64x1xf32>
    %84 = tpu.reciprocal %83 {approx = true} : vector<4x64x1xf32> -> vector<4x64x1xf32>
    %85 = vector.broadcast %84 : vector<4x64x1xf32> to vector<4x64x64xf32>
    %86 = arith.mulf %81, %85 : vector<4x64x64xf32>
    %87 = arith.truncf %86 : vector<4x64x64xf32> to vector<4x64x64xbf16>
    "tpu.trace_start"() <{level = 10 : i32, message = "bqk,bkd->bqd"}> : () -> ()
    %cst_37 = arith.constant dense<0.000000e+00> : vector<4x64x32xf32>
    %88 = tpu.matmul %87, %75, %cst_37 {dimension_numbers = #tpu.dot_dimension_numbers<[2], [1], [1], [2], [0, 0, 0, 1, 1, 2], [0], [0]>} : vector<4x64x64xbf16>, vector<4x64x32xbf16>, vector<4x64x32xf32> -> vector<4x64x32xf32>
    "tpu.trace_stop"() : () -> ()
    %89 = vector.shape_cast %88 : vector<4x64x32xf32> to vector<256x32xf32>
    %90 = arith.truncf %89 : vector<256x32xf32> to vector<256x32xbf16>
    %c2 = arith.constant 2 : index
    %c0_38 = arith.constant 0 : index
    %c0_39 = arith.constant 0 : index
    %91 = vector.load %arg9[%c2, %c0_38, %c0_39] : memref<4x32x128xbf16, #tpu.memory_space<vmem>>, vector<1x32x128xbf16>
    %92 = vector.shape_cast %91 : vector<1x32x128xbf16> to vector<32x128xbf16>
    %cst_40 = arith.constant dense<0.000000e+00> : vector<256x128xf32>
    %93 = tpu.matmul %90, %92, %cst_40 {dimension_numbers = #tpu.dot_dimension_numbers<[1], [0], [0], [1], [0, 0, 1, 1], [], []>} : vector<256x32xbf16>, vector<32x128xbf16>, vector<256x128xf32> -> vector<256x128xf32>
    %94 = arith.addf %72, %93 : vector<256x128xf32>
    %95 = vector.extract_strided_slice %13 {offsets = [0, 0, 96], sizes = [4, 64, 32], strides = [1, 1, 1]} : vector<4x64x128xbf16> to vector<4x64x32xbf16>
    %96 = vector.extract_strided_slice %20 {offsets = [0, 0, 96], sizes = [4, 64, 32], strides = [1, 1, 1]} : vector<4x64x128xbf16> to vector<4x64x32xbf16>
    %97 = vector.extract_strided_slice %27 {offsets = [0, 0, 96], sizes = [4, 64, 32], strides = [1, 1, 1]} : vector<4x64x128xbf16> to vector<4x64x32xbf16>
    "tpu.trace_start"() <{level = 10 : i32, message = "bqd,bkd->bqk"}> : () -> ()
    %cst_41 = arith.constant dense<0.000000e+00> : vector<4x64x64xf32>
    %98 = tpu.matmul %95, %96, %cst_41 {dimension_numbers = #tpu.dot_dimension_numbers<[2], [2], [1], [1], [0, 0, 0, 1, 1, 1], [0], [0]>} : vector<4x64x32xbf16>, vector<4x64x32xbf16>, vector<4x64x64xf32> -> vector<4x64x64xf32>
    "tpu.trace_stop"() : () -> ()
    %cst_42 = arith.constant dense<0xFF800000> : vector<4x64xf32>
    %99 = vector.multi_reduction <maximumf>, %98, %cst_42 [2] : vector<4x64x64xf32> to vector<4x64xf32>
    %100 = vector.shape_cast %99 : vector<4x64xf32> to vector<4x64x1xf32>
    %101 = vector.broadcast %100 : vector<4x64x1xf32> to vector<4x64x64xf32>
    %102 = arith.subf %98, %101 : vector<4x64x64xf32>
    %103 = math.exp %102 : vector<4x64x64xf32>
    %cst_43 = arith.constant dense<0.000000e+00> : vector<4x64xf32>
    %104 = vector.multi_reduction <add>, %103, %cst_43 [2] : vector<4x64x64xf32> to vector<4x64xf32>
    %105 = vector.shape_cast %104 : vector<4x64xf32> to vector<4x64x1xf32>
    %106 = tpu.reciprocal %105 {approx = true} : vector<4x64x1xf32> -> vector<4x64x1xf32>
    %107 = vector.broadcast %106 : vector<4x64x1xf32> to vector<4x64x64xf32>
    %108 = arith.mulf %103, %107 : vector<4x64x64xf32>
    %109 = arith.truncf %108 : vector<4x64x64xf32> to vector<4x64x64xbf16>
    "tpu.trace_start"() <{level = 10 : i32, message = "bqk,bkd->bqd"}> : () -> ()
    %cst_44 = arith.constant dense<0.000000e+00> : vector<4x64x32xf32>
    %110 = tpu.matmul %109, %97, %cst_44 {dimension_numbers = #tpu.dot_dimension_numbers<[2], [1], [1], [2], [0, 0, 0, 1, 1, 2], [0], [0]>} : vector<4x64x64xbf16>, vector<4x64x32xbf16>, vector<4x64x32xf32> -> vector<4x64x32xf32>
    "tpu.trace_stop"() : () -> ()
    %111 = vector.shape_cast %110 : vector<4x64x32xf32> to vector<256x32xf32>
    %112 = arith.truncf %111 : vector<256x32xf32> to vector<256x32xbf16>
    %c3 = arith.constant 3 : index
    %c0_45 = arith.constant 0 : index
    %c0_46 = arith.constant 0 : index
    %113 = vector.load %arg9[%c3, %c0_45, %c0_46] : memref<4x32x128xbf16, #tpu.memory_space<vmem>>, vector<1x32x128xbf16>
    %114 = vector.shape_cast %113 : vector<1x32x128xbf16> to vector<32x128xbf16>
    %cst_47 = arith.constant dense<0.000000e+00> : vector<256x128xf32>
    %115 = tpu.matmul %112, %114, %cst_47 {dimension_numbers = #tpu.dot_dimension_numbers<[1], [0], [0], [1], [0, 0, 1, 1], [], []>} : vector<256x32xbf16>, vector<32x128xbf16>, vector<256x128xf32> -> vector<256x128xf32>
    %116 = arith.addf %94, %115 : vector<256x128xf32>
    %c0_48 = arith.constant 0 : index
    %c0_49 = arith.constant 0 : index
    %117 = vector.load %arg10[%c0_48, %c0_49] : memref<1x128xf32, #tpu.memory_space<vmem>>, vector<1x128xf32>
    %118 = vector.broadcast %117 : vector<1x128xf32> to vector<256x128xf32>
    %119 = arith.addf %116, %118 : vector<256x128xf32>
    %120 = arith.addf %5, %119 : vector<256x128xf32>
    %c0_50 = arith.constant 0 : index
    %c0_51 = arith.constant 0 : index
    %121 = vector.load %arg11[%c0_50, %c0_51] : memref<1x128xf32, #tpu.memory_space<vmem>>, vector<1x128xf32>
    %c0_52 = arith.constant 0 : index
    %c0_53 = arith.constant 0 : index
    %122 = vector.load %arg12[%c0_52, %c0_53] : memref<1x128xf32, #tpu.memory_space<vmem>>, vector<1x128xf32>
    %cst_54 = arith.constant dense<0.000000e+00> : vector<256xf32>
    %123 = vector.multi_reduction <add>, %120, %cst_54 [1] : vector<256x128xf32> to vector<256xf32>
    %124 = vector.shape_cast %123 : vector<256xf32> to vector<256x1xf32>
    %cst_55 = arith.constant 1.280000e+02 : f32
    %125 = vector.broadcast %cst_55 : f32 to vector<256x1xf32>
    %126 = arith.divf %124, %125 : vector<256x1xf32>
    %127 = vector.broadcast %126 : vector<256x1xf32> to vector<256x128xf32>
    %128 = arith.subf %120, %127 : vector<256x128xf32>
    %129 = arith.mulf %128, %128 : vector<256x128xf32>
    %cst_56 = arith.constant dense<0.000000e+00> : vector<256xf32>
    %130 = vector.multi_reduction <add>, %129, %cst_56 [1] : vector<256x128xf32> to vector<256xf32>
    %131 = vector.shape_cast %130 : vector<256xf32> to vector<256x1xf32>
    %cst_57 = arith.constant 1.280000e+02 : f32
    %132 = vector.broadcast %cst_57 : f32 to vector<256x1xf32>
    %133 = arith.divf %131, %132 : vector<256x1xf32>
    %cst_58 = arith.constant 9.99999974E-6 : f32
    %134 = vector.broadcast %cst_58 : f32 to vector<256x1xf32>
    %135 = arith.addf %133, %134 : vector<256x1xf32>
    %136 = math.rsqrt %135 : vector<256x1xf32>
    %137 = vector.broadcast %136 : vector<256x1xf32> to vector<256x128xf32>
    %138 = arith.mulf %128, %137 : vector<256x128xf32>
    %139 = vector.broadcast %121 : vector<1x128xf32> to vector<256x128xf32>
    %140 = arith.mulf %138, %139 : vector<256x128xf32>
    %141 = vector.broadcast %122 : vector<1x128xf32> to vector<256x128xf32>
    %142 = arith.addf %140, %141 : vector<256x128xf32>
    %143 = arith.truncf %142 : vector<256x128xf32> to vector<256x128xbf16>
    %c0_59 = arith.constant 0 : index
    %c0_60 = arith.constant 0 : index
    %144 = vector.load %arg13[%c0_59, %c0_60] : memref<128x256xbf16, #tpu.memory_space<vmem>>, vector<128x256xbf16>
    %cst_61 = arith.constant dense<0.000000e+00> : vector<256x256xf32>
    %145 = tpu.matmul %143, %144, %cst_61 {dimension_numbers = #tpu.dot_dimension_numbers<[1], [0], [0], [1], [0, 0, 1, 1], [], []>} : vector<256x128xbf16>, vector<128x256xbf16>, vector<256x256xf32> -> vector<256x256xf32>
    %c0_62 = arith.constant 0 : index
    %c0_63 = arith.constant 0 : index
    %146 = vector.load %arg14[%c0_62, %c0_63] : memref<1x256xf32, #tpu.memory_space<vmem>>, vector<1x256xf32>
    %147 = vector.broadcast %146 : vector<1x256xf32> to vector<256x256xf32>
    %148 = arith.addf %145, %147 : vector<256x256xf32>
    %cst_64 = arith.constant 0.000000e+00 : f32
    %149 = vector.broadcast %cst_64 : f32 to vector<256x256xf32>
    %150 = arith.maximumf %148, %149 : vector<256x256xf32>
    %151 = arith.truncf %150 : vector<256x256xf32> to vector<256x256xbf16>
    %c0_65 = arith.constant 0 : index
    %c0_66 = arith.constant 0 : index
    %152 = vector.load %arg15[%c0_65, %c0_66] : memref<256x128xbf16, #tpu.memory_space<vmem>>, vector<256x128xbf16>
    %cst_67 = arith.constant dense<0.000000e+00> : vector<256x128xf32>
    %153 = tpu.matmul %151, %152, %cst_67 {dimension_numbers = #tpu.dot_dimension_numbers<[1], [0], [0], [1], [0, 0, 1, 1], [], []>} : vector<256x256xbf16>, vector<256x128xbf16>, vector<256x128xf32> -> vector<256x128xf32>
    %c0_68 = arith.constant 0 : index
    %c0_69 = arith.constant 0 : index
    %154 = vector.load %arg16[%c0_68, %c0_69] : memref<1x128xf32, #tpu.memory_space<vmem>>, vector<1x128xf32>
    %155 = vector.broadcast %154 : vector<1x128xf32> to vector<256x128xf32>
    %156 = arith.addf %153, %155 : vector<256x128xf32>
    %157 = arith.addf %142, %156 : vector<256x128xf32>
    %c0_70 = arith.constant 0 : index
    %c0_71 = arith.constant 0 : index
    %158 = vector.load %arg17[%c0_70, %c0_71] : memref<1x128xf32, #tpu.memory_space<vmem>>, vector<1x128xf32>
    %c0_72 = arith.constant 0 : index
    %c0_73 = arith.constant 0 : index
    %159 = vector.load %arg18[%c0_72, %c0_73] : memref<1x128xf32, #tpu.memory_space<vmem>>, vector<1x128xf32>
    %cst_74 = arith.constant dense<0.000000e+00> : vector<256xf32>
    %160 = vector.multi_reduction <add>, %157, %cst_74 [1] : vector<256x128xf32> to vector<256xf32>
    %161 = vector.shape_cast %160 : vector<256xf32> to vector<256x1xf32>
    %cst_75 = arith.constant 1.280000e+02 : f32
    %162 = vector.broadcast %cst_75 : f32 to vector<256x1xf32>
    %163 = arith.divf %161, %162 : vector<256x1xf32>
    %164 = vector.broadcast %163 : vector<256x1xf32> to vector<256x128xf32>
    %165 = arith.subf %157, %164 : vector<256x128xf32>
    %166 = arith.mulf %165, %165 : vector<256x128xf32>
    %cst_76 = arith.constant dense<0.000000e+00> : vector<256xf32>
    %167 = vector.multi_reduction <add>, %166, %cst_76 [1] : vector<256x128xf32> to vector<256xf32>
    %168 = vector.shape_cast %167 : vector<256xf32> to vector<256x1xf32>
    %cst_77 = arith.constant 1.280000e+02 : f32
    %169 = vector.broadcast %cst_77 : f32 to vector<256x1xf32>
    %170 = arith.divf %168, %169 : vector<256x1xf32>
    %cst_78 = arith.constant 9.99999974E-6 : f32
    %171 = vector.broadcast %cst_78 : f32 to vector<256x1xf32>
    %172 = arith.addf %170, %171 : vector<256x1xf32>
    %173 = math.rsqrt %172 : vector<256x1xf32>
    %174 = vector.broadcast %173 : vector<256x1xf32> to vector<256x128xf32>
    %175 = arith.mulf %165, %174 : vector<256x128xf32>
    %176 = vector.broadcast %158 : vector<1x128xf32> to vector<256x128xf32>
    %177 = arith.mulf %175, %176 : vector<256x128xf32>
    %178 = vector.broadcast %159 : vector<1x128xf32> to vector<256x128xf32>
    %179 = arith.addf %177, %178 : vector<256x128xf32>
    %180 = vector.shape_cast %179 : vector<256x128xf32> to vector<4x64x128xf32>
    %c0_79 = arith.constant 0 : index
    %c0_80 = arith.constant 0 : index
    %c0_81 = arith.constant 0 : index
    %181 = vector.load %arg19[%c0_79, %c0_80, %c0_81] : memref<4x64x128xf32, #tpu.memory_space<vmem>>, vector<4x64x128xf32>
    tpu.vector_store %arg19[%c0_79, %c0_80, %c0_81], %180 {strides = array<i32>} : memref<4x64x128xf32, #tpu.memory_space<vmem>>, vector<4x64x128xf32>,
    return
  }
  func.func @transform_0(%arg0: i32) -> (i32, i32, i32) {
    %c0_i32 = arith.constant 0 : i32
    %c0_i32_0 = arith.constant 0 : i32
    %c0_i32_1 = arith.constant 0 : i32
    return %arg0, %c0_i32, %c0_i32_0 : i32, i32, i32
  }
  func.func @transform_1(%arg0: i32) -> (i32, i32) {
    %c0_i32 = arith.constant 0 : i32
    %c0_i32_0 = arith.constant 0 : i32
    %c0_i32_1 = arith.constant 0 : i32
    return %c0_i32, %c0_i32_0 : i32, i32
  }
  func.func @transform_2(%arg0: i32) -> (i32, i32) {
    %c0_i32 = arith.constant 0 : i32
    %c0_i32_0 = arith.constant 0 : i32
    %c0_i32_1 = arith.constant 0 : i32
    return %c0_i32, %c0_i32_0 : i32, i32
  }
  func.func @transform_3(%arg0: i32) -> (i32, i32) {
    %c0_i32 = arith.constant 0 : i32
    %c0_i32_0 = arith.constant 0 : i32
    %c0_i32_1 = arith.constant 0 : i32
    return %c0_i32, %c0_i32_0 : i32, i32
  }
  func.func @transform_4(%arg0: i32) -> (i32, i32) {
    %c0_i32 = arith.constant 0 : i32
    %c0_i32_0 = arith.constant 0 : i32
    %c0_i32_1 = arith.constant 0 : i32
    return %c0_i32, %c0_i32_0 : i32, i32
  }
  func.func @transform_5(%arg0: i32) -> (i32, i32) {
    %c0_i32 = arith.constant 0 : i32
    %c0_i32_0 = arith.constant 0 : i32
    %c0_i32_1 = arith.constant 0 : i32
    return %c0_i32, %c0_i32_0 : i32, i32
  }
  func.func @transform_6(%arg0: i32) -> (i32, i32) {
    %c0_i32 = arith.constant 0 : i32
    %c0_i32_0 = arith.constant 0 : i32
    %c0_i32_1 = arith.constant 0 : i32
    return %c0_i32, %c0_i32_0 : i32, i32
  }
  func.func @transform_7(%arg0: i32) -> (i32, i32) {
    %c0_i32 = arith.constant 0 : i32
    %c0_i32_0 = arith.constant 0 : i32
    %c0_i32_1 = arith.constant 0 : i32
    return %c0_i32, %c0_i32_0 : i32, i32
  }
  func.func @transform_8(%arg0: i32) -> (i32, i32, i32) {
    %c0_i32 = arith.constant 0 : i32
    %c0_i32_0 = arith.constant 0 : i32
    %c0_i32_1 = arith.constant 0 : i32
    %c0_i32_2 = arith.constant 0 : i32
    return %c0_i32, %c0_i32_0, %c0_i32_1 : i32, i32, i32
  }
  func.func @transform_9(%arg0: i32) -> (i32, i32) {
    %c0_i32 = arith.constant 0 : i32
    %c0_i32_0 = arith.constant 0 : i32
    %c0_i32_1 = arith.constant 0 : i32
    return %c0_i32, %c0_i32_0 : i32, i32
  }
  func.func @transform_10(%arg0: i32) -> (i32, i32) {
    %c0_i32 = arith.constant 0 : i32
    %c0_i32_0 = arith.constant 0 : i32
    %c0_i32_1 = arith.constant 0 : i32
    return %c0_i32, %c0_i32_0 : i32, i32
  }
  func.func @transform_11(%arg0: i32) -> (i32, i32) {
    %c0_i32 = arith.constant 0 : i32
    %c0_i32_0 = arith.constant 0 : i32
    %c0_i32_1 = arith.constant 0 : i32
    return %c0_i32, %c0_i32_0 : i32, i32
  }
  func.func @transform_12(%arg0: i32) -> (i32, i32) {
    %c0_i32 = arith.constant 0 : i32
    %c0_i32_0 = arith.constant 0 : i32
    %c0_i32_1 = arith.constant 0 : i32
    return %c0_i32, %c0_i32_0 : i32, i32
  }
  func.func @transform_13(%arg0: i32) -> (i32, i32) {
    %c0_i32 = arith.constant 0 : i32
    %c0_i32_0 = arith.constant 0 : i32
    %c0_i32_1 = arith.constant 0 : i32
    return %c0_i32, %c0_i32_0 : i32, i32
  }
  func.func @transform_14(%arg0: i32) -> (i32, i32) {
    %c0_i32 = arith.constant 0 : i32
    %c0_i32_0 = arith.constant 0 : i32
    %c0_i32_1 = arith.constant 0 : i32
    return %c0_i32, %c0_i32_0 : i32, i32
  }
  func.func @transform_15(%arg0: i32) -> (i32, i32) {
    %c0_i32 = arith.constant 0 : i32
    %c0_i32_0 = arith.constant 0 : i32
    %c0_i32_1 = arith.constant 0 : i32
    return %c0_i32, %c0_i32_0 : i32, i32
  }
  func.func @transform_16(%arg0: i32) -> (i32, i32) {
    %c0_i32 = arith.constant 0 : i32
    %c0_i32_0 = arith.constant 0 : i32
    %c0_i32_1 = arith.constant 0 : i32
    return %c0_i32, %c0_i32_0 : i32, i32
  }
  func.func @transform_17(%arg0: i32) -> (i32, i32) {
    %c0_i32 = arith.constant 0 : i32
    %c0_i32_0 = arith.constant 0 : i32
    %c0_i32_1 = arith.constant 0 : i32
    return %c0_i32, %c0_i32_0 : i32, i32
  }
  func.func @transform_18(%arg0: i32) -> (i32, i32, i32) {
    %c0_i32 = arith.constant 0 : i32
    %c0_i32_0 = arith.constant 0 : i32
    %c0_i32_1 = arith.constant 0 : i32
    return %arg0, %c0_i32, %c0_i32_0 : i32, i32, i32
  }
}

</mosaic_0001>

<llo_original>
// kernel: tpu_custom_call.1
$region0: #{tpu_custom_call.1}
  #allocation0 [shape = 'u32[]', space=smem, size = 0x4, offset = 0x4, fixed_abs, tag = 'smem constant byte address 0x4 - core index']
  #allocation1 [shape = 'u32[144,128]{1,0:T(1,128)}', space=vmem, size = 0x12000, scoped, tag = 'internal scratch']
  %s0 = inlined_call_operand.hbm [shape: f32[8,64,128], index: 0, kind: input, shape index: {}]
  %s1 = inlined_call_operand.hbm [shape: f32[64,128], index: 1, kind: input, shape index: {}]
  %s2 = inlined_call_operand.hbm [shape: bf16[128,128], index: 2, kind: input, shape index: {}]
  %s3 = inlined_call_operand.vmem [shape: f32[1,128], index: 3, kind: input, shape index: {}]
  %s4 = inlined_call_operand.hbm [shape: bf16[128,128], index: 4, kind: input, shape index: {}]
  %s5 = inlined_call_operand.vmem [shape: f32[1,128], index: 5, kind: input, shape index: {}]
  %s6 = inlined_call_operand.hbm [shape: bf16[128,128], index: 6, kind: input, shape index: {}]
  %s7 = inlined_call_operand.vmem [shape: f32[1,128], index: 7, kind: input, shape index: {}]
  %s8 = inlined_call_operand.hbm [shape: bf16[4,32,128], index: 8, kind: input, shape index: {}]
  %s9 = inlined_call_operand.vmem [shape: f32[1,128], index: 9, kind: input, shape index: {}]
  %s10 = inlined_call_operand.vmem [shape: f32[1,128], index: 10, kind: input, shape index: {}]
  %s11 = inlined_call_operand.vmem [shape: f32[1,128], index: 11, kind: input, shape index: {}]
  %s12 = inlined_call_operand.hbm [shape: bf16[128,256], index: 12, kind: input, shape index: {}]
  %s13 = inlined_call_operand.vmem [shape: f32[1,256], index: 13, kind: input, shape index: {}]
  %s14 = inlined_call_operand.hbm [shape: bf16[256,128], index: 14, kind: input, shape index: {}]
  %s15 = inlined_call_operand.vmem [shape: f32[1,128], index: 15, kind: input, shape index: {}]
  %s16 = inlined_call_operand.vmem [shape: f32[1,128], index: 16, kind: input, shape index: {}]
  %s17 = inlined_call_operand.vmem [shape: f32[1,128], index: 17, kind: input, shape index: {}]
  %s18 = inlined_call_operand.hbm [shape: f32[8,64,128], index: 18, kind: output, shape index: {}]
  %s19 = sld [smem:[#allocation0]]
  $region137: #{tpu_custom_call.1} parent=0
    _
  %s21 = ssub.s32 1, %s19
  %s22 = scalar_select 0, %s21, %s19
  $region1: #{tpu_custom_call.1} parent=0
    #allocation2 [shape = 'u8[262144]{0}', space=vmem, size = 0x40000, scoped, tag = 'input window, operand 0']
    #allocation3 [shape = 's32[2]{0}', space=sflag, size = 0x8, scoped, tag = 'scoped memory for tpu_custom_call.1']
    #allocation4 [shape = 's32[2]{0}', space=sflag, size = 0x8, scoped, tag = 'scoped memory for tpu_custom_call.1']
    #allocation5 [shape = 'u8[32768]{0}', space=vmem, size = 0x8000, scoped, tag = 'input window, operand 1, single buffered']
    #allocation6 [shape = 's32[1]{0}', space=sflag, size = 0x4, scoped, tag = 'scoped memory for tpu_custom_call.1']
    #allocation7 [shape = 'u8[32768]{0}', space=vmem, size = 0x8000, scoped, tag = 'input window, operand 2, single buffered']
    #allocation8 [shape = 'u8[32768]{0}', space=vmem, size = 0x8000, scoped, tag = 'input window, operand 4, single buffered']
    #allocation9 [shape = 's32[1]{0}', space=sflag, size = 0x4, scoped, tag = 'scoped memory for tpu_custom_call.1']
    #allocation10 [shape = 'u8[32768]{0}', space=vmem, size = 0x8000, scoped, tag = 'input window, operand 6, single buffered']
    #allocation11 [shape = 'u8[32768]{0}', space=vmem, size = 0x8000, scoped, tag = 'input window, operand 8, single buffered']
    #allocation12 [shape = 's32[1]{0}', space=sflag, size = 0x4, scoped, tag = 'scoped memory for tpu_custom_call.1']
    #allocation13 [shape = 'u8[65536]{0}', space=vmem, size = 0x10000, scoped, tag = 'input window, operand 12, single buffered']
    #allocation14 [shape = 'u8[65536]{0}', space=vmem, size = 0x10000, scoped, tag = 'input window, operand 14, single buffered']
    #allocation15 [shape = 's32[1]{0}', space=sflag, size = 0x4, scoped, tag = 'scoped memory for tpu_custom_call.1']
    #allocation16 [shape = 'u8[262144]{0}', space=vmem, size = 0x40000, scoped, tag = 'output window, operand 0']
    %23 = vsyncpa [#allocation3], 0
    %s24 = scalar_lea.sflag [#allocation3], 1
    %25 = vsyncpa %s24, 0
    %26 = vsyncpa [#allocation6], 0
    %27 = vsyncpa [#allocation9], 0
    %28 = vsyncpa [#allocation12], 0
    %29 = vsyncpa [#allocation15], 0
    %30 = vsyncpa [#allocation4], 0
    %s31 = scalar_lea.sflag [#allocation4], 1
    %32 = vsyncpa %s31, 0
    loop: start=0, step=1, limit=4
    $region2: #{tpu_custom_call.1} parent=1 // loop_pre_header
      _
    $region3: #{tpu_custom_call.1} parent=1 // loop_header
      %s34 = sphi 0, %s38
      %p35 = scmp.ge.s32.totalorder %s34, 4
      %s44 = sphi 0, %s46
      %s47 = sphi 0, %s44
      %s48 = sphi 0, %s47
      %s64 = sphi 0, %s48
      %s68 = sphi 0, %s68
      %s70 = sphi 0, %s68
      %s71 = sphi 0, %s70
      %s85 = sphi 0, %s71
      %s89 = sphi 0, %s89
      %s91 = sphi 0, %s89
      %s92 = sphi 0, %s91
      %s106 = sphi 0, %s92
      %s110 = sphi 0, %s110
      %s112 = sphi 0, %s110
      %s113 = sphi 0, %s112
      %s127 = sphi 0, %s113
      %s131 = sphi 0, %s131
      %s133 = sphi 0, %s131
      %s134 = sphi 0, %s133
      %s148 = sphi 0, %s134
      %s152 = sphi 0, %s152
      %s154 = sphi 0, %s152
      %s155 = sphi 0, %s154
      %s169 = sphi 0, %s155
      %s173 = sphi 0, %s173
      %s175 = sphi 0, %s173
      %s176 = sphi 0, %s175
      %s190 = sphi 0, %s176
      %s194 = sphi 0, %s194
      %s196 = sphi 0, %s194
      %s197 = sphi 0, %s196
      %s211 = sphi 0, %s197
      %s215 = sphi 0, %s215
      %s217 = sphi 0, %s215
      %s218 = sphi 0, %s217
      %s232 = sphi 0, %s218
      %s236 = sphi 0, %s236
      %s238 = sphi 0, %s236
      %s239 = sphi 0, %s238
      %s253 = sphi 0, %s239
      %s257 = sphi 0, %s257
      %s259 = sphi 0, %s257
      %s260 = sphi 0, %s259
      %s274 = sphi 0, %s260
      %s278 = sphi 0, %s278
      %s280 = sphi 0, %s278
      %s281 = sphi 0, %s280
      %s295 = sphi 0, %s281
      %s299 = sphi 0, %s299
      %s301 = sphi 0, %s299
      %s302 = sphi 0, %s301
      %s316 = sphi 0, %s302
      %s320 = sphi 0, %s320
      %s322 = sphi 0, %s320
      %s323 = sphi 0, %s322
      %s337 = sphi 0, %s323
      %s341 = sphi 0, %s341
      %s343 = sphi 0, %s341
      %s344 = sphi 0, %s343
      %s358 = sphi 0, %s344
      %s362 = sphi 0, %s362
      %s364 = sphi 0, %s362
      %s365 = sphi 0, %s364
      %s379 = sphi 0, %s365
      %s383 = sphi 0, %s383
      %s385 = sphi 0, %s383
      %s386 = sphi 0, %s385
      %s400 = sphi 0, %s386
      %s404 = sphi 0, %s404
      %s406 = sphi 0, %s404
      %s407 = sphi 0, %s406
      %s421 = sphi 0, %s407
      %s427 = sphi 0, %s429
      %s430 = sphi 0, %s427
      %s431 = sphi 0, %s430
      %s447 = sphi 0, %s431
    $region4: #{tpu_custom_call.1} parent=1 // loop_header_branch
      %37 = sbr.rel (%p35) target = $region8
    $region5: #{tpu_custom_call.1} parent=1 // loop_body
      %s39 = ssub.s32 %s34, 1
      %s40 = ssub.s32 %s34, 2
      %s41 = sadd.s32 %s34, 1
      %s42 = ssub.s32 %s34, %s41
      %p43 = scmp.eq.s32.totalorder %s42, 0
      %s45 = sadd.s32 %s44, 1
      %s46 = scalar_select %p43, %s44, %s45
      %p49 = pneg %p43
      %p50 = scmp.eq.s32.totalorder %s34, 1
      %p51 = por %p49, %p50
      %p52 = scmp.ne.s32.totalorder %s44, %s47
      %p53 = scmp.eq.s32.totalorder %s34, 0
      %p54 = por %p52, %p53
      %p55 = scmp.ne.s32.totalorder %s44, %s47
      %p56 = scmp.eq.s32.totalorder %s39, 1
      %p57 = por %p55, %p56
      %p58 = scmp.ne.s32.totalorder %s47, %s48
      %p59 = scmp.eq.s32.totalorder %s39, 0
      %p60 = por %p58, %p59
      %p61 = scmp.ne.s32.totalorder %s47, %s48
      %p62 = scmp.eq.s32.totalorder %s40, 1
      %p63 = por %p61, %p62
      %p65 = scmp.ne.s32.totalorder %s48, %s64
      %p66 = scmp.eq.s32.totalorder %s40, 0
      %p67 = por %p65, %p66
      %s69 = sadd.s32 %s68, 1
      %p72 = scmp.eq.s32.totalorder %s34, 1
      %p73 = scmp.ne.s32.totalorder %s68, %s70
      %p74 = scmp.eq.s32.totalorder %s34, 0
      %p75 = por %p73, %p74
      %p76 = scmp.ne.s32.totalorder %s68, %s70
      %p77 = scmp.eq.s32.totalorder %s39, 1
      %p78 = por %p76, %p77
      %p79 = scmp.ne.s32.totalorder %s70, %s71
      %p80 = scmp.eq.s32.totalorder %s39, 0
      %p81 = por %p79, %p80
      %p82 = scmp.ne.s32.totalorder %s70, %s71
      %p83 = scmp.eq.s32.totalorder %s40, 1
      %p84 = por %p82, %p83
      %p86 = scmp.ne.s32.totalorder %s71, %s85
      %p87 = scmp.eq.s32.totalorder %s40, 0
      %p88 = por %p86, %p87
      %s90 = sadd.s32 %s89, 1
      %p93 = scmp.eq.s32.totalorder %s34, 1
      %p94 = scmp.ne.s32.totalorder %s89, %s91
      %p95 = scmp.eq.s32.totalorder %s34, 0
      %p96 = por %p94, %p95
      %p97 = scmp.ne.s32.totalorder %s89, %s91
      %p98 = scmp.eq.s32.totalorder %s39, 1
      %p99 = por %p97, %p98
      %p100 = scmp.ne.s32.totalorder %s91, %s92
      %p101 = scmp.eq.s32.totalorder %s39, 0
      %p102 = por %p100, %p101
      %p103 = scmp.ne.s32.totalorder %s91, %s92
      %p104 = scmp.eq.s32.totalorder %s40, 1
      %p105 = por %p103, %p104
      %p107 = scmp.ne.s32.totalorder %s92, %s106
      %p108 = scmp.eq.s32.totalorder %s40, 0
      %p109 = por %p107, %p108
      %s111 = sadd.s32 %s110, 1
      %p114 = scmp.eq.s32.totalorder %s34, 1
      %p115 = scmp.ne.s32.totalorder %s110, %s112
      %p116 = scmp.eq.s32.totalorder %s34, 0
      %p117 = por %p115, %p116
      %p118 = scmp.ne.s32.totalorder %s110, %s112
      %p119 = scmp.eq.s32.totalorder %s39, 1
      %p120 = por %p118, %p119
      %p121 = scmp.ne.s32.totalorder %s112, %s113
      %p122 = scmp.eq.s32.totalorder %s39, 0
      %p123 = por %p121, %p122
      %p124 = scmp.ne.s32.totalorder %s112, %s113
      %p125 = scmp.eq.s32.totalorder %s40, 1
      %p126 = por %p124, %p125
      %p128 = scmp.ne.s32.totalorder %s113, %s127
      %p129 = scmp.eq.s32.totalorder %s40, 0
      %p130 = por %p128, %p129
      %s132 = sadd.s32 %s131, 1
      %p135 = scmp.eq.s32.totalorder %s34, 1
      %p136 = scmp.ne.s32.totalorder %s131, %s133
      %p137 = scmp.eq.s32.totalorder %s34, 0
      %p138 = por %p136, %p137
      %p139 = scmp.ne.s32.totalorder %s131, %s133
      %p140 = scmp.eq.s32.totalorder %s39, 1
      %p141 = por %p139, %p140
      %p142 = scmp.ne.s32.totalorder %s133, %s134
      %p143 = scmp.eq.s32.totalorder %s39, 0
      %p144 = por %p142, %p143
      %p145 = scmp.ne.s32.totalorder %s133, %s134
      %p146 = scmp.eq.s32.totalorder %s40, 1
      %p147 = por %p145, %p146
      %p149 = scmp.ne.s32.totalorder %s134, %s148
      %p150 = scmp.eq.s32.totalorder %s40, 0
      %p151 = por %p149, %p150
      %s153 = sadd.s32 %s152, 1
      %p156 = scmp.eq.s32.totalorder %s34, 1
      %p157 = scmp.ne.s32.totalorder %s152, %s154
      %p158 = scmp.eq.s32.totalorder %s34, 0
      %p159 = por %p157, %p158
      %p160 = scmp.ne.s32.totalorder %s152, %s154
      %p161 = scmp.eq.s32.totalorder %s39, 1
      %p162 = por %p160, %p161
      %p163 = scmp.ne.s32.totalorder %s154, %s155
      %p164 = scmp.eq.s32.totalorder %s39, 0
      %p165 = por %p163, %p164
      %p166 = scmp.ne.s32.totalorder %s154, %s155
      %p167 = scmp.eq.s32.totalorder %s40, 1
      %p168 = por %p166, %p167
      %p170 = scmp.ne.s32.totalorder %s155, %s169
      %p171 = scmp.eq.s32.totalorder %s40, 0
      %p172 = por %p170, %p171
      %s174 = sadd.s32 %s173, 1
      %p177 = scmp.eq.s32.totalorder %s34, 1
      %p178 = scmp.ne.s32.totalorder %s173, %s175
      %p179 = scmp.eq.s32.totalorder %s34, 0
      %p180 = por %p178, %p179
      %p181 = scmp.ne.s32.totalorder %s173, %s175
      %p182 = scmp.eq.s32.totalorder %s39, 1
      %p183 = por %p181, %p182
      %p184 = scmp.ne.s32.totalorder %s175, %s176
      %p185 = scmp.eq.s32.totalorder %s39, 0
      %p186 = por %p184, %p185
      %p187 = scmp.ne.s32.totalorder %s175, %s176
      %p188 = scmp.eq.s32.totalorder %s40, 1
      %p189 = por %p187, %p188
      %p191 = scmp.ne.s32.totalorder %s176, %s190
      %p192 = scmp.eq.s32.totalorder %s40, 0
      %p193 = por %p191, %p192
      %s195 = sadd.s32 %s194, 1
      %p198 = scmp.eq.s32.totalorder %s34, 1
      %p199 = scmp.ne.s32.totalorder %s194, %s196
      %p200 = scmp.eq.s32.totalorder %s34, 0
      %p201 = por %p199, %p200
      %p202 = scmp.ne.s32.totalorder %s194, %s196
      %p203 = scmp.eq.s32.totalorder %s39, 1
      %p204 = por %p202, %p203
      %p205 = scmp.ne.s32.totalorder %s196, %s197
      %p206 = scmp.eq.s32.totalorder %s39, 0
      %p207 = por %p205, %p206
      %p208 = scmp.ne.s32.totalorder %s196, %s197
      %p209 = scmp.eq.s32.totalorder %s40, 1
      %p210 = por %p208, %p209
      %p212 = scmp.ne.s32.totalorder %s197, %s211
      %p213 = scmp.eq.s32.totalorder %s40, 0
      %p214 = por %p212, %p213
      %s216 = sadd.s32 %s215, 1
      %p219 = scmp.eq.s32.totalorder %s34, 1
      %p220 = scmp.ne.s32.totalorder %s215, %s217
      %p221 = scmp.eq.s32.totalorder %s34, 0
      %p222 = por %p220, %p221
      %p223 = scmp.ne.s32.totalorder %s215, %s217
      %p224 = scmp.eq.s32.totalorder %s39, 1
      %p225 = por %p223, %p224
      %p226 = scmp.ne.s32.totalorder %s217, %s218
      %p227 = scmp.eq.s32.totalorder %s39, 0
      %p228 = por %p226, %p227
      %p229 = scmp.ne.s32.totalorder %s217, %s218
      %p230 = scmp.eq.s32.totalorder %s40, 1
      %p231 = por %p229, %p230
      %p233 = scmp.ne.s32.totalorder %s218, %s232
      %p234 = scmp.eq.s32.totalorder %s40, 0
      %p235 = por %p233, %p234
      %s237 = sadd.s32 %s236, 1
      %p240 = scmp.eq.s32.totalorder %s34, 1
      %p241 = scmp.ne.s32.totalorder %s236, %s238
      %p242 = scmp.eq.s32.totalorder %s34, 0
      %p243 = por %p241, %p242
      %p244 = scmp.ne.s32.totalorder %s236, %s238
      %p245 = scmp.eq.s32.totalorder %s39, 1
      %p246 = por %p244, %p245
      %p247 = scmp.ne.s32.totalorder %s238, %s239
      %p248 = scmp.eq.s32.totalorder %s39, 0
      %p249 = por %p247, %p248
      %p250 = scmp.ne.s32.totalorder %s238, %s239
      %p251 = scmp.eq.s32.totalorder %s40, 1
      %p252 = por %p250, %p251
      %p254 = scmp.ne.s32.totalorder %s239, %s253
      %p255 = scmp.eq.s32.totalorder %s40, 0
      %p256 = por %p254, %p255
      %s258 = sadd.s32 %s257, 1
      %p261 = scmp.eq.s32.totalorder %s34, 1
      %p262 = scmp.ne.s32.totalorder %s257, %s259
      %p263 = scmp.eq.s32.totalorder %s34, 0
      %p264 = por %p262, %p263
      %p265 = scmp.ne.s32.totalorder %s257, %s259
      %p266 = scmp.eq.s32.totalorder %s39, 1
      %p267 = por %p265, %p266
      %p268 = scmp.ne.s32.totalorder %s259, %s260
      %p269 = scmp.eq.s32.totalorder %s39, 0
      %p270 = por %p268, %p269
      %p271 = scmp.ne.s32.totalorder %s259, %s260
      %p272 = scmp.eq.s32.totalorder %s40, 1
      %p273 = por %p271, %p272
      %p275 = scmp.ne.s32.totalorder %s260, %s274
      %p276 = scmp.eq.s32.totalorder %s40, 0
      %p277 = por %p275, %p276
      %s279 = sadd.s32 %s278, 1
      %p282 = scmp.eq.s32.totalorder %s34, 1
      %p283 = scmp.ne.s32.totalorder %s278, %s280
      %p284 = scmp.eq.s32.totalorder %s34, 0
      %p285 = por %p283, %p284
      %p286 = scmp.ne.s32.totalorder %s278, %s280
      %p287 = scmp.eq.s32.totalorder %s39, 1
      %p288 = por %p286, %p287
      %p289 = scmp.ne.s32.totalorder %s280, %s281
      %p290 = scmp.eq.s32.totalorder %s39, 0
      %p291 = por %p289, %p290
      %p292 = scmp.ne.s32.totalorder %s280, %s281
      %p293 = scmp.eq.s32.totalorder %s40, 1
      %p294 = por %p292, %p293
      %p296 = scmp.ne.s32.totalorder %s281, %s295
      %p297 = scmp.eq.s32.totalorder %s40, 0
      %p298 = por %p296, %p297
      %s300 = sadd.s32 %s299, 1
      %p303 = scmp.eq.s32.totalorder %s34, 1
      %p304 = scmp.ne.s32.totalorder %s299, %s301
      %p305 = scmp.eq.s32.totalorder %s34, 0
      %p306 = por %p304, %p305
      %p307 = scmp.ne.s32.totalorder %s299, %s301
      %p308 = scmp.eq.s32.totalorder %s39, 1
      %p309 = por %p307, %p308
      %p310 = scmp.ne.s32.totalorder %s301, %s302
      %p311 = scmp.eq.s32.totalorder %s39, 0
      %p312 = por %p310, %p311
      %p313 = scmp.ne.s32.totalorder %s301, %s302
      %p314 = scmp.eq.s32.totalorder %s40, 1
      %p315 = por %p313, %p314
      %p317 = scmp.ne.s32.totalorder %s302, %s316
      %p318 = scmp.eq.s32.totalorder %s40, 0
      %p319 = por %p317, %p318
      %s321 = sadd.s32 %s320, 1
      %p324 = scmp.eq.s32.totalorder %s34, 1
      %p325 = scmp.ne.s32.totalorder %s320, %s322
      %p326 = scmp.eq.s32.totalorder %s34, 0
      %p327 = por %p325, %p326
      %p328 = scmp.ne.s32.totalorder %s320, %s322
      %p329 = scmp.eq.s32.totalorder %s39, 1
      %p330 = por %p328, %p329
      %p331 = scmp.ne.s32.totalorder %s322, %s323
      %p332 = scmp.eq.s32.totalorder %s39, 0
      %p333 = por %p331, %p332
      %p334 = scmp.ne.s32.totalorder %s322, %s323
      %p335 = scmp.eq.s32.totalorder %s40, 1
      %p336 = por %p334, %p335
      %p338 = scmp.ne.s32.totalorder %s323, %s337
      %p339 = scmp.eq.s32.totalorder %s40, 0
      %p340 = por %p338, %p339
      %s342 = sadd.s32 %s341, 1
      %p345 = scmp.eq.s32.totalorder %s34, 1
      %p346 = scmp.ne.s32.totalorder %s341, %s343
      %p347 = scmp.eq.s32.totalorder %s34, 0
      %p348 = por %p346, %p347
      %p349 = scmp.ne.s32.totalorder %s341, %s343
      %p350 = scmp.eq.s32.totalorder %s39, 1
      %p351 = por %p349, %p350
      %p352 = scmp.ne.s32.totalorder %s343, %s344
      %p353 = scmp.eq.s32.totalorder %s39, 0
      %p354 = por %p352, %p353
      %p355 = scmp.ne.s32.totalorder %s343, %s344
      %p356 = scmp.eq.s32.totalorder %s40, 1
      %p357 = por %p355, %p356
      %p359 = scmp.ne.s32.totalorder %s344, %s358
      %p360 = scmp.eq.s32.totalorder %s40, 0
      %p361 = por %p359, %p360
      %s363 = sadd.s32 %s362, 1
      %p366 = scmp.eq.s32.totalorder %s34, 1
      %p367 = scmp.ne.s32.totalorder %s362, %s364
      %p368 = scmp.eq.s32.totalorder %s34, 0
      %p369 = por %p367, %p368
      %p370 = scmp.ne.s32.totalorder %s362, %s364
      %p371 = scmp.eq.s32.totalorder %s39, 1
      %p372 = por %p370, %p371
      %p373 = scmp.ne.s32.totalorder %s364, %s365
      %p374 = scmp.eq.s32.totalorder %s39, 0
      %p375 = por %p373, %p374
      %p376 = scmp.ne.s32.totalorder %s364, %s365
      %p377 = scmp.eq.s32.totalorder %s40, 1
      %p378 = por %p376, %p377
      %p380 = scmp.ne.s32.totalorder %s365, %s379
      %p381 = scmp.eq.s32.totalorder %s40, 0
      %p382 = por %p380, %p381
      %s384 = sadd.s32 %s383, 1
      %p387 = scmp.eq.s32.totalorder %s34, 1
      %p388 = scmp.ne.s32.totalorder %s383, %s385
      %p389 = scmp.eq.s32.totalorder %s34, 0
      %p390 = por %p388, %p389
      %p391 = scmp.ne.s32.totalorder %s383, %s385
      %p392 = scmp.eq.s32.totalorder %s39, 1
      %p393 = por %p391, %p392
      %p394 = scmp.ne.s32.totalorder %s385, %s386
      %p395 = scmp.eq.s32.totalorder %s39, 0
      %p396 = por %p394, %p395
      %p397 = scmp.ne.s32.totalorder %s385, %s386
      %p398 = scmp.eq.s32.totalorder %s40, 1
      %p399 = por %p397, %p398
      %p401 = scmp.ne.s32.totalorder %s386, %s400
      %p402 = scmp.eq.s32.totalorder %s40, 0
      %p403 = por %p401, %p402
      %s405 = sadd.s32 %s404, 1
      %p408 = scmp.eq.s32.totalorder %s34, 1
      %p409 = scmp.ne.s32.totalorder %s404, %s406
      %p410 = scmp.eq.s32.totalorder %s34, 0
      %p411 = por %p409, %p410
      %p412 = scmp.ne.s32.totalorder %s404, %s406
      %p413 = scmp.eq.s32.totalorder %s39, 1
      %p414 = por %p412, %p413
      %p415 = scmp.ne.s32.totalorder %s406, %s407
      %p416 = scmp.eq.s32.totalorder %s39, 0
      %p417 = por %p415, %p416
      %p418 = scmp.ne.s32.totalorder %s406, %s407
      %p419 = scmp.eq.s32.totalorder %s40, 1
      %p420 = por %p418, %p419
      %p422 = scmp.ne.s32.totalorder %s407, %s421
      %p423 = scmp.eq.s32.totalorder %s40, 0
      %p424 = por %p422, %p423
      %s425 = ssub.s32 %s34, %s41
      %p426 = scmp.eq.s32.totalorder %s425, 0
      %s428 = sadd.s32 %s427, 1
      %s429 = scalar_select %p426, %s427, %s428
      %p432 = pneg %p426
      %p433 = scmp.eq.s32.totalorder %s34, 1
      %p434 = por %p432, %p433
      %p435 = scmp.ne.s32.totalorder %s427, %s430
      %p436 = scmp.eq.s32.totalorder %s34, 0
      %p437 = por %p435, %p436
      %p438 = scmp.ne.s32.totalorder %s427, %s430
      %p439 = scmp.eq.s32.totalorder %s39, 1
      %p440 = por %p438, %p439
      %p441 = scmp.ne.s32.totalorder %s430, %s431
      %p442 = scmp.eq.s32.totalorder %s39, 0
      %p443 = por %p441, %p442
      %p444 = scmp.ne.s32.totalorder %s430, %s431
      %p445 = scmp.eq.s32.totalorder %s40, 1
      %p446 = por %p444, %p445
      %p448 = scmp.ne.s32.totalorder %s431, %s447
      %p449 = scmp.eq.s32.totalorder %s40, 0
      %p450 = por %p448, %p449
      %p451 = scmp.le.s32.totalorder 1, %s34
      %p452 = scmp.lt.s32.totalorder %s34, 3
      %p453 = pnand %p451, %p452
      %p454 = pneg %p453
      // Predicated region
      $region9: #{tpu_custom_call.1} parent=5 // pred_check
        _
      $region10: #{tpu_custom_call.1} parent=5 // pred_check_branch
        %456 = sbr.rel (%p453) target = $region12
      $region11: #{tpu_custom_call.1} parent=5 // pred_region
        %s457 = ssub.s32 %s34, 1
        // Predicated region
        $region13: #{tpu_custom_call.1} parent=11 // pred_check
          %p458 = pneg %p81
        $region14: #{tpu_custom_call.1} parent=11 // pred_check_branch
          %460 = sbr.rel (%p458) target = $region16
        $region15: #{tpu_custom_call.1} parent=11 // pred_region
          %s462 = ssub.s32 1024, 1024
          %463 = vsyncadd [#allocation6], %s462
          %s464 = sshll.u32 [#allocation5], 4
          %s465 = int_to_ptr.vmem [resolvable:$true] %s464
          %470 = dma.hbm_to_vmem [thread:$0]  %s1, 1024, %s465, [#allocation6], 128, 128, 8
        $region16: #{tpu_custom_call.1} parent=11 // pred_fallthru
          _
        // Predicated region
        $region17: #{tpu_custom_call.1} parent=11 // pred_check
          %p471 = pneg %p102
        $region18: #{tpu_custom_call.1} parent=11 // pred_check_branch
          %473 = sbr.rel (%p471) target = $region20
        $region19: #{tpu_custom_call.1} parent=11 // pred_region
          %s475 = ssub.s32 1024, 1024
          %476 = vsyncadd [#allocation6], %s475
          %s477 = sshll.u32 [#allocation7], 4
          %s478 = int_to_ptr.vmem [resolvable:$true] %s477
          %483 = dma.hbm_to_vmem [thread:$0]  %s2, 1024, %s478, [#allocation6], 64, 64, 4
        $region20: #{tpu_custom_call.1} parent=11 // pred_fallthru
          _
        // Predicated region
        $region21: #{tpu_custom_call.1} parent=11 // pred_check
          %p484 = pneg %p123
        $region22: #{tpu_custom_call.1} parent=11 // pred_check_branch
          %486 = sbr.rel (%p484) target = $region24
        $region23: #{tpu_custom_call.1} parent=11 // pred_region
          _
        $region24: #{tpu_custom_call.1} parent=11 // pred_fallthru
          _
        // Predicated region
        $region25: #{tpu_custom_call.1} parent=11 // pred_check
          %p487 = pneg %p144
        $region26: #{tpu_custom_call.1} parent=11 // pred_check_branch
          %489 = sbr.rel (%p487) target = $region28
        $region27: #{tpu_custom_call.1} parent=11 // pred_region
          %s491 = ssub.s32 1024, 1024
          %492 = vsyncadd [#allocation9], %s491
          %s493 = sshll.u32 [#allocation8], 4
          %s494 = int_to_ptr.vmem [resolvable:$true] %s493
          %499 = dma.hbm_to_vmem [thread:$0]  %s4, 1024, %s494, [#allocation9], 64, 64, 4
        $region28: #{tpu_custom_call.1} parent=11 // pred_fallthru
          _
        // Predicated region
        $region29: #{tpu_custom_call.1} parent=11 // pred_check
          %p500 = pneg %p165
        $region30: #{tpu_custom_call.1} parent=11 // pred_check_branch
          %502 = sbr.rel (%p500) target = $region32
        $region31: #{tpu_custom_call.1} parent=11 // pred_region
          _
        $region32: #{tpu_custom_call.1} parent=11 // pred_fallthru
          _
        // Predicated region
        $region33: #{tpu_custom_call.1} parent=11 // pred_check
          %p503 = pneg %p186
        $region34: #{tpu_custom_call.1} parent=11 // pred_check_branch
          %505 = sbr.rel (%p503) target = $region36
        $region35: #{tpu_custom_call.1} parent=11 // pred_region
          %s507 = ssub.s32 1024, 1024
          %508 = vsyncadd [#allocation9], %s507
          %s509 = sshll.u32 [#allocation10], 4
          %s510 = int_to_ptr.vmem [resolvable:$true] %s509
          %515 = dma.hbm_to_vmem [thread:$0]  %s6, 1024, %s510, [#allocation9], 64, 64, 4
        $region36: #{tpu_custom_call.1} parent=11 // pred_fallthru
          _
        // Predicated region
        $region37: #{tpu_custom_call.1} parent=11 // pred_check
          %p516 = pneg %p207
        $region38: #{tpu_custom_call.1} parent=11 // pred_check_branch
          %518 = sbr.rel (%p516) target = $region40
        $region39: #{tpu_custom_call.1} parent=11 // pred_region
          _
        $region40: #{tpu_custom_call.1} parent=11 // pred_fallthru
          _
        // Predicated region
        $region41: #{tpu_custom_call.1} parent=11 // pred_check
          %p519 = pneg %p228
        $region42: #{tpu_custom_call.1} parent=11 // pred_check_branch
          %521 = sbr.rel (%p519) target = $region44
        $region43: #{tpu_custom_call.1} parent=11 // pred_region
          %s523 = ssub.s32 1024, 1024
          %524 = vsyncadd [#allocation12], %s523
          %s525 = sshll.u32 [#allocation11], 4
          %s526 = int_to_ptr.vmem [resolvable:$true] %s525
          %531 = dma.hbm_to_vmem [thread:$0]  %s8, 1024, %s526, [#allocation12], 64, 64, 4
        $region44: #{tpu_custom_call.1} parent=11 // pred_fallthru
          _
        // Predicated region
        $region45: #{tpu_custom_call.1} parent=11 // pred_check
          %p532 = pneg %p249
        $region46: #{tpu_custom_call.1} parent=11 // pred_check_branch
          %534 = sbr.rel (%p532) target = $region48
        $region47: #{tpu_custom_call.1} parent=11 // pred_region
          _
        $region48: #{tpu_custom_call.1} parent=11 // pred_fallthru
          _
        // Predicated region
        $region49: #{tpu_custom_call.1} parent=11 // pred_check
          %p535 = pneg %p270
        $region50: #{tpu_custom_call.1} parent=11 // pred_check_branch
          %537 = sbr.rel (%p535) target = $region52
        $region51: #{tpu_custom_call.1} parent=11 // pred_region
          _
        $region52: #{tpu_custom_call.1} parent=11 // pred_fallthru
          _
        // Predicated region
        $region53: #{tpu_custom_call.1} parent=11 // pred_check
          %p538 = pneg %p291
        $region54: #{tpu_custom_call.1} parent=11 // pred_check_branch
          %540 = sbr.rel (%p538) target = $region56
        $region55: #{tpu_custom_call.1} parent=11 // pred_region
          _
        $region56: #{tpu_custom_call.1} parent=11 // pred_fallthru
          _
        // Predicated region
        $region57: #{tpu_custom_call.1} parent=11 // pred_check
          %p541 = pneg %p312
        $region58: #{tpu_custom_call.1} parent=11 // pred_check_branch
          %543 = sbr.rel (%p541) target = $region60
        $region59: #{tpu_custom_call.1} parent=11 // pred_region
          %s545 = ssub.s32 2048, 2048
          %546 = vsyncadd [#allocation12], %s545
          %s547 = sshll.u32 [#allocation13], 4
          %s548 = int_to_ptr.vmem [resolvable:$true] %s547
          %553 = dma.hbm_to_vmem [thread:$0]  %s12, 2048, %s548, [#allocation12], 128, 128, 8
        $region60: #{tpu_custom_call.1} parent=11 // pred_fallthru
          _
        // Predicated region
        $region61: #{tpu_custom_call.1} parent=11 // pred_check
          %p554 = pneg %p333
        $region62: #{tpu_custom_call.1} parent=11 // pred_check_branch
          %556 = sbr.rel (%p554) target = $region64
        $region63: #{tpu_custom_call.1} parent=11 // pred_region
          _
        $region64: #{tpu_custom_call.1} parent=11 // pred_fallthru
          _
        // Predicated region
        $region65: #{tpu_custom_call.1} parent=11 // pred_check
          %p557 = pneg %p354
        $region66: #{tpu_custom_call.1} parent=11 // pred_check_branch
          %559 = sbr.rel (%p557) target = $region68
        $region67: #{tpu_custom_call.1} parent=11 // pred_region
          %s561 = ssub.s32 2048, 2048
          %562 = vsyncadd [#allocation15], %s561
          %s563 = sshll.u32 [#allocation14], 4
          %s564 = int_to_ptr.vmem [resolvable:$true] %s563
          %569 = dma.hbm_to_vmem [thread:$0]  %s14, 2048, %s564, [#allocation15], 64, 64, 4
        $region68: #{tpu_custom_call.1} parent=11 // pred_fallthru
          _
        // Predicated region
        $region69: #{tpu_custom_call.1} parent=11 // pred_check
          %p570 = pneg %p375
        $region70: #{tpu_custom_call.1} parent=11 // pred_check_branch
          %572 = sbr.rel (%p570) target = $region72
        $region71: #{tpu_custom_call.1} parent=11 // pred_region
          _
        $region72: #{tpu_custom_call.1} parent=11 // pred_fallthru
          _
        // Predicated region
        $region73: #{tpu_custom_call.1} parent=11 // pred_check
          %p573 = pneg %p396
        $region74: #{tpu_custom_call.1} parent=11 // pred_check_branch
          %575 = sbr.rel (%p573) target = $region76
        $region75: #{tpu_custom_call.1} parent=11 // pred_region
          _
        $region76: #{tpu_custom_call.1} parent=11 // pred_fallthru
          _
        // Predicated region
        $region77: #{tpu_custom_call.1} parent=11 // pred_check
          %p576 = pneg %p417
        $region78: #{tpu_custom_call.1} parent=11 // pred_check_branch
          %578 = sbr.rel (%p576) target = $region80
        $region79: #{tpu_custom_call.1} parent=11 // pred_region
          _
        $region80: #{tpu_custom_call.1} parent=11 // pred_fallthru
          _
      $region12: #{tpu_custom_call.1} parent=5 // pred_fallthru
        _
      %p579 = scmp.lt.s32.totalorder %s34, 2
      // Predicated region
      $region81: #{tpu_custom_call.1} parent=5 // pred_check
        %p580 = pneg %p579
      $region82: #{tpu_custom_call.1} parent=5 // pred_check_branch
        %582 = sbr.rel (%p580) target = $region84
      $region83: #{tpu_custom_call.1} parent=5 // pred_region
        // Predicated region
        $region85: #{tpu_custom_call.1} parent=83 // pred_check
          %p583 = pneg %p54
        $region86: #{tpu_custom_call.1} parent=83 // pred_check_branch
          %585 = sbr.rel (%p583) target = $region88
        $region87: #{tpu_custom_call.1} parent=83 // pred_region
          %s586 = sand.u32 %s44, 1
          %s587 = scalar_lea.sflag [#allocation3], %s586
          %s588 = sand.u32 %s44, 1
          %s589 = smul.addr %s588, 256
          %s590 = scalar_lea.vmem [#allocation2], %s589
          %s591 = smul.u32 4, %s34
          %s593 = ssub.s32 4096, 4096
          %594 = vsyncadd %s587, %s593
          %s595 = smul.addr %s591, 8
          %s596 = smul.addr %s595, 128
          %s597 = scalar_lea.hbm %s0, %s596
          %s598 = sshll.u32 %s590, 4
          %s599 = int_to_ptr.vmem [resolvable:$true] %s598
          %604 = dma.hbm_to_vmem [thread:$0]  %s597, 4096, %s599, %s587, 128, 128, 8
        $region88: #{tpu_custom_call.1} parent=83 // pred_fallthru
          _
      $region84: #{tpu_custom_call.1} parent=5 // pred_fallthru
        _
      %p605 = scmp.le.s32.totalorder 1, %s34
      %p606 = scmp.lt.s32.totalorder %s34, 3
      %p607 = pnand %p605, %p606
      %p608 = pneg %p607
      // Predicated region
      $region89: #{tpu_custom_call.1} parent=5 // pred_check
        _
      $region90: #{tpu_custom_call.1} parent=5 // pred_check_branch
        %610 = sbr.rel (%p607) target = $region92
      $region91: #{tpu_custom_call.1} parent=5 // pred_region
        %s611 = ssub.s32 %s34, 1
        %s612 = sand.u32 %s47, 1
        %s613 = scalar_lea.sflag [#allocation3], %s612
        %s614 = sand.u32 %s47, 1
        %s615 = smul.addr %s614, 256
        %s616 = scalar_lea.vmem [#allocation2], %s615
        // Predicated region
        $region93: #{tpu_custom_call.1} parent=91 // pred_check
          %p617 = pneg %p60
        $region94: #{tpu_custom_call.1} parent=91 // pred_check_branch
          %619 = sbr.rel (%p617) target = $region96
        $region95: #{tpu_custom_call.1} parent=91 // pred_region
          %620 = dma.done %s613, 4096
        $region96: #{tpu_custom_call.1} parent=91 // pred_fallthru
          _
        // Predicated region
        $region97: #{tpu_custom_call.1} parent=91 // pred_check
          %p621 = pneg %p81
        $region98: #{tpu_custom_call.1} parent=91 // pred_check_branch
          %623 = sbr.rel (%p621) target = $region100
        $region99: #{tpu_custom_call.1} parent=91 // pred_region
          %624 = dma.done [#allocation6], 1024
        $region100: #{tpu_custom_call.1} parent=91 // pred_fallthru
          _
        // Predicated region
        $region101: #{tpu_custom_call.1} parent=91 // pred_check
          %p625 = pneg %p102
        $region102: #{tpu_custom_call.1} parent=91 // pred_check_branch
          %627 = sbr.rel (%p625) target = $region104
        $region103: #{tpu_custom_call.1} parent=91 // pred_region
          %628 = dma.done [#allocation6], 1024
        $region104: #{tpu_custom_call.1} parent=91 // pred_fallthru
          _
        // Predicated region
        $region105: #{tpu_custom_call.1} parent=91 // pred_check
          %p629 = pneg %p144
        $region106: #{tpu_custom_call.1} parent=91 // pred_check_branch
          %631 = sbr.rel (%p629) target = $region108
        $region107: #{tpu_custom_call.1} parent=91 // pred_region
          %632 = dma.done [#allocation9], 1024
        $region108: #{tpu_custom_call.1} parent=91 // pred_fallthru
          _
        // Predicated region
        $region109: #{tpu_custom_call.1} parent=91 // pred_check
          %p633 = pneg %p186
        $region110: #{tpu_custom_call.1} parent=91 // pred_check_branch
          %635 = sbr.rel (%p633) target = $region112
        $region111: #{tpu_custom_call.1} parent=91 // pred_region
          %636 = dma.done [#allocation9], 1024
        $region112: #{tpu_custom_call.1} parent=91 // pred_fallthru
          _
        // Predicated region
        $region113: #{tpu_custom_call.1} parent=91 // pred_check
          %p637 = pneg %p228
        $region114: #{tpu_custom_call.1} parent=91 // pred_check_branch
          %639 = sbr.rel (%p637) target = $region116
        $region115: #{tpu_custom_call.1} parent=91 // pred_region
          %640 = dma.done [#allocation12], 1024
        $region116: #{tpu_custom_call.1} parent=91 // pred_fallthru
          _
        // Predicated region
        $region117: #{tpu_custom_call.1} parent=91 // pred_check
          %p641 = pneg %p312
        $region118: #{tpu_custom_call.1} parent=91 // pred_check_branch
          %643 = sbr.rel (%p641) target = $region120
        $region119: #{tpu_custom_call.1} parent=91 // pred_region
          %644 = dma.done [#allocation12], 2048
        $region120: #{tpu_custom_call.1} parent=91 // pred_fallthru
          _
        // Predicated region
        $region121: #{tpu_custom_call.1} parent=91 // pred_check
          %p645 = pneg %p354
        $region122: #{tpu_custom_call.1} parent=91 // pred_check_branch
          %647 = sbr.rel (%p645) target = $region124
        $region123: #{tpu_custom_call.1} parent=91 // pred_region
          %648 = dma.done [#allocation15], 2048
        $region124: #{tpu_custom_call.1} parent=91 // pred_fallthru
          _
        %s649 = sand.u32 %s47, 1
        %s650 = scalar_lea.sflag [#allocation3], %s649
        %s651 = sand.u32 %s47, 1
        %s652 = smul.addr %s651, 256
        %s653 = scalar_lea.vmem [#allocation2], %s652
        %p654 = pneg %p60
        %p655 = pneg %p57
        %p656 = pneg %p81
        %p657 = pneg %p78
        %p658 = pneg %p102
        %p659 = pneg %p99
        %p660 = pneg %p123
        %p661 = pneg %p120
        %p662 = pneg %p144
        %p663 = pneg %p141
        %p664 = pneg %p165
        %p665 = pneg %p162
        %p666 = pneg %p186
        %p667 = pneg %p183
        %p668 = pneg %p207
        %p669 = pneg %p204
        %p670 = pneg %p228
        %p671 = pneg %p225
        %p672 = pneg %p249
        %p673 = pneg %p246
        %p674 = pneg %p270
        %p675 = pneg %p267
        %p676 = pneg %p291
        %p677 = pneg %p288
        %p678 = pneg %p312
        %p679 = pneg %p309
        %p680 = pneg %p333
        %p681 = pneg %p330
        %p682 = pneg %p354
        %p683 = pneg %p351
        %p684 = pneg %p375
        %p685 = pneg %p372
        %p686 = pneg %p396
        %p687 = pneg %p393
        %p688 = pneg %p417
        %p689 = pneg %p414
        %p690 = pneg %p443
        %p691 = pneg %p440
        %s692 = sand.u32 %s430, 1
        %s693 = scalar_lea.sflag [#allocation4], %s692
        %s694 = sand.u32 %s430, 1
        %s695 = smul.addr %s694, 256
        %s696 = scalar_lea.vmem [#allocation16], %s695
        %s697 = smul.u32 4, %s39
        %s698 = smul.u32 4, %s39
        %v700 = vld [vmem:[%s616] sm:$0xff]
        %v701 = vld [vmem:[%s616 + $0x8] sm:$0xff]
        %v702 = vld [vmem:[%s616 + $0x10] sm:$0xff]
        %v703 = vld [vmem:[%s616 + $0x18] sm:$0xff]
        %v704 = vld [vmem:[%s616 + $0x20] sm:$0xff]
        %v705 = vld [vmem:[%s616 + $0x28] sm:$0xff]
        %v706 = vld [vmem:[%s616 + $0x30] sm:$0xff]
        %v707 = vld [vmem:[%s616 + $0x38] sm:$0xff]
        %v708 = vld [vmem:[%s616 + $0x40] sm:$0xff]
        %v709 = vld [vmem:[%s616 + $0x48] sm:$0xff]
        %v710 = vld [vmem:[%s616 + $0x50] sm:$0xff]
        %v711 = vld [vmem:[%s616 + $0x58] sm:$0xff]
        %v712 = vld [vmem:[%s616 + $0x60] sm:$0xff]
        %v713 = vld [vmem:[%s616 + $0x68] sm:$0xff]
        %v714 = vld [vmem:[%s616 + $0x70] sm:$0xff]
        %v715 = vld [vmem:[%s616 + $0x78] sm:$0xff]
        %v716 = vld [vmem:[%s616 + $0x80] sm:$0xff]
        %v717 = vld [vmem:[%s616 + $0x88] sm:$0xff]
        %v718 = vld [vmem:[%s616 + $0x90] sm:$0xff]
        %v719 = vld [vmem:[%s616 + $0x98] sm:$0xff]
        %v720 = vld [vmem:[%s616 + $0xa0] sm:$0xff]
        %v721 = vld [vmem:[%s616 + $0xa8] sm:$0xff]
        %v722 = vld [vmem:[%s616 + $0xb0] sm:$0xff]
        %v723 = vld [vmem:[%s616 + $0xb8] sm:$0xff]
        %v724 = vld [vmem:[%s616 + $0xc0] sm:$0xff]
        %v725 = vld [vmem:[%s616 + $0xc8] sm:$0xff]
        %v726 = vld [vmem:[%s616 + $0xd0] sm:$0xff]
        %v727 = vld [vmem:[%s616 + $0xd8] sm:$0xff]
        %v728 = vld [vmem:[%s616 + $0xe0] sm:$0xff]
        %v729 = vld [vmem:[%s616 + $0xe8] sm:$0xff]
        %v730 = vld [vmem:[%s616 + $0xf0] sm:$0xff]
        %v731 = vld [vmem:[%s616 + $0xf8] sm:$0xff]
        %v732 = vld [vmem:[#allocation5] sm:$0xff]
        %v733 = vld [vmem:[#allocation5 + $0x8] sm:$0xff]
        %v734 = vld [vmem:[#allocation5 + $0x10] sm:$0xff]
        %v735 = vld [vmem:[#allocation5 + $0x18] sm:$0xff]
        %v736 = vld [vmem:[#allocation5 + $0x20] sm:$0xff]
        %v737 = vld [vmem:[#allocation5 + $0x28] sm:$0xff]
        %v738 = vld [vmem:[#allocation5 + $0x30] sm:$0xff]
        %v739 = vld [vmem:[#allocation5 + $0x38] sm:$0xff]
        %v740 = vadd.f32 %v700, %v732
        %v741 = vadd.f32 %v701, %v733
        %v742 = vadd.f32 %v702, %v734
        %v743 = vadd.f32 %v703, %v735
        %v744 = vadd.f32 %v704, %v736
        %v745 = vadd.f32 %v705, %v737
        %v746 = vadd.f32 %v706, %v738
        %v747 = vadd.f32 %v707, %v739
        %v748 = vadd.f32 %v708, %v732
        %v749 = vadd.f32 %v709, %v733
        %v750 = vadd.f32 %v710, %v734
        %v751 = vadd.f32 %v711, %v735
        %v752 = vadd.f32 %v712, %v736
        %v753 = vadd.f32 %v713, %v737
        %v754 = vadd.f32 %v714, %v738
        %v755 = vadd.f32 %v715, %v739
        %v756 = vadd.f32 %v716, %v732
        %v757 = vadd.f32 %v717, %v733
        %v758 = vadd.f32 %v718, %v734
        %v759 = vadd.f32 %v719, %v735
        %v760 = vadd.f32 %v720, %v736
        %v761 = vadd.f32 %v721, %v737
        %v762 = vadd.f32 %v722, %v738
        %v763 = vadd.f32 %v723, %v739
        %v764 = vadd.f32 %v724, %v732
        %v765 = vadd.f32 %v725, %v733
        %v766 = vadd.f32 %v726, %v734
        %v767 = vadd.f32 %v727, %v735
        %v768 = vadd.f32 %v728, %v736
        %v769 = vadd.f32 %v729, %v737
        %v770 = vadd.f32 %v730, %v738
        %v771 = vadd.f32 %v731, %v739
        %v772 = vpack.c.bf16 %v741, %v740
        %v773 = vpack.c.bf16 %v743, %v742
        %v774 = vpack.c.bf16 %v745, %v744
        %v775 = vpack.c.bf16 %v747, %v746
        %v776 = vpack.c.bf16 %v749, %v748
        %v777 = vpack.c.bf16 %v751, %v750
        %v778 = vpack.c.bf16 %v753, %v752
        %v779 = vpack.c.bf16 %v755, %v754
        %v780 = vpack.c.bf16 %v757, %v756
        %v781 = vpack.c.bf16 %v759, %v758
        %v782 = vpack.c.bf16 %v761, %v760
        %v783 = vpack.c.bf16 %v763, %v762
        %v784 = vpack.c.bf16 %v765, %v764
        %v785 = vpack.c.bf16 %v767, %v766
        %v786 = vpack.c.bf16 %v769, %v768
        %v787 = vpack.c.bf16 %v771, %v770
        %v788 = vld [vmem:[#allocation7] sm:$0xf]
        %v789 = vld [vmem:[#allocation7 + $0x4] sm:$0xf]
        %v790 = vld [vmem:[#allocation7 + $0x8] sm:$0xf]
        %v791 = vld [vmem:[#allocation7 + $0xc] sm:$0xf]
        %v792 = vld [vmem:[#allocation7 + $0x10] sm:$0xf]
        %v793 = vld [vmem:[#allocation7 + $0x14] sm:$0xf]
        %v794 = vld [vmem:[#allocation7 + $0x18] sm:$0xf]
        %v795 = vld [vmem:[#allocation7 + $0x1c] sm:$0xf]
        %v796 = vld [vmem:[#allocation7 + $0x20] sm:$0xf]
        %v797 = vld [vmem:[#allocation7 + $0x24] sm:$0xf]
        %v798 = vld [vmem:[#allocation7 + $0x28] sm:$0xf]
        %v799 = vld [vmem:[#allocation7 + $0x2c] sm:$0xf]
        %v800 = vld [vmem:[#allocation7 + $0x30] sm:$0xf]
        %v801 = vld [vmem:[#allocation7 + $0x34] sm:$0xf]
        %v802 = vld [vmem:[#allocation7 + $0x38] sm:$0xf]
        %v803 = vld [vmem:[#allocation7 + $0x3c] sm:$0xf]
        %v804 = vld [vmem:[%s3] sm:$0x1]
        %v806 = vlaneseq
        %v807 = vshrl.u32 %v806, 7
        %v808 = vsub.s32 0, %v807
        %v809 = vrot.slane %v804, %v808
        %v827 = vunpack.c.l.b16 %v788
        %v828 = vunpack.c.l.b16 %v789
        %v829 = vunpack.c.l.b16 %v790
        %v830 = vunpack.c.l.b16 %v791
        %v831 = vunpack.c.l.b16 %v792
        %v832 = vunpack.c.l.b16 %v793
        %v833 = vunpack.c.l.b16 %v794
        %v834 = vunpack.c.l.b16 %v795
        %v835 = vunpack.c.l.b16 %v796
        %v836 = vunpack.c.l.b16 %v797
        %v837 = vunpack.c.l.b16 %v798
        %v838 = vunpack.c.l.b16 %v799
        %v839 = vunpack.c.l.b16 %v800
        %v840 = vunpack.c.l.b16 %v801
        %v841 = vunpack.c.l.b16 %v802
        %v842 = vunpack.c.l.b16 %v803
        %v843 = vpack.c.b16 %v828, %v827
        %v844 = vpack.c.b16 %v830, %v829
        %v845 = vpack.c.b16 %v832, %v831
        %v846 = vpack.c.b16 %v834, %v833
        %v847 = vpack.c.b16 %v836, %v835
        %v848 = vpack.c.b16 %v838, %v837
        %v849 = vpack.c.b16 %v840, %v839
        %v850 = vpack.c.b16 %v842, %v841
        %859 = vmatprep.subr.bf16.mxu0 0
        %860 = vmatpush1.bf16.msra.mxu0 %v843
        %861 = vmatprep.subr.bf16.mxu0 0
        %862 = vmatpush1.bf16.msra.mxu0 %v844
        %863 = vmatprep.subr.bf16.mxu0 0
        %864 = vmatpush1.bf16.msra.mxu0 %v845
        %865 = vmatprep.subr.bf16.mxu0 0
        %866 = vmatpush1.bf16.msra.mxu0 %v846
        %867 = vmatprep.subr.bf16.mxu0 0
        %868 = vmatpush1.bf16.msra.mxu0 %v847
        %869 = vmatprep.subr.bf16.mxu0 0
        %870 = vmatpush1.bf16.msra.mxu0 %v848
        %871 = vmatprep.subr.bf16.mxu0 0
        %872 = vmatpush1.bf16.msra.mxu0 %v849
        %873 = vmatprep.subr.bf16.mxu0 0
        %874 = vmatpush1.bf16.msra.mxu0 %v850
        %875 = vmatprep.subr.bf16.mxu0 0
        %876 = vmatpush1.bf16.msra.mxu0 0
        %877 = vmatprep.subr.bf16.mxu0 0
        %878 = vmatpush1.bf16.msra.mxu0 0
        %879 = vmatprep.subr.bf16.mxu0 0
        %880 = vmatpush1.bf16.msra.mxu0 0
        %881 = vmatprep.subr.bf16.mxu0 0
        %882 = vmatpush1.bf16.msra.mxu0 0
        %883 = vmatprep.subr.bf16.mxu0 0
        %884 = vmatpush1.bf16.msra.mxu0 0
        %885 = vmatprep.subr.bf16.mxu0 0
        %886 = vmatpush1.bf16.msra.mxu0 0
        %887 = vmatprep.subr.bf16.mxu0 0
        %888 = vmatpush1.bf16.msra.mxu0 0
        %889 = vmatprep.subr.bf16.mxu0 0
        %890 = vmatpush1.bf16.msra.mxu0 0
        %891 = vmatprep.mubr.bf16.mxu0 0
        %892 = vmatmul.mubr.bf16.gmra.mrb[0].mxu0 %v772
        %v893 = vpop.f32.mrb[0].mxu0
        %v894 = vadd.f32 %v809, %v893
        %v895 = vpop.f32.mrb[0].mxu0
        %v896 = vpop.f32.mrb[0].mxu0
        %v897 = vadd.f32 %v809, %v896
        %v898 = vpop.f32.mrb[0].mxu0
        %899 = vmatprep.mubr.bf16.mxu0 0
        %900 = vmatmul.mubr.bf16.gmra.mrb[0].mxu0 %v773
        %v901 = vpop.f32.mrb[0].mxu0
        %v902 = vadd.f32 %v809, %v901
        %v903 = vpop.f32.mrb[0].mxu0
        %v904 = vpop.f32.mrb[0].mxu0
        %v905 = vadd.f32 %v809, %v904
        %v906 = vpop.f32.mrb[0].mxu0
        %907 = vmatprep.mubr.bf16.mxu0 0
        %908 = vmatmul.mubr.bf16.gmra.mrb[0].mxu0 %v774
        %v909 = vpop.f32.mrb[0].mxu0
        %v910 = vadd.f32 %v809, %v909
        %v911 = vpop.f32.mrb[0].mxu0
        %v912 = vpop.f32.mrb[0].mxu0
        %v913 = vadd.f32 %v809, %v912
        %v914 = vpop.f32.mrb[0].mxu0
        %915 = vmatprep.mubr.bf16.mxu0 0
        %916 = vmatmul.mubr.bf16.gmra.mrb[0].mxu0 %v775
        %v917 = vpop.f32.mrb[0].mxu0
        %v918 = vadd.f32 %v809, %v917
        %v919 = vpop.f32.mrb[0].mxu0
        %v920 = vpop.f32.mrb[0].mxu0
        %v921 = vadd.f32 %v809, %v920
        %v922 = vpop.f32.mrb[0].mxu0
        %923 = vmatprep.mubr.bf16.mxu0 0
        %924 = vmatmul.mubr.bf16.gmra.mrb[0].mxu0 %v776
        %v925 = vpop.f32.mrb[0].mxu0
        %v926 = vadd.f32 %v809, %v925
        %v927 = vpop.f32.mrb[0].mxu0
        %v928 = vpop.f32.mrb[0].mxu0
        %v929 = vadd.f32 %v809, %v928
        %v930 = vpop.f32.mrb[0].mxu0
        %931 = vmatprep.mubr.bf16.mxu0 0
        %932 = vmatmul.mubr.bf16.gmra.mrb[0].mxu0 %v777
        %v933 = vpop.f32.mrb[0].mxu0
        %v934 = vadd.f32 %v809, %v933
        %v935 = vpop.f32.mrb[0].mxu0
        %v936 = vpop.f32.mrb[0].mxu0
        %v937 = vadd.f32 %v809, %v936
        %v938 = vpop.f32.mrb[0].mxu0
        %939 = vmatprep.mubr.bf16.mxu0 0
        %940 = vmatmul.mubr.bf16.gmra.mrb[0].mxu0 %v778
        %v941 = vpop.f32.mrb[0].mxu0
        %v942 = vadd.f32 %v809, %v941
        %v943 = vpop.f32.mrb[0].mxu0
        %v944 = vpop.f32.mrb[0].mxu0
        %v945 = vadd.f32 %v809, %v944
        %v946 = vpop.f32.mrb[0].mxu0
        %947 = vmatprep.mubr.bf16.mxu0 0
        %948 = vmatmul.mubr.bf16.gmra.mrb[0].mxu0 %v779
        %v949 = vpop.f32.mrb[0].mxu0
        %v950 = vadd.f32 %v809, %v949
        %v951 = vpop.f32.mrb[0].mxu0
        %v952 = vpop.f32.mrb[0].mxu0
        %v953 = vadd.f32 %v809, %v952
        %v954 = vpop.f32.mrb[0].mxu0
        %955 = vmatprep.mubr.bf16.mxu0 0
        %956 = vmatmul.mubr.bf16.gmra.mrb[0].mxu0 %v780
        %v957 = vpop.f32.mrb[0].mxu0
        %v958 = vadd.f32 %v809, %v957
        %v959 = vpop.f32.mrb[0].mxu0
        %v960 = vpop.f32.mrb[0].mxu0
        %v961 = vadd.f32 %v809, %v960
        %v962 = vpop.f32.mrb[0].mxu0
        %963 = vmatprep.mubr.bf16.mxu0 0
        %964 = vmatmul.mubr.bf16.gmra.mrb[0].mxu0 %v781
        %v965 = vpop.f32.mrb[0].mxu0
        %v966 = vadd.f32 %v809, %v965
        %v967 = vpop.f32.mrb[0].mxu0
        %v968 = vpop.f32.mrb[0].mxu0
        %v969 = vadd.f32 %v809, %v968
        %v970 = vpop.f32.mrb[0].mxu0
        %971 = vmatprep.mubr.bf16.mxu0 0
        %972 = vmatmul.mubr.bf16.gmra.mrb[0].mxu0 %v782
        %v973 = vpop.f32.mrb[0].mxu0
        %v974 = vadd.f32 %v809, %v973
        %v975 = vpop.f32.mrb[0].mxu0
        %v976 = vpop.f32.mrb[0].mxu0
        %v977 = vadd.f32 %v809, %v976
        %v978 = vpop.f32.mrb[0].mxu0
        %979 = vmatprep.mubr.bf16.mxu0 0
        %980 = vmatmul.mubr.bf16.gmra.mrb[0].mxu0 %v783
        %v981 = vpop.f32.mrb[0].mxu0
        %v982 = vadd.f32 %v809, %v981
        %v983 = vpop.f32.mrb[0].mxu0
        %v984 = vpop.f32.mrb[0].mxu0
        %v985 = vadd.f32 %v809, %v984
        %v986 = vpop.f32.mrb[0].mxu0
        %987 = vmatprep.mubr.bf16.mxu0 0
        %988 = vmatmul.mubr.bf16.gmra.mrb[0].mxu0 %v784
        %v989 = vpop.f32.mrb[0].mxu0
        %v990 = vadd.f32 %v809, %v989
        %v991 = vpop.f32.mrb[0].mxu0
        %v992 = vpop.f32.mrb[0].mxu0
        %v993 = vadd.f32 %v809, %v992
        %v994 = vpop.f32.mrb[0].mxu0
        %995 = vmatprep.mubr.bf16.mxu0 0
        %996 = vmatmul.mubr.bf16.gmra.mrb[0].mxu0 %v785
        %v997 = vpop.f32.mrb[0].mxu0
        %v998 = vadd.f32 %v809, %v997
        %v999 = vpop.f32.mrb[0].mxu0
        %v1000 = vpop.f32.mrb[0].mxu0
        %v1001 = vadd.f32 %v809, %v1000
        %v1002 = vpop.f32.mrb[0].mxu0
        %1003 = vmatprep.mubr.bf16.mxu0 0
        %1004 = vmatmul.mubr.bf16.gmra.mrb[0].mxu0 %v786
        %v1005 = vpop.f32.mrb[0].mxu0
        %v1006 = vadd.f32 %v809, %v1005
        %v1007 = vpop.f32.mrb[0].mxu0
        %v1008 = vpop.f32.mrb[0].mxu0
        %v1009 = vadd.f32 %v809, %v1008
        %v1010 = vpop.f32.mrb[0].mxu0
        %1011 = vmatprep.mubr.bf16.mxu0 0
        %1012 = vmatmul.mubr.bf16.gmra.mrb[0].mxu0 %v787
        %v1013 = vpop.f32.mrb[0].mxu0
        %v1014 = vadd.f32 %v809, %v1013
        %v1015 = vpop.f32.mrb[0].mxu0
        %v1016 = vpop.f32.mrb[0].mxu0
        %v1017 = vadd.f32 %v809, %v1016
        %v1018 = vpop.f32.mrb[0].mxu0
        %1019 = vdwg.mxu0
        %v1020 = vpack.c.bf16 %v897, %v894
        %v1021 = vpack.c.bf16 %v905, %v902
        %v1022 = vpack.c.bf16 %v913, %v910
        %v1023 = vpack.c.bf16 %v921, %v918
        %v1024 = vpack.c.bf16 %v929, %v926
        %v1025 = vpack.c.bf16 %v937, %v934
        %v1026 = vpack.c.bf16 %v945, %v942
        %v1027 = vpack.c.bf16 %v953, %v950
        %v1028 = vpack.c.bf16 %v961, %v958
        %v1029 = vpack.c.bf16 %v969, %v966
        %v1030 = vpack.c.bf16 %v977, %v974
        %v1031 = vpack.c.bf16 %v985, %v982
        %v1032 = vpack.c.bf16 %v993, %v990
        %v1033 = vpack.c.bf16 %v1001, %v998
        %v1034 = vpack.c.bf16 %v1009, %v1006
        %v1035 = vpack.c.bf16 %v1017, %v1014
        %v1036 = vld [vmem:[#allocation8] sm:$0xf]
        %v1037 = vld [vmem:[#allocation8 + $0x4] sm:$0xf]
        %v1038 = vld [vmem:[#allocation8 + $0x8] sm:$0xf]
        %v1039 = vld [vmem:[#allocation8 + $0xc] sm:$0xf]
        %v1040 = vld [vmem:[#allocation8 + $0x10] sm:$0xf]
        %v1041 = vld [vmem:[#allocation8 + $0x14] sm:$0xf]
        %v1042 = vld [vmem:[#allocation8 + $0x18] sm:$0xf]
        %v1043 = vld [vmem:[#allocation8 + $0x1c] sm:$0xf]
        %v1044 = vld [vmem:[#allocation8 + $0x20] sm:$0xf]
        %v1045 = vld [vmem:[#allocation8 + $0x24] sm:$0xf]
        %v1046 = vld [vmem:[#allocation8 + $0x28] sm:$0xf]
        %v1047 = vld [vmem:[#allocation8 + $0x2c] sm:$0xf]
        %v1048 = vld [vmem:[#allocation8 + $0x30] sm:$0xf]
        %v1049 = vld [vmem:[#allocation8 + $0x34] sm:$0xf]
        %v1050 = vld [vmem:[#allocation8 + $0x38] sm:$0xf]
        %v1051 = vld [vmem:[#allocation8 + $0x3c] sm:$0xf]
        %v1052 = vld [vmem:[%s5] sm:$0x1]
        %v1054 = vlaneseq
        %v1055 = vshrl.u32 %v1054, 7
        %v1056 = vsub.s32 0, %v1055
        %v1057 = vrot.slane %v1052, %v1056
        %v1075 = vunpack.c.l.b16 %v1036
        %v1076 = vunpack.c.l.b16 %v1037
        %v1077 = vunpack.c.l.b16 %v1038
        %v1078 = vunpack.c.l.b16 %v1039
        %v1079 = vunpack.c.l.b16 %v1040
        %v1080 = vunpack.c.l.b16 %v1041
        %v1081 = vunpack.c.l.b16 %v1042
        %v1082 = vunpack.c.l.b16 %v1043
        %v1083 = vunpack.c.l.b16 %v1044
        %v1084 = vunpack.c.l.b16 %v1045
        %v1085 = vunpack.c.l.b16 %v1046
        %v1086 = vunpack.c.l.b16 %v1047
        %v1087 = vunpack.c.l.b16 %v1048
        %v1088 = vunpack.c.l.b16 %v1049
        %v1089 = vunpack.c.l.b16 %v1050
        %v1090 = vunpack.c.l.b16 %v1051
        %v1091 = vpack.c.b16 %v1076, %v1075
        %v1092 = vpack.c.b16 %v1078, %v1077
        %v1093 = vpack.c.b16 %v1080, %v1079
        %v1094 = vpack.c.b16 %v1082, %v1081
        %v1095 = vpack.c.b16 %v1084, %v1083
        %v1096 = vpack.c.b16 %v1086, %v1085
        %v1097 = vpack.c.b16 %v1088, %v1087
        %v1098 = vpack.c.b16 %v1090, %v1089
        %1107 = vmatprep.subr.bf16.mxu0 0
        %1108 = vmatpush1.bf16.msra.mxu0 %v1091
        %1109 = vmatprep.subr.bf16.mxu0 0
        %1110 = vmatpush1.bf16.msra.mxu0 %v1092
        %1111 = vmatprep.subr.bf16.mxu0 0
        %1112 = vmatpush1.bf16.msra.mxu0 %v1093
        %1113 = vmatprep.subr.bf16.mxu0 0
        %1114 = vmatpush1.bf16.msra.mxu0 %v1094
        %1115 = vmatprep.subr.bf16.mxu0 0
        %1116 = vmatpush1.bf16.msra.mxu0 %v1095
        %1117 = vmatprep.subr.bf16.mxu0 0
        %1118 = vmatpush1.bf16.msra.mxu0 %v1096
        %1119 = vmatprep.subr.bf16.mxu0 0
        %1120 = vmatpush1.bf16.msra.mxu0 %v1097
        %1121 = vmatprep.subr.bf16.mxu0 0
        %1122 = vmatpush1.bf16.msra.mxu0 %v1098
        %1123 = vmatprep.subr.bf16.mxu0 0
        %1124 = vmatpush1.bf16.msra.mxu0 0
        %1125 = vmatprep.subr.bf16.mxu0 0
        %1126 = vmatpush1.bf16.msra.mxu0 0
        %1127 = vmatprep.subr.bf16.mxu0 0
        %1128 = vmatpush1.bf16.msra.mxu0 0
        %1129 = vmatprep.subr.bf16.mxu0 0
        %1130 = vmatpush1.bf16.msra.mxu0 0
        %1131 = vmatprep.subr.bf16.mxu0 0
        %1132 = vmatpush1.bf16.msra.mxu0 0
        %1133 = vmatprep.subr.bf16.mxu0 0
        %1134 = vmatpush1.bf16.msra.mxu0 0
        %1135 = vmatprep.subr.bf16.mxu0 0
        %1136 = vmatpush1.bf16.msra.mxu0 0
        %1137 = vmatprep.subr.bf16.mxu0 0
        %1138 = vmatpush1.bf16.msra.mxu0 0
        %1139 = vmatprep.mubr.bf16.mxu0 0
        %1140 = vmatmul.mubr.bf16.gmra.mrb[0].mxu0 %v772
        %v1141 = vpop.f32.mrb[0].mxu0
        %v1142 = vadd.f32 %v1057, %v1141
        %v1143 = vpop.f32.mrb[0].mxu0
        %v1144 = vpop.f32.mrb[0].mxu0
        %v1145 = vadd.f32 %v1057, %v1144
        %v1146 = vpop.f32.mrb[0].mxu0
        %1147 = vmatprep.mubr.bf16.mxu0 0
        %1148 = vmatmul.mubr.bf16.gmra.mrb[0].mxu0 %v773
        %v1149 = vpop.f32.mrb[0].mxu0
        %v1150 = vadd.f32 %v1057, %v1149
        %v1151 = vpop.f32.mrb[0].mxu0
        %v1152 = vpop.f32.mrb[0].mxu0
        %v1153 = vadd.f32 %v1057, %v1152
        %v1154 = vpop.f32.mrb[0].mxu0
        %1155 = vmatprep.mubr.bf16.mxu0 0
        %1156 = vmatmul.mubr.bf16.gmra.mrb[0].mxu0 %v774
        %v1157 = vpop.f32.mrb[0].mxu0
        %v1158 = vadd.f32 %v1057, %v1157
        %v1159 = vpop.f32.mrb[0].mxu0
        %v1160 = vpop.f32.mrb[0].mxu0
        %v1161 = vadd.f32 %v1057, %v1160
        %v1162 = vpop.f32.mrb[0].mxu0
        %1163 = vmatprep.mubr.bf16.mxu0 0
        %1164 = vmatmul.mubr.bf16.gmra.mrb[0].mxu0 %v775
        %v1165 = vpop.f32.mrb[0].mxu0
        %v1166 = vadd.f32 %v1057, %v1165
        %v1167 = vpop.f32.mrb[0].mxu0
        %v1168 = vpop.f32.mrb[0].mxu0
        %v1169 = vadd.f32 %v1057, %v1168
        %v1170 = vpop.f32.mrb[0].mxu0
        %1171 = vmatprep.mubr.bf16.mxu0 0
        %1172 = vmatmul.mubr.bf16.gmra.mrb[0].mxu0 %v776
        %v1173 = vpop.f32.mrb[0].mxu0
        %v1174 = vadd.f32 %v1057, %v1173
        %v1175 = vpop.f32.mrb[0].mxu0
        %v1176 = vpop.f32.mrb[0].mxu0
        %v1177 = vadd.f32 %v1057, %v1176
        %v1178 = vpop.f32.mrb[0].mxu0
        %1179 = vmatprep.mubr.bf16.mxu0 0
        %1180 = vmatmul.mubr.bf16.gmra.mrb[0].mxu0 %v777
        %v1181 = vpop.f32.mrb[0].mxu0
        %v1182 = vadd.f32 %v1057, %v1181
        %v1183 = vpop.f32.mrb[0].mxu0
        %v1184 = vpop.f32.mrb[0].mxu0
        %v1185 = vadd.f32 %v1057, %v1184
        %v1186 = vpop.f32.mrb[0].mxu0
        %1187 = vmatprep.mubr.bf16.mxu0 0
        %1188 = vmatmul.mubr.bf16.gmra.mrb[0].mxu0 %v778
        %v1189 = vpop.f32.mrb[0].mxu0
        %v1190 = vadd.f32 %v1057, %v1189
        %v1191 = vpop.f32.mrb[0].mxu0
        %v1192 = vpop.f32.mrb[0].mxu0
        %v1193 = vadd.f32 %v1057, %v1192
        %v1194 = vpop.f32.mrb[0].mxu0
        %1195 = vmatprep.mubr.bf16.mxu0 0
        %1196 = vmatmul.mubr.bf16.gmra.mrb[0].mxu0 %v779
        %v1197 = vpop.f32.mrb[0].mxu0
        %v1198 = vadd.f32 %v1057, %v1197
        %v1199 = vpop.f32.mrb[0].mxu0
        %v1200 = vpop.f32.mrb[0].mxu0
        %v1201 = vadd.f32 %v1057, %v1200
        %v1202 = vpop.f32.mrb[0].mxu0
        %1203 = vmatprep.mubr.bf16.mxu0 0
        %1204 = vmatmul.mubr.bf16.gmra.mrb[0].mxu0 %v780
        %v1205 = vpop.f32.mrb[0].mxu0
        %v1206 = vadd.f32 %v1057, %v1205
        %v1207 = vpop.f32.mrb[0].mxu0
        %v1208 = vpop.f32.mrb[0].mxu0
        %v1209 = vadd.f32 %v1057, %v1208
        %v1210 = vpop.f32.mrb[0].mxu0
        %1211 = vmatprep.mubr.bf16.mxu0 0
        %1212 = vmatmul.mubr.bf16.gmra.mrb[0].mxu0 %v781
        %v1213 = vpop.f32.mrb[0].mxu0
        %v1214 = vadd.f32 %v1057, %v1213
        %v1215 = vpop.f32.mrb[0].mxu0
        %v1216 = vpop.f32.mrb[0].mxu0
        %v1217 = vadd.f32 %v1057, %v1216
        %v1218 = vpop.f32.mrb[0].mxu0
        %1219 = vmatprep.mubr.bf16.mxu0 0
        %1220 = vmatmul.mubr.bf16.gmra.mrb[0].mxu0 %v782
        %v1221 = vpop.f32.mrb[0].mxu0
        %v1222 = vadd.f32 %v1057, %v1221
        %v1223 = vpop.f32.mrb[0].mxu0
        %v1224 = vpop.f32.mrb[0].mxu0
        %v1225 = vadd.f32 %v1057, %v1224
        %v1226 = vpop.f32.mrb[0].mxu0
        %1227 = vmatprep.mubr.bf16.mxu0 0
        %1228 = vmatmul.mubr.bf16.gmra.mrb[0].mxu0 %v783
        %v1229 = vpop.f32.mrb[0].mxu0
        %v1230 = vadd.f32 %v1057, %v1229
        %v1231 = vpop.f32.mrb[0].mxu0
        %v1232 = vpop.f32.mrb[0].mxu0
        %v1233 = vadd.f32 %v1057, %v1232
        %v1234 = vpop.f32.mrb[0].mxu0
        %1235 = vmatprep.mubr.bf16.mxu0 0
        %1236 = vmatmul.mubr.bf16.gmra.mrb[0].mxu0 %v784
        %v1237 = vpop.f32.mrb[0].mxu0
        %v1238 = vadd.f32 %v1057, %v1237
        %v1239 = vpop.f32.mrb[0].mxu0
        %v1240 = vpop.f32.mrb[0].mxu0
        %v1241 = vadd.f32 %v1057, %v1240
        %v1242 = vpop.f32.mrb[0].mxu0
        %1243 = vmatprep.mubr.bf16.mxu0 0
        %1244 = vmatmul.mubr.bf16.gmra.mrb[0].mxu0 %v785
        %v1245 = vpop.f32.mrb[0].mxu0
        %v1246 = vadd.f32 %v1057, %v1245
        %v1247 = vpop.f32.mrb[0].mxu0
        %v1248 = vpop.f32.mrb[0].mxu0
        %v1249 = vadd.f32 %v1057, %v1248
        %v1250 = vpop.f32.mrb[0].mxu0
        %1251 = vmatprep.mubr.bf16.mxu0 0
        %1252 = vmatmul.mubr.bf16.gmra.mrb[0].mxu0 %v786
        %v1253 = vpop.f32.mrb[0].mxu0
        %v1254 = vadd.f32 %v1057, %v1253
        %v1255 = vpop.f32.mrb[0].mxu0
        %v1256 = vpop.f32.mrb[0].mxu0
        %v1257 = vadd.f32 %v1057, %v1256
        %v1258 = vpop.f32.mrb[0].mxu0
        %1259 = vmatprep.mubr.bf16.mxu0 0
        %1260 = vmatmul.mubr.bf16.gmra.mrb[0].mxu0 %v787
        %v1261 = vpop.f32.mrb[0].mxu0
        %v1262 = vadd.f32 %v1057, %v1261
        %v1263 = vpop.f32.mrb[0].mxu0
        %v1264 = vpop.f32.mrb[0].mxu0
        %v1265 = vadd.f32 %v1057, %v1264
        %v1266 = vpop.f32.mrb[0].mxu0
        %1267 = vdwg.mxu0
        %v1268 = vpack.c.bf16 %v1145, %v1142
        %v1269 = vpack.c.bf16 %v1153, %v1150
        %v1270 = vpack.c.bf16 %v1161, %v1158
        %v1271 = vpack.c.bf16 %v1169, %v1166
        %v1272 = vpack.c.bf16 %v1177, %v1174
        %v1273 = vpack.c.bf16 %v1185, %v1182
        %v1274 = vpack.c.bf16 %v1193, %v1190
        %v1275 = vpack.c.bf16 %v1201, %v1198
        %v1276 = vpack.c.bf16 %v1209, %v1206
        %v1277 = vpack.c.bf16 %v1217, %v1214
        %v1278 = vpack.c.bf16 %v1225, %v1222
        %v1279 = vpack.c.bf16 %v1233, %v1230
        %v1280 = vpack.c.bf16 %v1241, %v1238
        %v1281 = vpack.c.bf16 %v1249, %v1246
        %v1282 = vpack.c.bf16 %v1257, %v1254
        %v1283 = vpack.c.bf16 %v1265, %v1262
        %v1284 = vld [vmem:[#allocation10] sm:$0xf]
        %v1285 = vld [vmem:[#allocation10 + $0x4] sm:$0xf]
        %v1286 = vld [vmem:[#allocation10 + $0x8] sm:$0xf]
        %v1287 = vld [vmem:[#allocation10 + $0xc] sm:$0xf]
        %v1288 = vld [vmem:[#allocation10 + $0x10] sm:$0xf]
        %v1289 = vld [vmem:[#allocation10 + $0x14] sm:$0xf]
        %v1290 = vld [vmem:[#allocation10 + $0x18] sm:$0xf]
        %v1291 = vld [vmem:[#allocation10 + $0x1c] sm:$0xf]
        %v1292 = vld [vmem:[#allocation10 + $0x20] sm:$0xf]
        %v1293 = vld [vmem:[#allocation10 + $0x24] sm:$0xf]
        %v1294 = vld [vmem:[#allocation10 + $0x28] sm:$0xf]
        %v1295 = vld [vmem:[#allocation10 + $0x2c] sm:$0xf]
        %v1296 = vld [vmem:[#allocation10 + $0x30] sm:$0xf]
        %v1297 = vld [vmem:[#allocation10 + $0x34] sm:$0xf]
        %v1298 = vld [vmem:[#allocation10 + $0x38] sm:$0xf]
        %v1299 = vld [vmem:[#allocation10 + $0x3c] sm:$0xf]
        %v1300 = vld [vmem:[%s7] sm:$0x1]
        %v1302 = vlaneseq
        %v1303 = vshrl.u32 %v1302, 7
        %v1304 = vsub.s32 0, %v1303
        %v1305 = vrot.slane %v1300, %v1304
        %v1323 = vunpack.c.l.b16 %v1284
        %v1324 = vunpack.c.l.b16 %v1285
        %v1325 = vunpack.c.l.b16 %v1286
        %v1326 = vunpack.c.l.b16 %v1287
        %v1327 = vunpack.c.l.b16 %v1288
        %v1328 = vunpack.c.l.b16 %v1289
        %v1329 = vunpack.c.l.b16 %v1290
        %v1330 = vunpack.c.l.b16 %v1291
        %v1331 = vunpack.c.l.b16 %v1292
        %v1332 = vunpack.c.l.b16 %v1293
        %v1333 = vunpack.c.l.b16 %v1294
        %v1334 = vunpack.c.l.b16 %v1295
        %v1335 = vunpack.c.l.b16 %v1296
        %v1336 = vunpack.c.l.b16 %v1297
        %v1337 = vunpack.c.l.b16 %v1298
        %v1338 = vunpack.c.l.b16 %v1299
        %v1339 = vpack.c.b16 %v1324, %v1323
        %v1340 = vpack.c.b16 %v1326, %v1325
        %v1341 = vpack.c.b16 %v1328, %v1327
        %v1342 = vpack.c.b16 %v1330, %v1329
        %v1343 = vpack.c.b16 %v1332, %v1331
        %v1344 = vpack.c.b16 %v1334, %v1333
        %v1345 = vpack.c.b16 %v1336, %v1335
        %v1346 = vpack.c.b16 %v1338, %v1337
        %1355 = vmatprep.subr.bf16.mxu0 0
        %1356 = vmatpush1.bf16.msra.mxu0 %v1339
        %1357 = vmatprep.subr.bf16.mxu0 0
        %1358 = vmatpush1.bf16.msra.mxu0 %v1340
        %1359 = vmatprep.subr.bf16.mxu0 0
        %1360 = vmatpush1.bf16.msra.mxu0 %v1341
        %1361 = vmatprep.subr.bf16.mxu0 0
        %1362 = vmatpush1.bf16.msra.mxu0 %v1342
        %1363 = vmatprep.subr.bf16.mxu0 0
        %1364 = vmatpush1.bf16.msra.mxu0 %v1343
        %1365 = vmatprep.subr.bf16.mxu0 0
        %1366 = vmatpush1.bf16.msra.mxu0 %v1344
        %1367 = vmatprep.subr.bf16.mxu0 0
        %1368 = vmatpush1.bf16.msra.mxu0 %v1345
        %1369 = vmatprep.subr.bf16.mxu0 0
        %1370 = vmatpush1.bf16.msra.mxu0 %v1346
        %1371 = vmatprep.subr.bf16.mxu0 0
        %1372 = vmatpush1.bf16.msra.mxu0 0
        %1373 = vmatprep.subr.bf16.mxu0 0
        %1374 = vmatpush1.bf16.msra.mxu0 0
        %1375 = vmatprep.subr.bf16.mxu0 0
        %1376 = vmatpush1.bf16.msra.mxu0 0
        %1377 = vmatprep.subr.bf16.mxu0 0
        %1378 = vmatpush1.bf16.msra.mxu0 0
        %1379 = vmatprep.subr.bf16.mxu0 0
        %1380 = vmatpush1.bf16.msra.mxu0 0
        %1381 = vmatprep.subr.bf16.mxu0 0
        %1382 = vmatpush1.bf16.msra.mxu0 0
        %1383 = vmatprep.subr.bf16.mxu0 0
        %1384 = vmatpush1.bf16.msra.mxu0 0
        %1385 = vmatprep.subr.bf16.mxu0 0
        %1386 = vmatpush1.bf16.msra.mxu0 0
        %1387 = vmatprep.mubr.bf16.mxu0 0
        %1388 = vmatmul.mubr.bf16.gmra.mrb[0].mxu0 %v772
        %v1389 = vpop.f32.mrb[0].mxu0
        %v1390 = vadd.f32 %v1305, %v1389
        %v1391 = vpop.f32.mrb[0].mxu0
        %v1392 = vpop.f32.mrb[0].mxu0
        %v1393 = vadd.f32 %v1305, %v1392
        %v1394 = vpop.f32.mrb[0].mxu0
        %1395 = vmatprep.mubr.bf16.mxu0 0
        %1396 = vmatmul.mubr.bf16.gmra.mrb[0].mxu0 %v773
        %v1397 = vpop.f32.mrb[0].mxu0
        %v1398 = vadd.f32 %v1305, %v1397
        %v1399 = vpop.f32.mrb[0].mxu0
        %v1400 = vpop.f32.mrb[0].mxu0
        %v1401 = vadd.f32 %v1305, %v1400
        %v1402 = vpop.f32.mrb[0].mxu0
        %1403 = vmatprep.mubr.bf16.mxu0 0
        %1404 = vmatmul.mubr.bf16.gmra.mrb[0].mxu0 %v774
        %v1405 = vpop.f32.mrb[0].mxu0
        %v1406 = vadd.f32 %v1305, %v1405
        %v1407 = vpop.f32.mrb[0].mxu0
        %v1408 = vpop.f32.mrb[0].mxu0
        %v1409 = vadd.f32 %v1305, %v1408
        %v1410 = vpop.f32.mrb[0].mxu0
        %1411 = vmatprep.mubr.bf16.mxu0 0
        %1412 = vmatmul.mubr.bf16.gmra.mrb[0].mxu0 %v775
        %v1413 = vpop.f32.mrb[0].mxu0
        %v1414 = vadd.f32 %v1305, %v1413
        %v1415 = vpop.f32.mrb[0].mxu0
        %v1416 = vpop.f32.mrb[0].mxu0
        %v1417 = vadd.f32 %v1305, %v1416
        %v1418 = vpop.f32.mrb[0].mxu0
        %1419 = vmatprep.mubr.bf16.mxu0 0
        %1420 = vmatmul.mubr.bf16.gmra.mrb[0].mxu0 %v776
        %v1421 = vpop.f32.mrb[0].mxu0
        %v1422 = vadd.f32 %v1305, %v1421
        %v1423 = vpop.f32.mrb[0].mxu0
        %v1424 = vpop.f32.mrb[0].mxu0
        %v1425 = vadd.f32 %v1305, %v1424
        %v1426 = vpop.f32.mrb[0].mxu0
        %1427 = vmatprep.mubr.bf16.mxu0 0
        %1428 = vmatmul.mubr.bf16.gmra.mrb[0].mxu0 %v777
        %v1429 = vpop.f32.mrb[0].mxu0
        %v1430 = vadd.f32 %v1305, %v1429
        %v1431 = vpop.f32.mrb[0].mxu0
        %v1432 = vpop.f32.mrb[0].mxu0
        %v1433 = vadd.f32 %v1305, %v1432
        %v1434 = vpop.f32.mrb[0].mxu0
        %1435 = vmatprep.mubr.bf16.mxu0 0
        %1436 = vmatmul.mubr.bf16.gmra.mrb[0].mxu0 %v778
        %v1437 = vpop.f32.mrb[0].mxu0
        %v1438 = vadd.f32 %v1305, %v1437
        %v1439 = vpop.f32.mrb[0].mxu0
        %v1440 = vpop.f32.mrb[0].mxu0
        %v1441 = vadd.f32 %v1305, %v1440
        %v1442 = vpop.f32.mrb[0].mxu0
        %1443 = vmatprep.mubr.bf16.mxu0 0
        %1444 = vmatmul.mubr.bf16.gmra.mrb[0].mxu0 %v779
        %v1445 = vpop.f32.mrb[0].mxu0
        %v1446 = vadd.f32 %v1305, %v1445
        %v1447 = vpop.f32.mrb[0].mxu0
        %v1448 = vpop.f32.mrb[0].mxu0
        %v1449 = vadd.f32 %v1305, %v1448
        %v1450 = vpop.f32.mrb[0].mxu0
        %1451 = vmatprep.mubr.bf16.mxu0 0
        %1452 = vmatmul.mubr.bf16.gmra.mrb[0].mxu0 %v780
        %v1453 = vpop.f32.mrb[0].mxu0
        %v1454 = vadd.f32 %v1305, %v1453
        %v1455 = vpop.f32.mrb[0].mxu0
        %v1456 = vpop.f32.mrb[0].mxu0
        %v1457 = vadd.f32 %v1305, %v1456
        %v1458 = vpop.f32.mrb[0].mxu0
        %1459 = vmatprep.mubr.bf16.mxu0 0
        %1460 = vmatmul.mubr.bf16.gmra.mrb[0].mxu0 %v781
        %v1461 = vpop.f32.mrb[0].mxu0
        %v1462 = vadd.f32 %v1305, %v1461
        %v1463 = vpop.f32.mrb[0].mxu0
        %v1464 = vpop.f32.mrb[0].mxu0
        %v1465 = vadd.f32 %v1305, %v1464
        %v1466 = vpop.f32.mrb[0].mxu0
        %1467 = vmatprep.mubr.bf16.mxu0 0
        %1468 = vmatmul.mubr.bf16.gmra.mrb[0].mxu0 %v782
        %v1469 = vpop.f32.mrb[0].mxu0
        %v1470 = vadd.f32 %v1305, %v1469
        %v1471 = vpop.f32.mrb[0].mxu0
        %v1472 = vpop.f32.mrb[0].mxu0
        %v1473 = vadd.f32 %v1305, %v1472
        %v1474 = vpop.f32.mrb[0].mxu0
        %1475 = vmatprep.mubr.bf16.mxu0 0
        %1476 = vmatmul.mubr.bf16.gmra.mrb[0].mxu0 %v783
        %v1477 = vpop.f32.mrb[0].mxu0
        %v1478 = vadd.f32 %v1305, %v1477
        %v1479 = vpop.f32.mrb[0].mxu0
        %v1480 = vpop.f32.mrb[0].mxu0
        %v1481 = vadd.f32 %v1305, %v1480
        %v1482 = vpop.f32.mrb[0].mxu0
        %1483 = vmatprep.mubr.bf16.mxu0 0
        %1484 = vmatmul.mubr.bf16.gmra.mrb[0].mxu0 %v784
        %v1485 = vpop.f32.mrb[0].mxu0
        %v1486 = vadd.f32 %v1305, %v1485
        %v1487 = vpop.f32.mrb[0].mxu0
        %v1488 = vpop.f32.mrb[0].mxu0
        %v1489 = vadd.f32 %v1305, %v1488
        %v1490 = vpop.f32.mrb[0].mxu0
        %1491 = vmatprep.mubr.bf16.mxu0 0
        %1492 = vmatmul.mubr.bf16.gmra.mrb[0].mxu0 %v785
        %v1493 = vpop.f32.mrb[0].mxu0
        %v1494 = vadd.f32 %v1305, %v1493
        %v1495 = vpop.f32.mrb[0].mxu0
        %v1496 = vpop.f32.mrb[0].mxu0
        %v1497 = vadd.f32 %v1305, %v1496
        %v1498 = vpop.f32.mrb[0].mxu0
        %1499 = vmatprep.mubr.bf16.mxu0 0
        %1500 = vmatmul.mubr.bf16.gmra.mrb[0].mxu0 %v786
        %v1501 = vpop.f32.mrb[0].mxu0
        %v1502 = vadd.f32 %v1305, %v1501
        %v1503 = vpop.f32.mrb[0].mxu0
        %v1504 = vpop.f32.mrb[0].mxu0
        %v1505 = vadd.f32 %v1305, %v1504
        %v1506 = vpop.f32.mrb[0].mxu0
        %1507 = vmatprep.mubr.bf16.mxu0 0
        %1508 = vmatmul.mubr.bf16.gmra.mrb[0].mxu0 %v787
        %v1509 = vpop.f32.mrb[0].mxu0
        %v1510 = vadd.f32 %v1305, %v1509
        %v1511 = vpop.f32.mrb[0].mxu0
        %v1512 = vpop.f32.mrb[0].mxu0
        %v1513 = vadd.f32 %v1305, %v1512
        %v1514 = vpop.f32.mrb[0].mxu0
        %1515 = vdwg.mxu0
        %v1516 = vpack.c.bf16 %v1393, %v1390
        %v1517 = vpack.c.bf16 %v1401, %v1398
        %v1518 = vpack.c.bf16 %v1409, %v1406
        %v1519 = vpack.c.bf16 %v1417, %v1414
        %v1520 = vpack.c.bf16 %v1425, %v1422
        %v1521 = vpack.c.bf16 %v1433, %v1430
        %v1522 = vpack.c.bf16 %v1441, %v1438
        %v1523 = vpack.c.bf16 %v1449, %v1446
        %v1524 = vpack.c.bf16 %v1457, %v1454
        %v1525 = vpack.c.bf16 %v1465, %v1462
        %v1526 = vpack.c.bf16 %v1473, %v1470
        %v1527 = vpack.c.bf16 %v1481, %v1478
        %v1528 = vpack.c.bf16 %v1489, %v1486
        %v1529 = vpack.c.bf16 %v1497, %v1494
        %v1530 = vpack.c.bf16 %v1505, %v1502
        %v1531 = vpack.c.bf16 %v1513, %v1510
        %vm1532 = vcmask 261120
        %v1534 = vsel %vm1532, %v1020, 0
        %v1537 = vsel %vm1532, %v1021, 0
        %v1540 = vsel %vm1532, %v1022, 0
        %v1543 = vsel %vm1532, %v1023, 0
        %v1546 = vsel %vm1532, %v1268, 0
        %v1549 = vsel %vm1532, %v1269, 0
        %v1552 = vsel %vm1532, %v1270, 0
        %v1555 = vsel %vm1532, %v1271, 0
        %1557 = vmatprep.subr.bf16.mxu0 0
        %1558 = vmatpush1.bf16.xpose.msra.mxu0 %v1546
        %1559 = vmatprep.subr.bf16.mxu0 0
        %1560 = vmatpush1.bf16.xpose.msra.mxu0 %v1549
        %1561 = vmatprep.subr.bf16.mxu0 0
        %1562 = vmatpush1.bf16.xpose.msra.mxu0 %v1552
        %1563 = vmatprep.subr.bf16.mxu0 0
        %1564 = vmatpush1.bf16.xpose.msra.mxu0 %v1555
        %1565 = vmatprep.subr.bf16.mxu0 0
        %1566 = vmatpush1.bf16.xpose.msra.mxu0 0
        %1567 = vmatprep.subr.bf16.mxu0 0
        %1568 = vmatpush1.bf16.xpose.msra.mxu0 0
        %1569 = vmatprep.subr.bf16.mxu0 0
        %1570 = vmatpush1.bf16.xpose.msra.mxu0 0
        %1571 = vmatprep.subr.bf16.mxu0 0
        %1572 = vmatpush1.bf16.xpose.msra.mxu0 0
        %1573 = vmatprep.subr.bf16.mxu0 0
        %1574 = vmatpush1.bf16.xpose.msra.mxu0 0
        %1575 = vmatprep.subr.bf16.mxu0 0
        %1576 = vmatpush1.bf16.xpose.msra.mxu0 0
        %1577 = vmatprep.subr.bf16.mxu0 0
        %1578 = vmatpush1.bf16.xpose.msra.mxu0 0
        %1579 = vmatprep.subr.bf16.mxu0 0
        %1580 = vmatpush1.bf16.xpose.msra.mxu0 0
        %1581 = vmatprep.subr.bf16.mxu0 0
        %1582 = vmatpush1.bf16.xpose.msra.mxu0 0
        %1583 = vmatprep.subr.bf16.mxu0 0
        %1584 = vmatpush1.bf16.xpose.msra.mxu0 0
        %1585 = vmatprep.subr.bf16.mxu0 0
        %1586 = vmatpush1.bf16.xpose.msra.mxu0 0
        %1587 = vmatprep.subr.bf16.mxu0 0
        %1588 = vmatpush1.bf16.xpose.msra.mxu0 0
        %1589 = vmatprep.mubr.bf16.mxu0 0
        %1590 = vmatmul.mubr.bf16.gmra.mrb[0].mxu0 %v1534
        %v1591 = vpop.f32.mrb[0].mxu0
        %v1592 = vadd.f32 0.0, %v1591
        %v1593 = vpop.f32.mrb[0].mxu0
        %v1594 = vpop.f32.mrb[0].mxu0
        %v1595 = vadd.f32 0.0, %v1594
        %v1596 = vpop.f32.mrb[0].mxu0
        %1597 = vmatprep.mubr.bf16.mxu0 0
        %1598 = vmatmul.mubr.bf16.gmra.mrb[0].mxu0 %v1537
        %v1599 = vpop.f32.mrb[0].mxu0
        %v1600 = vadd.f32 0.0, %v1599
        %v1601 = vpop.f32.mrb[0].mxu0
        %v1602 = vpop.f32.mrb[0].mxu0
        %v1603 = vadd.f32 0.0, %v1602
        %v1604 = vpop.f32.mrb[0].mxu0
        %1605 = vmatprep.mubr.bf16.mxu0 0
        %1606 = vmatmul.mubr.bf16.gmra.mrb[0].mxu0 %v1540
        %v1607 = vpop.f32.mrb[0].mxu0
        %v1608 = vadd.f32 0.0, %v1607
        %v1609 = vpop.f32.mrb[0].mxu0
        %v1610 = vpop.f32.mrb[0].mxu0
        %v1611 = vadd.f32 0.0, %v1610
        %v1612 = vpop.f32.mrb[0].mxu0
        %1613 = vmatprep.mubr.bf16.mxu0 0
        %1614 = vmatmul.mubr.bf16.gmra.mrb[0].mxu0 %v1543
        %v1615 = vpop.f32.mrb[0].mxu0
        %v1616 = vadd.f32 0.0, %v1615
        %v1617 = vpop.f32.mrb[0].mxu0
        %v1618 = vpop.f32.mrb[0].mxu0
        %v1619 = vadd.f32 0.0, %v1618
        %v1620 = vpop.f32.mrb[0].mxu0
        %1621 = vdwg.mxu0
        %v1623 = vsel %vm1532, %v1024, 0
        %v1626 = vsel %vm1532, %v1025, 0
        %v1629 = vsel %vm1532, %v1026, 0
        %v1632 = vsel %vm1532, %v1027, 0
        %v1635 = vsel %vm1532, %v1272, 0
        %v1638 = vsel %vm1532, %v1273, 0
        %v1641 = vsel %vm1532, %v1274, 0
        %v1644 = vsel %vm1532, %v1275, 0
        %1646 = vmatprep.subr.bf16.mxu0 0
        %1647 = vmatpush1.bf16.xpose.msra.mxu0 %v1635
        %1648 = vmatprep.subr.bf16.mxu0 0
        %1649 = vmatpush1.bf16.xpose.msra.mxu0 %v1638
        %1650 = vmatprep.subr.bf16.mxu0 0
        %1651 = vmatpush1.bf16.xpose.msra.mxu0 %v1641
        %1652 = vmatprep.subr.bf16.mxu0 0
        %1653 = vmatpush1.bf16.xpose.msra.mxu0 %v1644
        %1654 = vmatprep.subr.bf16.mxu0 0
        %1655 = vmatpush1.bf16.xpose.msra.mxu0 0
        %1656 = vmatprep.subr.bf16.mxu0 0
        %1657 = vmatpush1.bf16.xpose.msra.mxu0 0
        %1658 = vmatprep.subr.bf16.mxu0 0
        %1659 = vmatpush1.bf16.xpose.msra.mxu0 0
        %1660 = vmatprep.subr.bf16.mxu0 0
        %1661 = vmatpush1.bf16.xpose.msra.mxu0 0
        %1662 = vmatprep.subr.bf16.mxu0 0
        %1663 = vmatpush1.bf16.xpose.msra.mxu0 0
        %1664 = vmatprep.subr.bf16.mxu0 0
        %1665 = vmatpush1.bf16.xpose.msra.mxu0 0
        %1666 = vmatprep.subr.bf16.mxu0 0
        %1667 = vmatpush1.bf16.xpose.msra.mxu0 0
        %1668 = vmatprep.subr.bf16.mxu0 0
        %1669 = vmatpush1.bf16.xpose.msra.mxu0 0
        %1670 = vmatprep.subr.bf16.mxu0 0
        %1671 = vmatpush1.bf16.xpose.msra.mxu0 0
        %1672 = vmatprep.subr.bf16.mxu0 0
        %1673 = vmatpush1.bf16.xpose.msra.mxu0 0
        %1674 = vmatprep.subr.bf16.mxu0 0
        %1675 = vmatpush1.bf16.xpose.msra.mxu0 0
        %1676 = vmatprep.subr.bf16.mxu0 0
        %1677 = vmatpush1.bf16.xpose.msra.mxu0 0
        %1678 = vmatprep.mubr.bf16.mxu0 0
        %1679 = vmatmul.mubr.bf16.gmra.mrb[0].mxu0 %v1623
        %v1680 = vpop.f32.mrb[0].mxu0
        %v1681 = vadd.f32 0.0, %v1680
        %v1682 = vpop.f32.mrb[0].mxu0
        %v1683 = vpop.f32.mrb[0].mxu0
        %v1684 = vadd.f32 0.0, %v1683
        %v1685 = vpop.f32.mrb[0].mxu0
        %1686 = vmatprep.mubr.bf16.mxu0 0
        %1687 = vmatmul.mubr.bf16.gmra.mrb[0].mxu0 %v1626
        %v1688 = vpop.f32.mrb[0].mxu0
        %v1689 = vadd.f32 0.0, %v1688
        %v1690 = vpop.f32.mrb[0].mxu0
        %v1691 = vpop.f32.mrb[0].mxu0
        %v1692 = vadd.f32 0.0, %v1691
        %v1693 = vpop.f32.mrb[0].mxu0
        %1694 = vmatprep.mubr.bf16.mxu0 0
        %1695 = vmatmul.mubr.bf16.gmra.mrb[0].mxu0 %v1629
        %v1696 = vpop.f32.mrb[0].mxu0
        %v1697 = vadd.f32 0.0, %v1696
        %v1698 = vpop.f32.mrb[0].mxu0
        %v1699 = vpop.f32.mrb[0].mxu0
        %v1700 = vadd.f32 0.0, %v1699
        %v1701 = vpop.f32.mrb[0].mxu0
        %1702 = vmatprep.mubr.bf16.mxu0 0
        %1703 = vmatmul.mubr.bf16.gmra.mrb[0].mxu0 %v1632
        %v1704 = vpop.f32.mrb[0].mxu0
        %v1705 = vadd.f32 0.0, %v1704
        %v1706 = vpop.f32.mrb[0].mxu0
        %v1707 = vpop.f32.mrb[0].mxu0
        %v1708 = vadd.f32 0.0, %v1707
        %v1709 = vpop.f32.mrb[0].mxu0
        %1710 = vdwg.mxu0
        %v1712 = vsel %vm1532, %v1028, 0
        %v1715 = vsel %vm1532, %v1029, 0
        %v1718 = vsel %vm1532, %v1030, 0
        %v1721 = vsel %vm1532, %v1031, 0
        %v1724 = vsel %vm1532, %v1276, 0
        %v1727 = vsel %vm1532, %v1277, 0
        %v1730 = vsel %vm1532, %v1278, 0
        %v1733 = vsel %vm1532, %v1279, 0
        %1735 = vmatprep.subr.bf16.mxu0 0
        %1736 = vmatpush1.bf16.xpose.msra.mxu0 %v1724
        %1737 = vmatprep.subr.bf16.mxu0 0
        %1738 = vmatpush1.bf16.xpose.msra.mxu0 %v1727
        %1739 = vmatprep.subr.bf16.mxu0 0
        %1740 = vmatpush1.bf16.xpose.msra.mxu0 %v1730
        %1741 = vmatprep.subr.bf16.mxu0 0
        %1742 = vmatpush1.bf16.xpose.msra.mxu0 %v1733
        %1743 = vmatprep.subr.bf16.mxu0 0
        %1744 = vmatpush1.bf16.xpose.msra.mxu0 0
        %1745 = vmatprep.subr.bf16.mxu0 0
        %1746 = vmatpush1.bf16.xpose.msra.mxu0 0
        %1747 = vmatprep.subr.bf16.mxu0 0
        %1748 = vmatpush1.bf16.xpose.msra.mxu0 0
        %1749 = vmatprep.subr.bf16.mxu0 0
        %1750 = vmatpush1.bf16.xpose.msra.mxu0 0
        %1751 = vmatprep.subr.bf16.mxu0 0
        %1752 = vmatpush1.bf16.xpose.msra.mxu0 0
        %1753 = vmatprep.subr.bf16.mxu0 0
        %1754 = vmatpush1.bf16.xpose.msra.mxu0 0
        %1755 = vmatprep.subr.bf16.mxu0 0
        %1756 = vmatpush1.bf16.xpose.msra.mxu0 0
        %1757 = vmatprep.subr.bf16.mxu0 0
        %1758 = vmatpush1.bf16.xpose.msra.mxu0 0
        %1759 = vmatprep.subr.bf16.mxu0 0
        %1760 = vmatpush1.bf16.xpose.msra.mxu0 0
        %1761 = vmatprep.subr.bf16.mxu0 0
        %1762 = vmatpush1.bf16.xpose.msra.mxu0 0
        %1763 = vmatprep.subr.bf16.mxu0 0
        %1764 = vmatpush1.bf16.xpose.msra.mxu0 0
        %1765 = vmatprep.subr.bf16.mxu0 0
        %1766 = vmatpush1.bf16.xpose.msra.mxu0 0
        %1767 = vmatprep.mubr.bf16.mxu0 0
        %1768 = vmatmul.mubr.bf16.gmra.mrb[0].mxu0 %v1712
        %v1769 = vpop.f32.mrb[0].mxu0
        %v1770 = vadd.f32 0.0, %v1769
        %v1771 = vpop.f32.mrb[0].mxu0
        %v1772 = vpop.f32.mrb[0].mxu0
        %v1773 = vadd.f32 0.0, %v1772
        %v1774 = vpop.f32.mrb[0].mxu0
        %1775 = vmatprep.mubr.bf16.mxu0 0
        %1776 = vmatmul.mubr.bf16.gmra.mrb[0].mxu0 %v1715
        %v1777 = vpop.f32.mrb[0].mxu0
        %v1778 = vadd.f32 0.0, %v1777
        %v1779 = vpop.f32.mrb[0].mxu0
        %v1780 = vpop.f32.mrb[0].mxu0
        %v1781 = vadd.f32 0.0, %v1780
        %v1782 = vpop.f32.mrb[0].mxu0
        %1783 = vmatprep.mubr.bf16.mxu0 0
        %1784 = vmatmul.mubr.bf16.gmra.mrb[0].mxu0 %v1718
        %v1785 = vpop.f32.mrb[0].mxu0
        %v1786 = vadd.f32 0.0, %v1785
        %v1787 = vpop.f32.mrb[0].mxu0
        %v1788 = vpop.f32.mrb[0].mxu0
        %v1789 = vadd.f32 0.0, %v1788
        %v1790 = vpop.f32.mrb[0].mxu0
        %1791 = vmatprep.mubr.bf16.mxu0 0
        %1792 = vmatmul.mubr.bf16.gmra.mrb[0].mxu0 %v1721
        %v1793 = vpop.f32.mrb[0].mxu0
        %v1794 = vadd.f32 0.0, %v1793
        %v1795 = vpop.f32.mrb[0].mxu0
        %v1796 = vpop.f32.mrb[0].mxu0
        %v1797 = vadd.f32 0.0, %v1796
        %v1798 = vpop.f32.mrb[0].mxu0
        %1799 = vdwg.mxu0
        %v1801 = vsel %vm1532, %v1032, 0
        %v1804 = vsel %vm1532, %v1033, 0
        %v1807 = vsel %vm1532, %v1034, 0
        %v1810 = vsel %vm1532, %v1035, 0
        %v1813 = vsel %vm1532, %v1280, 0
        %v1816 = vsel %vm1532, %v1281, 0
        %v1819 = vsel %vm1532, %v1282, 0
        %v1822 = vsel %vm1532, %v1283, 0
        %1824 = vmatprep.subr.bf16.mxu0 0
        %1825 = vmatpush1.bf16.xpose.msra.mxu0 %v1813
        %1826 = vmatprep.subr.bf16.mxu0 0
        %1827 = vmatpush1.bf16.xpose.msra.mxu0 %v1816
        %1828 = vmatprep.subr.bf16.mxu0 0
        %1829 = vmatpush1.bf16.xpose.msra.mxu0 %v1819
        %1830 = vmatprep.subr.bf16.mxu0 0
        %1831 = vmatpush1.bf16.xpose.msra.mxu0 %v1822
        %1832 = vmatprep.subr.bf16.mxu0 0
        %1833 = vmatpush1.bf16.xpose.msra.mxu0 0
        %1834 = vmatprep.subr.bf16.mxu0 0
        %1835 = vmatpush1.bf16.xpose.msra.mxu0 0
        %1836 = vmatprep.subr.bf16.mxu0 0
        %1837 = vmatpush1.bf16.xpose.msra.mxu0 0
        %1838 = vmatprep.subr.bf16.mxu0 0
        %1839 = vmatpush1.bf16.xpose.msra.mxu0 0
        %1840 = vmatprep.subr.bf16.mxu0 0
        %1841 = vmatpush1.bf16.xpose.msra.mxu0 0
        %1842 = vmatprep.subr.bf16.mxu0 0
        %1843 = vmatpush1.bf16.xpose.msra.mxu0 0
        %1844 = vmatprep.subr.bf16.mxu0 0
        %1845 = vmatpush1.bf16.xpose.msra.mxu0 0
        %1846 = vmatprep.subr.bf16.mxu0 0
        %1847 = vmatpush1.bf16.xpose.msra.mxu0 0
        %1848 = vmatprep.subr.bf16.mxu0 0
        %1849 = vmatpush1.bf16.xpose.msra.mxu0 0
        %1850 = vmatprep.subr.bf16.mxu0 0
        %1851 = vmatpush1.bf16.xpose.msra.mxu0 0
        %1852 = vmatprep.subr.bf16.mxu0 0
        %1853 = vmatpush1.bf16.xpose.msra.mxu0 0
        %1854 = vmatprep.subr.bf16.mxu0 0
        %1855 = vmatpush1.bf16.xpose.msra.mxu0 0
        %1856 = vmatprep.mubr.bf16.mxu0 0
        %1857 = vmatmul.mubr.bf16.gmra.mrb[0].mxu0 %v1801
        %v1858 = vpop.f32.mrb[0].mxu0
        %v1859 = vadd.f32 0.0, %v1858
        %v1860 = vpop.f32.mrb[0].mxu0
        %v1861 = vpop.f32.mrb[0].mxu0
        %v1862 = vadd.f32 0.0, %v1861
        %v1863 = vpop.f32.mrb[0].mxu0
        %1864 = vmatprep.mubr.bf16.mxu0 0
        %1865 = vmatmul.mubr.bf16.gmra.mrb[0].mxu0 %v1804
        %v1866 = vpop.f32.mrb[0].mxu0
        %v1867 = vadd.f32 0.0, %v1866
        %v1868 = vpop.f32.mrb[0].mxu0
        %v1869 = vpop.f32.mrb[0].mxu0
        %v1870 = vadd.f32 0.0, %v1869
        %v1871 = vpop.f32.mrb[0].mxu0
        %1872 = vmatprep.mubr.bf16.mxu0 0
        %1873 = vmatmul.mubr.bf16.gmra.mrb[0].mxu0 %v1807
        %v1874 = vpop.f32.mrb[0].mxu0
        %v1875 = vadd.f32 0.0, %v1874
        %v1876 = vpop.f32.mrb[0].mxu0
        %v1877 = vpop.f32.mrb[0].mxu0
        %v1878 = vadd.f32 0.0, %v1877
        %v1879 = vpop.f32.mrb[0].mxu0
        %1880 = vmatprep.mubr.bf16.mxu0 0
        %1881 = vmatmul.mubr.bf16.gmra.mrb[0].mxu0 %v1810
        %v1882 = vpop.f32.mrb[0].mxu0
        %v1883 = vadd.f32 0.0, %v1882
        %v1884 = vpop.f32.mrb[0].mxu0
        %v1885 = vpop.f32.mrb[0].mxu0
        %v1886 = vadd.f32 0.0, %v1885
        %v1887 = vpop.f32.mrb[0].mxu0
        %1888 = vdwg.mxu0
        %vm1889 = vcmask 523264
        %v1890 = vsel %vm1889, %v1592, -inf
        %1891 = vmax.xlane.f32.xlu0 %v1890
        %v1892 = vpop.xlane.xlu0 %1891
        %v1893 = vsel %vm1889, %v1595, -inf
        %1894 = vmax.xlane.f32.xlu0 %v1893
        %v1895 = vpop.xlane.xlu0 %1894
        %v1896 = vsel %vm1889, %v1600, -inf
        %1897 = vmax.xlane.f32.xlu0 %v1896
        %v1898 = vpop.xlane.xlu0 %1897
        %v1899 = vsel %vm1889, %v1603, -inf
        %1900 = vmax.xlane.f32.xlu0 %v1899
        %v1901 = vpop.xlane.xlu0 %1900
        %v1902 = vsel %vm1889, %v1608, -inf
        %1903 = vmax.xlane.f32.xlu0 %v1902
        %v1904 = vpop.xlane.xlu0 %1903
        %v1905 = vsel %vm1889, %v1611, -inf
        %1906 = vmax.xlane.f32.xlu0 %v1905
        %v1907 = vpop.xlane.xlu0 %1906
        %v1908 = vsel %vm1889, %v1616, -inf
        %1909 = vmax.xlane.f32.xlu0 %v1908
        %v1910 = vpop.xlane.xlu0 %1909
        %v1911 = vsel %vm1889, %v1619, -inf
        %1912 = vmax.xlane.f32.xlu0 %v1911
        %v1913 = vpop.xlane.xlu0 %1912
        %v1914 = vsel %vm1889, %v1681, -inf
        %1915 = vmax.xlane.f32.xlu0 %v1914
        %v1916 = vpop.xlane.xlu0 %1915
        %v1917 = vsel %vm1889, %v1684, -inf
        %1918 = vmax.xlane.f32.xlu0 %v1917
        %v1919 = vpop.xlane.xlu0 %1918
        %v1920 = vsel %vm1889, %v1689, -inf
        %1921 = vmax.xlane.f32.xlu0 %v1920
        %v1922 = vpop.xlane.xlu0 %1921
        %v1923 = vsel %vm1889, %v1692, -inf
        %1924 = vmax.xlane.f32.xlu0 %v1923
        %v1925 = vpop.xlane.xlu0 %1924
        %v1926 = vsel %vm1889, %v1697, -inf
        %1927 = vmax.xlane.f32.xlu0 %v1926
        %v1928 = vpop.xlane.xlu0 %1927
        %v1929 = vsel %vm1889, %v1700, -inf
        %1930 = vmax.xlane.f32.xlu0 %v1929
        %v1931 = vpop.xlane.xlu0 %1930
        %v1932 = vsel %vm1889, %v1705, -inf
        %1933 = vmax.xlane.f32.xlu0 %v1932
        %v1934 = vpop.xlane.xlu0 %1933
        %v1935 = vsel %vm1889, %v1708, -inf
        %1936 = vmax.xlane.f32.xlu0 %v1935
        %v1937 = vpop.xlane.xlu0 %1936
        %v1938 = vsel %vm1889, %v1770, -inf
        %1939 = vmax.xlane.f32.xlu0 %v1938
        %v1940 = vpop.xlane.xlu0 %1939
        %v1941 = vsel %vm1889, %v1773, -inf
        %1942 = vmax.xlane.f32.xlu0 %v1941
        %v1943 = vpop.xlane.xlu0 %1942
        %v1944 = vsel %vm1889, %v1778, -inf
        %1945 = vmax.xlane.f32.xlu0 %v1944
        %v1946 = vpop.xlane.xlu0 %1945
        %v1947 = vsel %vm1889, %v1781, -inf
        %1948 = vmax.xlane.f32.xlu0 %v1947
        %v1949 = vpop.xlane.xlu0 %1948
        %v1950 = vsel %vm1889, %v1786, -inf
        %1951 = vmax.xlane.f32.xlu0 %v1950
        %v1952 = vpop.xlane.xlu0 %1951
        %v1953 = vsel %vm1889, %v1789, -inf
        %1954 = vmax.xlane.f32.xlu0 %v1953
        %v1955 = vpop.xlane.xlu0 %1954
        %v1956 = vsel %vm1889, %v1794, -inf
        %1957 = vmax.xlane.f32.xlu0 %v1956
        %v1958 = vpop.xlane.xlu0 %1957
        %v1959 = vsel %vm1889, %v1797, -inf
        %1960 = vmax.xlane.f32.xlu0 %v1959
        %v1961 = vpop.xlane.xlu0 %1960
        %v1962 = vsel %vm1889, %v1859, -inf
        %1963 = vmax.xlane.f32.xlu0 %v1962
        %v1964 = vpop.xlane.xlu0 %1963
        %v1965 = vsel %vm1889, %v1862, -inf
        %1966 = vmax.xlane.f32.xlu0 %v1965
        %v1967 = vpop.xlane.xlu0 %1966
        %v1968 = vsel %vm1889, %v1867, -inf
        %1969 = vmax.xlane.f32.xlu0 %v1968
        %v1970 = vpop.xlane.xlu0 %1969
        %v1971 = vsel %vm1889, %v1870, -inf
        %1972 = vmax.xlane.f32.xlu0 %v1971
        %v1973 = vpop.xlane.xlu0 %1972
        %v1974 = vsel %vm1889, %v1875, -inf
        %1975 = vmax.xlane.f32.xlu0 %v1974
        %v1976 = vpop.xlane.xlu0 %1975
        %v1977 = vsel %vm1889, %v1878, -inf
        %1978 = vmax.xlane.f32.xlu0 %v1977
        %v1979 = vpop.xlane.xlu0 %1978
        %v1980 = vsel %vm1889, %v1883, -inf
        %1981 = vmax.xlane.f32.xlu0 %v1980
        %v1982 = vpop.xlane.xlu0 %1981
        %v1983 = vsel %vm1889, %v1886, -inf
        %1984 = vmax.xlane.f32.xlu0 %v1983
        %v1985 = vpop.xlane.xlu0 %1984
        %v1986 = vsub.f32 %v1592, %v1892
        %v1987 = vsub.f32 %v1595, %v1895
        %v1988 = vsub.f32 %v1600, %v1898
        %v1989 = vsub.f32 %v1603, %v1901
        %v1990 = vsub.f32 %v1608, %v1904
        %v1991 = vsub.f32 %v1611, %v1907
        %v1992 = vsub.f32 %v1616, %v1910
        %v1993 = vsub.f32 %v1619, %v1913
        %v1994 = vsub.f32 %v1681, %v1916
        %v1995 = vsub.f32 %v1684, %v1919
        %v1996 = vsub.f32 %v1689, %v1922
        %v1997 = vsub.f32 %v1692, %v1925
        %v1998 = vsub.f32 %v1697, %v1928
        %v1999 = vsub.f32 %v1700, %v1931
        %v2000 = vsub.f32 %v1705, %v1934
        %v2001 = vsub.f32 %v1708, %v1937
        %v2002 = vsub.f32 %v1770, %v1940
        %v2003 = vsub.f32 %v1773, %v1943
        %v2004 = vsub.f32 %v1778, %v1946
        %v2005 = vsub.f32 %v1781, %v1949
        %v2006 = vsub.f32 %v1786, %v1952
        %v2007 = vsub.f32 %v1789, %v1955
        %v2008 = vsub.f32 %v1794, %v1958
        %v2009 = vsub.f32 %v1797, %v1961
        %v2010 = vsub.f32 %v1859, %v1964
        %v2011 = vsub.f32 %v1862, %v1967
        %v2012 = vsub.f32 %v1867, %v1970
        %v2013 = vsub.f32 %v1870, %v1973
        %v2014 = vsub.f32 %v1875, %v1976
        %v2015 = vsub.f32 %v1878, %v1979
        %v2016 = vsub.f32 %v1883, %v1982
        %v2017 = vsub.f32 %v1886, %v1985
        %v2018 = vmul.f32 %v1986, 1.442695
        %v2019 = vpow.pop %v2018
        %v2020 = vmul.f32 %v1987, 1.442695
        %v2021 = vpow.pop %v2020
        %v2022 = vmul.f32 %v1988, 1.442695
        %v2023 = vpow.pop %v2022
        %v2024 = vmul.f32 %v1989, 1.442695
        %v2025 = vpow.pop %v2024
        %v2026 = vmul.f32 %v1990, 1.442695
        %v2027 = vpow.pop %v2026
        %v2028 = vmul.f32 %v1991, 1.442695
        %v2029 = vpow.pop %v2028
        %v2030 = vmul.f32 %v1992, 1.442695
        %v2031 = vpow.pop %v2030
        %v2032 = vmul.f32 %v1993, 1.442695
        %v2033 = vpow.pop %v2032
        %v2034 = vmul.f32 %v1994, 1.442695
        %v2035 = vpow.pop %v2034
        %v2036 = vmul.f32 %v1995, 1.442695
        %v2037 = vpow.pop %v2036
        %v2038 = vmul.f32 %v1996, 1.442695
        %v2039 = vpow.pop %v2038
        %v2040 = vmul.f32 %v1997, 1.442695
        %v2041 = vpow.pop %v2040
        %v2042 = vmul.f32 %v1998, 1.442695
        %v2043 = vpow.pop %v2042
        %v2044 = vmul.f32 %v1999, 1.442695
        %v2045 = vpow.pop %v2044
        %v2046 = vmul.f32 %v2000, 1.442695
        %v2047 = vpow.pop %v2046
        %v2048 = vmul.f32 %v2001, 1.442695
        %v2049 = vpow.pop %v2048
        %v2050 = vmul.f32 %v2002, 1.442695
        %v2051 = vpow.pop %v2050
        %v2052 = vmul.f32 %v2003, 1.442695
        %v2053 = vpow.pop %v2052
        %v2054 = vmul.f32 %v2004, 1.442695
        %v2055 = vpow.pop %v2054
        %v2056 = vmul.f32 %v2005, 1.442695
        %v2057 = vpow.pop %v2056
        %v2058 = vmul.f32 %v2006, 1.442695
        %v2059 = vpow.pop %v2058
        %v2060 = vmul.f32 %v2007, 1.442695
        %v2061 = vpow.pop %v2060
        %v2062 = vmul.f32 %v2008, 1.442695
        %v2063 = vpow.pop %v2062
        %v2064 = vmul.f32 %v2009, 1.442695
        %v2065 = vpow.pop %v2064
        %v2066 = vmul.f32 %v2010, 1.442695
        %v2067 = vpow.pop %v2066
        %v2068 = vmul.f32 %v2011, 1.442695
        %v2069 = vpow.pop %v2068
        %v2070 = vmul.f32 %v2012, 1.442695
        %v2071 = vpow.pop %v2070
        %v2072 = vmul.f32 %v2013, 1.442695
        %v2073 = vpow.pop %v2072
        %v2074 = vmul.f32 %v2014, 1.442695
        %v2075 = vpow.pop %v2074
        %v2076 = vmul.f32 %v2015, 1.442695
        %v2077 = vpow.pop %v2076
        %v2078 = vmul.f32 %v2016, 1.442695
        %v2079 = vpow.pop %v2078
        %v2080 = vmul.f32 %v2017, 1.442695
        %v2081 = vpow.pop %v2080
        %v2082 = vsel %vm1889, %v2019, 0.0
        %2083 = vadd.xlane.f32.xlu0 %v2082
        %v2084 = vpop.xlane.xlu0 %2083
        %v2085 = vsel %vm1889, %v2021, 0.0
        %2086 = vadd.xlane.f32.xlu0 %v2085
        %v2087 = vpop.xlane.xlu0 %2086
        %v2088 = vsel %vm1889, %v2023, 0.0
        %2089 = vadd.xlane.f32.xlu0 %v2088
        %v2090 = vpop.xlane.xlu0 %2089
        %v2091 = vsel %vm1889, %v2025, 0.0
        %2092 = vadd.xlane.f32.xlu0 %v2091
        %v2093 = vpop.xlane.xlu0 %2092
        %v2094 = vsel %vm1889, %v2027, 0.0
        %2095 = vadd.xlane.f32.xlu0 %v2094
        %v2096 = vpop.xlane.xlu0 %2095
        %v2097 = vsel %vm1889, %v2029, 0.0
        %2098 = vadd.xlane.f32.xlu0 %v2097
        %v2099 = vpop.xlane.xlu0 %2098
        %v2100 = vsel %vm1889, %v2031, 0.0
        %2101 = vadd.xlane.f32.xlu0 %v2100
        %v2102 = vpop.xlane.xlu0 %2101
        %v2103 = vsel %vm1889, %v2033, 0.0
        %2104 = vadd.xlane.f32.xlu0 %v2103
        %v2105 = vpop.xlane.xlu0 %2104
        %v2106 = vsel %vm1889, %v2035, 0.0
        %2107 = vadd.xlane.f32.xlu0 %v2106
        %v2108 = vpop.xlane.xlu0 %2107
        %v2109 = vsel %vm1889, %v2037, 0.0
        %2110 = vadd.xlane.f32.xlu0 %v2109
        %v2111 = vpop.xlane.xlu0 %2110
        %v2112 = vsel %vm1889, %v2039, 0.0
        %2113 = vadd.xlane.f32.xlu0 %v2112
        %v2114 = vpop.xlane.xlu0 %2113
        %v2115 = vsel %vm1889, %v2041, 0.0
        %2116 = vadd.xlane.f32.xlu0 %v2115
        %v2117 = vpop.xlane.xlu0 %2116
        %v2118 = vsel %vm1889, %v2043, 0.0
        %2119 = vadd.xlane.f32.xlu0 %v2118
        %v2120 = vpop.xlane.xlu0 %2119
        %v2121 = vsel %vm1889, %v2045, 0.0
        %2122 = vadd.xlane.f32.xlu0 %v2121
        %v2123 = vpop.xlane.xlu0 %2122
        %v2124 = vsel %vm1889, %v2047, 0.0
        %2125 = vadd.xlane.f32.xlu0 %v2124
        %v2126 = vpop.xlane.xlu0 %2125
        %v2127 = vsel %vm1889, %v2049, 0.0
        %2128 = vadd.xlane.f32.xlu0 %v2127
        %v2129 = vpop.xlane.xlu0 %2128
        %v2130 = vsel %vm1889, %v2051, 0.0
        %2131 = vadd.xlane.f32.xlu0 %v2130
        %v2132 = vpop.xlane.xlu0 %2131
        %v2133 = vsel %vm1889, %v2053, 0.0
        %2134 = vadd.xlane.f32.xlu0 %v2133
        %v2135 = vpop.xlane.xlu0 %2134
        %v2136 = vsel %vm1889, %v2055, 0.0
        %2137 = vadd.xlane.f32.xlu0 %v2136
        %v2138 = vpop.xlane.xlu0 %2137
        %v2139 = vsel %vm1889, %v2057, 0.0
        %2140 = vadd.xlane.f32.xlu0 %v2139
        %v2141 = vpop.xlane.xlu0 %2140
        %v2142 = vsel %vm1889, %v2059, 0.0
        %2143 = vadd.xlane.f32.xlu0 %v2142
        %v2144 = vpop.xlane.xlu0 %2143
        %v2145 = vsel %vm1889, %v2061, 0.0
        %2146 = vadd.xlane.f32.xlu0 %v2145
        %v2147 = vpop.xlane.xlu0 %2146
        %v2148 = vsel %vm1889, %v2063, 0.0
        %2149 = vadd.xlane.f32.xlu0 %v2148
        %v2150 = vpop.xlane.xlu0 %2149
        %v2151 = vsel %vm1889, %v2065, 0.0
        %2152 = vadd.xlane.f32.xlu0 %v2151
        %v2153 = vpop.xlane.xlu0 %2152
        %v2154 = vsel %vm1889, %v2067, 0.0
        %2155 = vadd.xlane.f32.xlu0 %v2154
        %v2156 = vpop.xlane.xlu0 %2155
        %v2157 = vsel %vm1889, %v2069, 0.0
        %2158 = vadd.xlane.f32.xlu0 %v2157
        %v2159 = vpop.xlane.xlu0 %2158
        %v2160 = vsel %vm1889, %v2071, 0.0
        %2161 = vadd.xlane.f32.xlu0 %v2160
        %v2162 = vpop.xlane.xlu0 %2161
        %v2163 = vsel %vm1889, %v2073, 0.0
        %2164 = vadd.xlane.f32.xlu0 %v2163
        %v2165 = vpop.xlane.xlu0 %2164
        %v2166 = vsel %vm1889, %v2075, 0.0
        %2167 = vadd.xlane.f32.xlu0 %v2166
        %v2168 = vpop.xlane.xlu0 %2167
        %v2169 = vsel %vm1889, %v2077, 0.0
        %2170 = vadd.xlane.f32.xlu0 %v2169
        %v2171 = vpop.xlane.xlu0 %2170
        %v2172 = vsel %vm1889, %v2079, 0.0
        %2173 = vadd.xlane.f32.xlu0 %v2172
        %v2174 = vpop.xlane.xlu0 %2173
        %v2175 = vsel %vm1889, %v2081, 0.0
        %2176 = vadd.xlane.f32.xlu0 %v2175
        %v2177 = vpop.xlane.xlu0 %2176
        %v2178 = vrcp.pop %v2084
        %v2179 = vrcp.pop %v2087
        %v2180 = vrcp.pop %v2090
        %v2181 = vrcp.pop %v2093
        %v2182 = vrcp.pop %v2096
        %v2183 = vrcp.pop %v2099
        %v2184 = vrcp.pop %v2102
        %v2185 = vrcp.pop %v2105
        %v2186 = vrcp.pop %v2108
        %v2187 = vrcp.pop %v2111
        %v2188 = vrcp.pop %v2114
        %v2189 = vrcp.pop %v2117
        %v2190 = vrcp.pop %v2120
        %v2191 = vrcp.pop %v2123
        %v2192 = vrcp.pop %v2126
        %v2193 = vrcp.pop %v2129
        %v2194 = vrcp.pop %v2132
        %v2195 = vrcp.pop %v2135
        %v2196 = vrcp.pop %v2138
        %v2197 = vrcp.pop %v2141
        %v2198 = vrcp.pop %v2144
        %v2199 = vrcp.pop %v2147
        %v2200 = vrcp.pop %v2150
        %v2201 = vrcp.pop %v2153
        %v2202 = vrcp.pop %v2156
        %v2203 = vrcp.pop %v2159
        %v2204 = vrcp.pop %v2162
        %v2205 = vrcp.pop %v2165
        %v2206 = vrcp.pop %v2168
        %v2207 = vrcp.pop %v2171
        %v2208 = vrcp.pop %v2174
        %v2209 = vrcp.pop %v2177
        %v2210 = vmul.f32 %v2019, %v2178
        %v2211 = vmul.f32 %v2021, %v2179
        %v2212 = vmul.f32 %v2023, %v2180
        %v2213 = vmul.f32 %v2025, %v2181
        %v2214 = vmul.f32 %v2027, %v2182
        %v2215 = vmul.f32 %v2029, %v2183
        %v2216 = vmul.f32 %v2031, %v2184
        %v2217 = vmul.f32 %v2033, %v2185
        %v2218 = vmul.f32 %v2035, %v2186
        %v2219 = vmul.f32 %v2037, %v2187
        %v2220 = vmul.f32 %v2039, %v2188
        %v2221 = vmul.f32 %v2041, %v2189
        %v2222 = vmul.f32 %v2043, %v2190
        %v2223 = vmul.f32 %v2045, %v2191
        %v2224 = vmul.f32 %v2047, %v2192
        %v2225 = vmul.f32 %v2049, %v2193
        %v2226 = vmul.f32 %v2051, %v2194
        %v2227 = vmul.f32 %v2053, %v2195
        %v2228 = vmul.f32 %v2055, %v2196
        %v2229 = vmul.f32 %v2057, %v2197
        %v2230 = vmul.f32 %v2059, %v2198
        %v2231 = vmul.f32 %v2061, %v2199
        %v2232 = vmul.f32 %v2063, %v2200
        %v2233 = vmul.f32 %v2065, %v2201
        %v2234 = vmul.f32 %v2067, %v2202
        %v2235 = vmul.f32 %v2069, %v2203
        %v2236 = vmul.f32 %v2071, %v2204
        %v2237 = vmul.f32 %v2073, %v2205
        %v2238 = vmul.f32 %v2075, %v2206
        %v2239 = vmul.f32 %v2077, %v2207
        %v2240 = vmul.f32 %v2079, %v2208
        %v2241 = vmul.f32 %v2081, %v2209
        %v2242 = vpack.c.bf16 %v2211, %v2210
        %v2243 = vpack.c.bf16 %v2213, %v2212
        %v2244 = vpack.c.bf16 %v2215, %v2214
        %v2245 = vpack.c.bf16 %v2217, %v2216
        %v2246 = vpack.c.bf16 %v2219, %v2218
        %v2247 = vpack.c.bf16 %v2221, %v2220
        %v2248 = vpack.c.bf16 %v2223, %v2222
        %v2249 = vpack.c.bf16 %v2225, %v2224
        %v2250 = vpack.c.bf16 %v2227, %v2226
        %v2251 = vpack.c.bf16 %v2229, %v2228
        %v2252 = vpack.c.bf16 %v2231, %v2230
        %v2253 = vpack.c.bf16 %v2233, %v2232
        %v2254 = vpack.c.bf16 %v2235, %v2234
        %v2255 = vpack.c.bf16 %v2237, %v2236
        %v2256 = vpack.c.bf16 %v2239, %v2238
        %v2257 = vpack.c.bf16 %v2241, %v2240
        %v2259 = vsel %vm1889, %v2242, 0
        %v2262 = vsel %vm1889, %v2243, 0
        %v2265 = vsel %vm1889, %v2244, 0
        %v2268 = vsel %vm1889, %v2245, 0
        %2270 = vmatprep.subr.bf16.mxu0 0
        %2271 = vmatpush1.bf16.msra.mxu0 %v1516
        %2272 = vmatprep.subr.bf16.mxu0 0
        %2273 = vmatpush1.bf16.msra.mxu0 %v1517
        %2274 = vmatprep.subr.bf16.mxu0 0
        %2275 = vmatpush1.bf16.msra.mxu0 %v1518
        %2276 = vmatprep.subr.bf16.mxu0 0
        %2277 = vmatpush1.bf16.msra.mxu0 %v1519
        %2278 = vmatprep.subr.bf16.mxu0 0
        %2279 = vmatpush1.bf16.msra.mxu0 0
        %2280 = vmatprep.subr.bf16.mxu0 0
        %2281 = vmatpush1.bf16.msra.mxu0 0
        %2282 = vmatprep.subr.bf16.mxu0 0
        %2283 = vmatpush1.bf16.msra.mxu0 0
        %2284 = vmatprep.subr.bf16.mxu0 0
        %2285 = vmatpush1.bf16.msra.mxu0 0
        %2286 = vmatprep.subr.bf16.mxu0 0
        %2287 = vmatpush1.bf16.msra.mxu0 0
        %2288 = vmatprep.subr.bf16.mxu0 0
        %2289 = vmatpush1.bf16.msra.mxu0 0
        %2290 = vmatprep.subr.bf16.mxu0 0
        %2291 = vmatpush1.bf16.msra.mxu0 0
        %2292 = vmatprep.subr.bf16.mxu0 0
        %2293 = vmatpush1.bf16.msra.mxu0 0
        %2294 = vmatprep.subr.bf16.mxu0 0
        %2295 = vmatpush1.bf16.msra.mxu0 0
        %2296 = vmatprep.subr.bf16.mxu0 0
        %2297 = vmatpush1.bf16.msra.mxu0 0
        %2298 = vmatprep.subr.bf16.mxu0 0
        %2299 = vmatpush1.bf16.msra.mxu0 0
        %2300 = vmatprep.subr.bf16.mxu0 0
        %2301 = vmatpush1.bf16.msra.mxu0 0
        %2302 = vmatprep.mubr.bf16.mxu0 0
        %2303 = vmatmul.mubr.bf16.gmra.mrb[0].mxu0 %v2259
        %v2304 = vpop.f32.mrb[0].mxu0
        %v2305 = vadd.f32 0.0, %v2304
        %v2306 = vpop.f32.mrb[0].mxu0
        %v2307 = vpop.f32.mrb[0].mxu0
        %v2308 = vadd.f32 0.0, %v2307
        %v2309 = vpop.f32.mrb[0].mxu0
        %2310 = vmatprep.mubr.bf16.mxu0 0
        %2311 = vmatmul.mubr.bf16.gmra.mrb[0].mxu0 %v2262
        %v2312 = vpop.f32.mrb[0].mxu0
        %v2313 = vadd.f32 0.0, %v2312
        %v2314 = vpop.f32.mrb[0].mxu0
        %v2315 = vpop.f32.mrb[0].mxu0
        %v2316 = vadd.f32 0.0, %v2315
        %v2317 = vpop.f32.mrb[0].mxu0
        %2318 = vmatprep.mubr.bf16.mxu0 0
        %2319 = vmatmul.mubr.bf16.gmra.mrb[0].mxu0 %v2265
        %v2320 = vpop.f32.mrb[0].mxu0
        %v2321 = vadd.f32 0.0, %v2320
        %v2322 = vpop.f32.mrb[0].mxu0
        %v2323 = vpop.f32.mrb[0].mxu0
        %v2324 = vadd.f32 0.0, %v2323
        %v2325 = vpop.f32.mrb[0].mxu0
        %2326 = vmatprep.mubr.bf16.mxu0 0
        %2327 = vmatmul.mubr.bf16.gmra.mrb[0].mxu0 %v2268
        %v2328 = vpop.f32.mrb[0].mxu0
        %v2329 = vadd.f32 0.0, %v2328
        %v2330 = vpop.f32.mrb[0].mxu0
        %v2331 = vpop.f32.mrb[0].mxu0
        %v2332 = vadd.f32 0.0, %v2331
        %v2333 = vpop.f32.mrb[0].mxu0
        %2334 = vdwg.mxu0
        %v2336 = vsel %vm1889, %v2246, 0
        %v2339 = vsel %vm1889, %v2247, 0
        %v2342 = vsel %vm1889, %v2248, 0
        %v2345 = vsel %vm1889, %v2249, 0
        %2347 = vmatprep.subr.bf16.mxu0 0
        %2348 = vmatpush1.bf16.msra.mxu0 %v1520
        %2349 = vmatprep.subr.bf16.mxu0 0
        %2350 = vmatpush1.bf16.msra.mxu0 %v1521
        %2351 = vmatprep.subr.bf16.mxu0 0
        %2352 = vmatpush1.bf16.msra.mxu0 %v1522
        %2353 = vmatprep.subr.bf16.mxu0 0
        %2354 = vmatpush1.bf16.msra.mxu0 %v1523
        %2355 = vmatprep.subr.bf16.mxu0 0
        %2356 = vmatpush1.bf16.msra.mxu0 0
        %2357 = vmatprep.subr.bf16.mxu0 0
        %2358 = vmatpush1.bf16.msra.mxu0 0
        %2359 = vmatprep.subr.bf16.mxu0 0
        %2360 = vmatpush1.bf16.msra.mxu0 0
        %2361 = vmatprep.subr.bf16.mxu0 0
        %2362 = vmatpush1.bf16.msra.mxu0 0
        %2363 = vmatprep.subr.bf16.mxu0 0
        %2364 = vmatpush1.bf16.msra.mxu0 0
        %2365 = vmatprep.subr.bf16.mxu0 0
        %2366 = vmatpush1.bf16.msra.mxu0 0
        %2367 = vmatprep.subr.bf16.mxu0 0
        %2368 = vmatpush1.bf16.msra.mxu0 0
        %2369 = vmatprep.subr.bf16.mxu0 0
        %2370 = vmatpush1.bf16.msra.mxu0 0
        %2371 = vmatprep.subr.bf16.mxu0 0
        %2372 = vmatpush1.bf16.msra.mxu0 0
        %2373 = vmatprep.subr.bf16.mxu0 0
        %2374 = vmatpush1.bf16.msra.mxu0 0
        %2375 = vmatprep.subr.bf16.mxu0 0
        %2376 = vmatpush1.bf16.msra.mxu0 0
        %2377 = vmatprep.subr.bf16.mxu0 0
        %2378 = vmatpush1.bf16.msra.mxu0 0
        %2379 = vmatprep.mubr.bf16.mxu0 0
        %2380 = vmatmul.mubr.bf16.gmra.mrb[0].mxu0 %v2336
        %v2381 = vpop.f32.mrb[0].mxu0
        %v2382 = vadd.f32 0.0, %v2381
        %v2383 = vpop.f32.mrb[0].mxu0
        %v2384 = vpop.f32.mrb[0].mxu0
        %v2385 = vadd.f32 0.0, %v2384
        %v2386 = vpop.f32.mrb[0].mxu0
        %2387 = vmatprep.mubr.bf16.mxu0 0
        %2388 = vmatmul.mubr.bf16.gmra.mrb[0].mxu0 %v2339
        %v2389 = vpop.f32.mrb[0].mxu0
        %v2390 = vadd.f32 0.0, %v2389
        %v2391 = vpop.f32.mrb[0].mxu0
        %v2392 = vpop.f32.mrb[0].mxu0
        %v2393 = vadd.f32 0.0, %v2392
        %v2394 = vpop.f32.mrb[0].mxu0
        %2395 = vmatprep.mubr.bf16.mxu0 0
        %2396 = vmatmul.mubr.bf16.gmra.mrb[0].mxu0 %v2342
        %v2397 = vpop.f32.mrb[0].mxu0
        %v2398 = vadd.f32 0.0, %v2397
        %v2399 = vpop.f32.mrb[0].mxu0
        %v2400 = vpop.f32.mrb[0].mxu0
        %v2401 = vadd.f32 0.0, %v2400
        %v2402 = vpop.f32.mrb[0].mxu0
        %2403 = vmatprep.mubr.bf16.mxu0 0
        %2404 = vmatmul.mubr.bf16.gmra.mrb[0].mxu0 %v2345
        %v2405 = vpop.f32.mrb[0].mxu0
        %v2406 = vadd.f32 0.0, %v2405
        %v2407 = vpop.f32.mrb[0].mxu0
        %v2408 = vpop.f32.mrb[0].mxu0
        %v2409 = vadd.f32 0.0, %v2408
        %v2410 = vpop.f32.mrb[0].mxu0
        %2411 = vdwg.mxu0
        %v2413 = vsel %vm1889, %v2250, 0
        %v2416 = vsel %vm1889, %v2251, 0
        %v2419 = vsel %vm1889, %v2252, 0
        %v2422 = vsel %vm1889, %v2253, 0
        %2424 = vmatprep.subr.bf16.mxu0 0
        %2425 = vmatpush1.bf16.msra.mxu0 %v1524
        %2426 = vmatprep.subr.bf16.mxu0 0
        %2427 = vmatpush1.bf16.msra.mxu0 %v1525
        %2428 = vmatprep.subr.bf16.mxu0 0
        %2429 = vmatpush1.bf16.msra.mxu0 %v1526
        %2430 = vmatprep.subr.bf16.mxu0 0
        %2431 = vmatpush1.bf16.msra.mxu0 %v1527
        %2432 = vmatprep.subr.bf16.mxu0 0
        %2433 = vmatpush1.bf16.msra.mxu0 0
        %2434 = vmatprep.subr.bf16.mxu0 0
        %2435 = vmatpush1.bf16.msra.mxu0 0
        %2436 = vmatprep.subr.bf16.mxu0 0
        %2437 = vmatpush1.bf16.msra.mxu0 0
        %2438 = vmatprep.subr.bf16.mxu0 0
        %2439 = vmatpush1.bf16.msra.mxu0 0
        %2440 = vmatprep.subr.bf16.mxu0 0
        %2441 = vmatpush1.bf16.msra.mxu0 0
        %2442 = vmatprep.subr.bf16.mxu0 0
        %2443 = vmatpush1.bf16.msra.mxu0 0
        %2444 = vmatprep.subr.bf16.mxu0 0
        %2445 = vmatpush1.bf16.msra.mxu0 0
        %2446 = vmatprep.subr.bf16.mxu0 0
        %2447 = vmatpush1.bf16.msra.mxu0 0
        %2448 = vmatprep.subr.bf16.mxu0 0
        %2449 = vmatpush1.bf16.msra.mxu0 0
        %2450 = vmatprep.subr.bf16.mxu0 0
        %2451 = vmatpush1.bf16.msra.mxu0 0
        %2452 = vmatprep.subr.bf16.mxu0 0
        %2453 = vmatpush1.bf16.msra.mxu0 0
        %2454 = vmatprep.subr.bf16.mxu0 0
        %2455 = vmatpush1.bf16.msra.mxu0 0
        %2456 = vmatprep.mubr.bf16.mxu0 0
        %2457 = vmatmul.mubr.bf16.gmra.mrb[0].mxu0 %v2413
        %v2458 = vpop.f32.mrb[0].mxu0
        %v2459 = vadd.f32 0.0, %v2458
        %v2460 = vpop.f32.mrb[0].mxu0
        %v2461 = vpop.f32.mrb[0].mxu0
        %v2462 = vadd.f32 0.0, %v2461
        %v2463 = vpop.f32.mrb[0].mxu0
        %2464 = vmatprep.mubr.bf16.mxu0 0
        %2465 = vmatmul.mubr.bf16.gmra.mrb[0].mxu0 %v2416
        %v2466 = vpop.f32.mrb[0].mxu0
        %v2467 = vadd.f32 0.0, %v2466
        %v2468 = vpop.f32.mrb[0].mxu0
        %v2469 = vpop.f32.mrb[0].mxu0
        %v2470 = vadd.f32 0.0, %v2469
        %v2471 = vpop.f32.mrb[0].mxu0
        %2472 = vmatprep.mubr.bf16.mxu0 0
        %2473 = vmatmul.mubr.bf16.gmra.mrb[0].mxu0 %v2419
        %v2474 = vpop.f32.mrb[0].mxu0
        %v2475 = vadd.f32 0.0, %v2474
        %v2476 = vpop.f32.mrb[0].mxu0
        %v2477 = vpop.f32.mrb[0].mxu0
        %v2478 = vadd.f32 0.0, %v2477
        %v2479 = vpop.f32.mrb[0].mxu0
        %2480 = vmatprep.mubr.bf16.mxu0 0
        %2481 = vmatmul.mubr.bf16.gmra.mrb[0].mxu0 %v2422
        %v2482 = vpop.f32.mrb[0].mxu0
        %v2483 = vadd.f32 0.0, %v2482
        %v2484 = vpop.f32.mrb[0].mxu0
        %v2485 = vpop.f32.mrb[0].mxu0
        %v2486 = vadd.f32 0.0, %v2485
        %v2487 = vpop.f32.mrb[0].mxu0
        %2488 = vdwg.mxu0
        %v2490 = vsel %vm1889, %v2254, 0
        %v2493 = vsel %vm1889, %v2255, 0
        %v2496 = vsel %vm1889, %v2256, 0
        %v2499 = vsel %vm1889, %v2257, 0
        %2501 = vmatprep.subr.bf16.mxu0 0
        %2502 = vmatpush1.bf16.msra.mxu0 %v1528
        %2503 = vmatprep.subr.bf16.mxu0 0
        %2504 = vmatpush1.bf16.msra.mxu0 %v1529
        %2505 = vmatprep.subr.bf16.mxu0 0
        %2506 = vmatpush1.bf16.msra.mxu0 %v1530
        %2507 = vmatprep.subr.bf16.mxu0 0
        %2508 = vmatpush1.bf16.msra.mxu0 %v1531
        %2509 = vmatprep.subr.bf16.mxu0 0
        %2510 = vmatpush1.bf16.msra.mxu0 0
        %2511 = vmatprep.subr.bf16.mxu0 0
        %2512 = vmatpush1.bf16.msra.mxu0 0
        %2513 = vmatprep.subr.bf16.mxu0 0
        %2514 = vmatpush1.bf16.msra.mxu0 0
        %2515 = vmatprep.subr.bf16.mxu0 0
        %2516 = vmatpush1.bf16.msra.mxu0 0
        %2517 = vmatprep.subr.bf16.mxu0 0
        %2518 = vmatpush1.bf16.msra.mxu0 0
        %2519 = vmatprep.subr.bf16.mxu0 0
        %2520 = vmatpush1.bf16.msra.mxu0 0
        %2521 = vmatprep.subr.bf16.mxu0 0
        %2522 = vmatpush1.bf16.msra.mxu0 0
        %2523 = vmatprep.subr.bf16.mxu0 0
        %2524 = vmatpush1.bf16.msra.mxu0 0
        %2525 = vmatprep.subr.bf16.mxu0 0
        %2526 = vmatpush1.bf16.msra.mxu0 0
        %2527 = vmatprep.subr.bf16.mxu0 0
        %2528 = vmatpush1.bf16.msra.mxu0 0
        %2529 = vmatprep.subr.bf16.mxu0 0
        %2530 = vmatpush1.bf16.msra.mxu0 0
        %2531 = vmatprep.subr.bf16.mxu0 0
        %2532 = vmatpush1.bf16.msra.mxu0 0
        %2533 = vmatprep.mubr.bf16.mxu0 0
        %2534 = vmatmul.mubr.bf16.gmra.mrb[0].mxu0 %v2490
        %v2535 = vpop.f32.mrb[0].mxu0
        %v2536 = vadd.f32 0.0, %v2535
        %v2537 = vpop.f32.mrb[0].mxu0
        %v2538 = vpop.f32.mrb[0].mxu0
        %v2539 = vadd.f32 0.0, %v2538
        %v2540 = vpop.f32.mrb[0].mxu0
        %2541 = vmatprep.mubr.bf16.mxu0 0
        %2542 = vmatmul.mubr.bf16.gmra.mrb[0].mxu0 %v2493
        %v2543 = vpop.f32.mrb[0].mxu0
        %v2544 = vadd.f32 0.0, %v2543
        %v2545 = vpop.f32.mrb[0].mxu0
        %v2546 = vpop.f32.mrb[0].mxu0
        %v2547 = vadd.f32 0.0, %v2546
        %v2548 = vpop.f32.mrb[0].mxu0
        %2549 = vmatprep.mubr.bf16.mxu0 0
        %2550 = vmatmul.mubr.bf16.gmra.mrb[0].mxu0 %v2496
        %v2551 = vpop.f32.mrb[0].mxu0
        %v2552 = vadd.f32 0.0, %v2551
        %v2553 = vpop.f32.mrb[0].mxu0
        %v2554 = vpop.f32.mrb[0].mxu0
        %v2555 = vadd.f32 0.0, %v2554
        %v2556 = vpop.f32.mrb[0].mxu0
        %2557 = vmatprep.mubr.bf16.mxu0 0
        %2558 = vmatmul.mubr.bf16.gmra.mrb[0].mxu0 %v2499
        %v2559 = vpop.f32.mrb[0].mxu0
        %v2560 = vadd.f32 0.0, %v2559
        %v2561 = vpop.f32.mrb[0].mxu0
        %v2562 = vpop.f32.mrb[0].mxu0
        %v2563 = vadd.f32 0.0, %v2562
        %v2564 = vpop.f32.mrb[0].mxu0
        %2565 = vdwg.mxu0
        %v2566 = vpack.c.bf16 %v2308, %v2305
        %v2567 = vpack.c.bf16 %v2316, %v2313
        %v2568 = vpack.c.bf16 %v2324, %v2321
        %v2569 = vpack.c.bf16 %v2332, %v2329
        %v2570 = vpack.c.bf16 %v2385, %v2382
        %v2571 = vpack.c.bf16 %v2393, %v2390
        %v2572 = vpack.c.bf16 %v2401, %v2398
        %v2573 = vpack.c.bf16 %v2409, %v2406
        %v2574 = vpack.c.bf16 %v2462, %v2459
        %v2575 = vpack.c.bf16 %v2470, %v2467
        %v2576 = vpack.c.bf16 %v2478, %v2475
        %v2577 = vpack.c.bf16 %v2486, %v2483
        %v2578 = vpack.c.bf16 %v2539, %v2536
        %v2579 = vpack.c.bf16 %v2547, %v2544
        %v2580 = vpack.c.bf16 %v2555, %v2552
        %v2581 = vpack.c.bf16 %v2563, %v2560
        %v2582 = vld [vmem:[#allocation11] sm:$0xf]
        %v2583 = vld [vmem:[#allocation11 + $0x4] sm:$0xf]
        %v2584 = vld [vmem:[#allocation11 + $0x8] sm:$0xf]
        %v2585 = vld [vmem:[#allocation11 + $0xc] sm:$0xf]
        %2590 = vrot.lane.b32.xlu0 %v1020, 96
        %v2591 = vpop.permute.xlu0 %2590
        %2592 = vrot.lane.b32.xlu0 %v1021, 96
        %v2593 = vpop.permute.xlu0 %2592
        %2594 = vrot.lane.b32.xlu0 %v1022, 96
        %v2595 = vpop.permute.xlu0 %2594
        %2596 = vrot.lane.b32.xlu0 %v1023, 96
        %v2597 = vpop.permute.xlu0 %2596
        %2602 = vrot.lane.b32.xlu0 %v1268, 96
        %v2603 = vpop.permute.xlu0 %2602
        %2604 = vrot.lane.b32.xlu0 %v1269, 96
        %v2605 = vpop.permute.xlu0 %2604
        %2606 = vrot.lane.b32.xlu0 %v1270, 96
        %v2607 = vpop.permute.xlu0 %2606
        %2608 = vrot.lane.b32.xlu0 %v1271, 96
        %v2609 = vpop.permute.xlu0 %2608
        %v2611 = vsel %vm1532, %v2591, 0
        %v2614 = vsel %vm1532, %v2593, 0
        %v2617 = vsel %vm1532, %v2595, 0
        %v2620 = vsel %vm1532, %v2597, 0
        %v2623 = vsel %vm1532, %v2603, 0
        %v2626 = vsel %vm1532, %v2605, 0
        %v2629 = vsel %vm1532, %v2607, 0
        %v2632 = vsel %vm1532, %v2609, 0
        %2634 = vmatprep.subr.bf16.mxu0 0
        %2635 = vmatpush1.bf16.xpose.msra.mxu0 %v2623
        %2636 = vmatprep.subr.bf16.mxu0 0
        %2637 = vmatpush1.bf16.xpose.msra.mxu0 %v2626
        %2638 = vmatprep.subr.bf16.mxu0 0
        %2639 = vmatpush1.bf16.xpose.msra.mxu0 %v2629
        %2640 = vmatprep.subr.bf16.mxu0 0
        %2641 = vmatpush1.bf16.xpose.msra.mxu0 %v2632
        %2642 = vmatprep.subr.bf16.mxu0 0
        %2643 = vmatpush1.bf16.xpose.msra.mxu0 0
        %2644 = vmatprep.subr.bf16.mxu0 0
        %2645 = vmatpush1.bf16.xpose.msra.mxu0 0
        %2646 = vmatprep.subr.bf16.mxu0 0
        %2647 = vmatpush1.bf16.xpose.msra.mxu0 0
        %2648 = vmatprep.subr.bf16.mxu0 0
        %2649 = vmatpush1.bf16.xpose.msra.mxu0 0
        %2650 = vmatprep.subr.bf16.mxu0 0
        %2651 = vmatpush1.bf16.xpose.msra.mxu0 0
        %2652 = vmatprep.subr.bf16.mxu0 0
        %2653 = vmatpush1.bf16.xpose.msra.mxu0 0
        %2654 = vmatprep.subr.bf16.mxu0 0
        %2655 = vmatpush1.bf16.xpose.msra.mxu0 0
        %2656 = vmatprep.subr.bf16.mxu0 0
        %2657 = vmatpush1.bf16.xpose.msra.mxu0 0
        %2658 = vmatprep.subr.bf16.mxu0 0
        %2659 = vmatpush1.bf16.xpose.msra.mxu0 0
        %2660 = vmatprep.subr.bf16.mxu0 0
        %2661 = vmatpush1.bf16.xpose.msra.mxu0 0
        %2662 = vmatprep.subr.bf16.mxu0 0
        %2663 = vmatpush1.bf16.xpose.msra.mxu0 0
        %2664 = vmatprep.subr.bf16.mxu0 0
        %2665 = vmatpush1.bf16.xpose.msra.mxu0 0
        %2666 = vmatprep.mubr.bf16.mxu0 0
        %2667 = vmatmul.mubr.bf16.gmra.mrb[0].mxu0 %v2611
        %v2668 = vpop.f32.mrb[0].mxu0
        %v2669 = vadd.f32 0.0, %v2668
        %v2670 = vpop.f32.mrb[0].mxu0
        %v2671 = vpop.f32.mrb[0].mxu0
        %v2672 = vadd.f32 0.0, %v2671
        %v2673 = vpop.f32.mrb[0].mxu0
        %2674 = vmatprep.mubr.bf16.mxu0 0
        %2675 = vmatmul.mubr.bf16.gmra.mrb[0].mxu0 %v2614
        %v2676 = vpop.f32.mrb[0].mxu0
        %v2677 = vadd.f32 0.0, %v2676
        %v2678 = vpop.f32.mrb[0].mxu0
        %v2679 = vpop.f32.mrb[0].mxu0
        %v2680 = vadd.f32 0.0, %v2679
        %v2681 = vpop.f32.mrb[0].mxu0
        %2682 = vmatprep.mubr.bf16.mxu0 0
        %2683 = vmatmul.mubr.bf16.gmra.mrb[0].mxu0 %v2617
        %v2684 = vpop.f32.mrb[0].mxu0
        %v2685 = vadd.f32 0.0, %v2684
        %v2686 = vpop.f32.mrb[0].mxu0
        %v2687 = vpop.f32.mrb[0].mxu0
        %v2688 = vadd.f32 0.0, %v2687
        %v2689 = vpop.f32.mrb[0].mxu0
        %2690 = vmatprep.mubr.bf16.mxu0 0
        %2691 = vmatmul.mubr.bf16.gmra.mrb[0].mxu0 %v2620
        %v2692 = vpop.f32.mrb[0].mxu0
        %v2693 = vadd.f32 0.0, %v2692
        %v2694 = vpop.f32.mrb[0].mxu0
        %v2695 = vpop.f32.mrb[0].mxu0
        %v2696 = vadd.f32 0.0, %v2695
        %v2697 = vpop.f32.mrb[0].mxu0
        %2698 = vdwg.mxu0
        %2703 = vrot.lane.b32.xlu0 %v1024, 96
        %v2704 = vpop.permute.xlu0 %2703
        %2705 = vrot.lane.b32.xlu0 %v1025, 96
        %v2706 = vpop.permute.xlu0 %2705
        %2707 = vrot.lane.b32.xlu0 %v1026, 96
        %v2708 = vpop.permute.xlu0 %2707
        %2709 = vrot.lane.b32.xlu0 %v1027, 96
        %v2710 = vpop.permute.xlu0 %2709
        %2715 = vrot.lane.b32.xlu0 %v1272, 96
        %v2716 = vpop.permute.xlu0 %2715
        %2717 = vrot.lane.b32.xlu0 %v1273, 96
        %v2718 = vpop.permute.xlu0 %2717
        %2719 = vrot.lane.b32.xlu0 %v1274, 96
        %v2720 = vpop.permute.xlu0 %2719
        %2721 = vrot.lane.b32.xlu0 %v1275, 96
        %v2722 = vpop.permute.xlu0 %2721
        %v2724 = vsel %vm1532, %v2704, 0
        %v2727 = vsel %vm1532, %v2706, 0
        %v2730 = vsel %vm1532, %v2708, 0
        %v2733 = vsel %vm1532, %v2710, 0
        %v2736 = vsel %vm1532, %v2716, 0
        %v2739 = vsel %vm1532, %v2718, 0
        %v2742 = vsel %vm1532, %v2720, 0
        %v2745 = vsel %vm1532, %v2722, 0
        %2747 = vmatprep.subr.bf16.mxu0 0
        %2748 = vmatpush1.bf16.xpose.msra.mxu0 %v2736
        %2749 = vmatprep.subr.bf16.mxu0 0
        %2750 = vmatpush1.bf16.xpose.msra.mxu0 %v2739
        %2751 = vmatprep.subr.bf16.mxu0 0
        %2752 = vmatpush1.bf16.xpose.msra.mxu0 %v2742
        %2753 = vmatprep.subr.bf16.mxu0 0
        %2754 = vmatpush1.bf16.xpose.msra.mxu0 %v2745
        %2755 = vmatprep.subr.bf16.mxu0 0
        %2756 = vmatpush1.bf16.xpose.msra.mxu0 0
        %2757 = vmatprep.subr.bf16.mxu0 0
        %2758 = vmatpush1.bf16.xpose.msra.mxu0 0
        %2759 = vmatprep.subr.bf16.mxu0 0
        %2760 = vmatpush1.bf16.xpose.msra.mxu0 0
        %2761 = vmatprep.subr.bf16.mxu0 0
        %2762 = vmatpush1.bf16.xpose.msra.mxu0 0
        %2763 = vmatprep.subr.bf16.mxu0 0
        %2764 = vmatpush1.bf16.xpose.msra.mxu0 0
        %2765 = vmatprep.subr.bf16.mxu0 0
        %2766 = vmatpush1.bf16.xpose.msra.mxu0 0
        %2767 = vmatprep.subr.bf16.mxu0 0
        %2768 = vmatpush1.bf16.xpose.msra.mxu0 0
        %2769 = vmatprep.subr.bf16.mxu0 0
        %2770 = vmatpush1.bf16.xpose.msra.mxu0 0
        %2771 = vmatprep.subr.bf16.mxu0 0
        %2772 = vmatpush1.bf16.xpose.msra.mxu0 0
        %2773 = vmatprep.subr.bf16.mxu0 0
        %2774 = vmatpush1.bf16.xpose.msra.mxu0 0
        %2775 = vmatprep.subr.bf16.mxu0 0
        %2776 = vmatpush1.bf16.xpose.msra.mxu0 0
        %2777 = vmatprep.subr.bf16.mxu0 0
        %2778 = vmatpush1.bf16.xpose.msra.mxu0 0
        %2779 = vmatprep.mubr.bf16.mxu0 0
        %2780 = vmatmul.mubr.bf16.gmra.mrb[0].mxu0 %v2724
        %v2781 = vpop.f32.mrb[0].mxu0
        %v2782 = vadd.f32 0.0, %v2781
        %v2783 = vpop.f32.mrb[0].mxu0
        %v2784 = vpop.f32.mrb[0].mxu0
        %v2785 = vadd.f32 0.0, %v2784
        %v2786 = vpop.f32.mrb[0].mxu0
        %2787 = vmatprep.mubr.bf16.mxu0 0
        %2788 = vmatmul.mubr.bf16.gmra.mrb[0].mxu0 %v2727
        %v2789 = vpop.f32.mrb[0].mxu0
        %v2790 = vadd.f32 0.0, %v2789
        %v2791 = vpop.f32.mrb[0].mxu0
        %v2792 = vpop.f32.mrb[0].mxu0
        %v2793 = vadd.f32 0.0, %v2792
        %v2794 = vpop.f32.mrb[0].mxu0
        %2795 = vmatprep.mubr.bf16.mxu0 0
        %2796 = vmatmul.mubr.bf16.gmra.mrb[0].mxu0 %v2730
        %v2797 = vpop.f32.mrb[0].mxu0
        %v2798 = vadd.f32 0.0, %v2797
        %v2799 = vpop.f32.mrb[0].mxu0
        %v2800 = vpop.f32.mrb[0].mxu0
        %v2801 = vadd.f32 0.0, %v2800
        %v2802 = vpop.f32.mrb[0].mxu0
        %2803 = vmatprep.mubr.bf16.mxu0 0
        %2804 = vmatmul.mubr.bf16.gmra.mrb[0].mxu0 %v2733
        %v2805 = vpop.f32.mrb[0].mxu0
        %v2806 = vadd.f32 0.0, %v2805
        %v2807 = vpop.f32.mrb[0].mxu0
        %v2808 = vpop.f32.mrb[0].mxu0
        %v2809 = vadd.f32 0.0, %v2808
        %v2810 = vpop.f32.mrb[0].mxu0
        %2811 = vdwg.mxu0
        %2816 = vrot.lane.b32.xlu0 %v1028, 96
        %v2817 = vpop.permute.xlu0 %2816
        %2818 = vrot.lane.b32.xlu0 %v1029, 96
        %v2819 = vpop.permute.xlu0 %2818
        %2820 = vrot.lane.b32.xlu0 %v1030, 96
        %v2821 = vpop.permute.xlu0 %2820
        %2822 = vrot.lane.b32.xlu0 %v1031, 96
        %v2823 = vpop.permute.xlu0 %2822
        %2828 = vrot.lane.b32.xlu0 %v1276, 96
        %v2829 = vpop.permute.xlu0 %2828
        %2830 = vrot.lane.b32.xlu0 %v1277, 96
        %v2831 = vpop.permute.xlu0 %2830
        %2832 = vrot.lane.b32.xlu0 %v1278, 96
        %v2833 = vpop.permute.xlu0 %2832
        %2834 = vrot.lane.b32.xlu0 %v1279, 96
        %v2835 = vpop.permute.xlu0 %2834
        %v2837 = vsel %vm1532, %v2817, 0
        %v2840 = vsel %vm1532, %v2819, 0
        %v2843 = vsel %vm1532, %v2821, 0
        %v2846 = vsel %vm1532, %v2823, 0
        %v2849 = vsel %vm1532, %v2829, 0
        %v2852 = vsel %vm1532, %v2831, 0
        %v2855 = vsel %vm1532, %v2833, 0
        %v2858 = vsel %vm1532, %v2835, 0
        %2860 = vmatprep.subr.bf16.mxu0 0
        %2861 = vmatpush1.bf16.xpose.msra.mxu0 %v2849
        %2862 = vmatprep.subr.bf16.mxu0 0
        %2863 = vmatpush1.bf16.xpose.msra.mxu0 %v2852
        %2864 = vmatprep.subr.bf16.mxu0 0
        %2865 = vmatpush1.bf16.xpose.msra.mxu0 %v2855
        %2866 = vmatprep.subr.bf16.mxu0 0
        %2867 = vmatpush1.bf16.xpose.msra.mxu0 %v2858
        %2868 = vmatprep.subr.bf16.mxu0 0
        %2869 = vmatpush1.bf16.xpose.msra.mxu0 0
        %2870 = vmatprep.subr.bf16.mxu0 0
        %2871 = vmatpush1.bf16.xpose.msra.mxu0 0
        %2872 = vmatprep.subr.bf16.mxu0 0
        %2873 = vmatpush1.bf16.xpose.msra.mxu0 0
        %2874 = vmatprep.subr.bf16.mxu0 0
        %2875 = vmatpush1.bf16.xpose.msra.mxu0 0
        %2876 = vmatprep.subr.bf16.mxu0 0
        %2877 = vmatpush1.bf16.xpose.msra.mxu0 0
        %2878 = vmatprep.subr.bf16.mxu0 0
        %2879 = vmatpush1.bf16.xpose.msra.mxu0 0
        %2880 = vmatprep.subr.bf16.mxu0 0
        %2881 = vmatpush1.bf16.xpose.msra.mxu0 0
        %2882 = vmatprep.subr.bf16.mxu0 0
        %2883 = vmatpush1.bf16.xpose.msra.mxu0 0
        %2884 = vmatprep.subr.bf16.mxu0 0
        %2885 = vmatpush1.bf16.xpose.msra.mxu0 0
        %2886 = vmatprep.subr.bf16.mxu0 0
        %2887 = vmatpush1.bf16.xpose.msra.mxu0 0
        %2888 = vmatprep.subr.bf16.mxu0 0
        %2889 = vmatpush1.bf16.xpose.msra.mxu0 0
        %2890 = vmatprep.subr.bf16.mxu0 0
        %2891 = vmatpush1.bf16.xpose.msra.mxu0 0
        %2892 = vmatprep.mubr.bf16.mxu0 0
        %2893 = vmatmul.mubr.bf16.gmra.mrb[0].mxu0 %v2837
        %v2894 = vpop.f32.mrb[0].mxu0
        %v2895 = vadd.f32 0.0, %v2894
        %v2896 = vpop.f32.mrb[0].mxu0
        %v2897 = vpop.f32.mrb[0].mxu0
        %v2898 = vadd.f32 0.0, %v2897
        %v2899 = vpop.f32.mrb[0].mxu0
        %2900 = vmatprep.mubr.bf16.mxu0 0
        %2901 = vmatmul.mubr.bf16.gmra.mrb[0].mxu0 %v2840
        %v2902 = vpop.f32.mrb[0].mxu0
        %v2903 = vadd.f32 0.0, %v2902
        %v2904 = vpop.f32.mrb[0].mxu0
        %v2905 = vpop.f32.mrb[0].mxu0
        %v2906 = vadd.f32 0.0, %v2905
        %v2907 = vpop.f32.mrb[0].mxu0
        %2908 = vmatprep.mubr.bf16.mxu0 0
        %2909 = vmatmul.mubr.bf16.gmra.mrb[0].mxu0 %v2843
        %v2910 = vpop.f32.mrb[0].mxu0
        %v2911 = vadd.f32 0.0, %v2910
        %v2912 = vpop.f32.mrb[0].mxu0
        %v2913 = vpop.f32.mrb[0].mxu0
        %v2914 = vadd.f32 0.0, %v2913
        %v2915 = vpop.f32.mrb[0].mxu0
        %2916 = vmatprep.mubr.bf16.mxu0 0
        %2917 = vmatmul.mubr.bf16.gmra.mrb[0].mxu0 %v2846
        %v2918 = vpop.f32.mrb[0].mxu0
        %v2919 = vadd.f32 0.0, %v2918
        %v2920 = vpop.f32.mrb[0].mxu0
        %v2921 = vpop.f32.mrb[0].mxu0
        %v2922 = vadd.f32 0.0, %v2921
        %v2923 = vpop.f32.mrb[0].mxu0
        %2924 = vdwg.mxu0
        %2929 = vrot.lane.b32.xlu0 %v1032, 96
        %v2930 = vpop.permute.xlu0 %2929
        %2931 = vrot.lane.b32.xlu0 %v1033, 96
        %v2932 = vpop.permute.xlu0 %2931
        %2933 = vrot.lane.b32.xlu0 %v1034, 96
        %v2934 = vpop.permute.xlu0 %2933
        %2935 = vrot.lane.b32.xlu0 %v1035, 96
        %v2936 = vpop.permute.xlu0 %2935
        %2941 = vrot.lane.b32.xlu0 %v1280, 96
        %v2942 = vpop.permute.xlu0 %2941
        %2943 = vrot.lane.b32.xlu0 %v1281, 96
        %v2944 = vpop.permute.xlu0 %2943
        %2945 = vrot.lane.b32.xlu0 %v1282, 96
        %v2946 = vpop.permute.xlu0 %2945
        %2947 = vrot.lane.b32.xlu0 %v1283, 96
        %v2948 = vpop.permute.xlu0 %2947
        %v2950 = vsel %vm1532, %v2930, 0
        %v2953 = vsel %vm1532, %v2932, 0
        %v2956 = vsel %vm1532, %v2934, 0
        %v2959 = vsel %vm1532, %v2936, 0
        %v2962 = vsel %vm1532, %v2942, 0
        %v2965 = vsel %vm1532, %v2944, 0
        %v2968 = vsel %vm1532, %v2946, 0
        %v2971 = vsel %vm1532, %v2948, 0
        %2973 = vmatprep.subr.bf16.mxu0 0
        %2974 = vmatpush1.bf16.xpose.msra.mxu0 %v2962
        %2975 = vmatprep.subr.bf16.mxu0 0
        %2976 = vmatpush1.bf16.xpose.msra.mxu0 %v2965
        %2977 = vmatprep.subr.bf16.mxu0 0
        %2978 = vmatpush1.bf16.xpose.msra.mxu0 %v2968
        %2979 = vmatprep.subr.bf16.mxu0 0
        %2980 = vmatpush1.bf16.xpose.msra.mxu0 %v2971
        %2981 = vmatprep.subr.bf16.mxu0 0
        %2982 = vmatpush1.bf16.xpose.msra.mxu0 0
        %2983 = vmatprep.subr.bf16.mxu0 0
        %2984 = vmatpush1.bf16.xpose.msra.mxu0 0
        %2985 = vmatprep.subr.bf16.mxu0 0
        %2986 = vmatpush1.bf16.xpose.msra.mxu0 0
        %2987 = vmatprep.subr.bf16.mxu0 0
        %2988 = vmatpush1.bf16.xpose.msra.mxu0 0
        %2989 = vmatprep.subr.bf16.mxu0 0
        %2990 = vmatpush1.bf16.xpose.msra.mxu0 0
        %2991 = vmatprep.subr.bf16.mxu0 0
        %2992 = vmatpush1.bf16.xpose.msra.mxu0 0
        %2993 = vmatprep.subr.bf16.mxu0 0
        %2994 = vmatpush1.bf16.xpose.msra.mxu0 0
        %2995 = vmatprep.subr.bf16.mxu0 0
        %2996 = vmatpush1.bf16.xpose.msra.mxu0 0
        %2997 = vmatprep.subr.bf16.mxu0 0
        %2998 = vmatpush1.bf16.xpose.msra.mxu0 0
        %2999 = vmatprep.subr.bf16.mxu0 0
        %3000 = vmatpush1.bf16.xpose.msra.mxu0 0
        %3001 = vmatprep.subr.bf16.mxu0 0
        %3002 = vmatpush1.bf16.xpose.msra.mxu0 0
        %3003 = vmatprep.subr.bf16.mxu0 0
        %3004 = vmatpush1.bf16.xpose.msra.mxu0 0
        %3005 = vmatprep.mubr.bf16.mxu0 0
        %3006 = vmatmul.mubr.bf16.gmra.mrb[0].mxu0 %v2950
        %v3007 = vpop.f32.mrb[0].mxu0
        %v3008 = vadd.f32 0.0, %v3007
        %v3009 = vpop.f32.mrb[0].mxu0
        %v3010 = vpop.f32.mrb[0].mxu0
        %v3011 = vadd.f32 0.0, %v3010
        %v3012 = vpop.f32.mrb[0].mxu0
        %3013 = vmatprep.mubr.bf16.mxu0 0
        %3014 = vmatmul.mubr.bf16.gmra.mrb[0].mxu0 %v2953
        %v3015 = vpop.f32.mrb[0].mxu0
        %v3016 = vadd.f32 0.0, %v3015
        %v3017 = vpop.f32.mrb[0].mxu0
        %v3018 = vpop.f32.mrb[0].mxu0
        %v3019 = vadd.f32 0.0, %v3018
        %v3020 = vpop.f32.mrb[0].mxu0
        %3021 = vmatprep.mubr.bf16.mxu0 0
        %3022 = vmatmul.mubr.bf16.gmra.mrb[0].mxu0 %v2956
        %v3023 = vpop.f32.mrb[0].mxu0
        %v3024 = vadd.f32 0.0, %v3023
        %v3025 = vpop.f32.mrb[0].mxu0
        %v3026 = vpop.f32.mrb[0].mxu0
        %v3027 = vadd.f32 0.0, %v3026
        %v3028 = vpop.f32.mrb[0].mxu0
        %3029 = vmatprep.mubr.bf16.mxu0 0
        %3030 = vmatmul.mubr.bf16.gmra.mrb[0].mxu0 %v2959
        %v3031 = vpop.f32.mrb[0].mxu0
        %v3032 = vadd.f32 0.0, %v3031
        %v3033 = vpop.f32.mrb[0].mxu0
        %v3034 = vpop.f32.mrb[0].mxu0
        %v3035 = vadd.f32 0.0, %v3034
        %v3036 = vpop.f32.mrb[0].mxu0
        %3037 = vdwg.mxu0
        %v3038 = vsel %vm1889, %v2669, -inf
        %3039 = vmax.xlane.f32.xlu0 %v3038
        %v3040 = vpop.xlane.xlu0 %3039
        %v3041 = vsel %vm1889, %v2672, -inf
        %3042 = vmax.xlane.f32.xlu0 %v3041
        %v3043 = vpop.xlane.xlu0 %3042
        %v3044 = vsel %vm1889, %v2677, -inf
        %3045 = vmax.xlane.f32.xlu0 %v3044
        %v3046 = vpop.xlane.xlu0 %3045
        %v3047 = vsel %vm1889, %v2680, -inf
        %3048 = vmax.xlane.f32.xlu0 %v3047
        %v3049 = vpop.xlane.xlu0 %3048
        %v3050 = vsel %vm1889, %v2685, -inf
        %3051 = vmax.xlane.f32.xlu0 %v3050
        %v3052 = vpop.xlane.xlu0 %3051
        %v3053 = vsel %vm1889, %v2688, -inf
        %3054 = vmax.xlane.f32.xlu0 %v3053
        %v3055 = vpop.xlane.xlu0 %3054
        %v3056 = vsel %vm1889, %v2693, -inf
        %3057 = vmax.xlane.f32.xlu0 %v3056
        %v3058 = vpop.xlane.xlu0 %3057
        %v3059 = vsel %vm1889, %v2696, -inf
        %3060 = vmax.xlane.f32.xlu0 %v3059
        %v3061 = vpop.xlane.xlu0 %3060
        %v3062 = vsel %vm1889, %v2782, -inf
        %3063 = vmax.xlane.f32.xlu0 %v3062
        %v3064 = vpop.xlane.xlu0 %3063
        %v3065 = vsel %vm1889, %v2785, -inf
        %3066 = vmax.xlane.f32.xlu0 %v3065
        %v3067 = vpop.xlane.xlu0 %3066
        %v3068 = vsel %vm1889, %v2790, -inf
        %3069 = vmax.xlane.f32.xlu0 %v3068
        %v3070 = vpop.xlane.xlu0 %3069
        %v3071 = vsel %vm1889, %v2793, -inf
        %3072 = vmax.xlane.f32.xlu0 %v3071
        %v3073 = vpop.xlane.xlu0 %3072
        %v3074 = vsel %vm1889, %v2798, -inf
        %3075 = vmax.xlane.f32.xlu0 %v3074
        %v3076 = vpop.xlane.xlu0 %3075
        %v3077 = vsel %vm1889, %v2801, -inf
        %3078 = vmax.xlane.f32.xlu0 %v3077
        %v3079 = vpop.xlane.xlu0 %3078
        %v3080 = vsel %vm1889, %v2806, -inf
        %3081 = vmax.xlane.f32.xlu0 %v3080
        %v3082 = vpop.xlane.xlu0 %3081
        %v3083 = vsel %vm1889, %v2809, -inf
        %3084 = vmax.xlane.f32.xlu0 %v3083
        %v3085 = vpop.xlane.xlu0 %3084
        %v3086 = vsel %vm1889, %v2895, -inf
        %3087 = vmax.xlane.f32.xlu0 %v3086
        %v3088 = vpop.xlane.xlu0 %3087
        %v3089 = vsel %vm1889, %v2898, -inf
        %3090 = vmax.xlane.f32.xlu0 %v3089
        %v3091 = vpop.xlane.xlu0 %3090
        %v3092 = vsel %vm1889, %v2903, -inf
        %3093 = vmax.xlane.f32.xlu0 %v3092
        %v3094 = vpop.xlane.xlu0 %3093
        %v3095 = vsel %vm1889, %v2906, -inf
        %3096 = vmax.xlane.f32.xlu0 %v3095
        %v3097 = vpop.xlane.xlu0 %3096
        %v3098 = vsel %vm1889, %v2911, -inf
        %3099 = vmax.xlane.f32.xlu0 %v3098
        %v3100 = vpop.xlane.xlu0 %3099
        %v3101 = vsel %vm1889, %v2914, -inf
        %3102 = vmax.xlane.f32.xlu0 %v3101
        %v3103 = vpop.xlane.xlu0 %3102
        %v3104 = vsel %vm1889, %v2919, -inf
        %3105 = vmax.xlane.f32.xlu0 %v3104
        %v3106 = vpop.xlane.xlu0 %3105
        %v3107 = vsel %vm1889, %v2922, -inf
        %3108 = vmax.xlane.f32.xlu0 %v3107
        %v3109 = vpop.xlane.xlu0 %3108
        %v3110 = vsel %vm1889, %v3008, -inf
        %3111 = vmax.xlane.f32.xlu0 %v3110
        %v3112 = vpop.xlane.xlu0 %3111
        %v3113 = vsel %vm1889, %v3011, -inf
        %3114 = vmax.xlane.f32.xlu0 %v3113
        %v3115 = vpop.xlane.xlu0 %3114
        %v3116 = vsel %vm1889, %v3016, -inf
        %3117 = vmax.xlane.f32.xlu0 %v3116
        %v3118 = vpop.xlane.xlu0 %3117
        %v3119 = vsel %vm1889, %v3019, -inf
        %3120 = vmax.xlane.f32.xlu0 %v3119
        %v3121 = vpop.xlane.xlu0 %3120
        %v3122 = vsel %vm1889, %v3024, -inf
        %3123 = vmax.xlane.f32.xlu0 %v3122
        %v3124 = vpop.xlane.xlu0 %3123
        %v3125 = vsel %vm1889, %v3027, -inf
        %3126 = vmax.xlane.f32.xlu0 %v3125
        %v3127 = vpop.xlane.xlu0 %3126
        %v3128 = vsel %vm1889, %v3032, -inf
        %3129 = vmax.xlane.f32.xlu0 %v3128
        %v3130 = vpop.xlane.xlu0 %3129
        %v3131 = vsel %vm1889, %v3035, -inf
        %3132 = vmax.xlane.f32.xlu0 %v3131
        %v3133 = vpop.xlane.xlu0 %3132
        %v3134 = vsub.f32 %v2669, %v3040
        %v3135 = vsub.f32 %v2672, %v3043
        %v3136 = vsub.f32 %v2677, %v3046
        %v3137 = vsub.f32 %v2680, %v3049
        %v3138 = vsub.f32 %v2685, %v3052
        %v3139 = vsub.f32 %v2688, %v3055
        %v3140 = vsub.f32 %v2693, %v3058
        %v3141 = vsub.f32 %v2696, %v3061
        %v3142 = vsub.f32 %v2782, %v3064
        %v3143 = vsub.f32 %v2785, %v3067
        %v3144 = vsub.f32 %v2790, %v3070
        %v3145 = vsub.f32 %v2793, %v3073
        %v3146 = vsub.f32 %v2798, %v3076
        %v3147 = vsub.f32 %v2801, %v3079
        %v3148 = vsub.f32 %v2806, %v3082
        %v3149 = vsub.f32 %v2809, %v3085
        %v3150 = vsub.f32 %v2895, %v3088
        %v3151 = vsub.f32 %v2898, %v3091
        %v3152 = vsub.f32 %v2903, %v3094
        %v3153 = vsub.f32 %v2906, %v3097
        %v3154 = vsub.f32 %v2911, %v3100
        %v3155 = vsub.f32 %v2914, %v3103
        %v3156 = vsub.f32 %v2919, %v3106
        %v3157 = vsub.f32 %v2922, %v3109
        %v3158 = vsub.f32 %v3008, %v3112
        %v3159 = vsub.f32 %v3011, %v3115
        %v3160 = vsub.f32 %v3016, %v3118
        %v3161 = vsub.f32 %v3019, %v3121
        %v3162 = vsub.f32 %v3024, %v3124
        %v3163 = vsub.f32 %v3027, %v3127
        %v3164 = vsub.f32 %v3032, %v3130
        %v3165 = vsub.f32 %v3035, %v3133
        %v3166 = vmul.f32 %v3134, 1.442695
        %v3167 = vpow.pop %v3166
        %v3168 = vmul.f32 %v3135, 1.442695
        %v3169 = vpow.pop %v3168
        %v3170 = vmul.f32 %v3136, 1.442695
        %v3171 = vpow.pop %v3170
        %v3172 = vmul.f32 %v3137, 1.442695
        %v3173 = vpow.pop %v3172
        %v3174 = vmul.f32 %v3138, 1.442695
        %v3175 = vpow.pop %v3174
        %v3176 = vmul.f32 %v3139, 1.442695
        %v3177 = vpow.pop %v3176
        %v3178 = vmul.f32 %v3140, 1.442695
        %v3179 = vpow.pop %v3178
        %v3180 = vmul.f32 %v3141, 1.442695
        %v3181 = vpow.pop %v3180
        %v3182 = vmul.f32 %v3142, 1.442695
        %v3183 = vpow.pop %v3182
        %v3184 = vmul.f32 %v3143, 1.442695
        %v3185 = vpow.pop %v3184
        %v3186 = vmul.f32 %v3144, 1.442695
        %v3187 = vpow.pop %v3186
        %v3188 = vmul.f32 %v3145, 1.442695
        %v3189 = vpow.pop %v3188
        %v3190 = vmul.f32 %v3146, 1.442695
        %v3191 = vpow.pop %v3190
        %v3192 = vmul.f32 %v3147, 1.442695
        %v3193 = vpow.pop %v3192
        %v3194 = vmul.f32 %v3148, 1.442695
        %v3195 = vpow.pop %v3194
        %v3196 = vmul.f32 %v3149, 1.442695
        %v3197 = vpow.pop %v3196
        %v3198 = vmul.f32 %v3150, 1.442695
        %v3199 = vpow.pop %v3198
        %v3200 = vmul.f32 %v3151, 1.442695
        %v3201 = vpow.pop %v3200
        %v3202 = vmul.f32 %v3152, 1.442695
        %v3203 = vpow.pop %v3202
        %v3204 = vmul.f32 %v3153, 1.442695
        %v3205 = vpow.pop %v3204
        %v3206 = vmul.f32 %v3154, 1.442695
        %v3207 = vpow.pop %v3206
        %v3208 = vmul.f32 %v3155, 1.442695
        %v3209 = vpow.pop %v3208
        %v3210 = vmul.f32 %v3156, 1.442695
        %v3211 = vpow.pop %v3210
        %v3212 = vmul.f32 %v3157, 1.442695
        %v3213 = vpow.pop %v3212
        %v3214 = vmul.f32 %v3158, 1.442695
        %v3215 = vpow.pop %v3214
        %v3216 = vmul.f32 %v3159, 1.442695
        %v3217 = vpow.pop %v3216
        %v3218 = vmul.f32 %v3160, 1.442695
        %v3219 = vpow.pop %v3218
        %v3220 = vmul.f32 %v3161, 1.442695
        %v3221 = vpow.pop %v3220
        %v3222 = vmul.f32 %v3162, 1.442695
        %v3223 = vpow.pop %v3222
        %v3224 = vmul.f32 %v3163, 1.442695
        %v3225 = vpow.pop %v3224
        %v3226 = vmul.f32 %v3164, 1.442695
        %v3227 = vpow.pop %v3226
        %v3228 = vmul.f32 %v3165, 1.442695
        %v3229 = vpow.pop %v3228
        %v3230 = vsel %vm1889, %v3167, 0.0
        %3231 = vadd.xlane.f32.xlu0 %v3230
        %v3232 = vpop.xlane.xlu0 %3231
        %v3233 = vsel %vm1889, %v3169, 0.0
        %3234 = vadd.xlane.f32.xlu0 %v3233
        %v3235 = vpop.xlane.xlu0 %3234
        %v3236 = vsel %vm1889, %v3171, 0.0
        %3237 = vadd.xlane.f32.xlu0 %v3236
        %v3238 = vpop.xlane.xlu0 %3237
        %v3239 = vsel %vm1889, %v3173, 0.0
        %3240 = vadd.xlane.f32.xlu0 %v3239
        %v3241 = vpop.xlane.xlu0 %3240
        %v3242 = vsel %vm1889, %v3175, 0.0
        %3243 = vadd.xlane.f32.xlu0 %v3242
        %v3244 = vpop.xlane.xlu0 %3243
        %v3245 = vsel %vm1889, %v3177, 0.0
        %3246 = vadd.xlane.f32.xlu0 %v3245
        %v3247 = vpop.xlane.xlu0 %3246
        %v3248 = vsel %vm1889, %v3179, 0.0
        %3249 = vadd.xlane.f32.xlu0 %v3248
        %v3250 = vpop.xlane.xlu0 %3249
        %v3251 = vsel %vm1889, %v3181, 0.0
        %3252 = vadd.xlane.f32.xlu0 %v3251
        %v3253 = vpop.xlane.xlu0 %3252
        %v3254 = vsel %vm1889, %v3183, 0.0
        %3255 = vadd.xlane.f32.xlu0 %v3254
        %v3256 = vpop.xlane.xlu0 %3255
        %v3257 = vsel %vm1889, %v3185, 0.0
        %3258 = vadd.xlane.f32.xlu0 %v3257
        %v3259 = vpop.xlane.xlu0 %3258
        %v3260 = vsel %vm1889, %v3187, 0.0
        %3261 = vadd.xlane.f32.xlu0 %v3260
        %v3262 = vpop.xlane.xlu0 %3261
        %v3263 = vsel %vm1889, %v3189, 0.0
        %3264 = vadd.xlane.f32.xlu0 %v3263
        %v3265 = vpop.xlane.xlu0 %3264
        %v3266 = vsel %vm1889, %v3191, 0.0
        %3267 = vadd.xlane.f32.xlu0 %v3266
        %v3268 = vpop.xlane.xlu0 %3267
        %v3269 = vsel %vm1889, %v3193, 0.0
        %3270 = vadd.xlane.f32.xlu0 %v3269
        %v3271 = vpop.xlane.xlu0 %3270
        %v3272 = vsel %vm1889, %v3195, 0.0
        %3273 = vadd.xlane.f32.xlu0 %v3272
        %v3274 = vpop.xlane.xlu0 %3273
        %v3275 = vsel %vm1889, %v3197, 0.0
        %3276 = vadd.xlane.f32.xlu0 %v3275
        %v3277 = vpop.xlane.xlu0 %3276
        %v3278 = vsel %vm1889, %v3199, 0.0
        %3279 = vadd.xlane.f32.xlu0 %v3278
        %v3280 = vpop.xlane.xlu0 %3279
        %v3281 = vsel %vm1889, %v3201, 0.0
        %3282 = vadd.xlane.f32.xlu0 %v3281
        %v3283 = vpop.xlane.xlu0 %3282
        %v3284 = vsel %vm1889, %v3203, 0.0
        %3285 = vadd.xlane.f32.xlu0 %v3284
        %v3286 = vpop.xlane.xlu0 %3285
        %v3287 = vsel %vm1889, %v3205, 0.0
        %3288 = vadd.xlane.f32.xlu0 %v3287
        %v3289 = vpop.xlane.xlu0 %3288
        %v3290 = vsel %vm1889, %v3207, 0.0
        %3291 = vadd.xlane.f32.xlu0 %v3290
        %v3292 = vpop.xlane.xlu0 %3291
        %v3293 = vsel %vm1889, %v3209, 0.0
        %3294 = vadd.xlane.f32.xlu0 %v3293
        %v3295 = vpop.xlane.xlu0 %3294
        %v3296 = vsel %vm1889, %v3211, 0.0
        %3297 = vadd.xlane.f32.xlu0 %v3296
        %v3298 = vpop.xlane.xlu0 %3297
        %v3299 = vsel %vm1889, %v3213, 0.0
        %3300 = vadd.xlane.f32.xlu0 %v3299
        %v3301 = vpop.xlane.xlu0 %3300
        %v3302 = vsel %vm1889, %v3215, 0.0
        %3303 = vadd.xlane.f32.xlu0 %v3302
        %v3304 = vpop.xlane.xlu0 %3303
        %v3305 = vsel %vm1889, %v3217, 0.0
        %3306 = vadd.xlane.f32.xlu0 %v3305
        %v3307 = vpop.xlane.xlu0 %3306
        %v3308 = vsel %vm1889, %v3219, 0.0
        %3309 = vadd.xlane.f32.xlu0 %v3308
        %v3310 = vpop.xlane.xlu0 %3309
        %v3311 = vsel %vm1889, %v3221, 0.0
        %3312 = vadd.xlane.f32.xlu0 %v3311
        %v3313 = vpop.xlane.xlu0 %3312
        %v3314 = vsel %vm1889, %v3223, 0.0
        %3315 = vadd.xlane.f32.xlu0 %v3314
        %v3316 = vpop.xlane.xlu0 %3315
        %v3317 = vsel %vm1889, %v3225, 0.0
        %3318 = vadd.xlane.f32.xlu0 %v3317
        %v3319 = vpop.xlane.xlu0 %3318
        %v3320 = vsel %vm1889, %v3227, 0.0
        %3321 = vadd.xlane.f32.xlu0 %v3320
        %v3322 = vpop.xlane.xlu0 %3321
        %v3323 = vsel %vm1889, %v3229, 0.0
        %3324 = vadd.xlane.f32.xlu0 %v3323
        %v3325 = vpop.xlane.xlu0 %3324
        %v3326 = vrcp.pop %v3232
        %v3327 = vrcp.pop %v3235
        %v3328 = vrcp.pop %v3238
        %v3329 = vrcp.pop %v3241
        %v3330 = vrcp.pop %v3244
        %v3331 = vrcp.pop %v3247
        %v3332 = vrcp.pop %v3250
        %v3333 = vrcp.pop %v3253
        %v3334 = vrcp.pop %v3256
        %v3335 = vrcp.pop %v3259
        %v3336 = vrcp.pop %v3262
        %v3337 = vrcp.pop %v3265
        %v3338 = vrcp.pop %v3268
        %v3339 = vrcp.pop %v3271
        %v3340 = vrcp.pop %v3274
        %v3341 = vrcp.pop %v3277
        %v3342 = vrcp.pop %v3280
        %v3343 = vrcp.pop %v3283
        %v3344 = vrcp.pop %v3286
        %v3345 = vrcp.pop %v3289
        %v3346 = vrcp.pop %v3292
        %v3347 = vrcp.pop %v3295
        %v3348 = vrcp.pop %v3298
        %v3349 = vrcp.pop %v3301
        %v3350 = vrcp.pop %v3304
        %v3351 = vrcp.pop %v3307
        %v3352 = vrcp.pop %v3310
        %v3353 = vrcp.pop %v3313
        %v3354 = vrcp.pop %v3316
        %v3355 = vrcp.pop %v3319
        %v3356 = vrcp.pop %v3322
        %v3357 = vrcp.pop %v3325
        %v3358 = vmul.f32 %v3167, %v3326
        %v3359 = vmul.f32 %v3169, %v3327
        %v3360 = vmul.f32 %v3171, %v3328
        %v3361 = vmul.f32 %v3173, %v3329
        %v3362 = vmul.f32 %v3175, %v3330
        %v3363 = vmul.f32 %v3177, %v3331
        %v3364 = vmul.f32 %v3179, %v3332
        %v3365 = vmul.f32 %v3181, %v3333
        %v3366 = vmul.f32 %v3183, %v3334
        %v3367 = vmul.f32 %v3185, %v3335
        %v3368 = vmul.f32 %v3187, %v3336
        %v3369 = vmul.f32 %v3189, %v3337
        %v3370 = vmul.f32 %v3191, %v3338
        %v3371 = vmul.f32 %v3193, %v3339
        %v3372 = vmul.f32 %v3195, %v3340
        %v3373 = vmul.f32 %v3197, %v3341
        %v3374 = vmul.f32 %v3199, %v3342
        %v3375 = vmul.f32 %v3201, %v3343
        %v3376 = vmul.f32 %v3203, %v3344
        %v3377 = vmul.f32 %v3205, %v3345
        %v3378 = vmul.f32 %v3207, %v3346
        %v3379 = vmul.f32 %v3209, %v3347
        %v3380 = vmul.f32 %v3211, %v3348
        %v3381 = vmul.f32 %v3213, %v3349
        %v3382 = vmul.f32 %v3215, %v3350
        %v3383 = vmul.f32 %v3217, %v3351
        %v3384 = vmul.f32 %v3219, %v3352
        %v3385 = vmul.f32 %v3221, %v3353
        %v3386 = vmul.f32 %v3223, %v3354
        %v3387 = vmul.f32 %v3225, %v3355
        %v3388 = vmul.f32 %v3227, %v3356
        %v3389 = vmul.f32 %v3229, %v3357
        %v3390 = vpack.c.bf16 %v3359, %v3358
        %v3391 = vpack.c.bf16 %v3361, %v3360
        %v3392 = vpack.c.bf16 %v3363, %v3362
        %v3393 = vpack.c.bf16 %v3365, %v3364
        %v3394 = vpack.c.bf16 %v3367, %v3366
        %v3395 = vpack.c.bf16 %v3369, %v3368
        %v3396 = vpack.c.bf16 %v3371, %v3370
        %v3397 = vpack.c.bf16 %v3373, %v3372
        %v3398 = vpack.c.bf16 %v3375, %v3374
        %v3399 = vpack.c.bf16 %v3377, %v3376
        %v3400 = vpack.c.bf16 %v3379, %v3378
        %v3401 = vpack.c.bf16 %v3381, %v3380
        %v3402 = vpack.c.bf16 %v3383, %v3382
        %v3403 = vpack.c.bf16 %v3385, %v3384
        %v3404 = vpack.c.bf16 %v3387, %v3386
        %v3405 = vpack.c.bf16 %v3389, %v3388
        %3410 = vrot.lane.b32.xlu0 %v1516, 96
        %v3411 = vpop.permute.xlu0 %3410
        %3412 = vrot.lane.b32.xlu0 %v1517, 96
        %v3413 = vpop.permute.xlu0 %3412
        %3414 = vrot.lane.b32.xlu0 %v1518, 96
        %v3415 = vpop.permute.xlu0 %3414
        %3416 = vrot.lane.b32.xlu0 %v1519, 96
        %v3417 = vpop.permute.xlu0 %3416
        %v3423 = vsel %vm1889, %v3390, 0
        %v3426 = vsel %vm1889, %v3391, 0
        %v3429 = vsel %vm1889, %v3392, 0
        %v3432 = vsel %vm1889, %v3393, 0
        %3434 = vmatprep.subr.bf16.mxu0 0
        %3435 = vmatpush1.bf16.msra.mxu0 %v3411
        %3436 = vmatprep.subr.bf16.mxu0 0
        %3437 = vmatpush1.bf16.msra.mxu0 %v3413
        %3438 = vmatprep.subr.bf16.mxu0 0
        %3439 = vmatpush1.bf16.msra.mxu0 %v3415
        %3440 = vmatprep.subr.bf16.mxu0 0
        %3441 = vmatpush1.bf16.msra.mxu0 %v3417
        %3442 = vmatprep.subr.bf16.mxu0 0
        %3443 = vmatpush1.bf16.msra.mxu0 0
        %3444 = vmatprep.subr.bf16.mxu0 0
        %3445 = vmatpush1.bf16.msra.mxu0 0
        %3446 = vmatprep.subr.bf16.mxu0 0
        %3447 = vmatpush1.bf16.msra.mxu0 0
        %3448 = vmatprep.subr.bf16.mxu0 0
        %3449 = vmatpush1.bf16.msra.mxu0 0
        %3450 = vmatprep.subr.bf16.mxu0 0
        %3451 = vmatpush1.bf16.msra.mxu0 0
        %3452 = vmatprep.subr.bf16.mxu0 0
        %3453 = vmatpush1.bf16.msra.mxu0 0
        %3454 = vmatprep.subr.bf16.mxu0 0
        %3455 = vmatpush1.bf16.msra.mxu0 0
        %3456 = vmatprep.subr.bf16.mxu0 0
        %3457 = vmatpush1.bf16.msra.mxu0 0
        %3458 = vmatprep.subr.bf16.mxu0 0
        %3459 = vmatpush1.bf16.msra.mxu0 0
        %3460 = vmatprep.subr.bf16.mxu0 0
        %3461 = vmatpush1.bf16.msra.mxu0 0
        %3462 = vmatprep.subr.bf16.mxu0 0
        %3463 = vmatpush1.bf16.msra.mxu0 0
        %3464 = vmatprep.subr.bf16.mxu0 0
        %3465 = vmatpush1.bf16.msra.mxu0 0
        %3466 = vmatprep.mubr.bf16.mxu0 0
        %3467 = vmatmul.mubr.bf16.gmra.mrb[0].mxu0 %v3423
        %v3468 = vpop.f32.mrb[0].mxu0
        %v3469 = vadd.f32 0.0, %v3468
        %v3470 = vpop.f32.mrb[0].mxu0
        %v3471 = vpop.f32.mrb[0].mxu0
        %v3472 = vadd.f32 0.0, %v3471
        %v3473 = vpop.f32.mrb[0].mxu0
        %3474 = vmatprep.mubr.bf16.mxu0 0
        %3475 = vmatmul.mubr.bf16.gmra.mrb[0].mxu0 %v3426
        %v3476 = vpop.f32.mrb[0].mxu0
        %v3477 = vadd.f32 0.0, %v3476
        %v3478 = vpop.f32.mrb[0].mxu0
        %v3479 = vpop.f32.mrb[0].mxu0
        %v3480 = vadd.f32 0.0, %v3479
        %v3481 = vpop.f32.mrb[0].mxu0
        %3482 = vmatprep.mubr.bf16.mxu0 0
        %3483 = vmatmul.mubr.bf16.gmra.mrb[0].mxu0 %v3429
        %v3484 = vpop.f32.mrb[0].mxu0
        %v3485 = vadd.f32 0.0, %v3484
        %v3486 = vpop.f32.mrb[0].mxu0
        %v3487 = vpop.f32.mrb[0].mxu0
        %v3488 = vadd.f32 0.0, %v3487
        %v3489 = vpop.f32.mrb[0].mxu0
        %3490 = vmatprep.mubr.bf16.mxu0 0
        %3491 = vmatmul.mubr.bf16.gmra.mrb[0].mxu0 %v3432
        %v3492 = vpop.f32.mrb[0].mxu0
        %v3493 = vadd.f32 0.0, %v3492
        %v3494 = vpop.f32.mrb[0].mxu0
        %v3495 = vpop.f32.mrb[0].mxu0
        %v3496 = vadd.f32 0.0, %v3495
        %v3497 = vpop.f32.mrb[0].mxu0
        %3498 = vdwg.mxu0
        %3503 = vrot.lane.b32.xlu0 %v1520, 96
        %v3504 = vpop.permute.xlu0 %3503
        %3505 = vrot.lane.b32.xlu0 %v1521, 96
        %v3506 = vpop.permute.xlu0 %3505
        %3507 = vrot.lane.b32.xlu0 %v1522, 96
        %v3508 = vpop.permute.xlu0 %3507
        %3509 = vrot.lane.b32.xlu0 %v1523, 96
        %v3510 = vpop.permute.xlu0 %3509
        %v3516 = vsel %vm1889, %v3394, 0
        %v3519 = vsel %vm1889, %v3395, 0
        %v3522 = vsel %vm1889, %v3396, 0
        %v3525 = vsel %vm1889, %v3397, 0
        %3527 = vmatprep.subr.bf16.mxu0 0
        %3528 = vmatpush1.bf16.msra.mxu0 %v3504
        %3529 = vmatprep.subr.bf16.mxu0 0
        %3530 = vmatpush1.bf16.msra.mxu0 %v3506
        %3531 = vmatprep.subr.bf16.mxu0 0
        %3532 = vmatpush1.bf16.msra.mxu0 %v3508
        %3533 = vmatprep.subr.bf16.mxu0 0
        %3534 = vmatpush1.bf16.msra.mxu0 %v3510
        %3535 = vmatprep.subr.bf16.mxu0 0
        %3536 = vmatpush1.bf16.msra.mxu0 0
        %3537 = vmatprep.subr.bf16.mxu0 0
        %3538 = vmatpush1.bf16.msra.mxu0 0
        %3539 = vmatprep.subr.bf16.mxu0 0
        %3540 = vmatpush1.bf16.msra.mxu0 0
        %3541 = vmatprep.subr.bf16.mxu0 0
        %3542 = vmatpush1.bf16.msra.mxu0 0
        %3543 = vmatprep.subr.bf16.mxu0 0
        %3544 = vmatpush1.bf16.msra.mxu0 0
        %3545 = vmatprep.subr.bf16.mxu0 0
        %3546 = vmatpush1.bf16.msra.mxu0 0
        %3547 = vmatprep.subr.bf16.mxu0 0
        %3548 = vmatpush1.bf16.msra.mxu0 0
        %3549 = vmatprep.subr.bf16.mxu0 0
        %3550 = vmatpush1.bf16.msra.mxu0 0
        %3551 = vmatprep.subr.bf16.mxu0 0
        %3552 = vmatpush1.bf16.msra.mxu0 0
        %3553 = vmatprep.subr.bf16.mxu0 0
        %3554 = vmatpush1.bf16.msra.mxu0 0
        %3555 = vmatprep.subr.bf16.mxu0 0
        %3556 = vmatpush1.bf16.msra.mxu0 0
        %3557 = vmatprep.subr.bf16.mxu0 0
        %3558 = vmatpush1.bf16.msra.mxu0 0
        %3559 = vmatprep.mubr.bf16.mxu0 0
        %3560 = vmatmul.mubr.bf16.gmra.mrb[0].mxu0 %v3516
        %v3561 = vpop.f32.mrb[0].mxu0
        %v3562 = vadd.f32 0.0, %v3561
        %v3563 = vpop.f32.mrb[0].mxu0
        %v3564 = vpop.f32.mrb[0].mxu0
        %v3565 = vadd.f32 0.0, %v3564
        %v3566 = vpop.f32.mrb[0].mxu0
        %3567 = vmatprep.mubr.bf16.mxu0 0
        %3568 = vmatmul.mubr.bf16.gmra.mrb[0].mxu0 %v3519
        %v3569 = vpop.f32.mrb[0].mxu0
        %v3570 = vadd.f32 0.0, %v3569
        %v3571 = vpop.f32.mrb[0].mxu0
        %v3572 = vpop.f32.mrb[0].mxu0
        %v3573 = vadd.f32 0.0, %v3572
        %v3574 = vpop.f32.mrb[0].mxu0
        %3575 = vmatprep.mubr.bf16.mxu0 0
        %3576 = vmatmul.mubr.bf16.gmra.mrb[0].mxu0 %v3522
        %v3577 = vpop.f32.mrb[0].mxu0
        %v3578 = vadd.f32 0.0, %v3577
        %v3579 = vpop.f32.mrb[0].mxu0
        %v3580 = vpop.f32.mrb[0].mxu0
        %v3581 = vadd.f32 0.0, %v3580
        %v3582 = vpop.f32.mrb[0].mxu0
        %3583 = vmatprep.mubr.bf16.mxu0 0
        %3584 = vmatmul.mubr.bf16.gmra.mrb[0].mxu0 %v3525
        %v3585 = vpop.f32.mrb[0].mxu0
        %v3586 = vadd.f32 0.0, %v3585
        %v3587 = vpop.f32.mrb[0].mxu0
        %v3588 = vpop.f32.mrb[0].mxu0
        %v3589 = vadd.f32 0.0, %v3588
        %v3590 = vpop.f32.mrb[0].mxu0
        %3591 = vdwg.mxu0
        %3596 = vrot.lane.b32.xlu0 %v1524, 96
        %v3597 = vpop.permute.xlu0 %3596
        %3598 = vrot.lane.b32.xlu0 %v1525, 96
        %v3599 = vpop.permute.xlu0 %3598
        %3600 = vrot.lane.b32.xlu0 %v1526, 96
        %v3601 = vpop.permute.xlu0 %3600
        %3602 = vrot.lane.b32.xlu0 %v1527, 96
        %v3603 = vpop.permute.xlu0 %3602
        %v3609 = vsel %vm1889, %v3398, 0
        %v3612 = vsel %vm1889, %v3399, 0
        %v3615 = vsel %vm1889, %v3400, 0
        %v3618 = vsel %vm1889, %v3401, 0
        %3620 = vmatprep.subr.bf16.mxu0 0
        %3621 = vmatpush1.bf16.msra.mxu0 %v3597
        %3622 = vmatprep.subr.bf16.mxu0 0
        %3623 = vmatpush1.bf16.msra.mxu0 %v3599
        %3624 = vmatprep.subr.bf16.mxu0 0
        %3625 = vmatpush1.bf16.msra.mxu0 %v3601
        %3626 = vmatprep.subr.bf16.mxu0 0
        %3627 = vmatpush1.bf16.msra.mxu0 %v3603
        %3628 = vmatprep.subr.bf16.mxu0 0
        %3629 = vmatpush1.bf16.msra.mxu0 0
        %3630 = vmatprep.subr.bf16.mxu0 0
        %3631 = vmatpush1.bf16.msra.mxu0 0
        %3632 = vmatprep.subr.bf16.mxu0 0
        %3633 = vmatpush1.bf16.msra.mxu0 0
        %3634 = vmatprep.subr.bf16.mxu0 0
        %3635 = vmatpush1.bf16.msra.mxu0 0
        %3636 = vmatprep.subr.bf16.mxu0 0
        %3637 = vmatpush1.bf16.msra.mxu0 0
        %3638 = vmatprep.subr.bf16.mxu0 0
        %3639 = vmatpush1.bf16.msra.mxu0 0
        %3640 = vmatprep.subr.bf16.mxu0 0
        %3641 = vmatpush1.bf16.msra.mxu0 0
        %3642 = vmatprep.subr.bf16.mxu0 0
        %3643 = vmatpush1.bf16.msra.mxu0 0
        %3644 = vmatprep.subr.bf16.mxu0 0
        %3645 = vmatpush1.bf16.msra.mxu0 0
        %3646 = vmatprep.subr.bf16.mxu0 0
        %3647 = vmatpush1.bf16.msra.mxu0 0
        %3648 = vmatprep.subr.bf16.mxu0 0
        %3649 = vmatpush1.bf16.msra.mxu0 0
        %3650 = vmatprep.subr.bf16.mxu0 0
        %3651 = vmatpush1.bf16.msra.mxu0 0
        %3652 = vmatprep.mubr.bf16.mxu0 0
        %3653 = vmatmul.mubr.bf16.gmra.mrb[0].mxu0 %v3609
        %v3654 = vpop.f32.mrb[0].mxu0
        %v3655 = vadd.f32 0.0, %v3654
        %v3656 = vpop.f32.mrb[0].mxu0
        %v3657 = vpop.f32.mrb[0].mxu0
        %v3658 = vadd.f32 0.0, %v3657
        %v3659 = vpop.f32.mrb[0].mxu0
        %3660 = vmatprep.mubr.bf16.mxu0 0
        %3661 = vmatmul.mubr.bf16.gmra.mrb[0].mxu0 %v3612
        %v3662 = vpop.f32.mrb[0].mxu0
        %v3663 = vadd.f32 0.0, %v3662
        %v3664 = vpop.f32.mrb[0].mxu0
        %v3665 = vpop.f32.mrb[0].mxu0
        %v3666 = vadd.f32 0.0, %v3665
        %v3667 = vpop.f32.mrb[0].mxu0
        %3668 = vmatprep.mubr.bf16.mxu0 0
        %3669 = vmatmul.mubr.bf16.gmra.mrb[0].mxu0 %v3615
        %v3670 = vpop.f32.mrb[0].mxu0
        %v3671 = vadd.f32 0.0, %v3670
        %v3672 = vpop.f32.mrb[0].mxu0
        %v3673 = vpop.f32.mrb[0].mxu0
        %v3674 = vadd.f32 0.0, %v3673
        %v3675 = vpop.f32.mrb[0].mxu0
        %3676 = vmatprep.mubr.bf16.mxu0 0
        %3677 = vmatmul.mubr.bf16.gmra.mrb[0].mxu0 %v3618
        %v3678 = vpop.f32.mrb[0].mxu0
        %v3679 = vadd.f32 0.0, %v3678
        %v3680 = vpop.f32.mrb[0].mxu0
        %v3681 = vpop.f32.mrb[0].mxu0
        %v3682 = vadd.f32 0.0, %v3681
        %v3683 = vpop.f32.mrb[0].mxu0
        %3684 = vdwg.mxu0
        %3689 = vrot.lane.b32.xlu0 %v1528, 96
        %v3690 = vpop.permute.xlu0 %3689
        %3691 = vrot.lane.b32.xlu0 %v1529, 96
        %v3692 = vpop.permute.xlu0 %3691
        %3693 = vrot.lane.b32.xlu0 %v1530, 96
        %v3694 = vpop.permute.xlu0 %3693
        %3695 = vrot.lane.b32.xlu0 %v1531, 96
        %v3696 = vpop.permute.xlu0 %3695
        %v3702 = vsel %vm1889, %v3402, 0
        %v3705 = vsel %vm1889, %v3403, 0
        %v3708 = vsel %vm1889, %v3404, 0
        %v3711 = vsel %vm1889, %v3405, 0
        %3713 = vmatprep.subr.bf16.mxu0 0
        %3714 = vmatpush1.bf16.msra.mxu0 %v3690
        %3715 = vmatprep.subr.bf16.mxu0 0
        %3716 = vmatpush1.bf16.msra.mxu0 %v3692
        %3717 = vmatprep.subr.bf16.mxu0 0
        %3718 = vmatpush1.bf16.msra.mxu0 %v3694
        %3719 = vmatprep.subr.bf16.mxu0 0
        %3720 = vmatpush1.bf16.msra.mxu0 %v3696
        %3721 = vmatprep.subr.bf16.mxu0 0
        %3722 = vmatpush1.bf16.msra.mxu0 0
        %3723 = vmatprep.subr.bf16.mxu0 0
        %3724 = vmatpush1.bf16.msra.mxu0 0
        %3725 = vmatprep.subr.bf16.mxu0 0
        %3726 = vmatpush1.bf16.msra.mxu0 0
        %3727 = vmatprep.subr.bf16.mxu0 0
        %3728 = vmatpush1.bf16.msra.mxu0 0
        %3729 = vmatprep.subr.bf16.mxu0 0
        %3730 = vmatpush1.bf16.msra.mxu0 0
        %3731 = vmatprep.subr.bf16.mxu0 0
        %3732 = vmatpush1.bf16.msra.mxu0 0
        %3733 = vmatprep.subr.bf16.mxu0 0
        %3734 = vmatpush1.bf16.msra.mxu0 0
        %3735 = vmatprep.subr.bf16.mxu0 0
        %3736 = vmatpush1.bf16.msra.mxu0 0
        %3737 = vmatprep.subr.bf16.mxu0 0
        %3738 = vmatpush1.bf16.msra.mxu0 0
        %3739 = vmatprep.subr.bf16.mxu0 0
        %3740 = vmatpush1.bf16.msra.mxu0 0
        %3741 = vmatprep.subr.bf16.mxu0 0
        %3742 = vmatpush1.bf16.msra.mxu0 0
        %3743 = vmatprep.subr.bf16.mxu0 0
        %3744 = vmatpush1.bf16.msra.mxu0 0
        %3745 = vmatprep.mubr.bf16.mxu0 0
        %3746 = vmatmul.mubr.bf16.gmra.mrb[0].mxu0 %v3702
        %v3747 = vpop.f32.mrb[0].mxu0
        %v3748 = vadd.f32 0.0, %v3747
        %v3749 = vpop.f32.mrb[0].mxu0
        %v3750 = vpop.f32.mrb[0].mxu0
        %v3751 = vadd.f32 0.0, %v3750
        %v3752 = vpop.f32.mrb[0].mxu0
        %3753 = vmatprep.mubr.bf16.mxu0 0
        %3754 = vmatmul.mubr.bf16.gmra.mrb[0].mxu0 %v3705
        %v3755 = vpop.f32.mrb[0].mxu0
        %v3756 = vadd.f32 0.0, %v3755
        %v3757 = vpop.f32.mrb[0].mxu0
        %v3758 = vpop.f32.mrb[0].mxu0
        %v3759 = vadd.f32 0.0, %v3758
        %v3760 = vpop.f32.mrb[0].mxu0
        %3761 = vmatprep.mubr.bf16.mxu0 0
        %3762 = vmatmul.mubr.bf16.gmra.mrb[0].mxu0 %v3708
        %v3763 = vpop.f32.mrb[0].mxu0
        %v3764 = vadd.f32 0.0, %v3763
        %v3765 = vpop.f32.mrb[0].mxu0
        %v3766 = vpop.f32.mrb[0].mxu0
        %v3767 = vadd.f32 0.0, %v3766
        %v3768 = vpop.f32.mrb[0].mxu0
        %3769 = vmatprep.mubr.bf16.mxu0 0
        %3770 = vmatmul.mubr.bf16.gmra.mrb[0].mxu0 %v3711
        %v3771 = vpop.f32.mrb[0].mxu0
        %v3772 = vadd.f32 0.0, %v3771
        %v3773 = vpop.f32.mrb[0].mxu0
        %v3774 = vpop.f32.mrb[0].mxu0
        %v3775 = vadd.f32 0.0, %v3774
        %v3776 = vpop.f32.mrb[0].mxu0
        %3777 = vdwg.mxu0
        %v3778 = vpack.c.bf16 %v3472, %v3469
        %v3779 = vpack.c.bf16 %v3480, %v3477
        %v3780 = vpack.c.bf16 %v3488, %v3485
        %v3781 = vpack.c.bf16 %v3496, %v3493
        %v3782 = vpack.c.bf16 %v3565, %v3562
        %v3783 = vpack.c.bf16 %v3573, %v3570
        %v3784 = vpack.c.bf16 %v3581, %v3578
        %v3785 = vpack.c.bf16 %v3589, %v3586
        %v3786 = vpack.c.bf16 %v3658, %v3655
        %v3787 = vpack.c.bf16 %v3666, %v3663
        %v3788 = vpack.c.bf16 %v3674, %v3671
        %v3789 = vpack.c.bf16 %v3682, %v3679
        %v3790 = vpack.c.bf16 %v3751, %v3748
        %v3791 = vpack.c.bf16 %v3759, %v3756
        %v3792 = vpack.c.bf16 %v3767, %v3764
        %v3793 = vpack.c.bf16 %v3775, %v3772
        %s3794 = scalar_lea.vmem [#allocation11], 16
        %v3795 = vld [vmem:[%s3794] sm:$0xf]
        %v3796 = vld [vmem:[%s3794 + $0x4] sm:$0xf]
        %v3797 = vld [vmem:[%s3794 + $0x8] sm:$0xf]
        %v3798 = vld [vmem:[%s3794 + $0xc] sm:$0xf]
        %v3803 = vunpack.c.l.b16 %v3795
        %v3804 = vunpack.c.l.b16 %v3796
        %v3805 = vunpack.c.l.b16 %v3797
        %v3806 = vunpack.c.l.b16 %v3798
        %v3807 = vpack.c.b16 %v3804, %v3803
        %v3808 = vpack.c.b16 %v3806, %v3805
        %v3812 = vsel %vm1532, %v3778, 0
        %v3815 = vsel %vm1532, %v3779, 0
        %v3818 = vsel %vm1532, %v3780, 0
        %v3821 = vsel %vm1532, %v3781, 0
        %v3824 = vsel %vm1532, %v3782, 0
        %v3827 = vsel %vm1532, %v3783, 0
        %v3830 = vsel %vm1532, %v3784, 0
        %v3833 = vsel %vm1532, %v3785, 0
        %v3836 = vsel %vm1532, %v3786, 0
        %v3839 = vsel %vm1532, %v3787, 0
        %v3842 = vsel %vm1532, %v3788, 0
        %v3845 = vsel %vm1532, %v3789, 0
        %v3848 = vsel %vm1532, %v3790, 0
        %v3851 = vsel %vm1532, %v3791, 0
        %v3854 = vsel %vm1532, %v3792, 0
        %v3857 = vsel %vm1532, %v3793, 0
        %3859 = vmatprep.subr.bf16.mxu0 0
        %3860 = vmatpush1.bf16.msra.mxu0 %v3807
        %3861 = vmatprep.subr.bf16.mxu0 0
        %3862 = vmatpush1.bf16.msra.mxu0 %v3808
        %3863 = vmatprep.subr.bf16.mxu0 0
        %3864 = vmatpush1.bf16.msra.mxu0 0
        %3865 = vmatprep.subr.bf16.mxu0 0
        %3866 = vmatpush1.bf16.msra.mxu0 0
        %3867 = vmatprep.subr.bf16.mxu0 0
        %3868 = vmatpush1.bf16.msra.mxu0 0
        %3869 = vmatprep.subr.bf16.mxu0 0
        %3870 = vmatpush1.bf16.msra.mxu0 0
        %3871 = vmatprep.subr.bf16.mxu0 0
        %3872 = vmatpush1.bf16.msra.mxu0 0
        %3873 = vmatprep.subr.bf16.mxu0 0
        %3874 = vmatpush1.bf16.msra.mxu0 0
        %3875 = vmatprep.subr.bf16.mxu0 0
        %3876 = vmatpush1.bf16.msra.mxu0 0
        %3877 = vmatprep.subr.bf16.mxu0 0
        %3878 = vmatpush1.bf16.msra.mxu0 0
        %3879 = vmatprep.subr.bf16.mxu0 0
        %3880 = vmatpush1.bf16.msra.mxu0 0
        %3881 = vmatprep.subr.bf16.mxu0 0
        %3882 = vmatpush1.bf16.msra.mxu0 0
        %3883 = vmatprep.subr.bf16.mxu0 0
        %3884 = vmatpush1.bf16.msra.mxu0 0
        %3885 = vmatprep.subr.bf16.mxu0 0
        %3886 = vmatpush1.bf16.msra.mxu0 0
        %3887 = vmatprep.subr.bf16.mxu0 0
        %3888 = vmatpush1.bf16.msra.mxu0 0
        %3889 = vmatprep.subr.bf16.mxu0 0
        %3890 = vmatpush1.bf16.msra.mxu0 0
        %3891 = vmatprep.mubr.bf16.mxu0 0
        %3892 = vmatmul.mubr.bf16.gmra.mrb[0].mxu0 %v3812
        %v3893 = vpop.f32.mrb[0].mxu0
        %v3894 = vadd.f32 0.0, %v3893
        %v3895 = vpop.f32.mrb[0].mxu0
        %v3896 = vpop.f32.mrb[0].mxu0
        %v3897 = vadd.f32 0.0, %v3896
        %v3898 = vpop.f32.mrb[0].mxu0
        %3899 = vmatprep.mubr.bf16.mxu0 0
        %3900 = vmatmul.mubr.bf16.gmra.mrb[0].mxu0 %v3815
        %v3901 = vpop.f32.mrb[0].mxu0
        %v3902 = vadd.f32 0.0, %v3901
        %v3903 = vpop.f32.mrb[0].mxu0
        %v3904 = vpop.f32.mrb[0].mxu0
        %v3905 = vadd.f32 0.0, %v3904
        %v3906 = vpop.f32.mrb[0].mxu0
        %3907 = vmatprep.mubr.bf16.mxu0 0
        %3908 = vmatmul.mubr.bf16.gmra.mrb[0].mxu0 %v3818
        %v3909 = vpop.f32.mrb[0].mxu0
        %v3910 = vadd.f32 0.0, %v3909
        %v3911 = vpop.f32.mrb[0].mxu0
        %v3912 = vpop.f32.mrb[0].mxu0
        %v3913 = vadd.f32 0.0, %v3912
        %v3914 = vpop.f32.mrb[0].mxu0
        %3915 = vmatprep.mubr.bf16.mxu0 0
        %3916 = vmatmul.mubr.bf16.gmra.mrb[0].mxu0 %v3821
        %v3917 = vpop.f32.mrb[0].mxu0
        %v3918 = vadd.f32 0.0, %v3917
        %v3919 = vpop.f32.mrb[0].mxu0
        %v3920 = vpop.f32.mrb[0].mxu0
        %v3921 = vadd.f32 0.0, %v3920
        %v3922 = vpop.f32.mrb[0].mxu0
        %3923 = vmatprep.mubr.bf16.mxu0 0
        %3924 = vmatmul.mubr.bf16.gmra.mrb[0].mxu0 %v3824
        %v3925 = vpop.f32.mrb[0].mxu0
        %v3926 = vadd.f32 0.0, %v3925
        %v3927 = vpop.f32.mrb[0].mxu0
        %v3928 = vpop.f32.mrb[0].mxu0
        %v3929 = vadd.f32 0.0, %v3928
        %v3930 = vpop.f32.mrb[0].mxu0
        %3931 = vmatprep.mubr.bf16.mxu0 0
        %3932 = vmatmul.mubr.bf16.gmra.mrb[0].mxu0 %v3827
        %v3933 = vpop.f32.mrb[0].mxu0
        %v3934 = vadd.f32 0.0, %v3933
        %v3935 = vpop.f32.mrb[0].mxu0
        %v3936 = vpop.f32.mrb[0].mxu0
        %v3937 = vadd.f32 0.0, %v3936
        %v3938 = vpop.f32.mrb[0].mxu0
        %3939 = vmatprep.mubr.bf16.mxu0 0
        %3940 = vmatmul.mubr.bf16.gmra.mrb[0].mxu0 %v3830
        %v3941 = vpop.f32.mrb[0].mxu0
        %v3942 = vadd.f32 0.0, %v3941
        %v3943 = vpop.f32.mrb[0].mxu0
        %v3944 = vpop.f32.mrb[0].mxu0
        %v3945 = vadd.f32 0.0, %v3944
        %v3946 = vpop.f32.mrb[0].mxu0
        %3947 = vmatprep.mubr.bf16.mxu0 0
        %3948 = vmatmul.mubr.bf16.gmra.mrb[0].mxu0 %v3833
        %v3949 = vpop.f32.mrb[0].mxu0
        %v3950 = vadd.f32 0.0, %v3949
        %v3951 = vpop.f32.mrb[0].mxu0
        %v3952 = vpop.f32.mrb[0].mxu0
        %v3953 = vadd.f32 0.0, %v3952
        %v3954 = vpop.f32.mrb[0].mxu0
        %3955 = vmatprep.mubr.bf16.mxu0 0
        %3956 = vmatmul.mubr.bf16.gmra.mrb[0].mxu0 %v3836
        %v3957 = vpop.f32.mrb[0].mxu0
        %v3958 = vadd.f32 0.0, %v3957
        %v3959 = vpop.f32.mrb[0].mxu0
        %v3960 = vpop.f32.mrb[0].mxu0
        %v3961 = vadd.f32 0.0, %v3960
        %v3962 = vpop.f32.mrb[0].mxu0
        %3963 = vmatprep.mubr.bf16.mxu0 0
        %3964 = vmatmul.mubr.bf16.gmra.mrb[0].mxu0 %v3839
        %v3965 = vpop.f32.mrb[0].mxu0
        %v3966 = vadd.f32 0.0, %v3965
        %v3967 = vpop.f32.mrb[0].mxu0
        %v3968 = vpop.f32.mrb[0].mxu0
        %v3969 = vadd.f32 0.0, %v3968
        %v3970 = vpop.f32.mrb[0].mxu0
        %3971 = vmatprep.mubr.bf16.mxu0 0
        %3972 = vmatmul.mubr.bf16.gmra.mrb[0].mxu0 %v3842
        %v3973 = vpop.f32.mrb[0].mxu0
        %v3974 = vadd.f32 0.0, %v3973
        %v3975 = vpop.f32.mrb[0].mxu0
        %v3976 = vpop.f32.mrb[0].mxu0
        %v3977 = vadd.f32 0.0, %v3976
        %v3978 = vpop.f32.mrb[0].mxu0
        %3979 = vmatprep.mubr.bf16.mxu0 0
        %3980 = vmatmul.mubr.bf16.gmra.mrb[0].mxu0 %v3845
        %v3981 = vpop.f32.mrb[0].mxu0
        %v3982 = vadd.f32 0.0, %v3981
        %v3983 = vpop.f32.mrb[0].mxu0
        %v3984 = vpop.f32.mrb[0].mxu0
        %v3985 = vadd.f32 0.0, %v3984
        %v3986 = vpop.f32.mrb[0].mxu0
        %3987 = vmatprep.mubr.bf16.mxu0 0
        %3988 = vmatmul.mubr.bf16.gmra.mrb[0].mxu0 %v3848
        %v3989 = vpop.f32.mrb[0].mxu0
        %v3990 = vadd.f32 0.0, %v3989
        %v3991 = vpop.f32.mrb[0].mxu0
        %v3992 = vpop.f32.mrb[0].mxu0
        %v3993 = vadd.f32 0.0, %v3992
        %v3994 = vpop.f32.mrb[0].mxu0
        %3995 = vmatprep.mubr.bf16.mxu0 0
        %3996 = vmatmul.mubr.bf16.gmra.mrb[0].mxu0 %v3851
        %v3997 = vpop.f32.mrb[0].mxu0
        %v3998 = vadd.f32 0.0, %v3997
        %v3999 = vpop.f32.mrb[0].mxu0
        %v4000 = vpop.f32.mrb[0].mxu0
        %v4001 = vadd.f32 0.0, %v4000
        %v4002 = vpop.f32.mrb[0].mxu0
        %4003 = vmatprep.mubr.bf16.mxu0 0
        %4004 = vmatmul.mubr.bf16.gmra.mrb[0].mxu0 %v3854
        %v4005 = vpop.f32.mrb[0].mxu0
        %v4006 = vadd.f32 0.0, %v4005
        %v4007 = vpop.f32.mrb[0].mxu0
        %v4008 = vpop.f32.mrb[0].mxu0
        %v4009 = vadd.f32 0.0, %v4008
        %v4010 = vpop.f32.mrb[0].mxu0
        %4011 = vmatprep.mubr.bf16.mxu0 0
        %4012 = vmatmul.mubr.bf16.gmra.mrb[0].mxu0 %v3857
        %v4013 = vpop.f32.mrb[0].mxu0
        %v4014 = vadd.f32 0.0, %v4013
        %v4015 = vpop.f32.mrb[0].mxu0
        %v4016 = vpop.f32.mrb[0].mxu0
        %v4017 = vadd.f32 0.0, %v4016
        %v4018 = vpop.f32.mrb[0].mxu0
        %4019 = vdwg.mxu0
        %v4024 = vunpack.c.l.b16 %v2582
        %v4025 = vunpack.c.l.b16 %v2583
        %v4026 = vunpack.c.l.b16 %v2584
        %v4027 = vunpack.c.l.b16 %v2585
        %v4028 = vpack.c.b16 %v4025, %v4024
        %v4029 = vpack.c.b16 %v4027, %v4026
        %v4033 = vsel %vm1532, %v2566, 0
        %v4036 = vsel %vm1532, %v2567, 0
        %v4039 = vsel %vm1532, %v2568, 0
        %v4042 = vsel %vm1532, %v2569, 0
        %v4045 = vsel %vm1532, %v2570, 0
        %v4048 = vsel %vm1532, %v2571, 0
        %v4051 = vsel %vm1532, %v2572, 0
        %v4054 = vsel %vm1532, %v2573, 0
        %v4057 = vsel %vm1532, %v2574, 0
        %v4060 = vsel %vm1532, %v2575, 0
        %v4063 = vsel %vm1532, %v2576, 0
        %v4066 = vsel %vm1532, %v2577, 0
        %v4069 = vsel %vm1532, %v2578, 0
        %v4072 = vsel %vm1532, %v2579, 0
        %v4075 = vsel %vm1532, %v2580, 0
        %v4078 = vsel %vm1532, %v2581, 0
        %4080 = vmatprep.subr.bf16.mxu0 0
        %4081 = vmatpush1.bf16.msra.mxu0 %v4028
        %4082 = vmatprep.subr.bf16.mxu0 0
        %4083 = vmatpush1.bf16.msra.mxu0 %v4029
        %4084 = vmatprep.subr.bf16.mxu0 0
        %4085 = vmatpush1.bf16.msra.mxu0 0
        %4086 = vmatprep.subr.bf16.mxu0 0
        %4087 = vmatpush1.bf16.msra.mxu0 0
        %4088 = vmatprep.subr.bf16.mxu0 0
        %4089 = vmatpush1.bf16.msra.mxu0 0
        %4090 = vmatprep.subr.bf16.mxu0 0
        %4091 = vmatpush1.bf16.msra.mxu0 0
        %4092 = vmatprep.subr.bf16.mxu0 0
        %4093 = vmatpush1.bf16.msra.mxu0 0
        %4094 = vmatprep.subr.bf16.mxu0 0
        %4095 = vmatpush1.bf16.msra.mxu0 0
        %4096 = vmatprep.subr.bf16.mxu0 0
        %4097 = vmatpush1.bf16.msra.mxu0 0
        %4098 = vmatprep.subr.bf16.mxu0 0
        %4099 = vmatpush1.bf16.msra.mxu0 0
        %4100 = vmatprep.subr.bf16.mxu0 0
        %4101 = vmatpush1.bf16.msra.mxu0 0
        %4102 = vmatprep.subr.bf16.mxu0 0
        %4103 = vmatpush1.bf16.msra.mxu0 0
        %4104 = vmatprep.subr.bf16.mxu0 0
        %4105 = vmatpush1.bf16.msra.mxu0 0
        %4106 = vmatprep.subr.bf16.mxu0 0
        %4107 = vmatpush1.bf16.msra.mxu0 0
        %4108 = vmatprep.subr.bf16.mxu0 0
        %4109 = vmatpush1.bf16.msra.mxu0 0
        %4110 = vmatprep.subr.bf16.mxu0 0
        %4111 = vmatpush1.bf16.msra.mxu0 0
        %4112 = vmatprep.mubr.bf16.mxu0 0
        %4113 = vmatmul.mubr.bf16.gmra.mrb[0].mxu0 %v4033
        %v4114 = vpop.f32.mrb[0].mxu0
        %v4115 = vadd.f32 %v3894, %v4114
        %v4116 = vpop.f32.mrb[0].mxu0
        %v4117 = vpop.f32.mrb[0].mxu0
        %v4118 = vadd.f32 %v3897, %v4117
        %v4119 = vpop.f32.mrb[0].mxu0
        %4120 = vmatprep.mubr.bf16.mxu0 0
        %4121 = vmatmul.mubr.bf16.gmra.mrb[0].mxu0 %v4036
        %v4122 = vpop.f32.mrb[0].mxu0
        %v4123 = vadd.f32 %v3902, %v4122
        %v4124 = vpop.f32.mrb[0].mxu0
        %v4125 = vpop.f32.mrb[0].mxu0
        %v4126 = vadd.f32 %v3905, %v4125
        %v4127 = vpop.f32.mrb[0].mxu0
        %4128 = vmatprep.mubr.bf16.mxu0 0
        %4129 = vmatmul.mubr.bf16.gmra.mrb[0].mxu0 %v4039
        %v4130 = vpop.f32.mrb[0].mxu0
        %v4131 = vadd.f32 %v3910, %v4130
        %v4132 = vpop.f32.mrb[0].mxu0
        %v4133 = vpop.f32.mrb[0].mxu0
        %v4134 = vadd.f32 %v3913, %v4133
        %v4135 = vpop.f32.mrb[0].mxu0
        %4136 = vmatprep.mubr.bf16.mxu0 0
        %4137 = vmatmul.mubr.bf16.gmra.mrb[0].mxu0 %v4042
        %v4138 = vpop.f32.mrb[0].mxu0
        %v4139 = vadd.f32 %v3918, %v4138
        %v4140 = vpop.f32.mrb[0].mxu0
        %v4141 = vpop.f32.mrb[0].mxu0
        %v4142 = vadd.f32 %v3921, %v4141
        %v4143 = vpop.f32.mrb[0].mxu0
        %4144 = vmatprep.mubr.bf16.mxu0 0
        %4145 = vmatmul.mubr.bf16.gmra.mrb[0].mxu0 %v4045
        %v4146 = vpop.f32.mrb[0].mxu0
        %v4147 = vadd.f32 %v3926, %v4146
        %v4148 = vpop.f32.mrb[0].mxu0
        %v4149 = vpop.f32.mrb[0].mxu0
        %v4150 = vadd.f32 %v3929, %v4149
        %v4151 = vpop.f32.mrb[0].mxu0
        %4152 = vmatprep.mubr.bf16.mxu0 0
        %4153 = vmatmul.mubr.bf16.gmra.mrb[0].mxu0 %v4048
        %v4154 = vpop.f32.mrb[0].mxu0
        %v4155 = vadd.f32 %v3934, %v4154
        %v4156 = vpop.f32.mrb[0].mxu0
        %v4157 = vpop.f32.mrb[0].mxu0
        %v4158 = vadd.f32 %v3937, %v4157
        %v4159 = vpop.f32.mrb[0].mxu0
        %4160 = vmatprep.mubr.bf16.mxu0 0
        %4161 = vmatmul.mubr.bf16.gmra.mrb[0].mxu0 %v4051
        %v4162 = vpop.f32.mrb[0].mxu0
        %v4163 = vadd.f32 %v3942, %v4162
        %v4164 = vpop.f32.mrb[0].mxu0
        %v4165 = vpop.f32.mrb[0].mxu0
        %v4166 = vadd.f32 %v3945, %v4165
        %v4167 = vpop.f32.mrb[0].mxu0
        %4168 = vmatprep.mubr.bf16.mxu0 0
        %4169 = vmatmul.mubr.bf16.gmra.mrb[0].mxu0 %v4054
        %v4170 = vpop.f32.mrb[0].mxu0
        %v4171 = vadd.f32 %v3950, %v4170
        %v4172 = vpop.f32.mrb[0].mxu0
        %v4173 = vpop.f32.mrb[0].mxu0
        %v4174 = vadd.f32 %v3953, %v4173
        %v4175 = vpop.f32.mrb[0].mxu0
        %4176 = vmatprep.mubr.bf16.mxu0 0
        %4177 = vmatmul.mubr.bf16.gmra.mrb[0].mxu0 %v4057
        %v4178 = vpop.f32.mrb[0].mxu0
        %v4179 = vadd.f32 %v3958, %v4178
        %v4180 = vpop.f32.mrb[0].mxu0
        %v4181 = vpop.f32.mrb[0].mxu0
        %v4182 = vadd.f32 %v3961, %v4181
        %v4183 = vpop.f32.mrb[0].mxu0
        %4184 = vmatprep.mubr.bf16.mxu0 0
        %4185 = vmatmul.mubr.bf16.gmra.mrb[0].mxu0 %v4060
        %v4186 = vpop.f32.mrb[0].mxu0
        %v4187 = vadd.f32 %v3966, %v4186
        %v4188 = vpop.f32.mrb[0].mxu0
        %v4189 = vpop.f32.mrb[0].mxu0
        %v4190 = vadd.f32 %v3969, %v4189
        %v4191 = vpop.f32.mrb[0].mxu0
        %4192 = vmatprep.mubr.bf16.mxu0 0
        %4193 = vmatmul.mubr.bf16.gmra.mrb[0].mxu0 %v4063
        %v4194 = vpop.f32.mrb[0].mxu0
        %v4195 = vadd.f32 %v3974, %v4194
        %v4196 = vpop.f32.mrb[0].mxu0
        %v4197 = vpop.f32.mrb[0].mxu0
        %v4198 = vadd.f32 %v3977, %v4197
        %v4199 = vpop.f32.mrb[0].mxu0
        %4200 = vmatprep.mubr.bf16.mxu0 0
        %4201 = vmatmul.mubr.bf16.gmra.mrb[0].mxu0 %v4066
        %v4202 = vpop.f32.mrb[0].mxu0
        %v4203 = vadd.f32 %v3982, %v4202
        %v4204 = vpop.f32.mrb[0].mxu0
        %v4205 = vpop.f32.mrb[0].mxu0
        %v4206 = vadd.f32 %v3985, %v4205
        %v4207 = vpop.f32.mrb[0].mxu0
        %4208 = vmatprep.mubr.bf16.mxu0 0
        %4209 = vmatmul.mubr.bf16.gmra.mrb[0].mxu0 %v4069
        %v4210 = vpop.f32.mrb[0].mxu0
        %v4211 = vadd.f32 %v3990, %v4210
        %v4212 = vpop.f32.mrb[0].mxu0
        %v4213 = vpop.f32.mrb[0].mxu0
        %v4214 = vadd.f32 %v3993, %v4213
        %v4215 = vpop.f32.mrb[0].mxu0
        %4216 = vmatprep.mubr.bf16.mxu0 0
        %4217 = vmatmul.mubr.bf16.gmra.mrb[0].mxu0 %v4072
        %v4218 = vpop.f32.mrb[0].mxu0
        %v4219 = vadd.f32 %v3998, %v4218
        %v4220 = vpop.f32.mrb[0].mxu0
        %v4221 = vpop.f32.mrb[0].mxu0
        %v4222 = vadd.f32 %v4001, %v4221
        %v4223 = vpop.f32.mrb[0].mxu0
        %4224 = vmatprep.mubr.bf16.mxu0 0
        %4225 = vmatmul.mubr.bf16.gmra.mrb[0].mxu0 %v4075
        %v4226 = vpop.f32.mrb[0].mxu0
        %v4227 = vadd.f32 %v4006, %v4226
        %v4228 = vpop.f32.mrb[0].mxu0
        %v4229 = vpop.f32.mrb[0].mxu0
        %v4230 = vadd.f32 %v4009, %v4229
        %v4231 = vpop.f32.mrb[0].mxu0
        %4232 = vmatprep.mubr.bf16.mxu0 0
        %4233 = vmatmul.mubr.bf16.gmra.mrb[0].mxu0 %v4078
        %v4234 = vpop.f32.mrb[0].mxu0
        %v4235 = vadd.f32 %v4014, %v4234
        %v4236 = vpop.f32.mrb[0].mxu0
        %v4237 = vpop.f32.mrb[0].mxu0
        %v4238 = vadd.f32 %v4017, %v4237
        %v4239 = vpop.f32.mrb[0].mxu0
        %4240 = vdwg.mxu0
        %4241 = vrot.lane.b32.xlu0 %v1020, 64
        %v4242 = vpop.permute.xlu0 %4241
        %4243 = vrot.lane.b32.xlu0 %v1021, 64
        %v4244 = vpop.permute.xlu0 %4243
        %4245 = vrot.lane.b32.xlu0 %v1022, 64
        %v4246 = vpop.permute.xlu0 %4245
        %4247 = vrot.lane.b32.xlu0 %v1023, 64
        %v4248 = vpop.permute.xlu0 %4247
        %4249 = vrot.lane.b32.xlu0 %v1268, 64
        %v4250 = vpop.permute.xlu0 %4249
        %4251 = vrot.lane.b32.xlu0 %v1269, 64
        %v4252 = vpop.permute.xlu0 %4251
        %4253 = vrot.lane.b32.xlu0 %v1270, 64
        %v4254 = vpop.permute.xlu0 %4253
        %4255 = vrot.lane.b32.xlu0 %v1271, 64
        %v4256 = vpop.permute.xlu0 %4255
        %v4258 = vsel %vm1532, %v4242, 0
        %v4261 = vsel %vm1532, %v4244, 0
        %v4264 = vsel %vm1532, %v4246, 0
        %v4267 = vsel %vm1532, %v4248, 0
        %v4270 = vsel %vm1532, %v4250, 0
        %v4273 = vsel %vm1532, %v4252, 0
        %v4276 = vsel %vm1532, %v4254, 0
        %v4279 = vsel %vm1532, %v4256, 0
        %4281 = vmatprep.subr.bf16.mxu0 0
        %4282 = vmatpush1.bf16.xpose.msra.mxu0 %v4270
        %4283 = vmatprep.subr.bf16.mxu0 0
        %4284 = vmatpush1.bf16.xpose.msra.mxu0 %v4273
        %4285 = vmatprep.subr.bf16.mxu0 0
        %4286 = vmatpush1.bf16.xpose.msra.mxu0 %v4276
        %4287 = vmatprep.subr.bf16.mxu0 0
        %4288 = vmatpush1.bf16.xpose.msra.mxu0 %v4279
        %4289 = vmatprep.subr.bf16.mxu0 0
        %4290 = vmatpush1.bf16.xpose.msra.mxu0 0
        %4291 = vmatprep.subr.bf16.mxu0 0
        %4292 = vmatpush1.bf16.xpose.msra.mxu0 0
        %4293 = vmatprep.subr.bf16.mxu0 0
        %4294 = vmatpush1.bf16.xpose.msra.mxu0 0
        %4295 = vmatprep.subr.bf16.mxu0 0
        %4296 = vmatpush1.bf16.xpose.msra.mxu0 0
        %4297 = vmatprep.subr.bf16.mxu0 0
        %4298 = vmatpush1.bf16.xpose.msra.mxu0 0
        %4299 = vmatprep.subr.bf16.mxu0 0
        %4300 = vmatpush1.bf16.xpose.msra.mxu0 0
        %4301 = vmatprep.subr.bf16.mxu0 0
        %4302 = vmatpush1.bf16.xpose.msra.mxu0 0
        %4303 = vmatprep.subr.bf16.mxu0 0
        %4304 = vmatpush1.bf16.xpose.msra.mxu0 0
        %4305 = vmatprep.subr.bf16.mxu0 0
        %4306 = vmatpush1.bf16.xpose.msra.mxu0 0
        %4307 = vmatprep.subr.bf16.mxu0 0
        %4308 = vmatpush1.bf16.xpose.msra.mxu0 0
        %4309 = vmatprep.subr.bf16.mxu0 0
        %4310 = vmatpush1.bf16.xpose.msra.mxu0 0
        %4311 = vmatprep.subr.bf16.mxu0 0
        %4312 = vmatpush1.bf16.xpose.msra.mxu0 0
        %4313 = vmatprep.mubr.bf16.mxu0 0
        %4314 = vmatmul.mubr.bf16.gmra.mrb[0].mxu0 %v4258
        %v4315 = vpop.f32.mrb[0].mxu0
        %v4316 = vadd.f32 0.0, %v4315
        %v4317 = vpop.f32.mrb[0].mxu0
        %v4318 = vpop.f32.mrb[0].mxu0
        %v4319 = vadd.f32 0.0, %v4318
        %v4320 = vpop.f32.mrb[0].mxu0
        %4321 = vmatprep.mubr.bf16.mxu0 0
        %4322 = vmatmul.mubr.bf16.gmra.mrb[0].mxu0 %v4261
        %v4323 = vpop.f32.mrb[0].mxu0
        %v4324 = vadd.f32 0.0, %v4323
        %v4325 = vpop.f32.mrb[0].mxu0
        %v4326 = vpop.f32.mrb[0].mxu0
        %v4327 = vadd.f32 0.0, %v4326
        %v4328 = vpop.f32.mrb[0].mxu0
        %4329 = vmatprep.mubr.bf16.mxu0 0
        %4330 = vmatmul.mubr.bf16.gmra.mrb[0].mxu0 %v4264
        %v4331 = vpop.f32.mrb[0].mxu0
        %v4332 = vadd.f32 0.0, %v4331
        %v4333 = vpop.f32.mrb[0].mxu0
        %v4334 = vpop.f32.mrb[0].mxu0
        %v4335 = vadd.f32 0.0, %v4334
        %v4336 = vpop.f32.mrb[0].mxu0
        %4337 = vmatprep.mubr.bf16.mxu0 0
        %4338 = vmatmul.mubr.bf16.gmra.mrb[0].mxu0 %v4267
        %v4339 = vpop.f32.mrb[0].mxu0
        %v4340 = vadd.f32 0.0, %v4339
        %v4341 = vpop.f32.mrb[0].mxu0
        %v4342 = vpop.f32.mrb[0].mxu0
        %v4343 = vadd.f32 0.0, %v4342
        %v4344 = vpop.f32.mrb[0].mxu0
        %4345 = vdwg.mxu0
        %4346 = vrot.lane.b32.xlu0 %v1024, 64
        %v4347 = vpop.permute.xlu0 %4346
        %4348 = vrot.lane.b32.xlu0 %v1025, 64
        %v4349 = vpop.permute.xlu0 %4348
        %4350 = vrot.lane.b32.xlu0 %v1026, 64
        %v4351 = vpop.permute.xlu0 %4350
        %4352 = vrot.lane.b32.xlu0 %v1027, 64
        %v4353 = vpop.permute.xlu0 %4352
        %4354 = vrot.lane.b32.xlu0 %v1272, 64
        %v4355 = vpop.permute.xlu0 %4354
        %4356 = vrot.lane.b32.xlu0 %v1273, 64
        %v4357 = vpop.permute.xlu0 %4356
        %4358 = vrot.lane.b32.xlu0 %v1274, 64
        %v4359 = vpop.permute.xlu0 %4358
        %4360 = vrot.lane.b32.xlu0 %v1275, 64
        %v4361 = vpop.permute.xlu0 %4360
        %v4363 = vsel %vm1532, %v4347, 0
        %v4366 = vsel %vm1532, %v4349, 0
        %v4369 = vsel %vm1532, %v4351, 0
        %v4372 = vsel %vm1532, %v4353, 0
        %v4375 = vsel %vm1532, %v4355, 0
        %v4378 = vsel %vm1532, %v4357, 0
        %v4381 = vsel %vm1532, %v4359, 0
        %v4384 = vsel %vm1532, %v4361, 0
        %4386 = vmatprep.subr.bf16.mxu0 0
        %4387 = vmatpush1.bf16.xpose.msra.mxu0 %v4375
        %4388 = vmatprep.subr.bf16.mxu0 0
        %4389 = vmatpush1.bf16.xpose.msra.mxu0 %v4378
        %4390 = vmatprep.subr.bf16.mxu0 0
        %4391 = vmatpush1.bf16.xpose.msra.mxu0 %v4381
        %4392 = vmatprep.subr.bf16.mxu0 0
        %4393 = vmatpush1.bf16.xpose.msra.mxu0 %v4384
        %4394 = vmatprep.subr.bf16.mxu0 0
        %4395 = vmatpush1.bf16.xpose.msra.mxu0 0
        %4396 = vmatprep.subr.bf16.mxu0 0
        %4397 = vmatpush1.bf16.xpose.msra.mxu0 0
        %4398 = vmatprep.subr.bf16.mxu0 0
        %4399 = vmatpush1.bf16.xpose.msra.mxu0 0
        %4400 = vmatprep.subr.bf16.mxu0 0
        %4401 = vmatpush1.bf16.xpose.msra.mxu0 0
        %4402 = vmatprep.subr.bf16.mxu0 0
        %4403 = vmatpush1.bf16.xpose.msra.mxu0 0
        %4404 = vmatprep.subr.bf16.mxu0 0
        %4405 = vmatpush1.bf16.xpose.msra.mxu0 0
        %4406 = vmatprep.subr.bf16.mxu0 0
        %4407 = vmatpush1.bf16.xpose.msra.mxu0 0
        %4408 = vmatprep.subr.bf16.mxu0 0
        %4409 = vmatpush1.bf16.xpose.msra.mxu0 0
        %4410 = vmatprep.subr.bf16.mxu0 0
        %4411 = vmatpush1.bf16.xpose.msra.mxu0 0
        %4412 = vmatprep.subr.bf16.mxu0 0
        %4413 = vmatpush1.bf16.xpose.msra.mxu0 0
        %4414 = vmatprep.subr.bf16.mxu0 0
        %4415 = vmatpush1.bf16.xpose.msra.mxu0 0
        %4416 = vmatprep.subr.bf16.mxu0 0
        %4417 = vmatpush1.bf16.xpose.msra.mxu0 0
        %4418 = vmatprep.mubr.bf16.mxu0 0
        %4419 = vmatmul.mubr.bf16.gmra.mrb[0].mxu0 %v4363
        %v4420 = vpop.f32.mrb[0].mxu0
        %v4421 = vadd.f32 0.0, %v4420
        %v4422 = vpop.f32.mrb[0].mxu0
        %v4423 = vpop.f32.mrb[0].mxu0
        %v4424 = vadd.f32 0.0, %v4423
        %v4425 = vpop.f32.mrb[0].mxu0
        %4426 = vmatprep.mubr.bf16.mxu0 0
        %4427 = vmatmul.mubr.bf16.gmra.mrb[0].mxu0 %v4366
        %v4428 = vpop.f32.mrb[0].mxu0
        %v4429 = vadd.f32 0.0, %v4428
        %v4430 = vpop.f32.mrb[0].mxu0
        %v4431 = vpop.f32.mrb[0].mxu0
        %v4432 = vadd.f32 0.0, %v4431
        %v4433 = vpop.f32.mrb[0].mxu0
        %4434 = vmatprep.mubr.bf16.mxu0 0
        %4435 = vmatmul.mubr.bf16.gmra.mrb[0].mxu0 %v4369
        %v4436 = vpop.f32.mrb[0].mxu0
        %v4437 = vadd.f32 0.0, %v4436
        %v4438 = vpop.f32.mrb[0].mxu0
        %v4439 = vpop.f32.mrb[0].mxu0
        %v4440 = vadd.f32 0.0, %v4439
        %v4441 = vpop.f32.mrb[0].mxu0
        %4442 = vmatprep.mubr.bf16.mxu0 0
        %4443 = vmatmul.mubr.bf16.gmra.mrb[0].mxu0 %v4372
        %v4444 = vpop.f32.mrb[0].mxu0
        %v4445 = vadd.f32 0.0, %v4444
        %v4446 = vpop.f32.mrb[0].mxu0
        %v4447 = vpop.f32.mrb[0].mxu0
        %v4448 = vadd.f32 0.0, %v4447
        %v4449 = vpop.f32.mrb[0].mxu0
        %4450 = vdwg.mxu0
        %4451 = vrot.lane.b32.xlu0 %v1028, 64
        %v4452 = vpop.permute.xlu0 %4451
        %4453 = vrot.lane.b32.xlu0 %v1029, 64
        %v4454 = vpop.permute.xlu0 %4453
        %4455 = vrot.lane.b32.xlu0 %v1030, 64
        %v4456 = vpop.permute.xlu0 %4455
        %4457 = vrot.lane.b32.xlu0 %v1031, 64
        %v4458 = vpop.permute.xlu0 %4457
        %4459 = vrot.lane.b32.xlu0 %v1276, 64
        %v4460 = vpop.permute.xlu0 %4459
        %4461 = vrot.lane.b32.xlu0 %v1277, 64
        %v4462 = vpop.permute.xlu0 %4461
        %4463 = vrot.lane.b32.xlu0 %v1278, 64
        %v4464 = vpop.permute.xlu0 %4463
        %4465 = vrot.lane.b32.xlu0 %v1279, 64
        %v4466 = vpop.permute.xlu0 %4465
        %v4468 = vsel %vm1532, %v4452, 0
        %v4471 = vsel %vm1532, %v4454, 0
        %v4474 = vsel %vm1532, %v4456, 0
        %v4477 = vsel %vm1532, %v4458, 0
        %v4480 = vsel %vm1532, %v4460, 0
        %v4483 = vsel %vm1532, %v4462, 0
        %v4486 = vsel %vm1532, %v4464, 0
        %v4489 = vsel %vm1532, %v4466, 0
        %4491 = vmatprep.subr.bf16.mxu0 0
        %4492 = vmatpush1.bf16.xpose.msra.mxu0 %v4480
        %4493 = vmatprep.subr.bf16.mxu0 0
        %4494 = vmatpush1.bf16.xpose.msra.mxu0 %v4483
        %4495 = vmatprep.subr.bf16.mxu0 0
        %4496 = vmatpush1.bf16.xpose.msra.mxu0 %v4486
        %4497 = vmatprep.subr.bf16.mxu0 0
        %4498 = vmatpush1.bf16.xpose.msra.mxu0 %v4489
        %4499 = vmatprep.subr.bf16.mxu0 0
        %4500 = vmatpush1.bf16.xpose.msra.mxu0 0
        %4501 = vmatprep.subr.bf16.mxu0 0
        %4502 = vmatpush1.bf16.xpose.msra.mxu0 0
        %4503 = vmatprep.subr.bf16.mxu0 0
        %4504 = vmatpush1.bf16.xpose.msra.mxu0 0
        %4505 = vmatprep.subr.bf16.mxu0 0
        %4506 = vmatpush1.bf16.xpose.msra.mxu0 0
        %4507 = vmatprep.subr.bf16.mxu0 0
        %4508 = vmatpush1.bf16.xpose.msra.mxu0 0
        %4509 = vmatprep.subr.bf16.mxu0 0
        %4510 = vmatpush1.bf16.xpose.msra.mxu0 0
        %4511 = vmatprep.subr.bf16.mxu0 0
        %4512 = vmatpush1.bf16.xpose.msra.mxu0 0
        %4513 = vmatprep.subr.bf16.mxu0 0
        %4514 = vmatpush1.bf16.xpose.msra.mxu0 0
        %4515 = vmatprep.subr.bf16.mxu0 0
        %4516 = vmatpush1.bf16.xpose.msra.mxu0 0
        %4517 = vmatprep.subr.bf16.mxu0 0
        %4518 = vmatpush1.bf16.xpose.msra.mxu0 0
        %4519 = vmatprep.subr.bf16.mxu0 0
        %4520 = vmatpush1.bf16.xpose.msra.mxu0 0
        %4521 = vmatprep.subr.bf16.mxu0 0
        %4522 = vmatpush1.bf16.xpose.msra.mxu0 0
        %4523 = vmatprep.mubr.bf16.mxu0 0
        %4524 = vmatmul.mubr.bf16.gmra.mrb[0].mxu0 %v4468
        %v4525 = vpop.f32.mrb[0].mxu0
        %v4526 = vadd.f32 0.0, %v4525
        %v4527 = vpop.f32.mrb[0].mxu0
        %v4528 = vpop.f32.mrb[0].mxu0
        %v4529 = vadd.f32 0.0, %v4528
        %v4530 = vpop.f32.mrb[0].mxu0
        %4531 = vmatprep.mubr.bf16.mxu0 0
        %4532 = vmatmul.mubr.bf16.gmra.mrb[0].mxu0 %v4471
        %v4533 = vpop.f32.mrb[0].mxu0
        %v4534 = vadd.f32 0.0, %v4533
        %v4535 = vpop.f32.mrb[0].mxu0
        %v4536 = vpop.f32.mrb[0].mxu0
        %v4537 = vadd.f32 0.0, %v4536
        %v4538 = vpop.f32.mrb[0].mxu0
        %4539 = vmatprep.mubr.bf16.mxu0 0
        %4540 = vmatmul.mubr.bf16.gmra.mrb[0].mxu0 %v4474
        %v4541 = vpop.f32.mrb[0].mxu0
        %v4542 = vadd.f32 0.0, %v4541
        %v4543 = vpop.f32.mrb[0].mxu0
        %v4544 = vpop.f32.mrb[0].mxu0
        %v4545 = vadd.f32 0.0, %v4544
        %v4546 = vpop.f32.mrb[0].mxu0
        %4547 = vmatprep.mubr.bf16.mxu0 0
        %4548 = vmatmul.mubr.bf16.gmra.mrb[0].mxu0 %v4477
        %v4549 = vpop.f32.mrb[0].mxu0
        %v4550 = vadd.f32 0.0, %v4549
        %v4551 = vpop.f32.mrb[0].mxu0
        %v4552 = vpop.f32.mrb[0].mxu0
        %v4553 = vadd.f32 0.0, %v4552
        %v4554 = vpop.f32.mrb[0].mxu0
        %4555 = vdwg.mxu0
        %4556 = vrot.lane.b32.xlu0 %v1032, 64
        %v4557 = vpop.permute.xlu0 %4556
        %4558 = vrot.lane.b32.xlu0 %v1033, 64
        %v4559 = vpop.permute.xlu0 %4558
        %4560 = vrot.lane.b32.xlu0 %v1034, 64
        %v4561 = vpop.permute.xlu0 %4560
        %4562 = vrot.lane.b32.xlu0 %v1035, 64
        %v4563 = vpop.permute.xlu0 %4562
        %4564 = vrot.lane.b32.xlu0 %v1280, 64
        %v4565 = vpop.permute.xlu0 %4564
        %4566 = vrot.lane.b32.xlu0 %v1281, 64
        %v4567 = vpop.permute.xlu0 %4566
        %4568 = vrot.lane.b32.xlu0 %v1282, 64
        %v4569 = vpop.permute.xlu0 %4568
        %4570 = vrot.lane.b32.xlu0 %v1283, 64
        %v4571 = vpop.permute.xlu0 %4570
        %v4573 = vsel %vm1532, %v4557, 0
        %v4576 = vsel %vm1532, %v4559, 0
        %v4579 = vsel %vm1532, %v4561, 0
        %v4582 = vsel %vm1532, %v4563, 0
        %v4585 = vsel %vm1532, %v4565, 0
        %v4588 = vsel %vm1532, %v4567, 0
        %v4591 = vsel %vm1532, %v4569, 0
        %v4594 = vsel %vm1532, %v4571, 0
        %4596 = vmatprep.subr.bf16.mxu0 0
        %4597 = vmatpush1.bf16.xpose.msra.mxu0 %v4585
        %4598 = vmatprep.subr.bf16.mxu0 0
        %4599 = vmatpush1.bf16.xpose.msra.mxu0 %v4588
        %4600 = vmatprep.subr.bf16.mxu0 0
        %4601 = vmatpush1.bf16.xpose.msra.mxu0 %v4591
        %4602 = vmatprep.subr.bf16.mxu0 0
        %4603 = vmatpush1.bf16.xpose.msra.mxu0 %v4594
        %4604 = vmatprep.subr.bf16.mxu0 0
        %4605 = vmatpush1.bf16.xpose.msra.mxu0 0
        %4606 = vmatprep.subr.bf16.mxu0 0
        %4607 = vmatpush1.bf16.xpose.msra.mxu0 0
        %4608 = vmatprep.subr.bf16.mxu0 0
        %4609 = vmatpush1.bf16.xpose.msra.mxu0 0
        %4610 = vmatprep.subr.bf16.mxu0 0
        %4611 = vmatpush1.bf16.xpose.msra.mxu0 0
        %4612 = vmatprep.subr.bf16.mxu0 0
        %4613 = vmatpush1.bf16.xpose.msra.mxu0 0
        %4614 = vmatprep.subr.bf16.mxu0 0
        %4615 = vmatpush1.bf16.xpose.msra.mxu0 0
        %4616 = vmatprep.subr.bf16.mxu0 0
        %4617 = vmatpush1.bf16.xpose.msra.mxu0 0
        %4618 = vmatprep.subr.bf16.mxu0 0
        %4619 = vmatpush1.bf16.xpose.msra.mxu0 0
        %4620 = vmatprep.subr.bf16.mxu0 0
        %4621 = vmatpush1.bf16.xpose.msra.mxu0 0
        %4622 = vmatprep.subr.bf16.mxu0 0
        %4623 = vmatpush1.bf16.xpose.msra.mxu0 0
        %4624 = vmatprep.subr.bf16.mxu0 0
        %4625 = vmatpush1.bf16.xpose.msra.mxu0 0
        %4626 = vmatprep.subr.bf16.mxu0 0
        %4627 = vmatpush1.bf16.xpose.msra.mxu0 0
        %4628 = vmatprep.mubr.bf16.mxu0 0
        %4629 = vmatmul.mubr.bf16.gmra.mrb[0].mxu0 %v4573
        %v4630 = vpop.f32.mrb[0].mxu0
        %v4631 = vadd.f32 0.0, %v4630
        %v4632 = vpop.f32.mrb[0].mxu0
        %v4633 = vpop.f32.mrb[0].mxu0
        %v4634 = vadd.f32 0.0, %v4633
        %v4635 = vpop.f32.mrb[0].mxu0
        %4636 = vmatprep.mubr.bf16.mxu0 0
        %4637 = vmatmul.mubr.bf16.gmra.mrb[0].mxu0 %v4576
        %v4638 = vpop.f32.mrb[0].mxu0
        %v4639 = vadd.f32 0.0, %v4638
        %v4640 = vpop.f32.mrb[0].mxu0
        %v4641 = vpop.f32.mrb[0].mxu0
        %v4642 = vadd.f32 0.0, %v4641
        %v4643 = vpop.f32.mrb[0].mxu0
        %4644 = vmatprep.mubr.bf16.mxu0 0
        %4645 = vmatmul.mubr.bf16.gmra.mrb[0].mxu0 %v4579
        %v4646 = vpop.f32.mrb[0].mxu0
        %v4647 = vadd.f32 0.0, %v4646
        %v4648 = vpop.f32.mrb[0].mxu0
        %v4649 = vpop.f32.mrb[0].mxu0
        %v4650 = vadd.f32 0.0, %v4649
        %v4651 = vpop.f32.mrb[0].mxu0
        %4652 = vmatprep.mubr.bf16.mxu0 0
        %4653 = vmatmul.mubr.bf16.gmra.mrb[0].mxu0 %v4582
        %v4654 = vpop.f32.mrb[0].mxu0
        %v4655 = vadd.f32 0.0, %v4654
        %v4656 = vpop.f32.mrb[0].mxu0
        %v4657 = vpop.f32.mrb[0].mxu0
        %v4658 = vadd.f32 0.0, %v4657
        %v4659 = vpop.f32.mrb[0].mxu0
        %4660 = vdwg.mxu0
        %v4661 = vsel %vm1889, %v4316, -inf
        %4662 = vmax.xlane.f32.xlu0 %v4661
        %v4663 = vpop.xlane.xlu0 %4662
        %v4664 = vsel %vm1889, %v4319, -inf
        %4665 = vmax.xlane.f32.xlu0 %v4664
        %v4666 = vpop.xlane.xlu0 %4665
        %v4667 = vsel %vm1889, %v4324, -inf
        %4668 = vmax.xlane.f32.xlu0 %v4667
        %v4669 = vpop.xlane.xlu0 %4668
        %v4670 = vsel %vm1889, %v4327, -inf
        %4671 = vmax.xlane.f32.xlu0 %v4670
        %v4672 = vpop.xlane.xlu0 %4671
        %v4673 = vsel %vm1889, %v4332, -inf
        %4674 = vmax.xlane.f32.xlu0 %v4673
        %v4675 = vpop.xlane.xlu0 %4674
        %v4676 = vsel %vm1889, %v4335, -inf
        %4677 = vmax.xlane.f32.xlu0 %v4676
        %v4678 = vpop.xlane.xlu0 %4677
        %v4679 = vsel %vm1889, %v4340, -inf
        %4680 = vmax.xlane.f32.xlu0 %v4679
        %v4681 = vpop.xlane.xlu0 %4680
        %v4682 = vsel %vm1889, %v4343, -inf
        %4683 = vmax.xlane.f32.xlu0 %v4682
        %v4684 = vpop.xlane.xlu0 %4683
        %v4685 = vsel %vm1889, %v4421, -inf
        %4686 = vmax.xlane.f32.xlu0 %v4685
        %v4687 = vpop.xlane.xlu0 %4686
        %v4688 = vsel %vm1889, %v4424, -inf
        %4689 = vmax.xlane.f32.xlu0 %v4688
        %v4690 = vpop.xlane.xlu0 %4689
        %v4691 = vsel %vm1889, %v4429, -inf
        %4692 = vmax.xlane.f32.xlu0 %v4691
        %v4693 = vpop.xlane.xlu0 %4692
        %v4694 = vsel %vm1889, %v4432, -inf
        %4695 = vmax.xlane.f32.xlu0 %v4694
        %v4696 = vpop.xlane.xlu0 %4695
        %v4697 = vsel %vm1889, %v4437, -inf
        %4698 = vmax.xlane.f32.xlu0 %v4697
        %v4699 = vpop.xlane.xlu0 %4698
        %v4700 = vsel %vm1889, %v4440, -inf
        %4701 = vmax.xlane.f32.xlu0 %v4700
        %v4702 = vpop.xlane.xlu0 %4701
        %v4703 = vsel %vm1889, %v4445, -inf
        %4704 = vmax.xlane.f32.xlu0 %v4703
        %v4705 = vpop.xlane.xlu0 %4704
        %v4706 = vsel %vm1889, %v4448, -inf
        %4707 = vmax.xlane.f32.xlu0 %v4706
        %v4708 = vpop.xlane.xlu0 %4707
        %v4709 = vsel %vm1889, %v4526, -inf
        %4710 = vmax.xlane.f32.xlu0 %v4709
        %v4711 = vpop.xlane.xlu0 %4710
        %v4712 = vsel %vm1889, %v4529, -inf
        %4713 = vmax.xlane.f32.xlu0 %v4712
        %v4714 = vpop.xlane.xlu0 %4713
        %v4715 = vsel %vm1889, %v4534, -inf
        %4716 = vmax.xlane.f32.xlu0 %v4715
        %v4717 = vpop.xlane.xlu0 %4716
        %v4718 = vsel %vm1889, %v4537, -inf
        %4719 = vmax.xlane.f32.xlu0 %v4718
        %v4720 = vpop.xlane.xlu0 %4719
        %v4721 = vsel %vm1889, %v4542, -inf
        %4722 = vmax.xlane.f32.xlu0 %v4721
        %v4723 = vpop.xlane.xlu0 %4722
        %v4724 = vsel %vm1889, %v4545, -inf
        %4725 = vmax.xlane.f32.xlu0 %v4724
        %v4726 = vpop.xlane.xlu0 %4725
        %v4727 = vsel %vm1889, %v4550, -inf
        %4728 = vmax.xlane.f32.xlu0 %v4727
        %v4729 = vpop.xlane.xlu0 %4728
        %v4730 = vsel %vm1889, %v4553, -inf
        %4731 = vmax.xlane.f32.xlu0 %v4730
        %v4732 = vpop.xlane.xlu0 %4731
        %v4733 = vsel %vm1889, %v4631, -inf
        %4734 = vmax.xlane.f32.xlu0 %v4733
        %v4735 = vpop.xlane.xlu0 %4734
        %v4736 = vsel %vm1889, %v4634, -inf
        %4737 = vmax.xlane.f32.xlu0 %v4736
        %v4738 = vpop.xlane.xlu0 %4737
        %v4739 = vsel %vm1889, %v4639, -inf
        %4740 = vmax.xlane.f32.xlu0 %v4739
        %v4741 = vpop.xlane.xlu0 %4740
        %v4742 = vsel %vm1889, %v4642, -inf
        %4743 = vmax.xlane.f32.xlu0 %v4742
        %v4744 = vpop.xlane.xlu0 %4743
        %v4745 = vsel %vm1889, %v4647, -inf
        %4746 = vmax.xlane.f32.xlu0 %v4745
        %v4747 = vpop.xlane.xlu0 %4746
        %v4748 = vsel %vm1889, %v4650, -inf
        %4749 = vmax.xlane.f32.xlu0 %v4748
        %v4750 = vpop.xlane.xlu0 %4749
        %v4751 = vsel %vm1889, %v4655, -inf
        %4752 = vmax.xlane.f32.xlu0 %v4751
        %v4753 = vpop.xlane.xlu0 %4752
        %v4754 = vsel %vm1889, %v4658, -inf
        %4755 = vmax.xlane.f32.xlu0 %v4754
        %v4756 = vpop.xlane.xlu0 %4755
        %v4757 = vsub.f32 %v4316, %v4663
        %v4758 = vsub.f32 %v4319, %v4666
        %v4759 = vsub.f32 %v4324, %v4669
        %v4760 = vsub.f32 %v4327, %v4672
        %v4761 = vsub.f32 %v4332, %v4675
        %v4762 = vsub.f32 %v4335, %v4678
        %v4763 = vsub.f32 %v4340, %v4681
        %v4764 = vsub.f32 %v4343, %v4684
        %v4765 = vsub.f32 %v4421, %v4687
        %v4766 = vsub.f32 %v4424, %v4690
        %v4767 = vsub.f32 %v4429, %v4693
        %v4768 = vsub.f32 %v4432, %v4696
        %v4769 = vsub.f32 %v4437, %v4699
        %v4770 = vsub.f32 %v4440, %v4702
        %v4771 = vsub.f32 %v4445, %v4705
        %v4772 = vsub.f32 %v4448, %v4708
        %v4773 = vsub.f32 %v4526, %v4711
        %v4774 = vsub.f32 %v4529, %v4714
        %v4775 = vsub.f32 %v4534, %v4717
        %v4776 = vsub.f32 %v4537, %v4720
        %v4777 = vsub.f32 %v4542, %v4723
        %v4778 = vsub.f32 %v4545, %v4726
        %v4779 = vsub.f32 %v4550, %v4729
        %v4780 = vsub.f32 %v4553, %v4732
        %v4781 = vsub.f32 %v4631, %v4735
        %v4782 = vsub.f32 %v4634, %v4738
        %v4783 = vsub.f32 %v4639, %v4741
        %v4784 = vsub.f32 %v4642, %v4744
        %v4785 = vsub.f32 %v4647, %v4747
        %v4786 = vsub.f32 %v4650, %v4750
        %v4787 = vsub.f32 %v4655, %v4753
        %v4788 = vsub.f32 %v4658, %v4756
        %v4789 = vmul.f32 %v4757, 1.442695
        %v4790 = vpow.pop %v4789
        %v4791 = vmul.f32 %v4758, 1.442695
        %v4792 = vpow.pop %v4791
        %v4793 = vmul.f32 %v4759, 1.442695
        %v4794 = vpow.pop %v4793
        %v4795 = vmul.f32 %v4760, 1.442695
        %v4796 = vpow.pop %v4795
        %v4797 = vmul.f32 %v4761, 1.442695
        %v4798 = vpow.pop %v4797
        %v4799 = vmul.f32 %v4762, 1.442695
        %v4800 = vpow.pop %v4799
        %v4801 = vmul.f32 %v4763, 1.442695
        %v4802 = vpow.pop %v4801
        %v4803 = vmul.f32 %v4764, 1.442695
        %v4804 = vpow.pop %v4803
        %v4805 = vmul.f32 %v4765, 1.442695
        %v4806 = vpow.pop %v4805
        %v4807 = vmul.f32 %v4766, 1.442695
        %v4808 = vpow.pop %v4807
        %v4809 = vmul.f32 %v4767, 1.442695
        %v4810 = vpow.pop %v4809
        %v4811 = vmul.f32 %v4768, 1.442695
        %v4812 = vpow.pop %v4811
        %v4813 = vmul.f32 %v4769, 1.442695
        %v4814 = vpow.pop %v4813
        %v4815 = vmul.f32 %v4770, 1.442695
        %v4816 = vpow.pop %v4815
        %v4817 = vmul.f32 %v4771, 1.442695
        %v4818 = vpow.pop %v4817
        %v4819 = vmul.f32 %v4772, 1.442695
        %v4820 = vpow.pop %v4819
        %v4821 = vmul.f32 %v4773, 1.442695
        %v4822 = vpow.pop %v4821
        %v4823 = vmul.f32 %v4774, 1.442695
        %v4824 = vpow.pop %v4823
        %v4825 = vmul.f32 %v4775, 1.442695
        %v4826 = vpow.pop %v4825
        %v4827 = vmul.f32 %v4776, 1.442695
        %v4828 = vpow.pop %v4827
        %v4829 = vmul.f32 %v4777, 1.442695
        %v4830 = vpow.pop %v4829
        %v4831 = vmul.f32 %v4778, 1.442695
        %v4832 = vpow.pop %v4831
        %v4833 = vmul.f32 %v4779, 1.442695
        %v4834 = vpow.pop %v4833
        %v4835 = vmul.f32 %v4780, 1.442695
        %v4836 = vpow.pop %v4835
        %v4837 = vmul.f32 %v4781, 1.442695
        %v4838 = vpow.pop %v4837
        %v4839 = vmul.f32 %v4782, 1.442695
        %v4840 = vpow.pop %v4839
        %v4841 = vmul.f32 %v4783, 1.442695
        %v4842 = vpow.pop %v4841
        %v4843 = vmul.f32 %v4784, 1.442695
        %v4844 = vpow.pop %v4843
        %v4845 = vmul.f32 %v4785, 1.442695
        %v4846 = vpow.pop %v4845
        %v4847 = vmul.f32 %v4786, 1.442695
        %v4848 = vpow.pop %v4847
        %v4849 = vmul.f32 %v4787, 1.442695
        %v4850 = vpow.pop %v4849
        %v4851 = vmul.f32 %v4788, 1.442695
        %v4852 = vpow.pop %v4851
        %v4853 = vsel %vm1889, %v4790, 0.0
        %4854 = vadd.xlane.f32.xlu0 %v4853
        %v4855 = vpop.xlane.xlu0 %4854
        %v4856 = vsel %vm1889, %v4792, 0.0
        %4857 = vadd.xlane.f32.xlu0 %v4856
        %v4858 = vpop.xlane.xlu0 %4857
        %v4859 = vsel %vm1889, %v4794, 0.0
        %4860 = vadd.xlane.f32.xlu0 %v4859
        %v4861 = vpop.xlane.xlu0 %4860
        %v4862 = vsel %vm1889, %v4796, 0.0
        %4863 = vadd.xlane.f32.xlu0 %v4862
        %v4864 = vpop.xlane.xlu0 %4863
        %v4865 = vsel %vm1889, %v4798, 0.0
        %4866 = vadd.xlane.f32.xlu0 %v4865
        %v4867 = vpop.xlane.xlu0 %4866
        %v4868 = vsel %vm1889, %v4800, 0.0
        %4869 = vadd.xlane.f32.xlu0 %v4868
        %v4870 = vpop.xlane.xlu0 %4869
        %v4871 = vsel %vm1889, %v4802, 0.0
        %4872 = vadd.xlane.f32.xlu0 %v4871
        %v4873 = vpop.xlane.xlu0 %4872
        %v4874 = vsel %vm1889, %v4804, 0.0
        %4875 = vadd.xlane.f32.xlu0 %v4874
        %v4876 = vpop.xlane.xlu0 %4875
        %v4877 = vsel %vm1889, %v4806, 0.0
        %4878 = vadd.xlane.f32.xlu0 %v4877
        %v4879 = vpop.xlane.xlu0 %4878
        %v4880 = vsel %vm1889, %v4808, 0.0
        %4881 = vadd.xlane.f32.xlu0 %v4880
        %v4882 = vpop.xlane.xlu0 %4881
        %v4883 = vsel %vm1889, %v4810, 0.0
        %4884 = vadd.xlane.f32.xlu0 %v4883
        %v4885 = vpop.xlane.xlu0 %4884
        %v4886 = vsel %vm1889, %v4812, 0.0
        %4887 = vadd.xlane.f32.xlu0 %v4886
        %v4888 = vpop.xlane.xlu0 %4887
        %v4889 = vsel %vm1889, %v4814, 0.0
        %4890 = vadd.xlane.f32.xlu0 %v4889
        %v4891 = vpop.xlane.xlu0 %4890
        %v4892 = vsel %vm1889, %v4816, 0.0
        %4893 = vadd.xlane.f32.xlu0 %v4892
        %v4894 = vpop.xlane.xlu0 %4893
        %v4895 = vsel %vm1889, %v4818, 0.0
        %4896 = vadd.xlane.f32.xlu0 %v4895
        %v4897 = vpop.xlane.xlu0 %4896
        %v4898 = vsel %vm1889, %v4820, 0.0
        %4899 = vadd.xlane.f32.xlu0 %v4898
        %v4900 = vpop.xlane.xlu0 %4899
        %v4901 = vsel %vm1889, %v4822, 0.0
        %4902 = vadd.xlane.f32.xlu0 %v4901
        %v4903 = vpop.xlane.xlu0 %4902
        %v4904 = vsel %vm1889, %v4824, 0.0
        %4905 = vadd.xlane.f32.xlu0 %v4904
        %v4906 = vpop.xlane.xlu0 %4905
        %v4907 = vsel %vm1889, %v4826, 0.0
        %4908 = vadd.xlane.f32.xlu0 %v4907
        %v4909 = vpop.xlane.xlu0 %4908
        %v4910 = vsel %vm1889, %v4828, 0.0
        %4911 = vadd.xlane.f32.xlu0 %v4910
        %v4912 = vpop.xlane.xlu0 %4911
        %v4913 = vsel %vm1889, %v4830, 0.0
        %4914 = vadd.xlane.f32.xlu0 %v4913
        %v4915 = vpop.xlane.xlu0 %4914
        %v4916 = vsel %vm1889, %v4832, 0.0
        %4917 = vadd.xlane.f32.xlu0 %v4916
        %v4918 = vpop.xlane.xlu0 %4917
        %v4919 = vsel %vm1889, %v4834, 0.0
        %4920 = vadd.xlane.f32.xlu0 %v4919
        %v4921 = vpop.xlane.xlu0 %4920
        %v4922 = vsel %vm1889, %v4836, 0.0
        %4923 = vadd.xlane.f32.xlu0 %v4922
        %v4924 = vpop.xlane.xlu0 %4923
        %v4925 = vsel %vm1889, %v4838, 0.0
        %4926 = vadd.xlane.f32.xlu0 %v4925
        %v4927 = vpop.xlane.xlu0 %4926
        %v4928 = vsel %vm1889, %v4840, 0.0
        %4929 = vadd.xlane.f32.xlu0 %v4928
        %v4930 = vpop.xlane.xlu0 %4929
        %v4931 = vsel %vm1889, %v4842, 0.0
        %4932 = vadd.xlane.f32.xlu0 %v4931
        %v4933 = vpop.xlane.xlu0 %4932
        %v4934 = vsel %vm1889, %v4844, 0.0
        %4935 = vadd.xlane.f32.xlu0 %v4934
        %v4936 = vpop.xlane.xlu0 %4935
        %v4937 = vsel %vm1889, %v4846, 0.0
        %4938 = vadd.xlane.f32.xlu0 %v4937
        %v4939 = vpop.xlane.xlu0 %4938
        %v4940 = vsel %vm1889, %v4848, 0.0
        %4941 = vadd.xlane.f32.xlu0 %v4940
        %v4942 = vpop.xlane.xlu0 %4941
        %v4943 = vsel %vm1889, %v4850, 0.0
        %4944 = vadd.xlane.f32.xlu0 %v4943
        %v4945 = vpop.xlane.xlu0 %4944
        %v4946 = vsel %vm1889, %v4852, 0.0
        %4947 = vadd.xlane.f32.xlu0 %v4946
        %v4948 = vpop.xlane.xlu0 %4947
        %v4949 = vrcp.pop %v4855
        %v4950 = vrcp.pop %v4858
        %v4951 = vrcp.pop %v4861
        %v4952 = vrcp.pop %v4864
        %v4953 = vrcp.pop %v4867
        %v4954 = vrcp.pop %v4870
        %v4955 = vrcp.pop %v4873
        %v4956 = vrcp.pop %v4876
        %v4957 = vrcp.pop %v4879
        %v4958 = vrcp.pop %v4882
        %v4959 = vrcp.pop %v4885
        %v4960 = vrcp.pop %v4888
        %v4961 = vrcp.pop %v4891
        %v4962 = vrcp.pop %v4894
        %v4963 = vrcp.pop %v4897
        %v4964 = vrcp.pop %v4900
        %v4965 = vrcp.pop %v4903
        %v4966 = vrcp.pop %v4906
        %v4967 = vrcp.pop %v4909
        %v4968 = vrcp.pop %v4912
        %v4969 = vrcp.pop %v4915
        %v4970 = vrcp.pop %v4918
        %v4971 = vrcp.pop %v4921
        %v4972 = vrcp.pop %v4924
        %v4973 = vrcp.pop %v4927
        %v4974 = vrcp.pop %v4930
        %v4975 = vrcp.pop %v4933
        %v4976 = vrcp.pop %v4936
        %v4977 = vrcp.pop %v4939
        %v4978 = vrcp.pop %v4942
        %v4979 = vrcp.pop %v4945
        %v4980 = vrcp.pop %v4948
        %v4981 = vmul.f32 %v4790, %v4949
        %v4982 = vmul.f32 %v4792, %v4950
        %v4983 = vmul.f32 %v4794, %v4951
        %v4984 = vmul.f32 %v4796, %v4952
        %v4985 = vmul.f32 %v4798, %v4953
        %v4986 = vmul.f32 %v4800, %v4954
        %v4987 = vmul.f32 %v4802, %v4955
        %v4988 = vmul.f32 %v4804, %v4956
        %v4989 = vmul.f32 %v4806, %v4957
        %v4990 = vmul.f32 %v4808, %v4958
        %v4991 = vmul.f32 %v4810, %v4959
        %v4992 = vmul.f32 %v4812, %v4960
        %v4993 = vmul.f32 %v4814, %v4961
        %v4994 = vmul.f32 %v4816, %v4962
        %v4995 = vmul.f32 %v4818, %v4963
        %v4996 = vmul.f32 %v4820, %v4964
        %v4997 = vmul.f32 %v4822, %v4965
        %v4998 = vmul.f32 %v4824, %v4966
        %v4999 = vmul.f32 %v4826, %v4967
        %v5000 = vmul.f32 %v4828, %v4968
        %v5001 = vmul.f32 %v4830, %v4969
        %v5002 = vmul.f32 %v4832, %v4970
        %v5003 = vmul.f32 %v4834, %v4971
        %v5004 = vmul.f32 %v4836, %v4972
        %v5005 = vmul.f32 %v4838, %v4973
        %v5006 = vmul.f32 %v4840, %v4974
        %v5007 = vmul.f32 %v4842, %v4975
        %v5008 = vmul.f32 %v4844, %v4976
        %v5009 = vmul.f32 %v4846, %v4977
        %v5010 = vmul.f32 %v4848, %v4978
        %v5011 = vmul.f32 %v4850, %v4979
        %v5012 = vmul.f32 %v4852, %v4980
        %v5013 = vpack.c.bf16 %v4982, %v4981
        %v5014 = vpack.c.bf16 %v4984, %v4983
        %v5015 = vpack.c.bf16 %v4986, %v4985
        %v5016 = vpack.c.bf16 %v4988, %v4987
        %v5017 = vpack.c.bf16 %v4990, %v4989
        %v5018 = vpack.c.bf16 %v4992, %v4991
        %v5019 = vpack.c.bf16 %v4994, %v4993
        %v5020 = vpack.c.bf16 %v4996, %v4995
        %v5021 = vpack.c.bf16 %v4998, %v4997
        %v5022 = vpack.c.bf16 %v5000, %v4999
        %v5023 = vpack.c.bf16 %v5002, %v5001
        %v5024 = vpack.c.bf16 %v5004, %v5003
        %v5025 = vpack.c.bf16 %v5006, %v5005
        %v5026 = vpack.c.bf16 %v5008, %v5007
        %v5027 = vpack.c.bf16 %v5010, %v5009
        %v5028 = vpack.c.bf16 %v5012, %v5011
        %5029 = vrot.lane.b32.xlu0 %v1516, 64
        %v5030 = vpop.permute.xlu0 %5029
        %5031 = vrot.lane.b32.xlu0 %v1517, 64
        %v5032 = vpop.permute.xlu0 %5031
        %5033 = vrot.lane.b32.xlu0 %v1518, 64
        %v5034 = vpop.permute.xlu0 %5033
        %5035 = vrot.lane.b32.xlu0 %v1519, 64
        %v5036 = vpop.permute.xlu0 %5035
        %v5042 = vsel %vm1889, %v5013, 0
        %v5045 = vsel %vm1889, %v5014, 0
        %v5048 = vsel %vm1889, %v5015, 0
        %v5051 = vsel %vm1889, %v5016, 0
        %5053 = vmatprep.subr.bf16.mxu0 0
        %5054 = vmatpush1.bf16.msra.mxu0 %v5030
        %5055 = vmatprep.subr.bf16.mxu0 0
        %5056 = vmatpush1.bf16.msra.mxu0 %v5032
        %5057 = vmatprep.subr.bf16.mxu0 0
        %5058 = vmatpush1.bf16.msra.mxu0 %v5034
        %5059 = vmatprep.subr.bf16.mxu0 0
        %5060 = vmatpush1.bf16.msra.mxu0 %v5036
        %5061 = vmatprep.subr.bf16.mxu0 0
        %5062 = vmatpush1.bf16.msra.mxu0 0
        %5063 = vmatprep.subr.bf16.mxu0 0
        %5064 = vmatpush1.bf16.msra.mxu0 0
        %5065 = vmatprep.subr.bf16.mxu0 0
        %5066 = vmatpush1.bf16.msra.mxu0 0
        %5067 = vmatprep.subr.bf16.mxu0 0
        %5068 = vmatpush1.bf16.msra.mxu0 0
        %5069 = vmatprep.subr.bf16.mxu0 0
        %5070 = vmatpush1.bf16.msra.mxu0 0
        %5071 = vmatprep.subr.bf16.mxu0 0
        %5072 = vmatpush1.bf16.msra.mxu0 0
        %5073 = vmatprep.subr.bf16.mxu0 0
        %5074 = vmatpush1.bf16.msra.mxu0 0
        %5075 = vmatprep.subr.bf16.mxu0 0
        %5076 = vmatpush1.bf16.msra.mxu0 0
        %5077 = vmatprep.subr.bf16.mxu0 0
        %5078 = vmatpush1.bf16.msra.mxu0 0
        %5079 = vmatprep.subr.bf16.mxu0 0
        %5080 = vmatpush1.bf16.msra.mxu0 0
        %5081 = vmatprep.subr.bf16.mxu0 0
        %5082 = vmatpush1.bf16.msra.mxu0 0
        %5083 = vmatprep.subr.bf16.mxu0 0
        %5084 = vmatpush1.bf16.msra.mxu0 0
        %5085 = vmatprep.mubr.bf16.mxu0 0
        %5086 = vmatmul.mubr.bf16.gmra.mrb[0].mxu0 %v5042
        %v5087 = vpop.f32.mrb[0].mxu0
        %v5088 = vadd.f32 0.0, %v5087
        %v5089 = vpop.f32.mrb[0].mxu0
        %v5090 = vpop.f32.mrb[0].mxu0
        %v5091 = vadd.f32 0.0, %v5090
        %v5092 = vpop.f32.mrb[0].mxu0
        %5093 = vmatprep.mubr.bf16.mxu0 0
        %5094 = vmatmul.mubr.bf16.gmra.mrb[0].mxu0 %v5045
        %v5095 = vpop.f32.mrb[0].mxu0
        %v5096 = vadd.f32 0.0, %v5095
        %v5097 = vpop.f32.mrb[0].mxu0
        %v5098 = vpop.f32.mrb[0].mxu0
        %v5099 = vadd.f32 0.0, %v5098
        %v5100 = vpop.f32.mrb[0].mxu0
        %5101 = vmatprep.mubr.bf16.mxu0 0
        %5102 = vmatmul.mubr.bf16.gmra.mrb[0].mxu0 %v5048
        %v5103 = vpop.f32.mrb[0].mxu0
        %v5104 = vadd.f32 0.0, %v5103
        %v5105 = vpop.f32.mrb[0].mxu0
        %v5106 = vpop.f32.mrb[0].mxu0
        %v5107 = vadd.f32 0.0, %v5106
        %v5108 = vpop.f32.mrb[0].mxu0
        %5109 = vmatprep.mubr.bf16.mxu0 0
        %5110 = vmatmul.mubr.bf16.gmra.mrb[0].mxu0 %v5051
        %v5111 = vpop.f32.mrb[0].mxu0
        %v5112 = vadd.f32 0.0, %v5111
        %v5113 = vpop.f32.mrb[0].mxu0
        %v5114 = vpop.f32.mrb[0].mxu0
        %v5115 = vadd.f32 0.0, %v5114
        %v5116 = vpop.f32.mrb[0].mxu0
        %5117 = vdwg.mxu0
        %5118 = vrot.lane.b32.xlu0 %v1520, 64
        %v5119 = vpop.permute.xlu0 %5118
        %5120 = vrot.lane.b32.xlu0 %v1521, 64
        %v5121 = vpop.permute.xlu0 %5120
        %5122 = vrot.lane.b32.xlu0 %v1522, 64
        %v5123 = vpop.permute.xlu0 %5122
        %5124 = vrot.lane.b32.xlu0 %v1523, 64
        %v5125 = vpop.permute.xlu0 %5124
        %v5131 = vsel %vm1889, %v5017, 0
        %v5134 = vsel %vm1889, %v5018, 0
        %v5137 = vsel %vm1889, %v5019, 0
        %v5140 = vsel %vm1889, %v5020, 0
        %5142 = vmatprep.subr.bf16.mxu0 0
        %5143 = vmatpush1.bf16.msra.mxu0 %v5119
        %5144 = vmatprep.subr.bf16.mxu0 0
        %5145 = vmatpush1.bf16.msra.mxu0 %v5121
        %5146 = vmatprep.subr.bf16.mxu0 0
        %5147 = vmatpush1.bf16.msra.mxu0 %v5123
        %5148 = vmatprep.subr.bf16.mxu0 0
        %5149 = vmatpush1.bf16.msra.mxu0 %v5125
        %5150 = vmatprep.subr.bf16.mxu0 0
        %5151 = vmatpush1.bf16.msra.mxu0 0
        %5152 = vmatprep.subr.bf16.mxu0 0
        %5153 = vmatpush1.bf16.msra.mxu0 0
        %5154 = vmatprep.subr.bf16.mxu0 0
        %5155 = vmatpush1.bf16.msra.mxu0 0
        %5156 = vmatprep.subr.bf16.mxu0 0
        %5157 = vmatpush1.bf16.msra.mxu0 0
        %5158 = vmatprep.subr.bf16.mxu0 0
        %5159 = vmatpush1.bf16.msra.mxu0 0
        %5160 = vmatprep.subr.bf16.mxu0 0
        %5161 = vmatpush1.bf16.msra.mxu0 0
        %5162 = vmatprep.subr.bf16.mxu0 0
        %5163 = vmatpush1.bf16.msra.mxu0 0
        %5164 = vmatprep.subr.bf16.mxu0 0
        %5165 = vmatpush1.bf16.msra.mxu0 0
        %5166 = vmatprep.subr.bf16.mxu0 0
        %5167 = vmatpush1.bf16.msra.mxu0 0
        %5168 = vmatprep.subr.bf16.mxu0 0
        %5169 = vmatpush1.bf16.msra.mxu0 0
        %5170 = vmatprep.subr.bf16.mxu0 0
        %5171 = vmatpush1.bf16.msra.mxu0 0
        %5172 = vmatprep.subr.bf16.mxu0 0
        %5173 = vmatpush1.bf16.msra.mxu0 0
        %5174 = vmatprep.mubr.bf16.mxu0 0
        %5175 = vmatmul.mubr.bf16.gmra.mrb[0].mxu0 %v5131
        %v5176 = vpop.f32.mrb[0].mxu0
        %v5177 = vadd.f32 0.0, %v5176
        %v5178 = vpop.f32.mrb[0].mxu0
        %v5179 = vpop.f32.mrb[0].mxu0
        %v5180 = vadd.f32 0.0, %v5179
        %v5181 = vpop.f32.mrb[0].mxu0
        %5182 = vmatprep.mubr.bf16.mxu0 0
        %5183 = vmatmul.mubr.bf16.gmra.mrb[0].mxu0 %v5134
        %v5184 = vpop.f32.mrb[0].mxu0
        %v5185 = vadd.f32 0.0, %v5184
        %v5186 = vpop.f32.mrb[0].mxu0
        %v5187 = vpop.f32.mrb[0].mxu0
        %v5188 = vadd.f32 0.0, %v5187
        %v5189 = vpop.f32.mrb[0].mxu0
        %5190 = vmatprep.mubr.bf16.mxu0 0
        %5191 = vmatmul.mubr.bf16.gmra.mrb[0].mxu0 %v5137
        %v5192 = vpop.f32.mrb[0].mxu0
        %v5193 = vadd.f32 0.0, %v5192
        %v5194 = vpop.f32.mrb[0].mxu0
        %v5195 = vpop.f32.mrb[0].mxu0
        %v5196 = vadd.f32 0.0, %v5195
        %v5197 = vpop.f32.mrb[0].mxu0
        %5198 = vmatprep.mubr.bf16.mxu0 0
        %5199 = vmatmul.mubr.bf16.gmra.mrb[0].mxu0 %v5140
        %v5200 = vpop.f32.mrb[0].mxu0
        %v5201 = vadd.f32 0.0, %v5200
        %v5202 = vpop.f32.mrb[0].mxu0
        %v5203 = vpop.f32.mrb[0].mxu0
        %v5204 = vadd.f32 0.0, %v5203
        %v5205 = vpop.f32.mrb[0].mxu0
        %5206 = vdwg.mxu0
        %5207 = vrot.lane.b32.xlu0 %v1524, 64
        %v5208 = vpop.permute.xlu0 %5207
        %5209 = vrot.lane.b32.xlu0 %v1525, 64
        %v5210 = vpop.permute.xlu0 %5209
        %5211 = vrot.lane.b32.xlu0 %v1526, 64
        %v5212 = vpop.permute.xlu0 %5211
        %5213 = vrot.lane.b32.xlu0 %v1527, 64
        %v5214 = vpop.permute.xlu0 %5213
        %v5220 = vsel %vm1889, %v5021, 0
        %v5223 = vsel %vm1889, %v5022, 0
        %v5226 = vsel %vm1889, %v5023, 0
        %v5229 = vsel %vm1889, %v5024, 0
        %5231 = vmatprep.subr.bf16.mxu0 0
        %5232 = vmatpush1.bf16.msra.mxu0 %v5208
        %5233 = vmatprep.subr.bf16.mxu0 0
        %5234 = vmatpush1.bf16.msra.mxu0 %v5210
        %5235 = vmatprep.subr.bf16.mxu0 0
        %5236 = vmatpush1.bf16.msra.mxu0 %v5212
        %5237 = vmatprep.subr.bf16.mxu0 0
        %5238 = vmatpush1.bf16.msra.mxu0 %v5214
        %5239 = vmatprep.subr.bf16.mxu0 0
        %5240 = vmatpush1.bf16.msra.mxu0 0
        %5241 = vmatprep.subr.bf16.mxu0 0
        %5242 = vmatpush1.bf16.msra.mxu0 0
        %5243 = vmatprep.subr.bf16.mxu0 0
        %5244 = vmatpush1.bf16.msra.mxu0 0
        %5245 = vmatprep.subr.bf16.mxu0 0
        %5246 = vmatpush1.bf16.msra.mxu0 0
        %5247 = vmatprep.subr.bf16.mxu0 0
        %5248 = vmatpush1.bf16.msra.mxu0 0
        %5249 = vmatprep.subr.bf16.mxu0 0
        %5250 = vmatpush1.bf16.msra.mxu0 0
        %5251 = vmatprep.subr.bf16.mxu0 0
        %5252 = vmatpush1.bf16.msra.mxu0 0
        %5253 = vmatprep.subr.bf16.mxu0 0
        %5254 = vmatpush1.bf16.msra.mxu0 0
        %5255 = vmatprep.subr.bf16.mxu0 0
        %5256 = vmatpush1.bf16.msra.mxu0 0
        %5257 = vmatprep.subr.bf16.mxu0 0
        %5258 = vmatpush1.bf16.msra.mxu0 0
        %5259 = vmatprep.subr.bf16.mxu0 0
        %5260 = vmatpush1.bf16.msra.mxu0 0
        %5261 = vmatprep.subr.bf16.mxu0 0
        %5262 = vmatpush1.bf16.msra.mxu0 0
        %5263 = vmatprep.mubr.bf16.mxu0 0
        %5264 = vmatmul.mubr.bf16.gmra.mrb[0].mxu0 %v5220
        %v5265 = vpop.f32.mrb[0].mxu0
        %v5266 = vadd.f32 0.0, %v5265
        %v5267 = vpop.f32.mrb[0].mxu0
        %v5268 = vpop.f32.mrb[0].mxu0
        %v5269 = vadd.f32 0.0, %v5268
        %v5270 = vpop.f32.mrb[0].mxu0
        %5271 = vmatprep.mubr.bf16.mxu0 0
        %5272 = vmatmul.mubr.bf16.gmra.mrb[0].mxu0 %v5223
        %v5273 = vpop.f32.mrb[0].mxu0
        %v5274 = vadd.f32 0.0, %v5273
        %v5275 = vpop.f32.mrb[0].mxu0
        %v5276 = vpop.f32.mrb[0].mxu0
        %v5277 = vadd.f32 0.0, %v5276
        %v5278 = vpop.f32.mrb[0].mxu0
        %5279 = vmatprep.mubr.bf16.mxu0 0
        %5280 = vmatmul.mubr.bf16.gmra.mrb[0].mxu0 %v5226
        %v5281 = vpop.f32.mrb[0].mxu0
        %v5282 = vadd.f32 0.0, %v5281
        %v5283 = vpop.f32.mrb[0].mxu0
        %v5284 = vpop.f32.mrb[0].mxu0
        %v5285 = vadd.f32 0.0, %v5284
        %v5286 = vpop.f32.mrb[0].mxu0
        %5287 = vmatprep.mubr.bf16.mxu0 0
        %5288 = vmatmul.mubr.bf16.gmra.mrb[0].mxu0 %v5229
        %v5289 = vpop.f32.mrb[0].mxu0
        %v5290 = vadd.f32 0.0, %v5289
        %v5291 = vpop.f32.mrb[0].mxu0
        %v5292 = vpop.f32.mrb[0].mxu0
        %v5293 = vadd.f32 0.0, %v5292
        %v5294 = vpop.f32.mrb[0].mxu0
        %5295 = vdwg.mxu0
        %5296 = vrot.lane.b32.xlu0 %v1528, 64
        %v5297 = vpop.permute.xlu0 %5296
        %5298 = vrot.lane.b32.xlu0 %v1529, 64
        %v5299 = vpop.permute.xlu0 %5298
        %5300 = vrot.lane.b32.xlu0 %v1530, 64
        %v5301 = vpop.permute.xlu0 %5300
        %5302 = vrot.lane.b32.xlu0 %v1531, 64
        %v5303 = vpop.permute.xlu0 %5302
        %v5309 = vsel %vm1889, %v5025, 0
        %v5312 = vsel %vm1889, %v5026, 0
        %v5315 = vsel %vm1889, %v5027, 0
        %v5318 = vsel %vm1889, %v5028, 0
        %5320 = vmatprep.subr.bf16.mxu0 0
        %5321 = vmatpush1.bf16.msra.mxu0 %v5297
        %5322 = vmatprep.subr.bf16.mxu0 0
        %5323 = vmatpush1.bf16.msra.mxu0 %v5299
        %5324 = vmatprep.subr.bf16.mxu0 0
        %5325 = vmatpush1.bf16.msra.mxu0 %v5301
        %5326 = vmatprep.subr.bf16.mxu0 0
        %5327 = vmatpush1.bf16.msra.mxu0 %v5303
        %5328 = vmatprep.subr.bf16.mxu0 0
        %5329 = vmatpush1.bf16.msra.mxu0 0
        %5330 = vmatprep.subr.bf16.mxu0 0
        %5331 = vmatpush1.bf16.msra.mxu0 0
        %5332 = vmatprep.subr.bf16.mxu0 0
        %5333 = vmatpush1.bf16.msra.mxu0 0
        %5334 = vmatprep.subr.bf16.mxu0 0
        %5335 = vmatpush1.bf16.msra.mxu0 0
        %5336 = vmatprep.subr.bf16.mxu0 0
        %5337 = vmatpush1.bf16.msra.mxu0 0
        %5338 = vmatprep.subr.bf16.mxu0 0
        %5339 = vmatpush1.bf16.msra.mxu0 0
        %5340 = vmatprep.subr.bf16.mxu0 0
        %5341 = vmatpush1.bf16.msra.mxu0 0
        %5342 = vmatprep.subr.bf16.mxu0 0
        %5343 = vmatpush1.bf16.msra.mxu0 0
        %5344 = vmatprep.subr.bf16.mxu0 0
        %5345 = vmatpush1.bf16.msra.mxu0 0
        %5346 = vmatprep.subr.bf16.mxu0 0
        %5347 = vmatpush1.bf16.msra.mxu0 0
        %5348 = vmatprep.subr.bf16.mxu0 0
        %5349 = vmatpush1.bf16.msra.mxu0 0
        %5350 = vmatprep.subr.bf16.mxu0 0
        %5351 = vmatpush1.bf16.msra.mxu0 0
        %5352 = vmatprep.mubr.bf16.mxu0 0
        %5353 = vmatmul.mubr.bf16.gmra.mrb[0].mxu0 %v5309
        %v5354 = vpop.f32.mrb[0].mxu0
        %v5355 = vadd.f32 0.0, %v5354
        %v5356 = vpop.f32.mrb[0].mxu0
        %v5357 = vpop.f32.mrb[0].mxu0
        %v5358 = vadd.f32 0.0, %v5357
        %v5359 = vpop.f32.mrb[0].mxu0
        %5360 = vmatprep.mubr.bf16.mxu0 0
        %5361 = vmatmul.mubr.bf16.gmra.mrb[0].mxu0 %v5312
        %v5362 = vpop.f32.mrb[0].mxu0
        %v5363 = vadd.f32 0.0, %v5362
        %v5364 = vpop.f32.mrb[0].mxu0
        %v5365 = vpop.f32.mrb[0].mxu0
        %v5366 = vadd.f32 0.0, %v5365
        %v5367 = vpop.f32.mrb[0].mxu0
        %5368 = vmatprep.mubr.bf16.mxu0 0
        %5369 = vmatmul.mubr.bf16.gmra.mrb[0].mxu0 %v5315
        %v5370 = vpop.f32.mrb[0].mxu0
        %v5371 = vadd.f32 0.0, %v5370
        %v5372 = vpop.f32.mrb[0].mxu0
        %v5373 = vpop.f32.mrb[0].mxu0
        %v5374 = vadd.f32 0.0, %v5373
        %v5375 = vpop.f32.mrb[0].mxu0
        %5376 = vmatprep.mubr.bf16.mxu0 0
        %5377 = vmatmul.mubr.bf16.gmra.mrb[0].mxu0 %v5318
        %v5378 = vpop.f32.mrb[0].mxu0
        %v5379 = vadd.f32 0.0, %v5378
        %v5380 = vpop.f32.mrb[0].mxu0
        %v5381 = vpop.f32.mrb[0].mxu0
        %v5382 = vadd.f32 0.0, %v5381
        %v5383 = vpop.f32.mrb[0].mxu0
        %5384 = vdwg.mxu0
        %v5385 = vpack.c.bf16 %v5091, %v5088
        %v5386 = vpack.c.bf16 %v5099, %v5096
        %v5387 = vpack.c.bf16 %v5107, %v5104
        %v5388 = vpack.c.bf16 %v5115, %v5112
        %v5389 = vpack.c.bf16 %v5180, %v5177
        %v5390 = vpack.c.bf16 %v5188, %v5185
        %v5391 = vpack.c.bf16 %v5196, %v5193
        %v5392 = vpack.c.bf16 %v5204, %v5201
        %v5393 = vpack.c.bf16 %v5269, %v5266
        %v5394 = vpack.c.bf16 %v5277, %v5274
        %v5395 = vpack.c.bf16 %v5285, %v5282
        %v5396 = vpack.c.bf16 %v5293, %v5290
        %v5397 = vpack.c.bf16 %v5358, %v5355
        %v5398 = vpack.c.bf16 %v5366, %v5363
        %v5399 = vpack.c.bf16 %v5374, %v5371
        %v5400 = vpack.c.bf16 %v5382, %v5379
        %s5401 = scalar_lea.vmem [#allocation11], 32
        %v5402 = vld [vmem:[%s5401] sm:$0xf]
        %v5403 = vld [vmem:[%s5401 + $0x4] sm:$0xf]
        %v5404 = vld [vmem:[%s5401 + $0x8] sm:$0xf]
        %v5405 = vld [vmem:[%s5401 + $0xc] sm:$0xf]
        %v5410 = vunpack.c.l.b16 %v5402
        %v5411 = vunpack.c.l.b16 %v5403
        %v5412 = vunpack.c.l.b16 %v5404
        %v5413 = vunpack.c.l.b16 %v5405
        %v5414 = vpack.c.b16 %v5411, %v5410
        %v5415 = vpack.c.b16 %v5413, %v5412
        %v5419 = vsel %vm1532, %v5385, 0
        %v5422 = vsel %vm1532, %v5386, 0
        %v5425 = vsel %vm1532, %v5387, 0
        %v5428 = vsel %vm1532, %v5388, 0
        %v5431 = vsel %vm1532, %v5389, 0
        %v5434 = vsel %vm1532, %v5390, 0
        %v5437 = vsel %vm1532, %v5391, 0
        %v5440 = vsel %vm1532, %v5392, 0
        %v5443 = vsel %vm1532, %v5393, 0
        %v5446 = vsel %vm1532, %v5394, 0
        %v5449 = vsel %vm1532, %v5395, 0
        %v5452 = vsel %vm1532, %v5396, 0
        %v5455 = vsel %vm1532, %v5397, 0
        %v5458 = vsel %vm1532, %v5398, 0
        %v5461 = vsel %vm1532, %v5399, 0
        %v5464 = vsel %vm1532, %v5400, 0
        %5466 = vmatprep.subr.bf16.mxu0 0
        %5467 = vmatpush1.bf16.msra.mxu0 %v5414
        %5468 = vmatprep.subr.bf16.mxu0 0
        %5469 = vmatpush1.bf16.msra.mxu0 %v5415
        %5470 = vmatprep.subr.bf16.mxu0 0
        %5471 = vmatpush1.bf16.msra.mxu0 0
        %5472 = vmatprep.subr.bf16.mxu0 0
        %5473 = vmatpush1.bf16.msra.mxu0 0
        %5474 = vmatprep.subr.bf16.mxu0 0
        %5475 = vmatpush1.bf16.msra.mxu0 0
        %5476 = vmatprep.subr.bf16.mxu0 0
        %5477 = vmatpush1.bf16.msra.mxu0 0
        %5478 = vmatprep.subr.bf16.mxu0 0
        %5479 = vmatpush1.bf16.msra.mxu0 0
        %5480 = vmatprep.subr.bf16.mxu0 0
        %5481 = vmatpush1.bf16.msra.mxu0 0
        %5482 = vmatprep.subr.bf16.mxu0 0
        %5483 = vmatpush1.bf16.msra.mxu0 0
        %5484 = vmatprep.subr.bf16.mxu0 0
        %5485 = vmatpush1.bf16.msra.mxu0 0
        %5486 = vmatprep.subr.bf16.mxu0 0
        %5487 = vmatpush1.bf16.msra.mxu0 0
        %5488 = vmatprep.subr.bf16.mxu0 0
        %5489 = vmatpush1.bf16.msra.mxu0 0
        %5490 = vmatprep.subr.bf16.mxu0 0
        %5491 = vmatpush1.bf16.msra.mxu0 0
        %5492 = vmatprep.subr.bf16.mxu0 0
        %5493 = vmatpush1.bf16.msra.mxu0 0
        %5494 = vmatprep.subr.bf16.mxu0 0
        %5495 = vmatpush1.bf16.msra.mxu0 0
        %5496 = vmatprep.subr.bf16.mxu0 0
        %5497 = vmatpush1.bf16.msra.mxu0 0
        %5498 = vmatprep.mubr.bf16.mxu0 0
        %5499 = vmatmul.mubr.bf16.gmra.mrb[0].mxu0 %v5419
        %v5500 = vpop.f32.mrb[0].mxu0
        %v5501 = vadd.f32 0.0, %v5500
        %v5502 = vpop.f32.mrb[0].mxu0
        %v5503 = vpop.f32.mrb[0].mxu0
        %v5504 = vadd.f32 0.0, %v5503
        %v5505 = vpop.f32.mrb[0].mxu0
        %5506 = vmatprep.mubr.bf16.mxu0 0
        %5507 = vmatmul.mubr.bf16.gmra.mrb[0].mxu0 %v5422
        %v5508 = vpop.f32.mrb[0].mxu0
        %v5509 = vadd.f32 0.0, %v5508
        %v5510 = vpop.f32.mrb[0].mxu0
        %v5511 = vpop.f32.mrb[0].mxu0
        %v5512 = vadd.f32 0.0, %v5511
        %v5513 = vpop.f32.mrb[0].mxu0
        %5514 = vmatprep.mubr.bf16.mxu0 0
        %5515 = vmatmul.mubr.bf16.gmra.mrb[0].mxu0 %v5425
        %v5516 = vpop.f32.mrb[0].mxu0
        %v5517 = vadd.f32 0.0, %v5516
        %v5518 = vpop.f32.mrb[0].mxu0
        %v5519 = vpop.f32.mrb[0].mxu0
        %v5520 = vadd.f32 0.0, %v5519
        %v5521 = vpop.f32.mrb[0].mxu0
        %5522 = vmatprep.mubr.bf16.mxu0 0
        %5523 = vmatmul.mubr.bf16.gmra.mrb[0].mxu0 %v5428
        %v5524 = vpop.f32.mrb[0].mxu0
        %v5525 = vadd.f32 0.0, %v5524
        %v5526 = vpop.f32.mrb[0].mxu0
        %v5527 = vpop.f32.mrb[0].mxu0
        %v5528 = vadd.f32 0.0, %v5527
        %v5529 = vpop.f32.mrb[0].mxu0
        %5530 = vmatprep.mubr.bf16.mxu0 0
        %5531 = vmatmul.mubr.bf16.gmra.mrb[0].mxu0 %v5431
        %v5532 = vpop.f32.mrb[0].mxu0
        %v5533 = vadd.f32 0.0, %v5532
        %v5534 = vpop.f32.mrb[0].mxu0
        %v5535 = vpop.f32.mrb[0].mxu0
        %v5536 = vadd.f32 0.0, %v5535
        %v5537 = vpop.f32.mrb[0].mxu0
        %5538 = vmatprep.mubr.bf16.mxu0 0
        %5539 = vmatmul.mubr.bf16.gmra.mrb[0].mxu0 %v5434
        %v5540 = vpop.f32.mrb[0].mxu0
        %v5541 = vadd.f32 0.0, %v5540
        %v5542 = vpop.f32.mrb[0].mxu0
        %v5543 = vpop.f32.mrb[0].mxu0
        %v5544 = vadd.f32 0.0, %v5543
        %v5545 = vpop.f32.mrb[0].mxu0
        %5546 = vmatprep.mubr.bf16.mxu0 0
        %5547 = vmatmul.mubr.bf16.gmra.mrb[0].mxu0 %v5437
        %v5548 = vpop.f32.mrb[0].mxu0
        %v5549 = vadd.f32 0.0, %v5548
        %v5550 = vpop.f32.mrb[0].mxu0
        %v5551 = vpop.f32.mrb[0].mxu0
        %v5552 = vadd.f32 0.0, %v5551
        %v5553 = vpop.f32.mrb[0].mxu0
        %5554 = vmatprep.mubr.bf16.mxu0 0
        %5555 = vmatmul.mubr.bf16.gmra.mrb[0].mxu0 %v5440
        %v5556 = vpop.f32.mrb[0].mxu0
        %v5557 = vadd.f32 0.0, %v5556
        %v5558 = vpop.f32.mrb[0].mxu0
        %v5559 = vpop.f32.mrb[0].mxu0
        %v5560 = vadd.f32 0.0, %v5559
        %v5561 = vpop.f32.mrb[0].mxu0
        %5562 = vmatprep.mubr.bf16.mxu0 0
        %5563 = vmatmul.mubr.bf16.gmra.mrb[0].mxu0 %v5443
        %v5564 = vpop.f32.mrb[0].mxu0
        %v5565 = vadd.f32 0.0, %v5564
        %v5566 = vpop.f32.mrb[0].mxu0
        %v5567 = vpop.f32.mrb[0].mxu0
        %v5568 = vadd.f32 0.0, %v5567
        %v5569 = vpop.f32.mrb[0].mxu0
        %5570 = vmatprep.mubr.bf16.mxu0 0
        %5571 = vmatmul.mubr.bf16.gmra.mrb[0].mxu0 %v5446
        %v5572 = vpop.f32.mrb[0].mxu0
        %v5573 = vadd.f32 0.0, %v5572
        %v5574 = vpop.f32.mrb[0].mxu0
        %v5575 = vpop.f32.mrb[0].mxu0
        %v5576 = vadd.f32 0.0, %v5575
        %v5577 = vpop.f32.mrb[0].mxu0
        %5578 = vmatprep.mubr.bf16.mxu0 0
        %5579 = vmatmul.mubr.bf16.gmra.mrb[0].mxu0 %v5449
        %v5580 = vpop.f32.mrb[0].mxu0
        %v5581 = vadd.f32 0.0, %v5580
        %v5582 = vpop.f32.mrb[0].mxu0
        %v5583 = vpop.f32.mrb[0].mxu0
        %v5584 = vadd.f32 0.0, %v5583
        %v5585 = vpop.f32.mrb[0].mxu0
        %5586 = vmatprep.mubr.bf16.mxu0 0
        %5587 = vmatmul.mubr.bf16.gmra.mrb[0].mxu0 %v5452
        %v5588 = vpop.f32.mrb[0].mxu0
        %v5589 = vadd.f32 0.0, %v5588
        %v5590 = vpop.f32.mrb[0].mxu0
        %v5591 = vpop.f32.mrb[0].mxu0
        %v5592 = vadd.f32 0.0, %v5591
        %v5593 = vpop.f32.mrb[0].mxu0
        %5594 = vmatprep.mubr.bf16.mxu0 0
        %5595 = vmatmul.mubr.bf16.gmra.mrb[0].mxu0 %v5455
        %v5596 = vpop.f32.mrb[0].mxu0
        %v5597 = vadd.f32 0.0, %v5596
        %v5598 = vpop.f32.mrb[0].mxu0
        %v5599 = vpop.f32.mrb[0].mxu0
        %v5600 = vadd.f32 0.0, %v5599
        %v5601 = vpop.f32.mrb[0].mxu0
        %5602 = vmatprep.mubr.bf16.mxu0 0
        %5603 = vmatmul.mubr.bf16.gmra.mrb[0].mxu0 %v5458
        %v5604 = vpop.f32.mrb[0].mxu0
        %v5605 = vadd.f32 0.0, %v5604
        %v5606 = vpop.f32.mrb[0].mxu0
        %v5607 = vpop.f32.mrb[0].mxu0
        %v5608 = vadd.f32 0.0, %v5607
        %v5609 = vpop.f32.mrb[0].mxu0
        %5610 = vmatprep.mubr.bf16.mxu0 0
        %5611 = vmatmul.mubr.bf16.gmra.mrb[0].mxu0 %v5461
        %v5612 = vpop.f32.mrb[0].mxu0
        %v5613 = vadd.f32 0.0, %v5612
        %v5614 = vpop.f32.mrb[0].mxu0
        %v5615 = vpop.f32.mrb[0].mxu0
        %v5616 = vadd.f32 0.0, %v5615
        %v5617 = vpop.f32.mrb[0].mxu0
        %5618 = vmatprep.mubr.bf16.mxu0 0
        %5619 = vmatmul.mubr.bf16.gmra.mrb[0].mxu0 %v5464
        %v5620 = vpop.f32.mrb[0].mxu0
        %v5621 = vadd.f32 0.0, %v5620
        %v5622 = vpop.f32.mrb[0].mxu0
        %v5623 = vpop.f32.mrb[0].mxu0
        %v5624 = vadd.f32 0.0, %v5623
        %v5625 = vpop.f32.mrb[0].mxu0
        %5626 = vdwg.mxu0
        %v5627 = vadd.f32 %v4115, %v5501
        %v5628 = vadd.f32 %v4118, %v5504
        %v5629 = vadd.f32 %v4123, %v5509
        %v5630 = vadd.f32 %v4126, %v5512
        %v5631 = vadd.f32 %v4131, %v5517
        %v5632 = vadd.f32 %v4134, %v5520
        %v5633 = vadd.f32 %v4139, %v5525
        %v5634 = vadd.f32 %v4142, %v5528
        %v5635 = vadd.f32 %v4147, %v5533
        %v5636 = vadd.f32 %v4150, %v5536
        %v5637 = vadd.f32 %v4155, %v5541
        %v5638 = vadd.f32 %v4158, %v5544
        %v5639 = vadd.f32 %v4163, %v5549
        %v5640 = vadd.f32 %v4166, %v5552
        %v5641 = vadd.f32 %v4171, %v5557
        %v5642 = vadd.f32 %v4174, %v5560
        %v5643 = vadd.f32 %v4179, %v5565
        %v5644 = vadd.f32 %v4182, %v5568
        %v5645 = vadd.f32 %v4187, %v5573
        %v5646 = vadd.f32 %v4190, %v5576
        %v5647 = vadd.f32 %v4195, %v5581
        %v5648 = vadd.f32 %v4198, %v5584
        %v5649 = vadd.f32 %v4203, %v5589
        %v5650 = vadd.f32 %v4206, %v5592
        %v5651 = vadd.f32 %v4211, %v5597
        %v5652 = vadd.f32 %v4214, %v5600
        %v5653 = vadd.f32 %v4219, %v5605
        %v5654 = vadd.f32 %v4222, %v5608
        %v5655 = vadd.f32 %v4227, %v5613
        %v5656 = vadd.f32 %v4230, %v5616
        %v5657 = vadd.f32 %v4235, %v5621
        %v5658 = vadd.f32 %v4238, %v5624
        %5659 = vrot.lane.b32.xlu0 %v1020, 32
        %v5660 = vpop.permute.xlu0 %5659
        %5661 = vrot.lane.b32.xlu0 %v1021, 32
        %v5662 = vpop.permute.xlu0 %5661
        %5663 = vrot.lane.b32.xlu0 %v1022, 32
        %v5664 = vpop.permute.xlu0 %5663
        %5665 = vrot.lane.b32.xlu0 %v1023, 32
        %v5666 = vpop.permute.xlu0 %5665
        %5667 = vrot.lane.b32.xlu0 %v1268, 32
        %v5668 = vpop.permute.xlu0 %5667
        %5669 = vrot.lane.b32.xlu0 %v1269, 32
        %v5670 = vpop.permute.xlu0 %5669
        %5671 = vrot.lane.b32.xlu0 %v1270, 32
        %v5672 = vpop.permute.xlu0 %5671
        %5673 = vrot.lane.b32.xlu0 %v1271, 32
        %v5674 = vpop.permute.xlu0 %5673
        %v5676 = vsel %vm1532, %v5660, 0
        %v5679 = vsel %vm1532, %v5662, 0
        %v5682 = vsel %vm1532, %v5664, 0
        %v5685 = vsel %vm1532, %v5666, 0
        %v5688 = vsel %vm1532, %v5668, 0
        %v5691 = vsel %vm1532, %v5670, 0
        %v5694 = vsel %vm1532, %v5672, 0
        %v5697 = vsel %vm1532, %v5674, 0
        %5699 = vmatprep.subr.bf16.mxu0 0
        %5700 = vmatpush1.bf16.xpose.msra.mxu0 %v5688
        %5701 = vmatprep.subr.bf16.mxu0 0
        %5702 = vmatpush1.bf16.xpose.msra.mxu0 %v5691
        %5703 = vmatprep.subr.bf16.mxu0 0
        %5704 = vmatpush1.bf16.xpose.msra.mxu0 %v5694
        %5705 = vmatprep.subr.bf16.mxu0 0
        %5706 = vmatpush1.bf16.xpose.msra.mxu0 %v5697
        %5707 = vmatprep.subr.bf16.mxu0 0
        %5708 = vmatpush1.bf16.xpose.msra.mxu0 0
        %5709 = vmatprep.subr.bf16.mxu0 0
        %5710 = vmatpush1.bf16.xpose.msra.mxu0 0
        %5711 = vmatprep.subr.bf16.mxu0 0
        %5712 = vmatpush1.bf16.xpose.msra.mxu0 0
        %5713 = vmatprep.subr.bf16.mxu0 0
        %5714 = vmatpush1.bf16.xpose.msra.mxu0 0
        %5715 = vmatprep.subr.bf16.mxu0 0
        %5716 = vmatpush1.bf16.xpose.msra.mxu0 0
        %5717 = vmatprep.subr.bf16.mxu0 0
        %5718 = vmatpush1.bf16.xpose.msra.mxu0 0
        %5719 = vmatprep.subr.bf16.mxu0 0
        %5720 = vmatpush1.bf16.xpose.msra.mxu0 0
        %5721 = vmatprep.subr.bf16.mxu0 0
        %5722 = vmatpush1.bf16.xpose.msra.mxu0 0
        %5723 = vmatprep.subr.bf16.mxu0 0
        %5724 = vmatpush1.bf16.xpose.msra.mxu0 0
        %5725 = vmatprep.subr.bf16.mxu0 0
        %5726 = vmatpush1.bf16.xpose.msra.mxu0 0
        %5727 = vmatprep.subr.bf16.mxu0 0
        %5728 = vmatpush1.bf16.xpose.msra.mxu0 0
        %5729 = vmatprep.subr.bf16.mxu0 0
        %5730 = vmatpush1.bf16.xpose.msra.mxu0 0
        %5731 = vmatprep.mubr.bf16.mxu0 0
        %5732 = vmatmul.mubr.bf16.gmra.mrb[0].mxu0 %v5676
        %v5733 = vpop.f32.mrb[0].mxu0
        %v5734 = vadd.f32 0.0, %v5733
        %v5735 = vpop.f32.mrb[0].mxu0
        %v5736 = vpop.f32.mrb[0].mxu0
        %v5737 = vadd.f32 0.0, %v5736
        %v5738 = vpop.f32.mrb[0].mxu0
        %5739 = vmatprep.mubr.bf16.mxu0 0
        %5740 = vmatmul.mubr.bf16.gmra.mrb[0].mxu0 %v5679
        %v5741 = vpop.f32.mrb[0].mxu0
        %v5742 = vadd.f32 0.0, %v5741
        %v5743 = vpop.f32.mrb[0].mxu0
        %v5744 = vpop.f32.mrb[0].mxu0
        %v5745 = vadd.f32 0.0, %v5744
        %v5746 = vpop.f32.mrb[0].mxu0
        %5747 = vmatprep.mubr.bf16.mxu0 0
        %5748 = vmatmul.mubr.bf16.gmra.mrb[0].mxu0 %v5682
        %v5749 = vpop.f32.mrb[0].mxu0
        %v5750 = vadd.f32 0.0, %v5749
        %v5751 = vpop.f32.mrb[0].mxu0
        %v5752 = vpop.f32.mrb[0].mxu0
        %v5753 = vadd.f32 0.0, %v5752
        %v5754 = vpop.f32.mrb[0].mxu0
        %5755 = vmatprep.mubr.bf16.mxu0 0
        %5756 = vmatmul.mubr.bf16.gmra.mrb[0].mxu0 %v5685
        %v5757 = vpop.f32.mrb[0].mxu0
        %v5758 = vadd.f32 0.0, %v5757
        %v5759 = vpop.f32.mrb[0].mxu0
        %v5760 = vpop.f32.mrb[0].mxu0
        %v5761 = vadd.f32 0.0, %v5760
        %v5762 = vpop.f32.mrb[0].mxu0
        %5763 = vdwg.mxu0
        %5764 = vrot.lane.b32.xlu0 %v1024, 32
        %v5765 = vpop.permute.xlu0 %5764
        %5766 = vrot.lane.b32.xlu0 %v1025, 32
        %v5767 = vpop.permute.xlu0 %5766
        %5768 = vrot.lane.b32.xlu0 %v1026, 32
        %v5769 = vpop.permute.xlu0 %5768
        %5770 = vrot.lane.b32.xlu0 %v1027, 32
        %v5771 = vpop.permute.xlu0 %5770
        %5772 = vrot.lane.b32.xlu0 %v1272, 32
        %v5773 = vpop.permute.xlu0 %5772
        %5774 = vrot.lane.b32.xlu0 %v1273, 32
        %v5775 = vpop.permute.xlu0 %5774
        %5776 = vrot.lane.b32.xlu0 %v1274, 32
        %v5777 = vpop.permute.xlu0 %5776
        %5778 = vrot.lane.b32.xlu0 %v1275, 32
        %v5779 = vpop.permute.xlu0 %5778
        %v5781 = vsel %vm1532, %v5765, 0
        %v5784 = vsel %vm1532, %v5767, 0
        %v5787 = vsel %vm1532, %v5769, 0
        %v5790 = vsel %vm1532, %v5771, 0
        %v5793 = vsel %vm1532, %v5773, 0
        %v5796 = vsel %vm1532, %v5775, 0
        %v5799 = vsel %vm1532, %v5777, 0
        %v5802 = vsel %vm1532, %v5779, 0
        %5804 = vmatprep.subr.bf16.mxu0 0
        %5805 = vmatpush1.bf16.xpose.msra.mxu0 %v5793
        %5806 = vmatprep.subr.bf16.mxu0 0
        %5807 = vmatpush1.bf16.xpose.msra.mxu0 %v5796
        %5808 = vmatprep.subr.bf16.mxu0 0
        %5809 = vmatpush1.bf16.xpose.msra.mxu0 %v5799
        %5810 = vmatprep.subr.bf16.mxu0 0
        %5811 = vmatpush1.bf16.xpose.msra.mxu0 %v5802
        %5812 = vmatprep.subr.bf16.mxu0 0
        %5813 = vmatpush1.bf16.xpose.msra.mxu0 0
        %5814 = vmatprep.subr.bf16.mxu0 0
        %5815 = vmatpush1.bf16.xpose.msra.mxu0 0
        %5816 = vmatprep.subr.bf16.mxu0 0
        %5817 = vmatpush1.bf16.xpose.msra.mxu0 0
        %5818 = vmatprep.subr.bf16.mxu0 0
        %5819 = vmatpush1.bf16.xpose.msra.mxu0 0
        %5820 = vmatprep.subr.bf16.mxu0 0
        %5821 = vmatpush1.bf16.xpose.msra.mxu0 0
        %5822 = vmatprep.subr.bf16.mxu0 0
        %5823 = vmatpush1.bf16.xpose.msra.mxu0 0
        %5824 = vmatprep.subr.bf16.mxu0 0
        %5825 = vmatpush1.bf16.xpose.msra.mxu0 0
        %5826 = vmatprep.subr.bf16.mxu0 0
        %5827 = vmatpush1.bf16.xpose.msra.mxu0 0
        %5828 = vmatprep.subr.bf16.mxu0 0
        %5829 = vmatpush1.bf16.xpose.msra.mxu0 0
        %5830 = vmatprep.subr.bf16.mxu0 0
        %5831 = vmatpush1.bf16.xpose.msra.mxu0 0
        %5832 = vmatprep.subr.bf16.mxu0 0
        %5833 = vmatpush1.bf16.xpose.msra.mxu0 0
        %5834 = vmatprep.subr.bf16.mxu0 0
        %5835 = vmatpush1.bf16.xpose.msra.mxu0 0
        %5836 = vmatprep.mubr.bf16.mxu0 0
        %5837 = vmatmul.mubr.bf16.gmra.mrb[0].mxu0 %v5781
        %v5838 = vpop.f32.mrb[0].mxu0
        %v5839 = vadd.f32 0.0, %v5838
        %v5840 = vpop.f32.mrb[0].mxu0
        %v5841 = vpop.f32.mrb[0].mxu0
        %v5842 = vadd.f32 0.0, %v5841
        %v5843 = vpop.f32.mrb[0].mxu0
        %5844 = vmatprep.mubr.bf16.mxu0 0
        %5845 = vmatmul.mubr.bf16.gmra.mrb[0].mxu0 %v5784
        %v5846 = vpop.f32.mrb[0].mxu0
        %v5847 = vadd.f32 0.0, %v5846
        %v5848 = vpop.f32.mrb[0].mxu0
        %v5849 = vpop.f32.mrb[0].mxu0
        %v5850 = vadd.f32 0.0, %v5849
        %v5851 = vpop.f32.mrb[0].mxu0
        %5852 = vmatprep.mubr.bf16.mxu0 0
        %5853 = vmatmul.mubr.bf16.gmra.mrb[0].mxu0 %v5787
        %v5854 = vpop.f32.mrb[0].mxu0
        %v5855 = vadd.f32 0.0, %v5854
        %v5856 = vpop.f32.mrb[0].mxu0
        %v5857 = vpop.f32.mrb[0].mxu0
        %v5858 = vadd.f32 0.0, %v5857
        %v5859 = vpop.f32.mrb[0].mxu0
        %5860 = vmatprep.mubr.bf16.mxu0 0
        %5861 = vmatmul.mubr.bf16.gmra.mrb[0].mxu0 %v5790
        %v5862 = vpop.f32.mrb[0].mxu0
        %v5863 = vadd.f32 0.0, %v5862
        %v5864 = vpop.f32.mrb[0].mxu0
        %v5865 = vpop.f32.mrb[0].mxu0
        %v5866 = vadd.f32 0.0, %v5865
        %v5867 = vpop.f32.mrb[0].mxu0
        %5868 = vdwg.mxu0
        %5869 = vrot.lane.b32.xlu0 %v1028, 32
        %v5870 = vpop.permute.xlu0 %5869
        %5871 = vrot.lane.b32.xlu0 %v1029, 32
        %v5872 = vpop.permute.xlu0 %5871
        %5873 = vrot.lane.b32.xlu0 %v1030, 32
        %v5874 = vpop.permute.xlu0 %5873
        %5875 = vrot.lane.b32.xlu0 %v1031, 32
        %v5876 = vpop.permute.xlu0 %5875
        %5877 = vrot.lane.b32.xlu0 %v1276, 32
        %v5878 = vpop.permute.xlu0 %5877
        %5879 = vrot.lane.b32.xlu0 %v1277, 32
        %v5880 = vpop.permute.xlu0 %5879
        %5881 = vrot.lane.b32.xlu0 %v1278, 32
        %v5882 = vpop.permute.xlu0 %5881
        %5883 = vrot.lane.b32.xlu0 %v1279, 32
        %v5884 = vpop.permute.xlu0 %5883
        %v5886 = vsel %vm1532, %v5870, 0
        %v5889 = vsel %vm1532, %v5872, 0
        %v5892 = vsel %vm1532, %v5874, 0
        %v5895 = vsel %vm1532, %v5876, 0
        %v5898 = vsel %vm1532, %v5878, 0
        %v5901 = vsel %vm1532, %v5880, 0
        %v5904 = vsel %vm1532, %v5882, 0
        %v5907 = vsel %vm1532, %v5884, 0
        %5909 = vmatprep.subr.bf16.mxu0 0
        %5910 = vmatpush1.bf16.xpose.msra.mxu0 %v5898
        %5911 = vmatprep.subr.bf16.mxu0 0
        %5912 = vmatpush1.bf16.xpose.msra.mxu0 %v5901
        %5913 = vmatprep.subr.bf16.mxu0 0
        %5914 = vmatpush1.bf16.xpose.msra.mxu0 %v5904
        %5915 = vmatprep.subr.bf16.mxu0 0
        %5916 = vmatpush1.bf16.xpose.msra.mxu0 %v5907
        %5917 = vmatprep.subr.bf16.mxu0 0
        %5918 = vmatpush1.bf16.xpose.msra.mxu0 0
        %5919 = vmatprep.subr.bf16.mxu0 0
        %5920 = vmatpush1.bf16.xpose.msra.mxu0 0
        %5921 = vmatprep.subr.bf16.mxu0 0
        %5922 = vmatpush1.bf16.xpose.msra.mxu0 0
        %5923 = vmatprep.subr.bf16.mxu0 0
        %5924 = vmatpush1.bf16.xpose.msra.mxu0 0
        %5925 = vmatprep.subr.bf16.mxu0 0
        %5926 = vmatpush1.bf16.xpose.msra.mxu0 0
        %5927 = vmatprep.subr.bf16.mxu0 0
        %5928 = vmatpush1.bf16.xpose.msra.mxu0 0
        %5929 = vmatprep.subr.bf16.mxu0 0
        %5930 = vmatpush1.bf16.xpose.msra.mxu0 0
        %5931 = vmatprep.subr.bf16.mxu0 0
        %5932 = vmatpush1.bf16.xpose.msra.mxu0 0
        %5933 = vmatprep.subr.bf16.mxu0 0
        %5934 = vmatpush1.bf16.xpose.msra.mxu0 0
        %5935 = vmatprep.subr.bf16.mxu0 0
        %5936 = vmatpush1.bf16.xpose.msra.mxu0 0
        %5937 = vmatprep.subr.bf16.mxu0 0
        %5938 = vmatpush1.bf16.xpose.msra.mxu0 0
        %5939 = vmatprep.subr.bf16.mxu0 0
        %5940 = vmatpush1.bf16.xpose.msra.mxu0 0
        %5941 = vmatprep.mubr.bf16.mxu0 0
        %5942 = vmatmul.mubr.bf16.gmra.mrb[0].mxu0 %v5886
        %v5943 = vpop.f32.mrb[0].mxu0
        %v5944 = vadd.f32 0.0, %v5943
        %v5945 = vpop.f32.mrb[0].mxu0
        %v5946 = vpop.f32.mrb[0].mxu0
        %v5947 = vadd.f32 0.0, %v5946
        %v5948 = vpop.f32.mrb[0].mxu0
        %5949 = vmatprep.mubr.bf16.mxu0 0
        %5950 = vmatmul.mubr.bf16.gmra.mrb[0].mxu0 %v5889
        %v5951 = vpop.f32.mrb[0].mxu0
        %v5952 = vadd.f32 0.0, %v5951
        %v5953 = vpop.f32.mrb[0].mxu0
        %v5954 = vpop.f32.mrb[0].mxu0
        %v5955 = vadd.f32 0.0, %v5954
        %v5956 = vpop.f32.mrb[0].mxu0
        %5957 = vmatprep.mubr.bf16.mxu0 0
        %5958 = vmatmul.mubr.bf16.gmra.mrb[0].mxu0 %v5892
        %v5959 = vpop.f32.mrb[0].mxu0
        %v5960 = vadd.f32 0.0, %v5959
        %v5961 = vpop.f32.mrb[0].mxu0
        %v5962 = vpop.f32.mrb[0].mxu0
        %v5963 = vadd.f32 0.0, %v5962
        %v5964 = vpop.f32.mrb[0].mxu0
        %5965 = vmatprep.mubr.bf16.mxu0 0
        %5966 = vmatmul.mubr.bf16.gmra.mrb[0].mxu0 %v5895
        %v5967 = vpop.f32.mrb[0].mxu0
        %v5968 = vadd.f32 0.0, %v5967
        %v5969 = vpop.f32.mrb[0].mxu0
        %v5970 = vpop.f32.mrb[0].mxu0
        %v5971 = vadd.f32 0.0, %v5970
        %v5972 = vpop.f32.mrb[0].mxu0
        %5973 = vdwg.mxu0
        %5974 = vrot.lane.b32.xlu0 %v1032, 32
        %v5975 = vpop.permute.xlu0 %5974
        %5976 = vrot.lane.b32.xlu0 %v1033, 32
        %v5977 = vpop.permute.xlu0 %5976
        %5978 = vrot.lane.b32.xlu0 %v1034, 32
        %v5979 = vpop.permute.xlu0 %5978
        %5980 = vrot.lane.b32.xlu0 %v1035, 32
        %v5981 = vpop.permute.xlu0 %5980
        %5982 = vrot.lane.b32.xlu0 %v1280, 32
        %v5983 = vpop.permute.xlu0 %5982
        %5984 = vrot.lane.b32.xlu0 %v1281, 32
        %v5985 = vpop.permute.xlu0 %5984
        %5986 = vrot.lane.b32.xlu0 %v1282, 32
        %v5987 = vpop.permute.xlu0 %5986
        %5988 = vrot.lane.b32.xlu0 %v1283, 32
        %v5989 = vpop.permute.xlu0 %5988
        %v5991 = vsel %vm1532, %v5975, 0
        %v5994 = vsel %vm1532, %v5977, 0
        %v5997 = vsel %vm1532, %v5979, 0
        %v6000 = vsel %vm1532, %v5981, 0
        %v6003 = vsel %vm1532, %v5983, 0
        %v6006 = vsel %vm1532, %v5985, 0
        %v6009 = vsel %vm1532, %v5987, 0
        %v6012 = vsel %vm1532, %v5989, 0
        %6014 = vmatprep.subr.bf16.mxu0 0
        %6015 = vmatpush1.bf16.xpose.msra.mxu0 %v6003
        %6016 = vmatprep.subr.bf16.mxu0 0
        %6017 = vmatpush1.bf16.xpose.msra.mxu0 %v6006
        %6018 = vmatprep.subr.bf16.mxu0 0
        %6019 = vmatpush1.bf16.xpose.msra.mxu0 %v6009
        %6020 = vmatprep.subr.bf16.mxu0 0
        %6021 = vmatpush1.bf16.xpose.msra.mxu0 %v6012
        %6022 = vmatprep.subr.bf16.mxu0 0
        %6023 = vmatpush1.bf16.xpose.msra.mxu0 0
        %6024 = vmatprep.subr.bf16.mxu0 0
        %6025 = vmatpush1.bf16.xpose.msra.mxu0 0
        %6026 = vmatprep.subr.bf16.mxu0 0
        %6027 = vmatpush1.bf16.xpose.msra.mxu0 0
        %6028 = vmatprep.subr.bf16.mxu0 0
        %6029 = vmatpush1.bf16.xpose.msra.mxu0 0
        %6030 = vmatprep.subr.bf16.mxu0 0
        %6031 = vmatpush1.bf16.xpose.msra.mxu0 0
        %6032 = vmatprep.subr.bf16.mxu0 0
        %6033 = vmatpush1.bf16.xpose.msra.mxu0 0
        %6034 = vmatprep.subr.bf16.mxu0 0
        %6035 = vmatpush1.bf16.xpose.msra.mxu0 0
        %6036 = vmatprep.subr.bf16.mxu0 0
        %6037 = vmatpush1.bf16.xpose.msra.mxu0 0
        %6038 = vmatprep.subr.bf16.mxu0 0
        %6039 = vmatpush1.bf16.xpose.msra.mxu0 0
        %6040 = vmatprep.subr.bf16.mxu0 0
        %6041 = vmatpush1.bf16.xpose.msra.mxu0 0
        %6042 = vmatprep.subr.bf16.mxu0 0
        %6043 = vmatpush1.bf16.xpose.msra.mxu0 0
        %6044 = vmatprep.subr.bf16.mxu0 0
        %6045 = vmatpush1.bf16.xpose.msra.mxu0 0
        %6046 = vmatprep.mubr.bf16.mxu0 0
        %6047 = vmatmul.mubr.bf16.gmra.mrb[0].mxu0 %v5991
        %v6048 = vpop.f32.mrb[0].mxu0
        %v6049 = vadd.f32 0.0, %v6048
        %v6050 = vpop.f32.mrb[0].mxu0
        %v6051 = vpop.f32.mrb[0].mxu0
        %v6052 = vadd.f32 0.0, %v6051
        %v6053 = vpop.f32.mrb[0].mxu0
        %6054 = vmatprep.mubr.bf16.mxu0 0
        %6055 = vmatmul.mubr.bf16.gmra.mrb[0].mxu0 %v5994
        %v6056 = vpop.f32.mrb[0].mxu0
        %v6057 = vadd.f32 0.0, %v6056
        %v6058 = vpop.f32.mrb[0].mxu0
        %v6059 = vpop.f32.mrb[0].mxu0
        %v6060 = vadd.f32 0.0, %v6059
        %v6061 = vpop.f32.mrb[0].mxu0
        %6062 = vmatprep.mubr.bf16.mxu0 0
        %6063 = vmatmul.mubr.bf16.gmra.mrb[0].mxu0 %v5997
        %v6064 = vpop.f32.mrb[0].mxu0
        %v6065 = vadd.f32 0.0, %v6064
        %v6066 = vpop.f32.mrb[0].mxu0
        %v6067 = vpop.f32.mrb[0].mxu0
        %v6068 = vadd.f32 0.0, %v6067
        %v6069 = vpop.f32.mrb[0].mxu0
        %6070 = vmatprep.mubr.bf16.mxu0 0
        %6071 = vmatmul.mubr.bf16.gmra.mrb[0].mxu0 %v6000
        %v6072 = vpop.f32.mrb[0].mxu0
        %v6073 = vadd.f32 0.0, %v6072
        %v6074 = vpop.f32.mrb[0].mxu0
        %v6075 = vpop.f32.mrb[0].mxu0
        %v6076 = vadd.f32 0.0, %v6075
        %v6077 = vpop.f32.mrb[0].mxu0
        %6078 = vdwg.mxu0
        %v6079 = vsel %vm1889, %v5734, -inf
        %6080 = vmax.xlane.f32.xlu0 %v6079
        %v6081 = vpop.xlane.xlu0 %6080
        %v6082 = vsel %vm1889, %v5737, -inf
        %6083 = vmax.xlane.f32.xlu0 %v6082
        %v6084 = vpop.xlane.xlu0 %6083
        %v6085 = vsel %vm1889, %v5742, -inf
        %6086 = vmax.xlane.f32.xlu0 %v6085
        %v6087 = vpop.xlane.xlu0 %6086
        %v6088 = vsel %vm1889, %v5745, -inf
        %6089 = vmax.xlane.f32.xlu0 %v6088
        %v6090 = vpop.xlane.xlu0 %6089
        %v6091 = vsel %vm1889, %v5750, -inf
        %6092 = vmax.xlane.f32.xlu0 %v6091
        %v6093 = vpop.xlane.xlu0 %6092
        %v6094 = vsel %vm1889, %v5753, -inf
        %6095 = vmax.xlane.f32.xlu0 %v6094
        %v6096 = vpop.xlane.xlu0 %6095
        %v6097 = vsel %vm1889, %v5758, -inf
        %6098 = vmax.xlane.f32.xlu0 %v6097
        %v6099 = vpop.xlane.xlu0 %6098
        %v6100 = vsel %vm1889, %v5761, -inf
        %6101 = vmax.xlane.f32.xlu0 %v6100
        %v6102 = vpop.xlane.xlu0 %6101
        %v6103 = vsel %vm1889, %v5839, -inf
        %6104 = vmax.xlane.f32.xlu0 %v6103
        %v6105 = vpop.xlane.xlu0 %6104
        %v6106 = vsel %vm1889, %v5842, -inf
        %6107 = vmax.xlane.f32.xlu0 %v6106
        %v6108 = vpop.xlane.xlu0 %6107
        %v6109 = vsel %vm1889, %v5847, -inf
        %6110 = vmax.xlane.f32.xlu0 %v6109
        %v6111 = vpop.xlane.xlu0 %6110
        %v6112 = vsel %vm1889, %v5850, -inf
        %6113 = vmax.xlane.f32.xlu0 %v6112
        %v6114 = vpop.xlane.xlu0 %6113
        %v6115 = vsel %vm1889, %v5855, -inf
        %6116 = vmax.xlane.f32.xlu0 %v6115
        %v6117 = vpop.xlane.xlu0 %6116
        %v6118 = vsel %vm1889, %v5858, -inf
        %6119 = vmax.xlane.f32.xlu0 %v6118
        %v6120 = vpop.xlane.xlu0 %6119
        %v6121 = vsel %vm1889, %v5863, -inf
        %6122 = vmax.xlane.f32.xlu0 %v6121
        %v6123 = vpop.xlane.xlu0 %6122
        %v6124 = vsel %vm1889, %v5866, -inf
        %6125 = vmax.xlane.f32.xlu0 %v6124
        %v6126 = vpop.xlane.xlu0 %6125
        %v6127 = vsel %vm1889, %v5944, -inf
        %6128 = vmax.xlane.f32.xlu0 %v6127
        %v6129 = vpop.xlane.xlu0 %6128
        %v6130 = vsel %vm1889, %v5947, -inf
        %6131 = vmax.xlane.f32.xlu0 %v6130
        %v6132 = vpop.xlane.xlu0 %6131
        %v6133 = vsel %vm1889, %v5952, -inf
        %6134 = vmax.xlane.f32.xlu0 %v6133
        %v6135 = vpop.xlane.xlu0 %6134
        %v6136 = vsel %vm1889, %v5955, -inf
        %6137 = vmax.xlane.f32.xlu0 %v6136
        %v6138 = vpop.xlane.xlu0 %6137
        %v6139 = vsel %vm1889, %v5960, -inf
        %6140 = vmax.xlane.f32.xlu0 %v6139
        %v6141 = vpop.xlane.xlu0 %6140
        %v6142 = vsel %vm1889, %v5963, -inf
        %6143 = vmax.xlane.f32.xlu0 %v6142
        %v6144 = vpop.xlane.xlu0 %6143
        %v6145 = vsel %vm1889, %v5968, -inf
        %6146 = vmax.xlane.f32.xlu0 %v6145
        %v6147 = vpop.xlane.xlu0 %6146
        %v6148 = vsel %vm1889, %v5971, -inf
        %6149 = vmax.xlane.f32.xlu0 %v6148
        %v6150 = vpop.xlane.xlu0 %6149
        %v6151 = vsel %vm1889, %v6049, -inf
        %6152 = vmax.xlane.f32.xlu0 %v6151
        %v6153 = vpop.xlane.xlu0 %6152
        %v6154 = vsel %vm1889, %v6052, -inf
        %6155 = vmax.xlane.f32.xlu0 %v6154
        %v6156 = vpop.xlane.xlu0 %6155
        %v6157 = vsel %vm1889, %v6057, -inf
        %6158 = vmax.xlane.f32.xlu0 %v6157
        %v6159 = vpop.xlane.xlu0 %6158
        %v6160 = vsel %vm1889, %v6060, -inf
        %6161 = vmax.xlane.f32.xlu0 %v6160
        %v6162 = vpop.xlane.xlu0 %6161
        %v6163 = vsel %vm1889, %v6065, -inf
        %6164 = vmax.xlane.f32.xlu0 %v6163
        %v6165 = vpop.xlane.xlu0 %6164
        %v6166 = vsel %vm1889, %v6068, -inf
        %6167 = vmax.xlane.f32.xlu0 %v6166
        %v6168 = vpop.xlane.xlu0 %6167
        %v6169 = vsel %vm1889, %v6073, -inf
        %6170 = vmax.xlane.f32.xlu0 %v6169
        %v6171 = vpop.xlane.xlu0 %6170
        %v6172 = vsel %vm1889, %v6076, -inf
        %6173 = vmax.xlane.f32.xlu0 %v6172
        %v6174 = vpop.xlane.xlu0 %6173
        %v6175 = vsub.f32 %v5734, %v6081
        %v6176 = vsub.f32 %v5737, %v6084
        %v6177 = vsub.f32 %v5742, %v6087
        %v6178 = vsub.f32 %v5745, %v6090
        %v6179 = vsub.f32 %v5750, %v6093
        %v6180 = vsub.f32 %v5753, %v6096
        %v6181 = vsub.f32 %v5758, %v6099
        %v6182 = vsub.f32 %v5761, %v6102
        %v6183 = vsub.f32 %v5839, %v6105
        %v6184 = vsub.f32 %v5842, %v6108
        %v6185 = vsub.f32 %v5847, %v6111
        %v6186 = vsub.f32 %v5850, %v6114
        %v6187 = vsub.f32 %v5855, %v6117
        %v6188 = vsub.f32 %v5858, %v6120
        %v6189 = vsub.f32 %v5863, %v6123
        %v6190 = vsub.f32 %v5866, %v6126
        %v6191 = vsub.f32 %v5944, %v6129
        %v6192 = vsub.f32 %v5947, %v6132
        %v6193 = vsub.f32 %v5952, %v6135
        %v6194 = vsub.f32 %v5955, %v6138
        %v6195 = vsub.f32 %v5960, %v6141
        %v6196 = vsub.f32 %v5963, %v6144
        %v6197 = vsub.f32 %v5968, %v6147
        %v6198 = vsub.f32 %v5971, %v6150
        %v6199 = vsub.f32 %v6049, %v6153
        %v6200 = vsub.f32 %v6052, %v6156
        %v6201 = vsub.f32 %v6057, %v6159
        %v6202 = vsub.f32 %v6060, %v6162
        %v6203 = vsub.f32 %v6065, %v6165
        %v6204 = vsub.f32 %v6068, %v6168
        %v6205 = vsub.f32 %v6073, %v6171
        %v6206 = vsub.f32 %v6076, %v6174
        %v6207 = vmul.f32 %v6175, 1.442695
        %v6208 = vpow.pop %v6207
        %v6209 = vmul.f32 %v6176, 1.442695
        %v6210 = vpow.pop %v6209
        %v6211 = vmul.f32 %v6177, 1.442695
        %v6212 = vpow.pop %v6211
        %v6213 = vmul.f32 %v6178, 1.442695
        %v6214 = vpow.pop %v6213
        %v6215 = vmul.f32 %v6179, 1.442695
        %v6216 = vpow.pop %v6215
        %v6217 = vmul.f32 %v6180, 1.442695
        %v6218 = vpow.pop %v6217
        %v6219 = vmul.f32 %v6181, 1.442695
        %v6220 = vpow.pop %v6219
        %v6221 = vmul.f32 %v6182, 1.442695
        %v6222 = vpow.pop %v6221
        %v6223 = vmul.f32 %v6183, 1.442695
        %v6224 = vpow.pop %v6223
        %v6225 = vmul.f32 %v6184, 1.442695
        %v6226 = vpow.pop %v6225
        %v6227 = vmul.f32 %v6185, 1.442695
        %v6228 = vpow.pop %v6227
        %v6229 = vmul.f32 %v6186, 1.442695
        %v6230 = vpow.pop %v6229
        %v6231 = vmul.f32 %v6187, 1.442695
        %v6232 = vpow.pop %v6231
        %v6233 = vmul.f32 %v6188, 1.442695
        %v6234 = vpow.pop %v6233
        %v6235 = vmul.f32 %v6189, 1.442695
        %v6236 = vpow.pop %v6235
        %v6237 = vmul.f32 %v6190, 1.442695
        %v6238 = vpow.pop %v6237
        %v6239 = vmul.f32 %v6191, 1.442695
        %v6240 = vpow.pop %v6239
        %v6241 = vmul.f32 %v6192, 1.442695
        %v6242 = vpow.pop %v6241
        %v6243 = vmul.f32 %v6193, 1.442695
        %v6244 = vpow.pop %v6243
        %v6245 = vmul.f32 %v6194, 1.442695
        %v6246 = vpow.pop %v6245
        %v6247 = vmul.f32 %v6195, 1.442695
        %v6248 = vpow.pop %v6247
        %v6249 = vmul.f32 %v6196, 1.442695
        %v6250 = vpow.pop %v6249
        %v6251 = vmul.f32 %v6197, 1.442695
        %v6252 = vpow.pop %v6251
        %v6253 = vmul.f32 %v6198, 1.442695
        %v6254 = vpow.pop %v6253
        %v6255 = vmul.f32 %v6199, 1.442695
        %v6256 = vpow.pop %v6255
        %v6257 = vmul.f32 %v6200, 1.442695
        %v6258 = vpow.pop %v6257
        %v6259 = vmul.f32 %v6201, 1.442695
        %v6260 = vpow.pop %v6259
        %v6261 = vmul.f32 %v6202, 1.442695
        %v6262 = vpow.pop %v6261
        %v6263 = vmul.f32 %v6203, 1.442695
        %v6264 = vpow.pop %v6263
        %v6265 = vmul.f32 %v6204, 1.442695
        %v6266 = vpow.pop %v6265
        %v6267 = vmul.f32 %v6205, 1.442695
        %v6268 = vpow.pop %v6267
        %v6269 = vmul.f32 %v6206, 1.442695
        %v6270 = vpow.pop %v6269
        %v6271 = vsel %vm1889, %v6208, 0.0
        %6272 = vadd.xlane.f32.xlu0 %v6271
        %v6273 = vpop.xlane.xlu0 %6272
        %v6274 = vsel %vm1889, %v6210, 0.0
        %6275 = vadd.xlane.f32.xlu0 %v6274
        %v6276 = vpop.xlane.xlu0 %6275
        %v6277 = vsel %vm1889, %v6212, 0.0
        %6278 = vadd.xlane.f32.xlu0 %v6277
        %v6279 = vpop.xlane.xlu0 %6278
        %v6280 = vsel %vm1889, %v6214, 0.0
        %6281 = vadd.xlane.f32.xlu0 %v6280
        %v6282 = vpop.xlane.xlu0 %6281
        %v6283 = vsel %vm1889, %v6216, 0.0
        %6284 = vadd.xlane.f32.xlu0 %v6283
        %v6285 = vpop.xlane.xlu0 %6284
        %v6286 = vsel %vm1889, %v6218, 0.0
        %6287 = vadd.xlane.f32.xlu0 %v6286
        %v6288 = vpop.xlane.xlu0 %6287
        %v6289 = vsel %vm1889, %v6220, 0.0
        %6290 = vadd.xlane.f32.xlu0 %v6289
        %v6291 = vpop.xlane.xlu0 %6290
        %v6292 = vsel %vm1889, %v6222, 0.0
        %6293 = vadd.xlane.f32.xlu0 %v6292
        %v6294 = vpop.xlane.xlu0 %6293
        %v6295 = vsel %vm1889, %v6224, 0.0
        %6296 = vadd.xlane.f32.xlu0 %v6295
        %v6297 = vpop.xlane.xlu0 %6296
        %v6298 = vsel %vm1889, %v6226, 0.0
        %6299 = vadd.xlane.f32.xlu0 %v6298
        %v6300 = vpop.xlane.xlu0 %6299
        %v6301 = vsel %vm1889, %v6228, 0.0
        %6302 = vadd.xlane.f32.xlu0 %v6301
        %v6303 = vpop.xlane.xlu0 %6302
        %v6304 = vsel %vm1889, %v6230, 0.0
        %6305 = vadd.xlane.f32.xlu0 %v6304
        %v6306 = vpop.xlane.xlu0 %6305
        %v6307 = vsel %vm1889, %v6232, 0.0
        %6308 = vadd.xlane.f32.xlu0 %v6307
        %v6309 = vpop.xlane.xlu0 %6308
        %v6310 = vsel %vm1889, %v6234, 0.0
        %6311 = vadd.xlane.f32.xlu0 %v6310
        %v6312 = vpop.xlane.xlu0 %6311
        %v6313 = vsel %vm1889, %v6236, 0.0
        %6314 = vadd.xlane.f32.xlu0 %v6313
        %v6315 = vpop.xlane.xlu0 %6314
        %v6316 = vsel %vm1889, %v6238, 0.0
        %6317 = vadd.xlane.f32.xlu0 %v6316
        %v6318 = vpop.xlane.xlu0 %6317
        %v6319 = vsel %vm1889, %v6240, 0.0
        %6320 = vadd.xlane.f32.xlu0 %v6319
        %v6321 = vpop.xlane.xlu0 %6320
        %v6322 = vsel %vm1889, %v6242, 0.0
        %6323 = vadd.xlane.f32.xlu0 %v6322
        %v6324 = vpop.xlane.xlu0 %6323
        %v6325 = vsel %vm1889, %v6244, 0.0
        %6326 = vadd.xlane.f32.xlu0 %v6325
        %v6327 = vpop.xlane.xlu0 %6326
        %v6328 = vsel %vm1889, %v6246, 0.0
        %6329 = vadd.xlane.f32.xlu0 %v6328
        %v6330 = vpop.xlane.xlu0 %6329
        %v6331 = vsel %vm1889, %v6248, 0.0
        %6332 = vadd.xlane.f32.xlu0 %v6331
        %v6333 = vpop.xlane.xlu0 %6332
        %v6334 = vsel %vm1889, %v6250, 0.0
        %6335 = vadd.xlane.f32.xlu0 %v6334
        %v6336 = vpop.xlane.xlu0 %6335
        %v6337 = vsel %vm1889, %v6252, 0.0
        %6338 = vadd.xlane.f32.xlu0 %v6337
        %v6339 = vpop.xlane.xlu0 %6338
        %v6340 = vsel %vm1889, %v6254, 0.0
        %6341 = vadd.xlane.f32.xlu0 %v6340
        %v6342 = vpop.xlane.xlu0 %6341
        %v6343 = vsel %vm1889, %v6256, 0.0
        %6344 = vadd.xlane.f32.xlu0 %v6343
        %v6345 = vpop.xlane.xlu0 %6344
        %v6346 = vsel %vm1889, %v6258, 0.0
        %6347 = vadd.xlane.f32.xlu0 %v6346
        %v6348 = vpop.xlane.xlu0 %6347
        %v6349 = vsel %vm1889, %v6260, 0.0
        %6350 = vadd.xlane.f32.xlu0 %v6349
        %v6351 = vpop.xlane.xlu0 %6350
        %v6352 = vsel %vm1889, %v6262, 0.0
        %6353 = vadd.xlane.f32.xlu0 %v6352
        %v6354 = vpop.xlane.xlu0 %6353
        %v6355 = vsel %vm1889, %v6264, 0.0
        %6356 = vadd.xlane.f32.xlu0 %v6355
        %v6357 = vpop.xlane.xlu0 %6356
        %v6358 = vsel %vm1889, %v6266, 0.0
        %6359 = vadd.xlane.f32.xlu0 %v6358
        %v6360 = vpop.xlane.xlu0 %6359
        %v6361 = vsel %vm1889, %v6268, 0.0
        %6362 = vadd.xlane.f32.xlu0 %v6361
        %v6363 = vpop.xlane.xlu0 %6362
        %v6364 = vsel %vm1889, %v6270, 0.0
        %6365 = vadd.xlane.f32.xlu0 %v6364
        %v6366 = vpop.xlane.xlu0 %6365
        %v6367 = vrcp.pop %v6273
        %v6368 = vrcp.pop %v6276
        %v6369 = vrcp.pop %v6279
        %v6370 = vrcp.pop %v6282
        %v6371 = vrcp.pop %v6285
        %v6372 = vrcp.pop %v6288
        %v6373 = vrcp.pop %v6291
        %v6374 = vrcp.pop %v6294
        %v6375 = vrcp.pop %v6297
        %v6376 = vrcp.pop %v6300
        %v6377 = vrcp.pop %v6303
        %v6378 = vrcp.pop %v6306
        %v6379 = vrcp.pop %v6309
        %v6380 = vrcp.pop %v6312
        %v6381 = vrcp.pop %v6315
        %v6382 = vrcp.pop %v6318
        %v6383 = vrcp.pop %v6321
        %v6384 = vrcp.pop %v6324
        %v6385 = vrcp.pop %v6327
        %v6386 = vrcp.pop %v6330
        %v6387 = vrcp.pop %v6333
        %v6388 = vrcp.pop %v6336
        %v6389 = vrcp.pop %v6339
        %v6390 = vrcp.pop %v6342
        %v6391 = vrcp.pop %v6345
        %v6392 = vrcp.pop %v6348
        %v6393 = vrcp.pop %v6351
        %v6394 = vrcp.pop %v6354
        %v6395 = vrcp.pop %v6357
        %v6396 = vrcp.pop %v6360
        %v6397 = vrcp.pop %v6363
        %v6398 = vrcp.pop %v6366
        %v6399 = vmul.f32 %v6208, %v6367
        %v6400 = vmul.f32 %v6210, %v6368
        %v6401 = vmul.f32 %v6212, %v6369
        %v6402 = vmul.f32 %v6214, %v6370
        %v6403 = vmul.f32 %v6216, %v6371
        %v6404 = vmul.f32 %v6218, %v6372
        %v6405 = vmul.f32 %v6220, %v6373
        %v6406 = vmul.f32 %v6222, %v6374
        %v6407 = vmul.f32 %v6224, %v6375
        %v6408 = vmul.f32 %v6226, %v6376
        %v6409 = vmul.f32 %v6228, %v6377
        %v6410 = vmul.f32 %v6230, %v6378
        %v6411 = vmul.f32 %v6232, %v6379
        %v6412 = vmul.f32 %v6234, %v6380
        %v6413 = vmul.f32 %v6236, %v6381
        %v6414 = vmul.f32 %v6238, %v6382
        %v6415 = vmul.f32 %v6240, %v6383
        %v6416 = vmul.f32 %v6242, %v6384
        %v6417 = vmul.f32 %v6244, %v6385
        %v6418 = vmul.f32 %v6246, %v6386
        %v6419 = vmul.f32 %v6248, %v6387
        %v6420 = vmul.f32 %v6250, %v6388
        %v6421 = vmul.f32 %v6252, %v6389
        %v6422 = vmul.f32 %v6254, %v6390
        %v6423 = vmul.f32 %v6256, %v6391
        %v6424 = vmul.f32 %v6258, %v6392
        %v6425 = vmul.f32 %v6260, %v6393
        %v6426 = vmul.f32 %v6262, %v6394
        %v6427 = vmul.f32 %v6264, %v6395
        %v6428 = vmul.f32 %v6266, %v6396
        %v6429 = vmul.f32 %v6268, %v6397
        %v6430 = vmul.f32 %v6270, %v6398
        %v6431 = vpack.c.bf16 %v6400, %v6399
        %v6432 = vpack.c.bf16 %v6402, %v6401
        %v6433 = vpack.c.bf16 %v6404, %v6403
        %v6434 = vpack.c.bf16 %v6406, %v6405
        %v6435 = vpack.c.bf16 %v6408, %v6407
        %v6436 = vpack.c.bf16 %v6410, %v6409
        %v6437 = vpack.c.bf16 %v6412, %v6411
        %v6438 = vpack.c.bf16 %v6414, %v6413
        %v6439 = vpack.c.bf16 %v6416, %v6415
        %v6440 = vpack.c.bf16 %v6418, %v6417
        %v6441 = vpack.c.bf16 %v6420, %v6419
        %v6442 = vpack.c.bf16 %v6422, %v6421
        %v6443 = vpack.c.bf16 %v6424, %v6423
        %v6444 = vpack.c.bf16 %v6426, %v6425
        %v6445 = vpack.c.bf16 %v6428, %v6427
        %v6446 = vpack.c.bf16 %v6430, %v6429
        %6447 = vrot.lane.b32.xlu0 %v1516, 32
        %v6448 = vpop.permute.xlu0 %6447
        %6449 = vrot.lane.b32.xlu0 %v1517, 32
        %v6450 = vpop.permute.xlu0 %6449
        %6451 = vrot.lane.b32.xlu0 %v1518, 32
        %v6452 = vpop.permute.xlu0 %6451
        %6453 = vrot.lane.b32.xlu0 %v1519, 32
        %v6454 = vpop.permute.xlu0 %6453
        %v6460 = vsel %vm1889, %v6431, 0
        %v6463 = vsel %vm1889, %v6432, 0
        %v6466 = vsel %vm1889, %v6433, 0
        %v6469 = vsel %vm1889, %v6434, 0
        %6471 = vmatprep.subr.bf16.mxu0 0
        %6472 = vmatpush1.bf16.msra.mxu0 %v6448
        %6473 = vmatprep.subr.bf16.mxu0 0
        %6474 = vmatpush1.bf16.msra.mxu0 %v6450
        %6475 = vmatprep.subr.bf16.mxu0 0
        %6476 = vmatpush1.bf16.msra.mxu0 %v6452
        %6477 = vmatprep.subr.bf16.mxu0 0
        %6478 = vmatpush1.bf16.msra.mxu0 %v6454
        %6479 = vmatprep.subr.bf16.mxu0 0
        %6480 = vmatpush1.bf16.msra.mxu0 0
        %6481 = vmatprep.subr.bf16.mxu0 0
        %6482 = vmatpush1.bf16.msra.mxu0 0
        %6483 = vmatprep.subr.bf16.mxu0 0
        %6484 = vmatpush1.bf16.msra.mxu0 0
        %6485 = vmatprep.subr.bf16.mxu0 0
        %6486 = vmatpush1.bf16.msra.mxu0 0
        %6487 = vmatprep.subr.bf16.mxu0 0
        %6488 = vmatpush1.bf16.msra.mxu0 0
        %6489 = vmatprep.subr.bf16.mxu0 0
        %6490 = vmatpush1.bf16.msra.mxu0 0
        %6491 = vmatprep.subr.bf16.mxu0 0
        %6492 = vmatpush1.bf16.msra.mxu0 0
        %6493 = vmatprep.subr.bf16.mxu0 0
        %6494 = vmatpush1.bf16.msra.mxu0 0
        %6495 = vmatprep.subr.bf16.mxu0 0
        %6496 = vmatpush1.bf16.msra.mxu0 0
        %6497 = vmatprep.subr.bf16.mxu0 0
        %6498 = vmatpush1.bf16.msra.mxu0 0
        %6499 = vmatprep.subr.bf16.mxu0 0
        %6500 = vmatpush1.bf16.msra.mxu0 0
        %6501 = vmatprep.subr.bf16.mxu0 0
        %6502 = vmatpush1.bf16.msra.mxu0 0
        %6503 = vmatprep.mubr.bf16.mxu0 0
        %6504 = vmatmul.mubr.bf16.gmra.mrb[0].mxu0 %v6460
        %v6505 = vpop.f32.mrb[0].mxu0
        %v6506 = vadd.f32 0.0, %v6505
        %v6507 = vpop.f32.mrb[0].mxu0
        %v6508 = vpop.f32.mrb[0].mxu0
        %v6509 = vadd.f32 0.0, %v6508
        %v6510 = vpop.f32.mrb[0].mxu0
        %6511 = vmatprep.mubr.bf16.mxu0 0
        %6512 = vmatmul.mubr.bf16.gmra.mrb[0].mxu0 %v6463
        %v6513 = vpop.f32.mrb[0].mxu0
        %v6514 = vadd.f32 0.0, %v6513
        %v6515 = vpop.f32.mrb[0].mxu0
        %v6516 = vpop.f32.mrb[0].mxu0
        %v6517 = vadd.f32 0.0, %v6516
        %v6518 = vpop.f32.mrb[0].mxu0
        %6519 = vmatprep.mubr.bf16.mxu0 0
        %6520 = vmatmul.mubr.bf16.gmra.mrb[0].mxu0 %v6466
        %v6521 = vpop.f32.mrb[0].mxu0
        %v6522 = vadd.f32 0.0, %v6521
        %v6523 = vpop.f32.mrb[0].mxu0
        %v6524 = vpop.f32.mrb[0].mxu0
        %v6525 = vadd.f32 0.0, %v6524
        %v6526 = vpop.f32.mrb[0].mxu0
        %6527 = vmatprep.mubr.bf16.mxu0 0
        %6528 = vmatmul.mubr.bf16.gmra.mrb[0].mxu0 %v6469
        %v6529 = vpop.f32.mrb[0].mxu0
        %v6530 = vadd.f32 0.0, %v6529
        %v6531 = vpop.f32.mrb[0].mxu0
        %v6532 = vpop.f32.mrb[0].mxu0
        %v6533 = vadd.f32 0.0, %v6532
        %v6534 = vpop.f32.mrb[0].mxu0
        %6535 = vdwg.mxu0
        %6536 = vrot.lane.b32.xlu0 %v1520, 32
        %v6537 = vpop.permute.xlu0 %6536
        %6538 = vrot.lane.b32.xlu0 %v1521, 32
        %v6539 = vpop.permute.xlu0 %6538
        %6540 = vrot.lane.b32.xlu0 %v1522, 32
        %v6541 = vpop.permute.xlu0 %6540
        %6542 = vrot.lane.b32.xlu0 %v1523, 32
        %v6543 = vpop.permute.xlu0 %6542
        %v6549 = vsel %vm1889, %v6435, 0
        %v6552 = vsel %vm1889, %v6436, 0
        %v6555 = vsel %vm1889, %v6437, 0
        %v6558 = vsel %vm1889, %v6438, 0
        %6560 = vmatprep.subr.bf16.mxu0 0
        %6561 = vmatpush1.bf16.msra.mxu0 %v6537
        %6562 = vmatprep.subr.bf16.mxu0 0
        %6563 = vmatpush1.bf16.msra.mxu0 %v6539
        %6564 = vmatprep.subr.bf16.mxu0 0
        %6565 = vmatpush1.bf16.msra.mxu0 %v6541
        %6566 = vmatprep.subr.bf16.mxu0 0
        %6567 = vmatpush1.bf16.msra.mxu0 %v6543
        %6568 = vmatprep.subr.bf16.mxu0 0
        %6569 = vmatpush1.bf16.msra.mxu0 0
        %6570 = vmatprep.subr.bf16.mxu0 0
        %6571 = vmatpush1.bf16.msra.mxu0 0
        %6572 = vmatprep.subr.bf16.mxu0 0
        %6573 = vmatpush1.bf16.msra.mxu0 0
        %6574 = vmatprep.subr.bf16.mxu0 0
        %6575 = vmatpush1.bf16.msra.mxu0 0
        %6576 = vmatprep.subr.bf16.mxu0 0
        %6577 = vmatpush1.bf16.msra.mxu0 0
        %6578 = vmatprep.subr.bf16.mxu0 0
        %6579 = vmatpush1.bf16.msra.mxu0 0
        %6580 = vmatprep.subr.bf16.mxu0 0
        %6581 = vmatpush1.bf16.msra.mxu0 0
        %6582 = vmatprep.subr.bf16.mxu0 0
        %6583 = vmatpush1.bf16.msra.mxu0 0
        %6584 = vmatprep.subr.bf16.mxu0 0
        %6585 = vmatpush1.bf16.msra.mxu0 0
        %6586 = vmatprep.subr.bf16.mxu0 0
        %6587 = vmatpush1.bf16.msra.mxu0 0
        %6588 = vmatprep.subr.bf16.mxu0 0
        %6589 = vmatpush1.bf16.msra.mxu0 0
        %6590 = vmatprep.subr.bf16.mxu0 0
        %6591 = vmatpush1.bf16.msra.mxu0 0
        %6592 = vmatprep.mubr.bf16.mxu0 0
        %6593 = vmatmul.mubr.bf16.gmra.mrb[0].mxu0 %v6549
        %v6594 = vpop.f32.mrb[0].mxu0
        %v6595 = vadd.f32 0.0, %v6594
        %v6596 = vpop.f32.mrb[0].mxu0
        %v6597 = vpop.f32.mrb[0].mxu0
        %v6598 = vadd.f32 0.0, %v6597
        %v6599 = vpop.f32.mrb[0].mxu0
        %6600 = vmatprep.mubr.bf16.mxu0 0
        %6601 = vmatmul.mubr.bf16.gmra.mrb[0].mxu0 %v6552
        %v6602 = vpop.f32.mrb[0].mxu0
        %v6603 = vadd.f32 0.0, %v6602
        %v6604 = vpop.f32.mrb[0].mxu0
        %v6605 = vpop.f32.mrb[0].mxu0
        %v6606 = vadd.f32 0.0, %v6605
        %v6607 = vpop.f32.mrb[0].mxu0
        %6608 = vmatprep.mubr.bf16.mxu0 0
        %6609 = vmatmul.mubr.bf16.gmra.mrb[0].mxu0 %v6555
        %v6610 = vpop.f32.mrb[0].mxu0
        %v6611 = vadd.f32 0.0, %v6610
        %v6612 = vpop.f32.mrb[0].mxu0
        %v6613 = vpop.f32.mrb[0].mxu0
        %v6614 = vadd.f32 0.0, %v6613
        %v6615 = vpop.f32.mrb[0].mxu0
        %6616 = vmatprep.mubr.bf16.mxu0 0
        %6617 = vmatmul.mubr.bf16.gmra.mrb[0].mxu0 %v6558
        %v6618 = vpop.f32.mrb[0].mxu0
        %v6619 = vadd.f32 0.0, %v6618
        %v6620 = vpop.f32.mrb[0].mxu0
        %v6621 = vpop.f32.mrb[0].mxu0
        %v6622 = vadd.f32 0.0, %v6621
        %v6623 = vpop.f32.mrb[0].mxu0
        %6624 = vdwg.mxu0
        %6625 = vrot.lane.b32.xlu0 %v1524, 32
        %v6626 = vpop.permute.xlu0 %6625
        %6627 = vrot.lane.b32.xlu0 %v1525, 32
        %v6628 = vpop.permute.xlu0 %6627
        %6629 = vrot.lane.b32.xlu0 %v1526, 32
        %v6630 = vpop.permute.xlu0 %6629
        %6631 = vrot.lane.b32.xlu0 %v1527, 32
        %v6632 = vpop.permute.xlu0 %6631
        %v6638 = vsel %vm1889, %v6439, 0
        %v6641 = vsel %vm1889, %v6440, 0
        %v6644 = vsel %vm1889, %v6441, 0
        %v6647 = vsel %vm1889, %v6442, 0
        %6649 = vmatprep.subr.bf16.mxu0 0
        %6650 = vmatpush1.bf16.msra.mxu0 %v6626
        %6651 = vmatprep.subr.bf16.mxu0 0
        %6652 = vmatpush1.bf16.msra.mxu0 %v6628
        %6653 = vmatprep.subr.bf16.mxu0 0
        %6654 = vmatpush1.bf16.msra.mxu0 %v6630
        %6655 = vmatprep.subr.bf16.mxu0 0
        %6656 = vmatpush1.bf16.msra.mxu0 %v6632
        %6657 = vmatprep.subr.bf16.mxu0 0
        %6658 = vmatpush1.bf16.msra.mxu0 0
        %6659 = vmatprep.subr.bf16.mxu0 0
        %6660 = vmatpush1.bf16.msra.mxu0 0
        %6661 = vmatprep.subr.bf16.mxu0 0
        %6662 = vmatpush1.bf16.msra.mxu0 0
        %6663 = vmatprep.subr.bf16.mxu0 0
        %6664 = vmatpush1.bf16.msra.mxu0 0
        %6665 = vmatprep.subr.bf16.mxu0 0
        %6666 = vmatpush1.bf16.msra.mxu0 0
        %6667 = vmatprep.subr.bf16.mxu0 0
        %6668 = vmatpush1.bf16.msra.mxu0 0
        %6669 = vmatprep.subr.bf16.mxu0 0
        %6670 = vmatpush1.bf16.msra.mxu0 0
        %6671 = vmatprep.subr.bf16.mxu0 0
        %6672 = vmatpush1.bf16.msra.mxu0 0
        %6673 = vmatprep.subr.bf16.mxu0 0
        %6674 = vmatpush1.bf16.msra.mxu0 0
        %6675 = vmatprep.subr.bf16.mxu0 0
        %6676 = vmatpush1.bf16.msra.mxu0 0
        %6677 = vmatprep.subr.bf16.mxu0 0
        %6678 = vmatpush1.bf16.msra.mxu0 0
        %6679 = vmatprep.subr.bf16.mxu0 0
        %6680 = vmatpush1.bf16.msra.mxu0 0
        %6681 = vmatprep.mubr.bf16.mxu0 0
        %6682 = vmatmul.mubr.bf16.gmra.mrb[0].mxu0 %v6638
        %v6683 = vpop.f32.mrb[0].mxu0
        %v6684 = vadd.f32 0.0, %v6683
        %v6685 = vpop.f32.mrb[0].mxu0
        %v6686 = vpop.f32.mrb[0].mxu0
        %v6687 = vadd.f32 0.0, %v6686
        %v6688 = vpop.f32.mrb[0].mxu0
        %6689 = vmatprep.mubr.bf16.mxu0 0
        %6690 = vmatmul.mubr.bf16.gmra.mrb[0].mxu0 %v6641
        %v6691 = vpop.f32.mrb[0].mxu0
        %v6692 = vadd.f32 0.0, %v6691
        %v6693 = vpop.f32.mrb[0].mxu0
        %v6694 = vpop.f32.mrb[0].mxu0
        %v6695 = vadd.f32 0.0, %v6694
        %v6696 = vpop.f32.mrb[0].mxu0
        %6697 = vmatprep.mubr.bf16.mxu0 0
        %6698 = vmatmul.mubr.bf16.gmra.mrb[0].mxu0 %v6644
        %v6699 = vpop.f32.mrb[0].mxu0
        %v6700 = vadd.f32 0.0, %v6699
        %v6701 = vpop.f32.mrb[0].mxu0
        %v6702 = vpop.f32.mrb[0].mxu0
        %v6703 = vadd.f32 0.0, %v6702
        %v6704 = vpop.f32.mrb[0].mxu0
        %6705 = vmatprep.mubr.bf16.mxu0 0
        %6706 = vmatmul.mubr.bf16.gmra.mrb[0].mxu0 %v6647
        %v6707 = vpop.f32.mrb[0].mxu0
        %v6708 = vadd.f32 0.0, %v6707
        %v6709 = vpop.f32.mrb[0].mxu0
        %v6710 = vpop.f32.mrb[0].mxu0
        %v6711 = vadd.f32 0.0, %v6710
        %v6712 = vpop.f32.mrb[0].mxu0
        %6713 = vdwg.mxu0
        %6714 = vrot.lane.b32.xlu0 %v1528, 32
        %v6715 = vpop.permute.xlu0 %6714
        %6716 = vrot.lane.b32.xlu0 %v1529, 32
        %v6717 = vpop.permute.xlu0 %6716
        %6718 = vrot.lane.b32.xlu0 %v1530, 32
        %v6719 = vpop.permute.xlu0 %6718
        %6720 = vrot.lane.b32.xlu0 %v1531, 32
        %v6721 = vpop.permute.xlu0 %6720
        %v6727 = vsel %vm1889, %v6443, 0
        %v6730 = vsel %vm1889, %v6444, 0
        %v6733 = vsel %vm1889, %v6445, 0
        %v6736 = vsel %vm1889, %v6446, 0
        %6738 = vmatprep.subr.bf16.mxu0 0
        %6739 = vmatpush1.bf16.msra.mxu0 %v6715
        %6740 = vmatprep.subr.bf16.mxu0 0
        %6741 = vmatpush1.bf16.msra.mxu0 %v6717
        %6742 = vmatprep.subr.bf16.mxu0 0
        %6743 = vmatpush1.bf16.msra.mxu0 %v6719
        %6744 = vmatprep.subr.bf16.mxu0 0
        %6745 = vmatpush1.bf16.msra.mxu0 %v6721
        %6746 = vmatprep.subr.bf16.mxu0 0
        %6747 = vmatpush1.bf16.msra.mxu0 0
        %6748 = vmatprep.subr.bf16.mxu0 0
        %6749 = vmatpush1.bf16.msra.mxu0 0
        %6750 = vmatprep.subr.bf16.mxu0 0
        %6751 = vmatpush1.bf16.msra.mxu0 0
        %6752 = vmatprep.subr.bf16.mxu0 0
        %6753 = vmatpush1.bf16.msra.mxu0 0
        %6754 = vmatprep.subr.bf16.mxu0 0
        %6755 = vmatpush1.bf16.msra.mxu0 0
        %6756 = vmatprep.subr.bf16.mxu0 0
        %6757 = vmatpush1.bf16.msra.mxu0 0
        %6758 = vmatprep.subr.bf16.mxu0 0
        %6759 = vmatpush1.bf16.msra.mxu0 0
        %6760 = vmatprep.subr.bf16.mxu0 0
        %6761 = vmatpush1.bf16.msra.mxu0 0
        %6762 = vmatprep.subr.bf16.mxu0 0
        %6763 = vmatpush1.bf16.msra.mxu0 0
        %6764 = vmatprep.subr.bf16.mxu0 0
        %6765 = vmatpush1.bf16.msra.mxu0 0
        %6766 = vmatprep.subr.bf16.mxu0 0
        %6767 = vmatpush1.bf16.msra.mxu0 0
        %6768 = vmatprep.subr.bf16.mxu0 0
        %6769 = vmatpush1.bf16.msra.mxu0 0
        %6770 = vmatprep.mubr.bf16.mxu0 0
        %6771 = vmatmul.mubr.bf16.gmra.mrb[0].mxu0 %v6727
        %v6772 = vpop.f32.mrb[0].mxu0
        %v6773 = vadd.f32 0.0, %v6772
        %v6774 = vpop.f32.mrb[0].mxu0
        %v6775 = vpop.f32.mrb[0].mxu0
        %v6776 = vadd.f32 0.0, %v6775
        %v6777 = vpop.f32.mrb[0].mxu0
        %6778 = vmatprep.mubr.bf16.mxu0 0
        %6779 = vmatmul.mubr.bf16.gmra.mrb[0].mxu0 %v6730
        %v6780 = vpop.f32.mrb[0].mxu0
        %v6781 = vadd.f32 0.0, %v6780
        %v6782 = vpop.f32.mrb[0].mxu0
        %v6783 = vpop.f32.mrb[0].mxu0
        %v6784 = vadd.f32 0.0, %v6783
        %v6785 = vpop.f32.mrb[0].mxu0
        %6786 = vmatprep.mubr.bf16.mxu0 0
        %6787 = vmatmul.mubr.bf16.gmra.mrb[0].mxu0 %v6733
        %v6788 = vpop.f32.mrb[0].mxu0
        %v6789 = vadd.f32 0.0, %v6788
        %v6790 = vpop.f32.mrb[0].mxu0
        %v6791 = vpop.f32.mrb[0].mxu0
        %v6792 = vadd.f32 0.0, %v6791
        %v6793 = vpop.f32.mrb[0].mxu0
        %6794 = vmatprep.mubr.bf16.mxu0 0
        %6795 = vmatmul.mubr.bf16.gmra.mrb[0].mxu0 %v6736
        %v6796 = vpop.f32.mrb[0].mxu0
        %v6797 = vadd.f32 0.0, %v6796
        %v6798 = vpop.f32.mrb[0].mxu0
        %v6799 = vpop.f32.mrb[0].mxu0
        %v6800 = vadd.f32 0.0, %v6799
        %v6801 = vpop.f32.mrb[0].mxu0
        %6802 = vdwg.mxu0
        %v6803 = vpack.c.bf16 %v6509, %v6506
        %v6804 = vpack.c.bf16 %v6517, %v6514
        %v6805 = vpack.c.bf16 %v6525, %v6522
        %v6806 = vpack.c.bf16 %v6533, %v6530
        %v6807 = vpack.c.bf16 %v6598, %v6595
        %v6808 = vpack.c.bf16 %v6606, %v6603
        %v6809 = vpack.c.bf16 %v6614, %v6611
        %v6810 = vpack.c.bf16 %v6622, %v6619
        %v6811 = vpack.c.bf16 %v6687, %v6684
        %v6812 = vpack.c.bf16 %v6695, %v6692
        %v6813 = vpack.c.bf16 %v6703, %v6700
        %v6814 = vpack.c.bf16 %v6711, %v6708
        %v6815 = vpack.c.bf16 %v6776, %v6773
        %v6816 = vpack.c.bf16 %v6784, %v6781
        %v6817 = vpack.c.bf16 %v6792, %v6789
        %v6818 = vpack.c.bf16 %v6800, %v6797
        %s6819 = scalar_lea.vmem [#allocation11], 48
        %v6820 = vld [vmem:[%s6819] sm:$0xf]
        %v6821 = vld [vmem:[%s6819 + $0x4] sm:$0xf]
        %v6822 = vld [vmem:[%s6819 + $0x8] sm:$0xf]
        %v6823 = vld [vmem:[%s6819 + $0xc] sm:$0xf]
        %v6828 = vunpack.c.l.b16 %v6820
        %v6829 = vunpack.c.l.b16 %v6821
        %v6830 = vunpack.c.l.b16 %v6822
        %v6831 = vunpack.c.l.b16 %v6823
        %v6832 = vpack.c.b16 %v6829, %v6828
        %v6833 = vpack.c.b16 %v6831, %v6830
        %v6837 = vsel %vm1532, %v6803, 0
        %v6840 = vsel %vm1532, %v6804, 0
        %v6843 = vsel %vm1532, %v6805, 0
        %v6846 = vsel %vm1532, %v6806, 0
        %v6849 = vsel %vm1532, %v6807, 0
        %v6852 = vsel %vm1532, %v6808, 0
        %v6855 = vsel %vm1532, %v6809, 0
        %v6858 = vsel %vm1532, %v6810, 0
        %v6861 = vsel %vm1532, %v6811, 0
        %v6864 = vsel %vm1532, %v6812, 0
        %v6867 = vsel %vm1532, %v6813, 0
        %v6870 = vsel %vm1532, %v6814, 0
        %v6873 = vsel %vm1532, %v6815, 0
        %v6876 = vsel %vm1532, %v6816, 0
        %v6879 = vsel %vm1532, %v6817, 0
        %v6882 = vsel %vm1532, %v6818, 0
        %6884 = vmatprep.subr.bf16.mxu0 0
        %6885 = vmatpush1.bf16.msra.mxu0 %v6832
        %6886 = vmatprep.subr.bf16.mxu0 0
        %6887 = vmatpush1.bf16.msra.mxu0 %v6833
        %6888 = vmatprep.subr.bf16.mxu0 0
        %6889 = vmatpush1.bf16.msra.mxu0 0
        %6890 = vmatprep.subr.bf16.mxu0 0
        %6891 = vmatpush1.bf16.msra.mxu0 0
        %6892 = vmatprep.subr.bf16.mxu0 0
        %6893 = vmatpush1.bf16.msra.mxu0 0
        %6894 = vmatprep.subr.bf16.mxu0 0
        %6895 = vmatpush1.bf16.msra.mxu0 0
        %6896 = vmatprep.subr.bf16.mxu0 0
        %6897 = vmatpush1.bf16.msra.mxu0 0
        %6898 = vmatprep.subr.bf16.mxu0 0
        %6899 = vmatpush1.bf16.msra.mxu0 0
        %6900 = vmatprep.subr.bf16.mxu0 0
        %6901 = vmatpush1.bf16.msra.mxu0 0
        %6902 = vmatprep.subr.bf16.mxu0 0
        %6903 = vmatpush1.bf16.msra.mxu0 0
        %6904 = vmatprep.subr.bf16.mxu0 0
        %6905 = vmatpush1.bf16.msra.mxu0 0
        %6906 = vmatprep.subr.bf16.mxu0 0
        %6907 = vmatpush1.bf16.msra.mxu0 0
        %6908 = vmatprep.subr.bf16.mxu0 0
        %6909 = vmatpush1.bf16.msra.mxu0 0
        %6910 = vmatprep.subr.bf16.mxu0 0
        %6911 = vmatpush1.bf16.msra.mxu0 0
        %6912 = vmatprep.subr.bf16.mxu0 0
        %6913 = vmatpush1.bf16.msra.mxu0 0
        %6914 = vmatprep.subr.bf16.mxu0 0
        %6915 = vmatpush1.bf16.msra.mxu0 0
        %6916 = vmatprep.mubr.bf16.mxu0 0
        %6917 = vmatmul.mubr.bf16.gmra.mrb[0].mxu0 %v6837
        %v6918 = vpop.f32.mrb[0].mxu0
        %v6919 = vadd.f32 0.0, %v6918
        %v6920 = vpop.f32.mrb[0].mxu0
        %v6921 = vpop.f32.mrb[0].mxu0
        %v6922 = vadd.f32 0.0, %v6921
        %v6923 = vpop.f32.mrb[0].mxu0
        %6924 = vmatprep.mubr.bf16.mxu0 0
        %6925 = vmatmul.mubr.bf16.gmra.mrb[0].mxu0 %v6840
        %v6926 = vpop.f32.mrb[0].mxu0
        %v6927 = vadd.f32 0.0, %v6926
        %v6928 = vpop.f32.mrb[0].mxu0
        %v6929 = vpop.f32.mrb[0].mxu0
        %v6930 = vadd.f32 0.0, %v6929
        %v6931 = vpop.f32.mrb[0].mxu0
        %6932 = vmatprep.mubr.bf16.mxu0 0
        %6933 = vmatmul.mubr.bf16.gmra.mrb[0].mxu0 %v6843
        %v6934 = vpop.f32.mrb[0].mxu0
        %v6935 = vadd.f32 0.0, %v6934
        %v6936 = vpop.f32.mrb[0].mxu0
        %v6937 = vpop.f32.mrb[0].mxu0
        %v6938 = vadd.f32 0.0, %v6937
        %v6939 = vpop.f32.mrb[0].mxu0
        %6940 = vmatprep.mubr.bf16.mxu0 0
        %6941 = vmatmul.mubr.bf16.gmra.mrb[0].mxu0 %v6846
        %v6942 = vpop.f32.mrb[0].mxu0
        %v6943 = vadd.f32 0.0, %v6942
        %v6944 = vpop.f32.mrb[0].mxu0
        %v6945 = vpop.f32.mrb[0].mxu0
        %v6946 = vadd.f32 0.0, %v6945
        %v6947 = vpop.f32.mrb[0].mxu0
        %6948 = vmatprep.mubr.bf16.mxu0 0
        %6949 = vmatmul.mubr.bf16.gmra.mrb[0].mxu0 %v6849
        %v6950 = vpop.f32.mrb[0].mxu0
        %v6951 = vadd.f32 0.0, %v6950
        %v6952 = vpop.f32.mrb[0].mxu0
        %v6953 = vpop.f32.mrb[0].mxu0
        %v6954 = vadd.f32 0.0, %v6953
        %v6955 = vpop.f32.mrb[0].mxu0
        %6956 = vmatprep.mubr.bf16.mxu0 0
        %6957 = vmatmul.mubr.bf16.gmra.mrb[0].mxu0 %v6852
        %v6958 = vpop.f32.mrb[0].mxu0
        %v6959 = vadd.f32 0.0, %v6958
        %v6960 = vpop.f32.mrb[0].mxu0
        %v6961 = vpop.f32.mrb[0].mxu0
        %v6962 = vadd.f32 0.0, %v6961
        %v6963 = vpop.f32.mrb[0].mxu0
        %6964 = vmatprep.mubr.bf16.mxu0 0
        %6965 = vmatmul.mubr.bf16.gmra.mrb[0].mxu0 %v6855
        %v6966 = vpop.f32.mrb[0].mxu0
        %v6967 = vadd.f32 0.0, %v6966
        %v6968 = vpop.f32.mrb[0].mxu0
        %v6969 = vpop.f32.mrb[0].mxu0
        %v6970 = vadd.f32 0.0, %v6969
        %v6971 = vpop.f32.mrb[0].mxu0
        %6972 = vmatprep.mubr.bf16.mxu0 0
        %6973 = vmatmul.mubr.bf16.gmra.mrb[0].mxu0 %v6858
        %v6974 = vpop.f32.mrb[0].mxu0
        %v6975 = vadd.f32 0.0, %v6974
        %v6976 = vpop.f32.mrb[0].mxu0
        %v6977 = vpop.f32.mrb[0].mxu0
        %v6978 = vadd.f32 0.0, %v6977
        %v6979 = vpop.f32.mrb[0].mxu0
        %6980 = vmatprep.mubr.bf16.mxu0 0
        %6981 = vmatmul.mubr.bf16.gmra.mrb[0].mxu0 %v6861
        %v6982 = vpop.f32.mrb[0].mxu0
        %v6983 = vadd.f32 0.0, %v6982
        %v6984 = vpop.f32.mrb[0].mxu0
        %v6985 = vpop.f32.mrb[0].mxu0
        %v6986 = vadd.f32 0.0, %v6985
        %v6987 = vpop.f32.mrb[0].mxu0
        %6988 = vmatprep.mubr.bf16.mxu0 0
        %6989 = vmatmul.mubr.bf16.gmra.mrb[0].mxu0 %v6864
        %v6990 = vpop.f32.mrb[0].mxu0
        %v6991 = vadd.f32 0.0, %v6990
        %v6992 = vpop.f32.mrb[0].mxu0
        %v6993 = vpop.f32.mrb[0].mxu0
        %v6994 = vadd.f32 0.0, %v6993
        %v6995 = vpop.f32.mrb[0].mxu0
        %6996 = vmatprep.mubr.bf16.mxu0 0
        %6997 = vmatmul.mubr.bf16.gmra.mrb[0].mxu0 %v6867
        %v6998 = vpop.f32.mrb[0].mxu0
        %v6999 = vadd.f32 0.0, %v6998
        %v7000 = vpop.f32.mrb[0].mxu0
        %v7001 = vpop.f32.mrb[0].mxu0
        %v7002 = vadd.f32 0.0, %v7001
        %v7003 = vpop.f32.mrb[0].mxu0
        %7004 = vmatprep.mubr.bf16.mxu0 0
        %7005 = vmatmul.mubr.bf16.gmra.mrb[0].mxu0 %v6870
        %v7006 = vpop.f32.mrb[0].mxu0
        %v7007 = vadd.f32 0.0, %v7006
        %v7008 = vpop.f32.mrb[0].mxu0
        %v7009 = vpop.f32.mrb[0].mxu0
        %v7010 = vadd.f32 0.0, %v7009
        %v7011 = vpop.f32.mrb[0].mxu0
        %7012 = vmatprep.mubr.bf16.mxu0 0
        %7013 = vmatmul.mubr.bf16.gmra.mrb[0].mxu0 %v6873
        %v7014 = vpop.f32.mrb[0].mxu0
        %v7015 = vadd.f32 0.0, %v7014
        %v7016 = vpop.f32.mrb[0].mxu0
        %v7017 = vpop.f32.mrb[0].mxu0
        %v7018 = vadd.f32 0.0, %v7017
        %v7019 = vpop.f32.mrb[0].mxu0
        %7020 = vmatprep.mubr.bf16.mxu0 0
        %7021 = vmatmul.mubr.bf16.gmra.mrb[0].mxu0 %v6876
        %v7022 = vpop.f32.mrb[0].mxu0
        %v7023 = vadd.f32 0.0, %v7022
        %v7024 = vpop.f32.mrb[0].mxu0
        %v7025 = vpop.f32.mrb[0].mxu0
        %v7026 = vadd.f32 0.0, %v7025
        %v7027 = vpop.f32.mrb[0].mxu0
        %7028 = vmatprep.mubr.bf16.mxu0 0
        %7029 = vmatmul.mubr.bf16.gmra.mrb[0].mxu0 %v6879
        %v7030 = vpop.f32.mrb[0].mxu0
        %v7031 = vadd.f32 0.0, %v7030
        %v7032 = vpop.f32.mrb[0].mxu0
        %v7033 = vpop.f32.mrb[0].mxu0
        %v7034 = vadd.f32 0.0, %v7033
        %v7035 = vpop.f32.mrb[0].mxu0
        %7036 = vmatprep.mubr.bf16.mxu0 0
        %7037 = vmatmul.mubr.bf16.gmra.mrb[0].mxu0 %v6882
        %v7038 = vpop.f32.mrb[0].mxu0
        %v7039 = vadd.f32 0.0, %v7038
        %v7040 = vpop.f32.mrb[0].mxu0
        %v7041 = vpop.f32.mrb[0].mxu0
        %v7042 = vadd.f32 0.0, %v7041
        %v7043 = vpop.f32.mrb[0].mxu0
        %7044 = vdwg.mxu0
        %v7045 = vadd.f32 %v5627, %v6919
        %v7046 = vadd.f32 %v5628, %v6922
        %v7047 = vadd.f32 %v5629, %v6927
        %v7048 = vadd.f32 %v5630, %v6930
        %v7049 = vadd.f32 %v5631, %v6935
        %v7050 = vadd.f32 %v5632, %v6938
        %v7051 = vadd.f32 %v5633, %v6943
        %v7052 = vadd.f32 %v5634, %v6946
        %v7053 = vadd.f32 %v5635, %v6951
        %v7054 = vadd.f32 %v5636, %v6954
        %v7055 = vadd.f32 %v5637, %v6959
        %v7056 = vadd.f32 %v5638, %v6962
        %v7057 = vadd.f32 %v5639, %v6967
        %v7058 = vadd.f32 %v5640, %v6970
        %v7059 = vadd.f32 %v5641, %v6975
        %v7060 = vadd.f32 %v5642, %v6978
        %v7061 = vadd.f32 %v5643, %v6983
        %v7062 = vadd.f32 %v5644, %v6986
        %v7063 = vadd.f32 %v5645, %v6991
        %v7064 = vadd.f32 %v5646, %v6994
        %v7065 = vadd.f32 %v5647, %v6999
        %v7066 = vadd.f32 %v5648, %v7002
        %v7067 = vadd.f32 %v5649, %v7007
        %v7068 = vadd.f32 %v5650, %v7010
        %v7069 = vadd.f32 %v5651, %v7015
        %v7070 = vadd.f32 %v5652, %v7018
        %v7071 = vadd.f32 %v5653, %v7023
        %v7072 = vadd.f32 %v5654, %v7026
        %v7073 = vadd.f32 %v5655, %v7031
        %v7074 = vadd.f32 %v5656, %v7034
        %v7075 = vadd.f32 %v5657, %v7039
        %v7076 = vadd.f32 %v5658, %v7042
        %v7077 = vld [vmem:[%s9] sm:$0x1]
        %v7079 = vlaneseq
        %v7080 = vshrl.u32 %v7079, 7
        %v7081 = vsub.s32 0, %v7080
        %v7082 = vrot.slane %v7077, %v7081
        %v7084 = vadd.f32 %v7045, %v7082
        %v7085 = vadd.f32 %v7046, %v7082
        %v7086 = vadd.f32 %v7047, %v7082
        %v7087 = vadd.f32 %v7048, %v7082
        %v7088 = vadd.f32 %v7049, %v7082
        %v7089 = vadd.f32 %v7050, %v7082
        %v7090 = vadd.f32 %v7051, %v7082
        %v7091 = vadd.f32 %v7052, %v7082
        %v7092 = vadd.f32 %v7053, %v7082
        %v7093 = vadd.f32 %v7054, %v7082
        %v7094 = vadd.f32 %v7055, %v7082
        %v7095 = vadd.f32 %v7056, %v7082
        %v7096 = vadd.f32 %v7057, %v7082
        %v7097 = vadd.f32 %v7058, %v7082
        %v7098 = vadd.f32 %v7059, %v7082
        %v7099 = vadd.f32 %v7060, %v7082
        %v7100 = vadd.f32 %v7061, %v7082
        %v7101 = vadd.f32 %v7062, %v7082
        %v7102 = vadd.f32 %v7063, %v7082
        %v7103 = vadd.f32 %v7064, %v7082
        %v7104 = vadd.f32 %v7065, %v7082
        %v7105 = vadd.f32 %v7066, %v7082
        %v7106 = vadd.f32 %v7067, %v7082
        %v7107 = vadd.f32 %v7068, %v7082
        %v7108 = vadd.f32 %v7069, %v7082
        %v7109 = vadd.f32 %v7070, %v7082
        %v7110 = vadd.f32 %v7071, %v7082
        %v7111 = vadd.f32 %v7072, %v7082
        %v7112 = vadd.f32 %v7073, %v7082
        %v7113 = vadd.f32 %v7074, %v7082
        %v7114 = vadd.f32 %v7075, %v7082
        %v7115 = vadd.f32 %v7076, %v7082
        %v7116 = vadd.f32 %v740, %v7084
        %v7117 = vadd.f32 %v741, %v7085
        %v7118 = vadd.f32 %v742, %v7086
        %v7119 = vadd.f32 %v743, %v7087
        %v7120 = vadd.f32 %v744, %v7088
        %v7121 = vadd.f32 %v745, %v7089
        %v7122 = vadd.f32 %v746, %v7090
        %v7123 = vadd.f32 %v747, %v7091
        %v7124 = vadd.f32 %v748, %v7092
        %v7125 = vadd.f32 %v749, %v7093
        %v7126 = vadd.f32 %v750, %v7094
        %v7127 = vadd.f32 %v751, %v7095
        %v7128 = vadd.f32 %v752, %v7096
        %v7129 = vadd.f32 %v753, %v7097
        %v7130 = vadd.f32 %v754, %v7098
        %v7131 = vadd.f32 %v755, %v7099
        %v7132 = vadd.f32 %v756, %v7100
        %v7133 = vadd.f32 %v757, %v7101
        %v7134 = vadd.f32 %v758, %v7102
        %v7135 = vadd.f32 %v759, %v7103
        %v7136 = vadd.f32 %v760, %v7104
        %v7137 = vadd.f32 %v761, %v7105
        %v7138 = vadd.f32 %v762, %v7106
        %v7139 = vadd.f32 %v763, %v7107
        %v7140 = vadd.f32 %v764, %v7108
        %v7141 = vadd.f32 %v765, %v7109
        %v7142 = vadd.f32 %v766, %v7110
        %v7143 = vadd.f32 %v767, %v7111
        %v7144 = vadd.f32 %v768, %v7112
        %v7145 = vadd.f32 %v769, %v7113
        %v7146 = vadd.f32 %v770, %v7114
        %v7147 = vadd.f32 %v771, %v7115
        %v7148 = vld [vmem:[%s10] sm:$0x1]
        %v7149 = vld [vmem:[%s11] sm:$0x1]
        %7150 = vadd.xlane.f32.xlu0 %v7116
        %v7151 = vpop.xlane.xlu0 %7150
        %7152 = vadd.xlane.f32.xlu0 %v7117
        %v7153 = vpop.xlane.xlu0 %7152
        %7154 = vadd.xlane.f32.xlu0 %v7118
        %v7155 = vpop.xlane.xlu0 %7154
        %7156 = vadd.xlane.f32.xlu0 %v7119
        %v7157 = vpop.xlane.xlu0 %7156
        %7158 = vadd.xlane.f32.xlu0 %v7120
        %v7159 = vpop.xlane.xlu0 %7158
        %7160 = vadd.xlane.f32.xlu0 %v7121
        %v7161 = vpop.xlane.xlu0 %7160
        %7162 = vadd.xlane.f32.xlu0 %v7122
        %v7163 = vpop.xlane.xlu0 %7162
        %7164 = vadd.xlane.f32.xlu0 %v7123
        %v7165 = vpop.xlane.xlu0 %7164
        %7166 = vadd.xlane.f32.xlu0 %v7124
        %v7167 = vpop.xlane.xlu0 %7166
        %7168 = vadd.xlane.f32.xlu0 %v7125
        %v7169 = vpop.xlane.xlu0 %7168
        %7170 = vadd.xlane.f32.xlu0 %v7126
        %v7171 = vpop.xlane.xlu0 %7170
        %7172 = vadd.xlane.f32.xlu0 %v7127
        %v7173 = vpop.xlane.xlu0 %7172
        %7174 = vadd.xlane.f32.xlu0 %v7128
        %v7175 = vpop.xlane.xlu0 %7174
        %7176 = vadd.xlane.f32.xlu0 %v7129
        %v7177 = vpop.xlane.xlu0 %7176
        %7178 = vadd.xlane.f32.xlu0 %v7130
        %v7179 = vpop.xlane.xlu0 %7178
        %7180 = vadd.xlane.f32.xlu0 %v7131
        %v7181 = vpop.xlane.xlu0 %7180
        %7182 = vadd.xlane.f32.xlu0 %v7132
        %v7183 = vpop.xlane.xlu0 %7182
        %7184 = vadd.xlane.f32.xlu0 %v7133
        %v7185 = vpop.xlane.xlu0 %7184
        %7186 = vadd.xlane.f32.xlu0 %v7134
        %v7187 = vpop.xlane.xlu0 %7186
        %7188 = vadd.xlane.f32.xlu0 %v7135
        %v7189 = vpop.xlane.xlu0 %7188
        %7190 = vadd.xlane.f32.xlu0 %v7136
        %v7191 = vpop.xlane.xlu0 %7190
        %7192 = vadd.xlane.f32.xlu0 %v7137
        %v7193 = vpop.xlane.xlu0 %7192
        %7194 = vadd.xlane.f32.xlu0 %v7138
        %v7195 = vpop.xlane.xlu0 %7194
        %7196 = vadd.xlane.f32.xlu0 %v7139
        %v7197 = vpop.xlane.xlu0 %7196
        %7198 = vadd.xlane.f32.xlu0 %v7140
        %v7199 = vpop.xlane.xlu0 %7198
        %7200 = vadd.xlane.f32.xlu0 %v7141
        %v7201 = vpop.xlane.xlu0 %7200
        %7202 = vadd.xlane.f32.xlu0 %v7142
        %v7203 = vpop.xlane.xlu0 %7202
        %7204 = vadd.xlane.f32.xlu0 %v7143
        %v7205 = vpop.xlane.xlu0 %7204
        %7206 = vadd.xlane.f32.xlu0 %v7144
        %v7207 = vpop.xlane.xlu0 %7206
        %7208 = vadd.xlane.f32.xlu0 %v7145
        %v7209 = vpop.xlane.xlu0 %7208
        %7210 = vadd.xlane.f32.xlu0 %v7146
        %v7211 = vpop.xlane.xlu0 %7210
        %7212 = vadd.xlane.f32.xlu0 %v7147
        %v7213 = vpop.xlane.xlu0 %7212
        %v7214 = vrcp.pop 128.0
        %v7215 = vmul.f32 %v7151, %v7214
        %v7216 = vmul.f32 %v7153, %v7214
        %v7217 = vmul.f32 %v7155, %v7214
        %v7218 = vmul.f32 %v7157, %v7214
        %v7219 = vmul.f32 %v7159, %v7214
        %v7220 = vmul.f32 %v7161, %v7214
        %v7221 = vmul.f32 %v7163, %v7214
        %v7222 = vmul.f32 %v7165, %v7214
        %v7223 = vmul.f32 %v7167, %v7214
        %v7224 = vmul.f32 %v7169, %v7214
        %v7225 = vmul.f32 %v7171, %v7214
        %v7226 = vmul.f32 %v7173, %v7214
        %v7227 = vmul.f32 %v7175, %v7214
        %v7228 = vmul.f32 %v7177, %v7214
        %v7229 = vmul.f32 %v7179, %v7214
        %v7230 = vmul.f32 %v7181, %v7214
        %v7231 = vmul.f32 %v7183, %v7214
        %v7232 = vmul.f32 %v7185, %v7214
        %v7233 = vmul.f32 %v7187, %v7214
        %v7234 = vmul.f32 %v7189, %v7214
        %v7235 = vmul.f32 %v7191, %v7214
        %v7236 = vmul.f32 %v7193, %v7214
        %v7237 = vmul.f32 %v7195, %v7214
        %v7238 = vmul.f32 %v7197, %v7214
        %v7239 = vmul.f32 %v7199, %v7214
        %v7240 = vmul.f32 %v7201, %v7214
        %v7241 = vmul.f32 %v7203, %v7214
        %v7242 = vmul.f32 %v7205, %v7214
        %v7243 = vmul.f32 %v7207, %v7214
        %v7244 = vmul.f32 %v7209, %v7214
        %v7245 = vmul.f32 %v7211, %v7214
        %v7246 = vmul.f32 %v7213, %v7214
        %v7247 = vsub.f32 %v7116, %v7215
        %v7248 = vsub.f32 %v7117, %v7216
        %v7249 = vsub.f32 %v7118, %v7217
        %v7250 = vsub.f32 %v7119, %v7218
        %v7251 = vsub.f32 %v7120, %v7219
        %v7252 = vsub.f32 %v7121, %v7220
        %v7253 = vsub.f32 %v7122, %v7221
        %v7254 = vsub.f32 %v7123, %v7222
        %v7255 = vsub.f32 %v7124, %v7223
        %v7256 = vsub.f32 %v7125, %v7224
        %v7257 = vsub.f32 %v7126, %v7225
        %v7258 = vsub.f32 %v7127, %v7226
        %v7259 = vsub.f32 %v7128, %v7227
        %v7260 = vsub.f32 %v7129, %v7228
        %v7261 = vsub.f32 %v7130, %v7229
        %v7262 = vsub.f32 %v7131, %v7230
        %v7263 = vsub.f32 %v7132, %v7231
        %v7264 = vsub.f32 %v7133, %v7232
        %v7265 = vsub.f32 %v7134, %v7233
        %v7266 = vsub.f32 %v7135, %v7234
        %v7267 = vsub.f32 %v7136, %v7235
        %v7268 = vsub.f32 %v7137, %v7236
        %v7269 = vsub.f32 %v7138, %v7237
        %v7270 = vsub.f32 %v7139, %v7238
        %v7271 = vsub.f32 %v7140, %v7239
        %v7272 = vsub.f32 %v7141, %v7240
        %v7273 = vsub.f32 %v7142, %v7241
        %v7274 = vsub.f32 %v7143, %v7242
        %v7275 = vsub.f32 %v7144, %v7243
        %v7276 = vsub.f32 %v7145, %v7244
        %v7277 = vsub.f32 %v7146, %v7245
        %v7278 = vsub.f32 %v7147, %v7246
        %v7279 = vmul.f32 %v7247, %v7247
        %v7280 = vmul.f32 %v7248, %v7248
        %v7281 = vmul.f32 %v7249, %v7249
        %v7282 = vmul.f32 %v7250, %v7250
        %v7283 = vmul.f32 %v7251, %v7251
        %v7284 = vmul.f32 %v7252, %v7252
        %v7285 = vmul.f32 %v7253, %v7253
        %v7286 = vmul.f32 %v7254, %v7254
        %v7287 = vmul.f32 %v7255, %v7255
        %v7288 = vmul.f32 %v7256, %v7256
        %v7289 = vmul.f32 %v7257, %v7257
        %v7290 = vmul.f32 %v7258, %v7258
        %v7291 = vmul.f32 %v7259, %v7259
        %v7292 = vmul.f32 %v7260, %v7260
        %v7293 = vmul.f32 %v7261, %v7261
        %v7294 = vmul.f32 %v7262, %v7262
        %v7295 = vmul.f32 %v7263, %v7263
        %v7296 = vmul.f32 %v7264, %v7264
        %v7297 = vmul.f32 %v7265, %v7265
        %v7298 = vmul.f32 %v7266, %v7266
        %v7299 = vmul.f32 %v7267, %v7267
        %v7300 = vmul.f32 %v7268, %v7268
        %v7301 = vmul.f32 %v7269, %v7269
        %v7302 = vmul.f32 %v7270, %v7270
        %v7303 = vmul.f32 %v7271, %v7271
        %v7304 = vmul.f32 %v7272, %v7272
        %v7305 = vmul.f32 %v7273, %v7273
        %v7306 = vmul.f32 %v7274, %v7274
        %v7307 = vmul.f32 %v7275, %v7275
        %v7308 = vmul.f32 %v7276, %v7276
        %v7309 = vmul.f32 %v7277, %v7277
        %v7310 = vmul.f32 %v7278, %v7278
        %7311 = vadd.xlane.f32.xlu0 %v7279
        %v7312 = vpop.xlane.xlu0 %7311
        %7313 = vadd.xlane.f32.xlu0 %v7280
        %v7314 = vpop.xlane.xlu0 %7313
        %7315 = vadd.xlane.f32.xlu0 %v7281
        %v7316 = vpop.xlane.xlu0 %7315
        %7317 = vadd.xlane.f32.xlu0 %v7282
        %v7318 = vpop.xlane.xlu0 %7317
        %7319 = vadd.xlane.f32.xlu0 %v7283
        %v7320 = vpop.xlane.xlu0 %7319
        %7321 = vadd.xlane.f32.xlu0 %v7284
        %v7322 = vpop.xlane.xlu0 %7321
        %7323 = vadd.xlane.f32.xlu0 %v7285
        %v7324 = vpop.xlane.xlu0 %7323
        %7325 = vadd.xlane.f32.xlu0 %v7286
        %v7326 = vpop.xlane.xlu0 %7325
        %7327 = vadd.xlane.f32.xlu0 %v7287
        %v7328 = vpop.xlane.xlu0 %7327
        %7329 = vadd.xlane.f32.xlu0 %v7288
        %v7330 = vpop.xlane.xlu0 %7329
        %7331 = vadd.xlane.f32.xlu0 %v7289
        %v7332 = vpop.xlane.xlu0 %7331
        %7333 = vadd.xlane.f32.xlu0 %v7290
        %v7334 = vpop.xlane.xlu0 %7333
        %7335 = vadd.xlane.f32.xlu0 %v7291
        %v7336 = vpop.xlane.xlu0 %7335
        %7337 = vadd.xlane.f32.xlu0 %v7292
        %v7338 = vpop.xlane.xlu0 %7337
        %7339 = vadd.xlane.f32.xlu0 %v7293
        %v7340 = vpop.xlane.xlu0 %7339
        %7341 = vadd.xlane.f32.xlu0 %v7294
        %v7342 = vpop.xlane.xlu0 %7341
        %7343 = vadd.xlane.f32.xlu0 %v7295
        %v7344 = vpop.xlane.xlu0 %7343
        %7345 = vadd.xlane.f32.xlu0 %v7296
        %v7346 = vpop.xlane.xlu0 %7345
        %7347 = vadd.xlane.f32.xlu0 %v7297
        %v7348 = vpop.xlane.xlu0 %7347
        %7349 = vadd.xlane.f32.xlu0 %v7298
        %v7350 = vpop.xlane.xlu0 %7349
        %7351 = vadd.xlane.f32.xlu0 %v7299
        %v7352 = vpop.xlane.xlu0 %7351
        %7353 = vadd.xlane.f32.xlu0 %v7300
        %v7354 = vpop.xlane.xlu0 %7353
        %7355 = vadd.xlane.f32.xlu0 %v7301
        %v7356 = vpop.xlane.xlu0 %7355
        %7357 = vadd.xlane.f32.xlu0 %v7302
        %v7358 = vpop.xlane.xlu0 %7357
        %7359 = vadd.xlane.f32.xlu0 %v7303
        %v7360 = vpop.xlane.xlu0 %7359
        %7361 = vadd.xlane.f32.xlu0 %v7304
        %v7362 = vpop.xlane.xlu0 %7361
        %7363 = vadd.xlane.f32.xlu0 %v7305
        %v7364 = vpop.xlane.xlu0 %7363
        %7365 = vadd.xlane.f32.xlu0 %v7306
        %v7366 = vpop.xlane.xlu0 %7365
        %7367 = vadd.xlane.f32.xlu0 %v7307
        %v7368 = vpop.xlane.xlu0 %7367
        %7369 = vadd.xlane.f32.xlu0 %v7308
        %v7370 = vpop.xlane.xlu0 %7369
        %7371 = vadd.xlane.f32.xlu0 %v7309
        %v7372 = vpop.xlane.xlu0 %7371
        %7373 = vadd.xlane.f32.xlu0 %v7310
        %v7374 = vpop.xlane.xlu0 %7373
        %v7375 = vmul.f32 %v7312, %v7214
        %v7376 = vmul.f32 %v7314, %v7214
        %v7377 = vmul.f32 %v7316, %v7214
        %v7378 = vmul.f32 %v7318, %v7214
        %v7379 = vmul.f32 %v7320, %v7214
        %v7380 = vmul.f32 %v7322, %v7214
        %v7381 = vmul.f32 %v7324, %v7214
        %v7382 = vmul.f32 %v7326, %v7214
        %v7383 = vmul.f32 %v7328, %v7214
        %v7384 = vmul.f32 %v7330, %v7214
        %v7385 = vmul.f32 %v7332, %v7214
        %v7386 = vmul.f32 %v7334, %v7214
        %v7387 = vmul.f32 %v7336, %v7214
        %v7388 = vmul.f32 %v7338, %v7214
        %v7389 = vmul.f32 %v7340, %v7214
        %v7390 = vmul.f32 %v7342, %v7214
        %v7391 = vmul.f32 %v7344, %v7214
        %v7392 = vmul.f32 %v7346, %v7214
        %v7393 = vmul.f32 %v7348, %v7214
        %v7394 = vmul.f32 %v7350, %v7214
        %v7395 = vmul.f32 %v7352, %v7214
        %v7396 = vmul.f32 %v7354, %v7214
        %v7397 = vmul.f32 %v7356, %v7214
        %v7398 = vmul.f32 %v7358, %v7214
        %v7399 = vmul.f32 %v7360, %v7214
        %v7400 = vmul.f32 %v7362, %v7214
        %v7401 = vmul.f32 %v7364, %v7214
        %v7402 = vmul.f32 %v7366, %v7214
        %v7403 = vmul.f32 %v7368, %v7214
        %v7404 = vmul.f32 %v7370, %v7214
        %v7405 = vmul.f32 %v7372, %v7214
        %v7406 = vmul.f32 %v7374, %v7214
        %v7407 = vadd.f32 %v7375, 1e-05
        %v7408 = vadd.f32 %v7376, 1e-05
        %v7409 = vadd.f32 %v7377, 1e-05
        %v7410 = vadd.f32 %v7378, 1e-05
        %v7411 = vadd.f32 %v7379, 1e-05
        %v7412 = vadd.f32 %v7380, 1e-05
        %v7413 = vadd.f32 %v7381, 1e-05
        %v7414 = vadd.f32 %v7382, 1e-05
        %v7415 = vadd.f32 %v7383, 1e-05
        %v7416 = vadd.f32 %v7384, 1e-05
        %v7417 = vadd.f32 %v7385, 1e-05
        %v7418 = vadd.f32 %v7386, 1e-05
        %v7419 = vadd.f32 %v7387, 1e-05
        %v7420 = vadd.f32 %v7388, 1e-05
        %v7421 = vadd.f32 %v7389, 1e-05
        %v7422 = vadd.f32 %v7390, 1e-05
        %v7423 = vadd.f32 %v7391, 1e-05
        %v7424 = vadd.f32 %v7392, 1e-05
        %v7425 = vadd.f32 %v7393, 1e-05
        %v7426 = vadd.f32 %v7394, 1e-05
        %v7427 = vadd.f32 %v7395, 1e-05
        %v7428 = vadd.f32 %v7396, 1e-05
        %v7429 = vadd.f32 %v7397, 1e-05
        %v7430 = vadd.f32 %v7398, 1e-05
        %v7431 = vadd.f32 %v7399, 1e-05
        %v7432 = vadd.f32 %v7400, 1e-05
        %v7433 = vadd.f32 %v7401, 1e-05
        %v7434 = vadd.f32 %v7402, 1e-05
        %v7435 = vadd.f32 %v7403, 1e-05
        %v7436 = vadd.f32 %v7404, 1e-05
        %v7437 = vadd.f32 %v7405, 1e-05
        %v7438 = vadd.f32 %v7406, 1e-05
        %v7439 = vrsqrt.pop %v7407
        %v7440 = vrsqrt.pop %v7408
        %v7441 = vrsqrt.pop %v7409
        %v7442 = vrsqrt.pop %v7410
        %v7443 = vrsqrt.pop %v7411
        %v7444 = vrsqrt.pop %v7412
        %v7445 = vrsqrt.pop %v7413
        %v7446 = vrsqrt.pop %v7414
        %v7447 = vrsqrt.pop %v7415
        %v7448 = vrsqrt.pop %v7416
        %v7449 = vrsqrt.pop %v7417
        %v7450 = vrsqrt.pop %v7418
        %v7451 = vrsqrt.pop %v7419
        %v7452 = vrsqrt.pop %v7420
        %v7453 = vrsqrt.pop %v7421
        %v7454 = vrsqrt.pop %v7422
        %v7455 = vrsqrt.pop %v7423
        %v7456 = vrsqrt.pop %v7424
        %v7457 = vrsqrt.pop %v7425
        %v7458 = vrsqrt.pop %v7426
        %v7459 = vrsqrt.pop %v7427
        %v7460 = vrsqrt.pop %v7428
        %v7461 = vrsqrt.pop %v7429
        %v7462 = vrsqrt.pop %v7430
        %v7463 = vrsqrt.pop %v7431
        %v7464 = vrsqrt.pop %v7432
        %v7465 = vrsqrt.pop %v7433
        %v7466 = vrsqrt.pop %v7434
        %v7467 = vrsqrt.pop %v7435
        %v7468 = vrsqrt.pop %v7436
        %v7469 = vrsqrt.pop %v7437
        %v7470 = vrsqrt.pop %v7438
        %v7471 = vmul.f32 %v7247, %v7439
        %v7472 = vmul.f32 %v7248, %v7440
        %v7473 = vmul.f32 %v7249, %v7441
        %v7474 = vmul.f32 %v7250, %v7442
        %v7475 = vmul.f32 %v7251, %v7443
        %v7476 = vmul.f32 %v7252, %v7444
        %v7477 = vmul.f32 %v7253, %v7445
        %v7478 = vmul.f32 %v7254, %v7446
        %v7479 = vmul.f32 %v7255, %v7447
        %v7480 = vmul.f32 %v7256, %v7448
        %v7481 = vmul.f32 %v7257, %v7449
        %v7482 = vmul.f32 %v7258, %v7450
        %v7483 = vmul.f32 %v7259, %v7451
        %v7484 = vmul.f32 %v7260, %v7452
        %v7485 = vmul.f32 %v7261, %v7453
        %v7486 = vmul.f32 %v7262, %v7454
        %v7487 = vmul.f32 %v7263, %v7455
        %v7488 = vmul.f32 %v7264, %v7456
        %v7489 = vmul.f32 %v7265, %v7457
        %v7490 = vmul.f32 %v7266, %v7458
        %v7491 = vmul.f32 %v7267, %v7459
        %v7492 = vmul.f32 %v7268, %v7460
        %v7493 = vmul.f32 %v7269, %v7461
        %v7494 = vmul.f32 %v7270, %v7462
        %v7495 = vmul.f32 %v7271, %v7463
        %v7496 = vmul.f32 %v7272, %v7464
        %v7497 = vmul.f32 %v7273, %v7465
        %v7498 = vmul.f32 %v7274, %v7466
        %v7499 = vmul.f32 %v7275, %v7467
        %v7500 = vmul.f32 %v7276, %v7468
        %v7501 = vmul.f32 %v7277, %v7469
        %v7502 = vmul.f32 %v7278, %v7470
        %v7504 = vlaneseq
        %v7505 = vshrl.u32 %v7504, 7
        %v7506 = vsub.s32 0, %v7505
        %v7507 = vrot.slane %v7148, %v7506
        %v7509 = vmul.f32 %v7471, %v7507
        %v7510 = vmul.f32 %v7472, %v7507
        %v7511 = vmul.f32 %v7473, %v7507
        %v7512 = vmul.f32 %v7474, %v7507
        %v7513 = vmul.f32 %v7475, %v7507
        %v7514 = vmul.f32 %v7476, %v7507
        %v7515 = vmul.f32 %v7477, %v7507
        %v7516 = vmul.f32 %v7478, %v7507
        %v7517 = vmul.f32 %v7479, %v7507
        %v7518 = vmul.f32 %v7480, %v7507
        %v7519 = vmul.f32 %v7481, %v7507
        %v7520 = vmul.f32 %v7482, %v7507
        %v7521 = vmul.f32 %v7483, %v7507
        %v7522 = vmul.f32 %v7484, %v7507
        %v7523 = vmul.f32 %v7485, %v7507
        %v7524 = vmul.f32 %v7486, %v7507
        %v7525 = vmul.f32 %v7487, %v7507
        %v7526 = vmul.f32 %v7488, %v7507
        %v7527 = vmul.f32 %v7489, %v7507
        %v7528 = vmul.f32 %v7490, %v7507
        %v7529 = vmul.f32 %v7491, %v7507
        %v7530 = vmul.f32 %v7492, %v7507
        %v7531 = vmul.f32 %v7493, %v7507
        %v7532 = vmul.f32 %v7494, %v7507
        %v7533 = vmul.f32 %v7495, %v7507
        %v7534 = vmul.f32 %v7496, %v7507
        %v7535 = vmul.f32 %v7497, %v7507
        %v7536 = vmul.f32 %v7498, %v7507
        %v7537 = vmul.f32 %v7499, %v7507
        %v7538 = vmul.f32 %v7500, %v7507
        %v7539 = vmul.f32 %v7501, %v7507
        %v7540 = vmul.f32 %v7502, %v7507
        %v7542 = vlaneseq
        %v7543 = vshrl.u32 %v7542, 7
        %v7544 = vsub.s32 0, %v7543
        %v7545 = vrot.slane %v7149, %v7544
        %v7547 = vadd.f32 %v7509, %v7545
        %v7548 = vadd.f32 %v7510, %v7545
        %v7549 = vadd.f32 %v7511, %v7545
        %v7550 = vadd.f32 %v7512, %v7545
        %v7551 = vadd.f32 %v7513, %v7545
        %v7552 = vadd.f32 %v7514, %v7545
        %v7553 = vadd.f32 %v7515, %v7545
        %v7554 = vadd.f32 %v7516, %v7545
        %v7555 = vadd.f32 %v7517, %v7545
        %v7556 = vadd.f32 %v7518, %v7545
        %v7557 = vadd.f32 %v7519, %v7545
        %v7558 = vadd.f32 %v7520, %v7545
        %v7559 = vadd.f32 %v7521, %v7545
        %v7560 = vadd.f32 %v7522, %v7545
        %v7561 = vadd.f32 %v7523, %v7545
        %v7562 = vadd.f32 %v7524, %v7545
        %v7563 = vadd.f32 %v7525, %v7545
        %v7564 = vadd.f32 %v7526, %v7545
        %v7565 = vadd.f32 %v7527, %v7545
        %v7566 = vadd.f32 %v7528, %v7545
        %v7567 = vadd.f32 %v7529, %v7545
        %v7568 = vadd.f32 %v7530, %v7545
        %v7569 = vadd.f32 %v7531, %v7545
        %v7570 = vadd.f32 %v7532, %v7545
        %v7571 = vadd.f32 %v7533, %v7545
        %v7572 = vadd.f32 %v7534, %v7545
        %v7573 = vadd.f32 %v7535, %v7545
        %v7574 = vadd.f32 %v7536, %v7545
        %v7575 = vadd.f32 %v7537, %v7545
        %v7576 = vadd.f32 %v7538, %v7545
        %v7577 = vadd.f32 %v7539, %v7545
        %v7578 = vadd.f32 %v7540, %v7545
        %v7579 = vpack.c.bf16 %v7548, %v7547
        %v7580 = vpack.c.bf16 %v7550, %v7549
        %v7581 = vpack.c.bf16 %v7552, %v7551
        %v7582 = vpack.c.bf16 %v7554, %v7553
        %v7583 = vpack.c.bf16 %v7556, %v7555
        %v7584 = vpack.c.bf16 %v7558, %v7557
        %v7585 = vpack.c.bf16 %v7560, %v7559
        %v7586 = vpack.c.bf16 %v7562, %v7561
        %v7587 = vpack.c.bf16 %v7564, %v7563
        %v7588 = vpack.c.bf16 %v7566, %v7565
        %v7589 = vpack.c.bf16 %v7568, %v7567
        %v7590 = vpack.c.bf16 %v7570, %v7569
        %v7591 = vpack.c.bf16 %v7572, %v7571
        %v7592 = vpack.c.bf16 %v7574, %v7573
        %v7593 = vpack.c.bf16 %v7576, %v7575
        %v7594 = vpack.c.bf16 %v7578, %v7577
        %v7595 = vld [vmem:[#allocation13] sm:$0xff]
        %v7596 = vld [vmem:[#allocation13 + $0x8] sm:$0xff]
        %v7597 = vld [vmem:[#allocation13 + $0x10] sm:$0xff]
        %v7598 = vld [vmem:[#allocation13 + $0x18] sm:$0xff]
        %v7599 = vld [vmem:[#allocation13 + $0x20] sm:$0xff]
        %v7600 = vld [vmem:[#allocation13 + $0x28] sm:$0xff]
        %v7601 = vld [vmem:[#allocation13 + $0x30] sm:$0xff]
        %v7602 = vld [vmem:[#allocation13 + $0x38] sm:$0xff]
        %v7603 = vld [vmem:[#allocation13 + $0x40] sm:$0xff]
        %v7604 = vld [vmem:[#allocation13 + $0x48] sm:$0xff]
        %v7605 = vld [vmem:[#allocation13 + $0x50] sm:$0xff]
        %v7606 = vld [vmem:[#allocation13 + $0x58] sm:$0xff]
        %v7607 = vld [vmem:[#allocation13 + $0x60] sm:$0xff]
        %v7608 = vld [vmem:[#allocation13 + $0x68] sm:$0xff]
        %v7609 = vld [vmem:[#allocation13 + $0x70] sm:$0xff]
        %v7610 = vld [vmem:[#allocation13 + $0x78] sm:$0xff]
        %v7611 = vld [vmem:[%s13] sm:$0x3]
        %v7613 = vlaneseq
        %v7614 = vshrl.u32 %v7613, 7
        %v7615 = vsub.s32 0, %v7614
        %v7616 = vrot.slane %v7611, %v7615
        %v7617 = vlaneseq
        %v7618 = vshrl.u32 %v7617, 7
        %v7619 = vsub.s32 1, %v7618
        %v7620 = vrot.slane %v7611, %v7619
        %v7639 = vunpack.c.l.b16 %v7595
        %v7640 = vunpack.c.h.b16 %v7595
        %v7641 = vunpack.c.l.b16 %v7596
        %v7642 = vunpack.c.h.b16 %v7596
        %v7643 = vunpack.c.l.b16 %v7597
        %v7644 = vunpack.c.h.b16 %v7597
        %v7645 = vunpack.c.l.b16 %v7598
        %v7646 = vunpack.c.h.b16 %v7598
        %v7647 = vunpack.c.l.b16 %v7599
        %v7648 = vunpack.c.h.b16 %v7599
        %v7649 = vunpack.c.l.b16 %v7600
        %v7650 = vunpack.c.h.b16 %v7600
        %v7651 = vunpack.c.l.b16 %v7601
        %v7652 = vunpack.c.h.b16 %v7601
        %v7653 = vunpack.c.l.b16 %v7602
        %v7654 = vunpack.c.h.b16 %v7602
        %v7655 = vunpack.c.l.b16 %v7603
        %v7656 = vunpack.c.h.b16 %v7603
        %v7657 = vunpack.c.l.b16 %v7604
        %v7658 = vunpack.c.h.b16 %v7604
        %v7659 = vunpack.c.l.b16 %v7605
        %v7660 = vunpack.c.h.b16 %v7605
        %v7661 = vunpack.c.l.b16 %v7606
        %v7662 = vunpack.c.h.b16 %v7606
        %v7663 = vunpack.c.l.b16 %v7607
        %v7664 = vunpack.c.h.b16 %v7607
        %v7665 = vunpack.c.l.b16 %v7608
        %v7666 = vunpack.c.h.b16 %v7608
        %v7667 = vunpack.c.l.b16 %v7609
        %v7668 = vunpack.c.h.b16 %v7609
        %v7669 = vunpack.c.l.b16 %v7610
        %v7670 = vunpack.c.h.b16 %v7610
        %v7671 = vpack.c.b16 %v7641, %v7639
        %v7672 = vpack.c.b16 %v7642, %v7640
        %v7673 = vpack.c.b16 %v7645, %v7643
        %v7674 = vpack.c.b16 %v7646, %v7644
        %v7675 = vpack.c.b16 %v7649, %v7647
        %v7676 = vpack.c.b16 %v7650, %v7648
        %v7677 = vpack.c.b16 %v7653, %v7651
        %v7678 = vpack.c.b16 %v7654, %v7652
        %v7679 = vpack.c.b16 %v7657, %v7655
        %v7680 = vpack.c.b16 %v7658, %v7656
        %v7681 = vpack.c.b16 %v7661, %v7659
        %v7682 = vpack.c.b16 %v7662, %v7660
        %v7683 = vpack.c.b16 %v7665, %v7663
        %v7684 = vpack.c.b16 %v7666, %v7664
        %v7685 = vpack.c.b16 %v7669, %v7667
        %v7686 = vpack.c.b16 %v7670, %v7668
        %7703 = vmatprep.subr.bf16.mxu0 %v7672
        %7704 = vmatpush1.bf16.msra.mxu0 %v7671
        %7705 = vmatprep.subr.bf16.mxu0 %v7674
        %7706 = vmatpush1.bf16.msra.mxu0 %v7673
        %7707 = vmatprep.subr.bf16.mxu0 %v7676
        %7708 = vmatpush1.bf16.msra.mxu0 %v7675
        %7709 = vmatprep.subr.bf16.mxu0 %v7678
        %7710 = vmatpush1.bf16.msra.mxu0 %v7677
        %7711 = vmatprep.subr.bf16.mxu0 %v7680
        %7712 = vmatpush1.bf16.msra.mxu0 %v7679
        %7713 = vmatprep.subr.bf16.mxu0 %v7682
        %7714 = vmatpush1.bf16.msra.mxu0 %v7681
        %7715 = vmatprep.subr.bf16.mxu0 %v7684
        %7716 = vmatpush1.bf16.msra.mxu0 %v7683
        %7717 = vmatprep.subr.bf16.mxu0 %v7686
        %7718 = vmatpush1.bf16.msra.mxu0 %v7685
        %7719 = vmatprep.subr.bf16.mxu0 0
        %7720 = vmatpush1.bf16.msra.mxu0 0
        %7721 = vmatprep.subr.bf16.mxu0 0
        %7722 = vmatpush1.bf16.msra.mxu0 0
        %7723 = vmatprep.subr.bf16.mxu0 0
        %7724 = vmatpush1.bf16.msra.mxu0 0
        %7725 = vmatprep.subr.bf16.mxu0 0
        %7726 = vmatpush1.bf16.msra.mxu0 0
        %7727 = vmatprep.subr.bf16.mxu0 0
        %7728 = vmatpush1.bf16.msra.mxu0 0
        %7729 = vmatprep.subr.bf16.mxu0 0
        %7730 = vmatpush1.bf16.msra.mxu0 0
        %7731 = vmatprep.subr.bf16.mxu0 0
        %7732 = vmatpush1.bf16.msra.mxu0 0
        %7733 = vmatprep.subr.bf16.mxu0 0
        %7734 = vmatpush1.bf16.msra.mxu0 0
        %7735 = vmatprep.mubr.bf16.mxu0 0
        %7736 = vmatmul.mubr.bf16.gmra.mrb[0].mxu0 %v7579
        %v7737 = vpop.f32.mrb[0].mxu0
        %v7738 = vadd.f32 %v7616, %v7737
        %v7739 = vpop.f32.mrb[0].mxu0
        %v7740 = vadd.f32 %v7620, %v7739
        %v7741 = vpop.f32.mrb[0].mxu0
        %v7742 = vadd.f32 %v7616, %v7741
        %v7743 = vpop.f32.mrb[0].mxu0
        %v7744 = vadd.f32 %v7620, %v7743
        %7745 = vmatprep.mubr.bf16.mxu0 0
        %7746 = vmatmul.mubr.bf16.gmra.mrb[0].mxu0 %v7580
        %v7747 = vpop.f32.mrb[0].mxu0
        %v7748 = vadd.f32 %v7616, %v7747
        %v7749 = vpop.f32.mrb[0].mxu0
        %v7750 = vadd.f32 %v7620, %v7749
        %v7751 = vpop.f32.mrb[0].mxu0
        %v7752 = vadd.f32 %v7616, %v7751
        %v7753 = vpop.f32.mrb[0].mxu0
        %v7754 = vadd.f32 %v7620, %v7753
        %7755 = vmatprep.mubr.bf16.mxu0 0
        %7756 = vmatmul.mubr.bf16.gmra.mrb[0].mxu0 %v7581
        %v7757 = vpop.f32.mrb[0].mxu0
        %v7758 = vadd.f32 %v7616, %v7757
        %v7759 = vpop.f32.mrb[0].mxu0
        %v7760 = vadd.f32 %v7620, %v7759
        %v7761 = vpop.f32.mrb[0].mxu0
        %v7762 = vadd.f32 %v7616, %v7761
        %v7763 = vpop.f32.mrb[0].mxu0
        %v7764 = vadd.f32 %v7620, %v7763
        %7765 = vmatprep.mubr.bf16.mxu0 0
        %7766 = vmatmul.mubr.bf16.gmra.mrb[0].mxu0 %v7582
        %v7767 = vpop.f32.mrb[0].mxu0
        %v7768 = vadd.f32 %v7616, %v7767
        %v7769 = vpop.f32.mrb[0].mxu0
        %v7770 = vadd.f32 %v7620, %v7769
        %v7771 = vpop.f32.mrb[0].mxu0
        %v7772 = vadd.f32 %v7616, %v7771
        %v7773 = vpop.f32.mrb[0].mxu0
        %v7774 = vadd.f32 %v7620, %v7773
        %7775 = vmatprep.mubr.bf16.mxu0 0
        %7776 = vmatmul.mubr.bf16.gmra.mrb[0].mxu0 %v7583
        %v7777 = vpop.f32.mrb[0].mxu0
        %v7778 = vadd.f32 %v7616, %v7777
        %v7779 = vpop.f32.mrb[0].mxu0
        %v7780 = vadd.f32 %v7620, %v7779
        %v7781 = vpop.f32.mrb[0].mxu0
        %v7782 = vadd.f32 %v7616, %v7781
        %v7783 = vpop.f32.mrb[0].mxu0
        %v7784 = vadd.f32 %v7620, %v7783
        %7785 = vmatprep.mubr.bf16.mxu0 0
        %7786 = vmatmul.mubr.bf16.gmra.mrb[0].mxu0 %v7584
        %v7787 = vpop.f32.mrb[0].mxu0
        %v7788 = vadd.f32 %v7616, %v7787
        %v7789 = vpop.f32.mrb[0].mxu0
        %v7790 = vadd.f32 %v7620, %v7789
        %v7791 = vpop.f32.mrb[0].mxu0
        %v7792 = vadd.f32 %v7616, %v7791
        %v7793 = vpop.f32.mrb[0].mxu0
        %v7794 = vadd.f32 %v7620, %v7793
        %7795 = vmatprep.mubr.bf16.mxu0 0
        %7796 = vmatmul.mubr.bf16.gmra.mrb[0].mxu0 %v7585
        %v7797 = vpop.f32.mrb[0].mxu0
        %v7798 = vadd.f32 %v7616, %v7797
        %v7799 = vpop.f32.mrb[0].mxu0
        %v7800 = vadd.f32 %v7620, %v7799
        %v7801 = vpop.f32.mrb[0].mxu0
        %v7802 = vadd.f32 %v7616, %v7801
        %v7803 = vpop.f32.mrb[0].mxu0
        %v7804 = vadd.f32 %v7620, %v7803
        %7805 = vmatprep.mubr.bf16.mxu0 0
        %7806 = vmatmul.mubr.bf16.gmra.mrb[0].mxu0 %v7586
        %v7807 = vpop.f32.mrb[0].mxu0
        %v7808 = vadd.f32 %v7616, %v7807
        %v7809 = vpop.f32.mrb[0].mxu0
        %v7810 = vadd.f32 %v7620, %v7809
        %v7811 = vpop.f32.mrb[0].mxu0
        %v7812 = vadd.f32 %v7616, %v7811
        %v7813 = vpop.f32.mrb[0].mxu0
        %v7814 = vadd.f32 %v7620, %v7813
        %7815 = vmatprep.mubr.bf16.mxu0 0
        %7816 = vmatmul.mubr.bf16.gmra.mrb[0].mxu0 %v7587
        %v7817 = vpop.f32.mrb[0].mxu0
        %v7818 = vadd.f32 %v7616, %v7817
        %v7819 = vpop.f32.mrb[0].mxu0
        %v7820 = vadd.f32 %v7620, %v7819
        %v7821 = vpop.f32.mrb[0].mxu0
        %v7822 = vadd.f32 %v7616, %v7821
        %v7823 = vpop.f32.mrb[0].mxu0
        %v7824 = vadd.f32 %v7620, %v7823
        %7825 = vmatprep.mubr.bf16.mxu0 0
        %7826 = vmatmul.mubr.bf16.gmra.mrb[0].mxu0 %v7588
        %v7827 = vpop.f32.mrb[0].mxu0
        %v7828 = vadd.f32 %v7616, %v7827
        %v7829 = vpop.f32.mrb[0].mxu0
        %v7830 = vadd.f32 %v7620, %v7829
        %v7831 = vpop.f32.mrb[0].mxu0
        %v7832 = vadd.f32 %v7616, %v7831
        %v7833 = vpop.f32.mrb[0].mxu0
        %v7834 = vadd.f32 %v7620, %v7833
        %7835 = vmatprep.mubr.bf16.mxu0 0
        %7836 = vmatmul.mubr.bf16.gmra.mrb[0].mxu0 %v7589
        %v7837 = vpop.f32.mrb[0].mxu0
        %v7838 = vadd.f32 %v7616, %v7837
        %v7839 = vpop.f32.mrb[0].mxu0
        %v7840 = vadd.f32 %v7620, %v7839
        %v7841 = vpop.f32.mrb[0].mxu0
        %v7842 = vadd.f32 %v7616, %v7841
        %v7843 = vpop.f32.mrb[0].mxu0
        %v7844 = vadd.f32 %v7620, %v7843
        %7845 = vmatprep.mubr.bf16.mxu0 0
        %7846 = vmatmul.mubr.bf16.gmra.mrb[0].mxu0 %v7590
        %v7847 = vpop.f32.mrb[0].mxu0
        %v7848 = vadd.f32 %v7616, %v7847
        %v7849 = vpop.f32.mrb[0].mxu0
        %v7850 = vadd.f32 %v7620, %v7849
        %v7851 = vpop.f32.mrb[0].mxu0
        %v7852 = vadd.f32 %v7616, %v7851
        %v7853 = vpop.f32.mrb[0].mxu0
        %v7854 = vadd.f32 %v7620, %v7853
        %7855 = vmatprep.mubr.bf16.mxu0 0
        %7856 = vmatmul.mubr.bf16.gmra.mrb[0].mxu0 %v7591
        %v7857 = vpop.f32.mrb[0].mxu0
        %v7858 = vadd.f32 %v7616, %v7857
        %v7859 = vpop.f32.mrb[0].mxu0
        %v7860 = vadd.f32 %v7620, %v7859
        %v7861 = vpop.f32.mrb[0].mxu0
        %v7862 = vadd.f32 %v7616, %v7861
        %v7863 = vpop.f32.mrb[0].mxu0
        %v7864 = vadd.f32 %v7620, %v7863
        %7865 = vmatprep.mubr.bf16.mxu0 0
        %7866 = vmatmul.mubr.bf16.gmra.mrb[0].mxu0 %v7592
        %v7867 = vpop.f32.mrb[0].mxu0
        %v7868 = vadd.f32 %v7616, %v7867
        %v7869 = vpop.f32.mrb[0].mxu0
        %v7870 = vadd.f32 %v7620, %v7869
        %v7871 = vpop.f32.mrb[0].mxu0
        %v7872 = vadd.f32 %v7616, %v7871
        %v7873 = vpop.f32.mrb[0].mxu0
        %v7874 = vadd.f32 %v7620, %v7873
        %7875 = vmatprep.mubr.bf16.mxu0 0
        %7876 = vmatmul.mubr.bf16.gmra.mrb[0].mxu0 %v7593
        %v7877 = vpop.f32.mrb[0].mxu0
        %v7878 = vadd.f32 %v7616, %v7877
        %v7879 = vpop.f32.mrb[0].mxu0
        %v7880 = vadd.f32 %v7620, %v7879
        %v7881 = vpop.f32.mrb[0].mxu0
        %v7882 = vadd.f32 %v7616, %v7881
        %v7883 = vpop.f32.mrb[0].mxu0
        %v7884 = vadd.f32 %v7620, %v7883
        %7885 = vmatprep.mubr.bf16.mxu0 0
        %7886 = vmatmul.mubr.bf16.gmra.mrb[0].mxu0 %v7594
        %v7887 = vpop.f32.mrb[0].mxu0
        %v7888 = vadd.f32 %v7616, %v7887
        %v7889 = vpop.f32.mrb[0].mxu0
        %v7890 = vadd.f32 %v7620, %v7889
        %v7891 = vpop.f32.mrb[0].mxu0
        %v7892 = vadd.f32 %v7616, %v7891
        %v7893 = vpop.f32.mrb[0].mxu0
        %v7894 = vadd.f32 %v7620, %v7893
        %7895 = vdwg.mxu0
        %v7896 = vmax.f32 %v7738, 0.0
        %v7897 = vmax.f32 %v7740, 0.0
        %v7898 = vmax.f32 %v7742, 0.0
        %v7899 = vmax.f32 %v7744, 0.0
        %v7900 = vmax.f32 %v7748, 0.0
        %v7901 = vmax.f32 %v7750, 0.0
        %v7902 = vmax.f32 %v7752, 0.0
        %v7903 = vmax.f32 %v7754, 0.0
        %v7904 = vmax.f32 %v7758, 0.0
        %v7905 = vmax.f32 %v7760, 0.0
        %v7906 = vmax.f32 %v7762, 0.0
        %v7907 = vmax.f32 %v7764, 0.0
        %v7908 = vmax.f32 %v7768, 0.0
        %v7909 = vmax.f32 %v7770, 0.0
        %v7910 = vmax.f32 %v7772, 0.0
        %v7911 = vmax.f32 %v7774, 0.0
        %v7912 = vmax.f32 %v7778, 0.0
        %v7913 = vmax.f32 %v7780, 0.0
        %v7914 = vmax.f32 %v7782, 0.0
        %v7915 = vmax.f32 %v7784, 0.0
        %v7916 = vmax.f32 %v7788, 0.0
        %v7917 = vmax.f32 %v7790, 0.0
        %v7918 = vmax.f32 %v7792, 0.0
        %v7919 = vmax.f32 %v7794, 0.0
        %v7920 = vmax.f32 %v7798, 0.0
        %v7921 = vmax.f32 %v7800, 0.0
        %v7922 = vmax.f32 %v7802, 0.0
        %v7923 = vmax.f32 %v7804, 0.0
        %v7924 = vmax.f32 %v7808, 0.0
        %v7925 = vmax.f32 %v7810, 0.0
        %v7926 = vmax.f32 %v7812, 0.0
        %v7927 = vmax.f32 %v7814, 0.0
        %v7928 = vmax.f32 %v7818, 0.0
        %v7929 = vmax.f32 %v7820, 0.0
        %v7930 = vmax.f32 %v7822, 0.0
        %v7931 = vmax.f32 %v7824, 0.0
        %v7932 = vmax.f32 %v7828, 0.0
        %v7933 = vmax.f32 %v7830, 0.0
        %v7934 = vmax.f32 %v7832, 0.0
        %v7935 = vmax.f32 %v7834, 0.0
        %v7936 = vmax.f32 %v7838, 0.0
        %v7937 = vmax.f32 %v7840, 0.0
        %v7938 = vmax.f32 %v7842, 0.0
        %v7939 = vmax.f32 %v7844, 0.0
        %v7940 = vmax.f32 %v7848, 0.0
        %v7941 = vmax.f32 %v7850, 0.0
        %v7942 = vmax.f32 %v7852, 0.0
        %v7943 = vmax.f32 %v7854, 0.0
        %v7944 = vmax.f32 %v7858, 0.0
        %v7945 = vmax.f32 %v7860, 0.0
        %v7946 = vmax.f32 %v7862, 0.0
        %v7947 = vmax.f32 %v7864, 0.0
        %v7948 = vmax.f32 %v7868, 0.0
        %v7949 = vmax.f32 %v7870, 0.0
        %v7950 = vmax.f32 %v7872, 0.0
        %v7951 = vmax.f32 %v7874, 0.0
        %v7952 = vmax.f32 %v7878, 0.0
        %v7953 = vmax.f32 %v7880, 0.0
        %v7954 = vmax.f32 %v7882, 0.0
        %v7955 = vmax.f32 %v7884, 0.0
        %v7956 = vmax.f32 %v7888, 0.0
        %v7957 = vmax.f32 %v7890, 0.0
        %v7958 = vmax.f32 %v7892, 0.0
        %v7959 = vmax.f32 %v7894, 0.0
        %v7960 = vpack.c.bf16 %v7898, %v7896
        %v7961 = vpack.c.bf16 %v7899, %v7897
        %v7962 = vpack.c.bf16 %v7902, %v7900
        %v7963 = vpack.c.bf16 %v7903, %v7901
        %v7964 = vpack.c.bf16 %v7906, %v7904
        %v7965 = vpack.c.bf16 %v7907, %v7905
        %v7966 = vpack.c.bf16 %v7910, %v7908
        %v7967 = vpack.c.bf16 %v7911, %v7909
        %v7968 = vpack.c.bf16 %v7914, %v7912
        %v7969 = vpack.c.bf16 %v7915, %v7913
        %v7970 = vpack.c.bf16 %v7918, %v7916
        %v7971 = vpack.c.bf16 %v7919, %v7917
        %v7972 = vpack.c.bf16 %v7922, %v7920
        %v7973 = vpack.c.bf16 %v7923, %v7921
        %v7974 = vpack.c.bf16 %v7926, %v7924
        %v7975 = vpack.c.bf16 %v7927, %v7925
        %v7976 = vpack.c.bf16 %v7930, %v7928
        %v7977 = vpack.c.bf16 %v7931, %v7929
        %v7978 = vpack.c.bf16 %v7934, %v7932
        %v7979 = vpack.c.bf16 %v7935, %v7933
        %v7980 = vpack.c.bf16 %v7938, %v7936
        %v7981 = vpack.c.bf16 %v7939, %v7937
        %v7982 = vpack.c.bf16 %v7942, %v7940
        %v7983 = vpack.c.bf16 %v7943, %v7941
        %v7984 = vpack.c.bf16 %v7946, %v7944
        %v7985 = vpack.c.bf16 %v7947, %v7945
        %v7986 = vpack.c.bf16 %v7950, %v7948
        %v7987 = vpack.c.bf16 %v7951, %v7949
        %v7988 = vpack.c.bf16 %v7954, %v7952
        %v7989 = vpack.c.bf16 %v7955, %v7953
        %v7990 = vpack.c.bf16 %v7958, %v7956
        %v7991 = vpack.c.bf16 %v7959, %v7957
        %v7992 = vld [vmem:[#allocation14] sm:$0xf]
        %v7993 = vld [vmem:[#allocation14 + $0x4] sm:$0xf]
        %v7994 = vld [vmem:[#allocation14 + $0x8] sm:$0xf]
        %v7995 = vld [vmem:[#allocation14 + $0xc] sm:$0xf]
        %v7996 = vld [vmem:[#allocation14 + $0x10] sm:$0xf]
        %v7997 = vld [vmem:[#allocation14 + $0x14] sm:$0xf]
        %v7998 = vld [vmem:[#allocation14 + $0x18] sm:$0xf]
        %v7999 = vld [vmem:[#allocation14 + $0x1c] sm:$0xf]
        %v8000 = vld [vmem:[#allocation14 + $0x20] sm:$0xf]
        %v8001 = vld [vmem:[#allocation14 + $0x24] sm:$0xf]
        %v8002 = vld [vmem:[#allocation14 + $0x28] sm:$0xf]
        %v8003 = vld [vmem:[#allocation14 + $0x2c] sm:$0xf]
        %v8004 = vld [vmem:[#allocation14 + $0x30] sm:$0xf]
        %v8005 = vld [vmem:[#allocation14 + $0x34] sm:$0xf]
        %v8006 = vld [vmem:[#allocation14 + $0x38] sm:$0xf]
        %v8007 = vld [vmem:[#allocation14 + $0x3c] sm:$0xf]
        %v8008 = vld [vmem:[#allocation14 + $0x40] sm:$0xf]
        %v8009 = vld [vmem:[#allocation14 + $0x44] sm:$0xf]
        %v8010 = vld [vmem:[#allocation14 + $0x48] sm:$0xf]
        %v8011 = vld [vmem:[#allocation14 + $0x4c] sm:$0xf]
        %v8012 = vld [vmem:[#allocation14 + $0x50] sm:$0xf]
        %v8013 = vld [vmem:[#allocation14 + $0x54] sm:$0xf]
        %v8014 = vld [vmem:[#allocation14 + $0x58] sm:$0xf]
        %v8015 = vld [vmem:[#allocation14 + $0x5c] sm:$0xf]
        %v8016 = vld [vmem:[#allocation14 + $0x60] sm:$0xf]
        %v8017 = vld [vmem:[#allocation14 + $0x64] sm:$0xf]
        %v8018 = vld [vmem:[#allocation14 + $0x68] sm:$0xf]
        %v8019 = vld [vmem:[#allocation14 + $0x6c] sm:$0xf]
        %v8020 = vld [vmem:[#allocation14 + $0x70] sm:$0xf]
        %v8021 = vld [vmem:[#allocation14 + $0x74] sm:$0xf]
        %v8022 = vld [vmem:[#allocation14 + $0x78] sm:$0xf]
        %v8023 = vld [vmem:[#allocation14 + $0x7c] sm:$0xf]
        %v8024 = vld [vmem:[%s15] sm:$0x1]
        %v8026 = vlaneseq
        %v8027 = vshrl.u32 %v8026, 7
        %v8028 = vsub.s32 0, %v8027
        %v8029 = vrot.slane %v8024, %v8028
        %v8063 = vunpack.c.l.b16 %v7992
        %v8064 = vunpack.c.l.b16 %v7993
        %v8065 = vunpack.c.l.b16 %v7994
        %v8066 = vunpack.c.l.b16 %v7995
        %v8067 = vunpack.c.l.b16 %v7996
        %v8068 = vunpack.c.l.b16 %v7997
        %v8069 = vunpack.c.l.b16 %v7998
        %v8070 = vunpack.c.l.b16 %v7999
        %v8071 = vunpack.c.l.b16 %v8000
        %v8072 = vunpack.c.l.b16 %v8001
        %v8073 = vunpack.c.l.b16 %v8002
        %v8074 = vunpack.c.l.b16 %v8003
        %v8075 = vunpack.c.l.b16 %v8004
        %v8076 = vunpack.c.l.b16 %v8005
        %v8077 = vunpack.c.l.b16 %v8006
        %v8078 = vunpack.c.l.b16 %v8007
        %v8079 = vunpack.c.l.b16 %v8008
        %v8080 = vunpack.c.l.b16 %v8009
        %v8081 = vunpack.c.l.b16 %v8010
        %v8082 = vunpack.c.l.b16 %v8011
        %v8083 = vunpack.c.l.b16 %v8012
        %v8084 = vunpack.c.l.b16 %v8013
        %v8085 = vunpack.c.l.b16 %v8014
        %v8086 = vunpack.c.l.b16 %v8015
        %v8087 = vunpack.c.l.b16 %v8016
        %v8088 = vunpack.c.l.b16 %v8017
        %v8089 = vunpack.c.l.b16 %v8018
        %v8090 = vunpack.c.l.b16 %v8019
        %v8091 = vunpack.c.l.b16 %v8020
        %v8092 = vunpack.c.l.b16 %v8021
        %v8093 = vunpack.c.l.b16 %v8022
        %v8094 = vunpack.c.l.b16 %v8023
        %v8095 = vpack.c.b16 %v8064, %v8063
        %v8096 = vpack.c.b16 %v8066, %v8065
        %v8097 = vpack.c.b16 %v8068, %v8067
        %v8098 = vpack.c.b16 %v8070, %v8069
        %v8099 = vpack.c.b16 %v8072, %v8071
        %v8100 = vpack.c.b16 %v8074, %v8073
        %v8101 = vpack.c.b16 %v8076, %v8075
        %v8102 = vpack.c.b16 %v8078, %v8077
        %v8103 = vpack.c.b16 %v8080, %v8079
        %v8104 = vpack.c.b16 %v8082, %v8081
        %v8105 = vpack.c.b16 %v8084, %v8083
        %v8106 = vpack.c.b16 %v8086, %v8085
        %v8107 = vpack.c.b16 %v8088, %v8087
        %v8108 = vpack.c.b16 %v8090, %v8089
        %v8109 = vpack.c.b16 %v8092, %v8091
        %v8110 = vpack.c.b16 %v8094, %v8093
        %8127 = vmatprep.subr.bf16.mxu0 0
        %8128 = vmatpush1.bf16.msra.mxu0 %v8095
        %8129 = vmatprep.subr.bf16.mxu0 0
        %8130 = vmatpush1.bf16.msra.mxu0 %v8096
        %8131 = vmatprep.subr.bf16.mxu0 0
        %8132 = vmatpush1.bf16.msra.mxu0 %v8097
        %8133 = vmatprep.subr.bf16.mxu0 0
        %8134 = vmatpush1.bf16.msra.mxu0 %v8098
        %8135 = vmatprep.subr.bf16.mxu0 0
        %8136 = vmatpush1.bf16.msra.mxu0 %v8099
        %8137 = vmatprep.subr.bf16.mxu0 0
        %8138 = vmatpush1.bf16.msra.mxu0 %v8100
        %8139 = vmatprep.subr.bf16.mxu0 0
        %8140 = vmatpush1.bf16.msra.mxu0 %v8101
        %8141 = vmatprep.subr.bf16.mxu0 0
        %8142 = vmatpush1.bf16.msra.mxu0 %v8102
        %8143 = vmatprep.subr.bf16.mxu0 0
        %8144 = vmatpush1.bf16.msra.mxu0 %v8103
        %8145 = vmatprep.subr.bf16.mxu0 0
        %8146 = vmatpush1.bf16.msra.mxu0 %v8104
        %8147 = vmatprep.subr.bf16.mxu0 0
        %8148 = vmatpush1.bf16.msra.mxu0 %v8105
        %8149 = vmatprep.subr.bf16.mxu0 0
        %8150 = vmatpush1.bf16.msra.mxu0 %v8106
        %8151 = vmatprep.subr.bf16.mxu0 0
        %8152 = vmatpush1.bf16.msra.mxu0 %v8107
        %8153 = vmatprep.subr.bf16.mxu0 0
        %8154 = vmatpush1.bf16.msra.mxu0 %v8108
        %8155 = vmatprep.subr.bf16.mxu0 0
        %8156 = vmatpush1.bf16.msra.mxu0 %v8109
        %8157 = vmatprep.subr.bf16.mxu0 0
        %8158 = vmatpush1.bf16.msra.mxu0 %v8110
        %8159 = vmatprep.mubr.bf16.mxu0 %v7961
        %8160 = vmatmul.mubr.bf16.gmra.mrb[0].mxu0 %v7960
        %v8161 = vpop.f32.mrb[0].mxu0
        %v8162 = vadd.f32 %v8029, %v8161
        %v8163 = vpop.f32.mrb[0].mxu0
        %v8164 = vpop.f32.mrb[0].mxu0
        %v8165 = vadd.f32 %v8029, %v8164
        %v8166 = vpop.f32.mrb[0].mxu0
        %8167 = vmatprep.mubr.bf16.mxu0 %v7963
        %8168 = vmatmul.mubr.bf16.gmra.mrb[0].mxu0 %v7962
        %v8169 = vpop.f32.mrb[0].mxu0
        %v8170 = vadd.f32 %v8029, %v8169
        %v8171 = vpop.f32.mrb[0].mxu0
        %v8172 = vpop.f32.mrb[0].mxu0
        %v8173 = vadd.f32 %v8029, %v8172
        %v8174 = vpop.f32.mrb[0].mxu0
        %8175 = vmatprep.mubr.bf16.mxu0 %v7965
        %8176 = vmatmul.mubr.bf16.gmra.mrb[0].mxu0 %v7964
        %v8177 = vpop.f32.mrb[0].mxu0
        %v8178 = vadd.f32 %v8029, %v8177
        %v8179 = vpop.f32.mrb[0].mxu0
        %v8180 = vpop.f32.mrb[0].mxu0
        %v8181 = vadd.f32 %v8029, %v8180
        %v8182 = vpop.f32.mrb[0].mxu0
        %8183 = vmatprep.mubr.bf16.mxu0 %v7967
        %8184 = vmatmul.mubr.bf16.gmra.mrb[0].mxu0 %v7966
        %v8185 = vpop.f32.mrb[0].mxu0
        %v8186 = vadd.f32 %v8029, %v8185
        %v8187 = vpop.f32.mrb[0].mxu0
        %v8188 = vpop.f32.mrb[0].mxu0
        %v8189 = vadd.f32 %v8029, %v8188
        %v8190 = vpop.f32.mrb[0].mxu0
        %8191 = vmatprep.mubr.bf16.mxu0 %v7969
        %8192 = vmatmul.mubr.bf16.gmra.mrb[0].mxu0 %v7968
        %v8193 = vpop.f32.mrb[0].mxu0
        %v8194 = vadd.f32 %v8029, %v8193
        %v8195 = vpop.f32.mrb[0].mxu0
        %v8196 = vpop.f32.mrb[0].mxu0
        %v8197 = vadd.f32 %v8029, %v8196
        %v8198 = vpop.f32.mrb[0].mxu0
        %8199 = vmatprep.mubr.bf16.mxu0 %v7971
        %8200 = vmatmul.mubr.bf16.gmra.mrb[0].mxu0 %v7970
        %v8201 = vpop.f32.mrb[0].mxu0
        %v8202 = vadd.f32 %v8029, %v8201
        %v8203 = vpop.f32.mrb[0].mxu0
        %v8204 = vpop.f32.mrb[0].mxu0
        %v8205 = vadd.f32 %v8029, %v8204
        %v8206 = vpop.f32.mrb[0].mxu0
        %8207 = vmatprep.mubr.bf16.mxu0 %v7973
        %8208 = vmatmul.mubr.bf16.gmra.mrb[0].mxu0 %v7972
        %v8209 = vpop.f32.mrb[0].mxu0
        %v8210 = vadd.f32 %v8029, %v8209
        %v8211 = vpop.f32.mrb[0].mxu0
        %v8212 = vpop.f32.mrb[0].mxu0
        %v8213 = vadd.f32 %v8029, %v8212
        %v8214 = vpop.f32.mrb[0].mxu0
        %8215 = vmatprep.mubr.bf16.mxu0 %v7975
        %8216 = vmatmul.mubr.bf16.gmra.mrb[0].mxu0 %v7974
        %v8217 = vpop.f32.mrb[0].mxu0
        %v8218 = vadd.f32 %v8029, %v8217
        %v8219 = vpop.f32.mrb[0].mxu0
        %v8220 = vpop.f32.mrb[0].mxu0
        %v8221 = vadd.f32 %v8029, %v8220
        %v8222 = vpop.f32.mrb[0].mxu0
        %8223 = vmatprep.mubr.bf16.mxu0 %v7977
        %8224 = vmatmul.mubr.bf16.gmra.mrb[0].mxu0 %v7976
        %v8225 = vpop.f32.mrb[0].mxu0
        %v8226 = vadd.f32 %v8029, %v8225
        %v8227 = vpop.f32.mrb[0].mxu0
        %v8228 = vpop.f32.mrb[0].mxu0
        %v8229 = vadd.f32 %v8029, %v8228
        %v8230 = vpop.f32.mrb[0].mxu0
        %8231 = vmatprep.mubr.bf16.mxu0 %v7979
        %8232 = vmatmul.mubr.bf16.gmra.mrb[0].mxu0 %v7978
        %v8233 = vpop.f32.mrb[0].mxu0
        %v8234 = vadd.f32 %v8029, %v8233
        %v8235 = vpop.f32.mrb[0].mxu0
        %v8236 = vpop.f32.mrb[0].mxu0
        %v8237 = vadd.f32 %v8029, %v8236
        %v8238 = vpop.f32.mrb[0].mxu0
        %8239 = vmatprep.mubr.bf16.mxu0 %v7981
        %8240 = vmatmul.mubr.bf16.gmra.mrb[0].mxu0 %v7980
        %v8241 = vpop.f32.mrb[0].mxu0
        %v8242 = vadd.f32 %v8029, %v8241
        %v8243 = vpop.f32.mrb[0].mxu0
        %v8244 = vpop.f32.mrb[0].mxu0
        %v8245 = vadd.f32 %v8029, %v8244
        %v8246 = vpop.f32.mrb[0].mxu0
        %8247 = vmatprep.mubr.bf16.mxu0 %v7983
        %8248 = vmatmul.mubr.bf16.gmra.mrb[0].mxu0 %v7982
        %v8249 = vpop.f32.mrb[0].mxu0
        %v8250 = vadd.f32 %v8029, %v8249
        %v8251 = vpop.f32.mrb[0].mxu0
        %v8252 = vpop.f32.mrb[0].mxu0
        %v8253 = vadd.f32 %v8029, %v8252
        %v8254 = vpop.f32.mrb[0].mxu0
        %8255 = vmatprep.mubr.bf16.mxu0 %v7985
        %8256 = vmatmul.mubr.bf16.gmra.mrb[0].mxu0 %v7984
        %v8257 = vpop.f32.mrb[0].mxu0
        %v8258 = vadd.f32 %v8029, %v8257
        %v8259 = vpop.f32.mrb[0].mxu0
        %v8260 = vpop.f32.mrb[0].mxu0
        %v8261 = vadd.f32 %v8029, %v8260
        %v8262 = vpop.f32.mrb[0].mxu0
        %8263 = vmatprep.mubr.bf16.mxu0 %v7987
        %8264 = vmatmul.mubr.bf16.gmra.mrb[0].mxu0 %v7986
        %v8265 = vpop.f32.mrb[0].mxu0
        %v8266 = vadd.f32 %v8029, %v8265
        %v8267 = vpop.f32.mrb[0].mxu0
        %v8268 = vpop.f32.mrb[0].mxu0
        %v8269 = vadd.f32 %v8029, %v8268
        %v8270 = vpop.f32.mrb[0].mxu0
        %8271 = vmatprep.mubr.bf16.mxu0 %v7989
        %8272 = vmatmul.mubr.bf16.gmra.mrb[0].mxu0 %v7988
        %v8273 = vpop.f32.mrb[0].mxu0
        %v8274 = vadd.f32 %v8029, %v8273
        %v8275 = vpop.f32.mrb[0].mxu0
        %v8276 = vpop.f32.mrb[0].mxu0
        %v8277 = vadd.f32 %v8029, %v8276
        %v8278 = vpop.f32.mrb[0].mxu0
        %8279 = vmatprep.mubr.bf16.mxu0 %v7991
        %8280 = vmatmul.mubr.bf16.gmra.mrb[0].mxu0 %v7990
        %v8281 = vpop.f32.mrb[0].mxu0
        %v8282 = vadd.f32 %v8029, %v8281
        %v8283 = vpop.f32.mrb[0].mxu0
        %v8284 = vpop.f32.mrb[0].mxu0
        %v8285 = vadd.f32 %v8029, %v8284
        %v8286 = vpop.f32.mrb[0].mxu0
        %8287 = vdwg.mxu0
        %v8288 = vadd.f32 %v7547, %v8162
        %v8289 = vadd.f32 %v7548, %v8165
        %v8290 = vadd.f32 %v7549, %v8170
        %v8291 = vadd.f32 %v7550, %v8173
        %v8292 = vadd.f32 %v7551, %v8178
        %v8293 = vadd.f32 %v7552, %v8181
        %v8294 = vadd.f32 %v7553, %v8186
        %v8295 = vadd.f32 %v7554, %v8189
        %v8296 = vadd.f32 %v7555, %v8194
        %v8297 = vadd.f32 %v7556, %v8197
        %v8298 = vadd.f32 %v7557, %v8202
        %v8299 = vadd.f32 %v7558, %v8205
        %v8300 = vadd.f32 %v7559, %v8210
        %v8301 = vadd.f32 %v7560, %v8213
        %v8302 = vadd.f32 %v7561, %v8218
        %v8303 = vadd.f32 %v7562, %v8221
        %v8304 = vadd.f32 %v7563, %v8226
        %v8305 = vadd.f32 %v7564, %v8229
        %v8306 = vadd.f32 %v7565, %v8234
        %v8307 = vadd.f32 %v7566, %v8237
        %v8308 = vadd.f32 %v7567, %v8242
        %v8309 = vadd.f32 %v7568, %v8245
        %v8310 = vadd.f32 %v7569, %v8250
        %v8311 = vadd.f32 %v7570, %v8253
        %v8312 = vadd.f32 %v7571, %v8258
        %v8313 = vadd.f32 %v7572, %v8261
        %v8314 = vadd.f32 %v7573, %v8266
        %v8315 = vadd.f32 %v7574, %v8269
        %v8316 = vadd.f32 %v7575, %v8274
        %v8317 = vadd.f32 %v7576, %v8277
        %v8318 = vadd.f32 %v7577, %v8282
        %v8319 = vadd.f32 %v7578, %v8285
        %v8320 = vld [vmem:[%s16] sm:$0x1]
        %v8321 = vld [vmem:[%s17] sm:$0x1]
        %8322 = vadd.xlane.f32.xlu0 %v8288
        %v8323 = vpop.xlane.xlu0 %8322
        %8324 = vadd.xlane.f32.xlu0 %v8289
        %v8325 = vpop.xlane.xlu0 %8324
        %8326 = vadd.xlane.f32.xlu0 %v8290
        %v8327 = vpop.xlane.xlu0 %8326
        %8328 = vadd.xlane.f32.xlu0 %v8291
        %v8329 = vpop.xlane.xlu0 %8328
        %8330 = vadd.xlane.f32.xlu0 %v8292
        %v8331 = vpop.xlane.xlu0 %8330
        %8332 = vadd.xlane.f32.xlu0 %v8293
        %v8333 = vpop.xlane.xlu0 %8332
        %8334 = vadd.xlane.f32.xlu0 %v8294
        %v8335 = vpop.xlane.xlu0 %8334
        %8336 = vadd.xlane.f32.xlu0 %v8295
        %v8337 = vpop.xlane.xlu0 %8336
        %8338 = vadd.xlane.f32.xlu0 %v8296
        %v8339 = vpop.xlane.xlu0 %8338
        %8340 = vadd.xlane.f32.xlu0 %v8297
        %v8341 = vpop.xlane.xlu0 %8340
        %8342 = vadd.xlane.f32.xlu0 %v8298
        %v8343 = vpop.xlane.xlu0 %8342
        %8344 = vadd.xlane.f32.xlu0 %v8299
        %v8345 = vpop.xlane.xlu0 %8344
        %8346 = vadd.xlane.f32.xlu0 %v8300
        %v8347 = vpop.xlane.xlu0 %8346
        %8348 = vadd.xlane.f32.xlu0 %v8301
        %v8349 = vpop.xlane.xlu0 %8348
        %8350 = vadd.xlane.f32.xlu0 %v8302
        %v8351 = vpop.xlane.xlu0 %8350
        %8352 = vadd.xlane.f32.xlu0 %v8303
        %v8353 = vpop.xlane.xlu0 %8352
        %8354 = vadd.xlane.f32.xlu0 %v8304
        %v8355 = vpop.xlane.xlu0 %8354
        %8356 = vadd.xlane.f32.xlu0 %v8305
        %v8357 = vpop.xlane.xlu0 %8356
        %8358 = vadd.xlane.f32.xlu0 %v8306
        %v8359 = vpop.xlane.xlu0 %8358
        %8360 = vadd.xlane.f32.xlu0 %v8307
        %v8361 = vpop.xlane.xlu0 %8360
        %8362 = vadd.xlane.f32.xlu0 %v8308
        %v8363 = vpop.xlane.xlu0 %8362
        %8364 = vadd.xlane.f32.xlu0 %v8309
        %v8365 = vpop.xlane.xlu0 %8364
        %8366 = vadd.xlane.f32.xlu0 %v8310
        %v8367 = vpop.xlane.xlu0 %8366
        %8368 = vadd.xlane.f32.xlu0 %v8311
        %v8369 = vpop.xlane.xlu0 %8368
        %8370 = vadd.xlane.f32.xlu0 %v8312
        %v8371 = vpop.xlane.xlu0 %8370
        %8372 = vadd.xlane.f32.xlu0 %v8313
        %v8373 = vpop.xlane.xlu0 %8372
        %8374 = vadd.xlane.f32.xlu0 %v8314
        %v8375 = vpop.xlane.xlu0 %8374
        %8376 = vadd.xlane.f32.xlu0 %v8315
        %v8377 = vpop.xlane.xlu0 %8376
        %8378 = vadd.xlane.f32.xlu0 %v8316
        %v8379 = vpop.xlane.xlu0 %8378
        %8380 = vadd.xlane.f32.xlu0 %v8317
        %v8381 = vpop.xlane.xlu0 %8380
        %8382 = vadd.xlane.f32.xlu0 %v8318
        %v8383 = vpop.xlane.xlu0 %8382
        %8384 = vadd.xlane.f32.xlu0 %v8319
        %v8385 = vpop.xlane.xlu0 %8384
        %v8386 = vmul.f32 %v8323, %v7214
        %v8387 = vmul.f32 %v8325, %v7214
        %v8388 = vmul.f32 %v8327, %v7214
        %v8389 = vmul.f32 %v8329, %v7214
        %v8390 = vmul.f32 %v8331, %v7214
        %v8391 = vmul.f32 %v8333, %v7214
        %v8392 = vmul.f32 %v8335, %v7214
        %v8393 = vmul.f32 %v8337, %v7214
        %v8394 = vmul.f32 %v8339, %v7214
        %v8395 = vmul.f32 %v8341, %v7214
        %v8396 = vmul.f32 %v8343, %v7214
        %v8397 = vmul.f32 %v8345, %v7214
        %v8398 = vmul.f32 %v8347, %v7214
        %v8399 = vmul.f32 %v8349, %v7214
        %v8400 = vmul.f32 %v8351, %v7214
        %v8401 = vmul.f32 %v8353, %v7214
        %v8402 = vmul.f32 %v8355, %v7214
        %v8403 = vmul.f32 %v8357, %v7214
        %v8404 = vmul.f32 %v8359, %v7214
        %v8405 = vmul.f32 %v8361, %v7214
        %v8406 = vmul.f32 %v8363, %v7214
        %v8407 = vmul.f32 %v8365, %v7214
        %v8408 = vmul.f32 %v8367, %v7214
        %v8409 = vmul.f32 %v8369, %v7214
        %v8410 = vmul.f32 %v8371, %v7214
        %v8411 = vmul.f32 %v8373, %v7214
        %v8412 = vmul.f32 %v8375, %v7214
        %v8413 = vmul.f32 %v8377, %v7214
        %v8414 = vmul.f32 %v8379, %v7214
        %v8415 = vmul.f32 %v8381, %v7214
        %v8416 = vmul.f32 %v8383, %v7214
        %v8417 = vmul.f32 %v8385, %v7214
        %v8418 = vsub.f32 %v8288, %v8386
        %v8419 = vsub.f32 %v8289, %v8387
        %v8420 = vsub.f32 %v8290, %v8388
        %v8421 = vsub.f32 %v8291, %v8389
        %v8422 = vsub.f32 %v8292, %v8390
        %v8423 = vsub.f32 %v8293, %v8391
        %v8424 = vsub.f32 %v8294, %v8392
        %v8425 = vsub.f32 %v8295, %v8393
        %v8426 = vsub.f32 %v8296, %v8394
        %v8427 = vsub.f32 %v8297, %v8395
        %v8428 = vsub.f32 %v8298, %v8396
        %v8429 = vsub.f32 %v8299, %v8397
        %v8430 = vsub.f32 %v8300, %v8398
        %v8431 = vsub.f32 %v8301, %v8399
        %v8432 = vsub.f32 %v8302, %v8400
        %v8433 = vsub.f32 %v8303, %v8401
        %v8434 = vsub.f32 %v8304, %v8402
        %v8435 = vsub.f32 %v8305, %v8403
        %v8436 = vsub.f32 %v8306, %v8404
        %v8437 = vsub.f32 %v8307, %v8405
        %v8438 = vsub.f32 %v8308, %v8406
        %v8439 = vsub.f32 %v8309, %v8407
        %v8440 = vsub.f32 %v8310, %v8408
        %v8441 = vsub.f32 %v8311, %v8409
        %v8442 = vsub.f32 %v8312, %v8410
        %v8443 = vsub.f32 %v8313, %v8411
        %v8444 = vsub.f32 %v8314, %v8412
        %v8445 = vsub.f32 %v8315, %v8413
        %v8446 = vsub.f32 %v8316, %v8414
        %v8447 = vsub.f32 %v8317, %v8415
        %v8448 = vsub.f32 %v8318, %v8416
        %v8449 = vsub.f32 %v8319, %v8417
        %v8450 = vmul.f32 %v8418, %v8418
        %v8451 = vmul.f32 %v8419, %v8419
        %v8452 = vmul.f32 %v8420, %v8420
        %v8453 = vmul.f32 %v8421, %v8421
        %v8454 = vmul.f32 %v8422, %v8422
        %v8455 = vmul.f32 %v8423, %v8423
        %v8456 = vmul.f32 %v8424, %v8424
        %v8457 = vmul.f32 %v8425, %v8425
        %v8458 = vmul.f32 %v8426, %v8426
        %v8459 = vmul.f32 %v8427, %v8427
        %v8460 = vmul.f32 %v8428, %v8428
        %v8461 = vmul.f32 %v8429, %v8429
        %v8462 = vmul.f32 %v8430, %v8430
        %v8463 = vmul.f32 %v8431, %v8431
        %v8464 = vmul.f32 %v8432, %v8432
        %v8465 = vmul.f32 %v8433, %v8433
        %v8466 = vmul.f32 %v8434, %v8434
        %v8467 = vmul.f32 %v8435, %v8435
        %v8468 = vmul.f32 %v8436, %v8436
        %v8469 = vmul.f32 %v8437, %v8437
        %v8470 = vmul.f32 %v8438, %v8438
        %v8471 = vmul.f32 %v8439, %v8439
        %v8472 = vmul.f32 %v8440, %v8440
        %v8473 = vmul.f32 %v8441, %v8441
        %v8474 = vmul.f32 %v8442, %v8442
        %v8475 = vmul.f32 %v8443, %v8443
        %v8476 = vmul.f32 %v8444, %v8444
        %v8477 = vmul.f32 %v8445, %v8445
        %v8478 = vmul.f32 %v8446, %v8446
        %v8479 = vmul.f32 %v8447, %v8447
        %v8480 = vmul.f32 %v8448, %v8448
        %v8481 = vmul.f32 %v8449, %v8449
        %8482 = vadd.xlane.f32.xlu0 %v8450
        %v8483 = vpop.xlane.xlu0 %8482
        %8484 = vadd.xlane.f32.xlu0 %v8451
        %v8485 = vpop.xlane.xlu0 %8484
        %8486 = vadd.xlane.f32.xlu0 %v8452
        %v8487 = vpop.xlane.xlu0 %8486
        %8488 = vadd.xlane.f32.xlu0 %v8453
        %v8489 = vpop.xlane.xlu0 %8488
        %8490 = vadd.xlane.f32.xlu0 %v8454
        %v8491 = vpop.xlane.xlu0 %8490
        %8492 = vadd.xlane.f32.xlu0 %v8455
        %v8493 = vpop.xlane.xlu0 %8492
        %8494 = vadd.xlane.f32.xlu0 %v8456
        %v8495 = vpop.xlane.xlu0 %8494
        %8496 = vadd.xlane.f32.xlu0 %v8457
        %v8497 = vpop.xlane.xlu0 %8496
        %8498 = vadd.xlane.f32.xlu0 %v8458
        %v8499 = vpop.xlane.xlu0 %8498
        %8500 = vadd.xlane.f32.xlu0 %v8459
        %v8501 = vpop.xlane.xlu0 %8500
        %8502 = vadd.xlane.f32.xlu0 %v8460
        %v8503 = vpop.xlane.xlu0 %8502
        %8504 = vadd.xlane.f32.xlu0 %v8461
        %v8505 = vpop.xlane.xlu0 %8504
        %8506 = vadd.xlane.f32.xlu0 %v8462
        %v8507 = vpop.xlane.xlu0 %8506
        %8508 = vadd.xlane.f32.xlu0 %v8463
        %v8509 = vpop.xlane.xlu0 %8508
        %8510 = vadd.xlane.f32.xlu0 %v8464
        %v8511 = vpop.xlane.xlu0 %8510
        %8512 = vadd.xlane.f32.xlu0 %v8465
        %v8513 = vpop.xlane.xlu0 %8512
        %8514 = vadd.xlane.f32.xlu0 %v8466
        %v8515 = vpop.xlane.xlu0 %8514
        %8516 = vadd.xlane.f32.xlu0 %v8467
        %v8517 = vpop.xlane.xlu0 %8516
        %8518 = vadd.xlane.f32.xlu0 %v8468
        %v8519 = vpop.xlane.xlu0 %8518
        %8520 = vadd.xlane.f32.xlu0 %v8469
        %v8521 = vpop.xlane.xlu0 %8520
        %8522 = vadd.xlane.f32.xlu0 %v8470
        %v8523 = vpop.xlane.xlu0 %8522
        %8524 = vadd.xlane.f32.xlu0 %v8471
        %v8525 = vpop.xlane.xlu0 %8524
        %8526 = vadd.xlane.f32.xlu0 %v8472
        %v8527 = vpop.xlane.xlu0 %8526
        %8528 = vadd.xlane.f32.xlu0 %v8473
        %v8529 = vpop.xlane.xlu0 %8528
        %8530 = vadd.xlane.f32.xlu0 %v8474
        %v8531 = vpop.xlane.xlu0 %8530
        %8532 = vadd.xlane.f32.xlu0 %v8475
        %v8533 = vpop.xlane.xlu0 %8532
        %8534 = vadd.xlane.f32.xlu0 %v8476
        %v8535 = vpop.xlane.xlu0 %8534
        %8536 = vadd.xlane.f32.xlu0 %v8477
        %v8537 = vpop.xlane.xlu0 %8536
        %8538 = vadd.xlane.f32.xlu0 %v8478
        %v8539 = vpop.xlane.xlu0 %8538
        %8540 = vadd.xlane.f32.xlu0 %v8479
        %v8541 = vpop.xlane.xlu0 %8540
        %8542 = vadd.xlane.f32.xlu0 %v8480
        %v8543 = vpop.xlane.xlu0 %8542
        %8544 = vadd.xlane.f32.xlu0 %v8481
        %v8545 = vpop.xlane.xlu0 %8544
        %v8546 = vmul.f32 %v8483, %v7214
        %v8547 = vmul.f32 %v8485, %v7214
        %v8548 = vmul.f32 %v8487, %v7214
        %v8549 = vmul.f32 %v8489, %v7214
        %v8550 = vmul.f32 %v8491, %v7214
        %v8551 = vmul.f32 %v8493, %v7214
        %v8552 = vmul.f32 %v8495, %v7214
        %v8553 = vmul.f32 %v8497, %v7214
        %v8554 = vmul.f32 %v8499, %v7214
        %v8555 = vmul.f32 %v8501, %v7214
        %v8556 = vmul.f32 %v8503, %v7214
        %v8557 = vmul.f32 %v8505, %v7214
        %v8558 = vmul.f32 %v8507, %v7214
        %v8559 = vmul.f32 %v8509, %v7214
        %v8560 = vmul.f32 %v8511, %v7214
        %v8561 = vmul.f32 %v8513, %v7214
        %v8562 = vmul.f32 %v8515, %v7214
        %v8563 = vmul.f32 %v8517, %v7214
        %v8564 = vmul.f32 %v8519, %v7214
        %v8565 = vmul.f32 %v8521, %v7214
        %v8566 = vmul.f32 %v8523, %v7214
        %v8567 = vmul.f32 %v8525, %v7214
        %v8568 = vmul.f32 %v8527, %v7214
        %v8569 = vmul.f32 %v8529, %v7214
        %v8570 = vmul.f32 %v8531, %v7214
        %v8571 = vmul.f32 %v8533, %v7214
        %v8572 = vmul.f32 %v8535, %v7214
        %v8573 = vmul.f32 %v8537, %v7214
        %v8574 = vmul.f32 %v8539, %v7214
        %v8575 = vmul.f32 %v8541, %v7214
        %v8576 = vmul.f32 %v8543, %v7214
        %v8577 = vmul.f32 %v8545, %v7214
        %v8578 = vadd.f32 %v8546, 1e-05
        %v8579 = vadd.f32 %v8547, 1e-05
        %v8580 = vadd.f32 %v8548, 1e-05
        %v8581 = vadd.f32 %v8549, 1e-05
        %v8582 = vadd.f32 %v8550, 1e-05
        %v8583 = vadd.f32 %v8551, 1e-05
        %v8584 = vadd.f32 %v8552, 1e-05
        %v8585 = vadd.f32 %v8553, 1e-05
        %v8586 = vadd.f32 %v8554, 1e-05
        %v8587 = vadd.f32 %v8555, 1e-05
        %v8588 = vadd.f32 %v8556, 1e-05
        %v8589 = vadd.f32 %v8557, 1e-05
        %v8590 = vadd.f32 %v8558, 1e-05
        %v8591 = vadd.f32 %v8559, 1e-05
        %v8592 = vadd.f32 %v8560, 1e-05
        %v8593 = vadd.f32 %v8561, 1e-05
        %v8594 = vadd.f32 %v8562, 1e-05
        %v8595 = vadd.f32 %v8563, 1e-05
        %v8596 = vadd.f32 %v8564, 1e-05
        %v8597 = vadd.f32 %v8565, 1e-05
        %v8598 = vadd.f32 %v8566, 1e-05
        %v8599 = vadd.f32 %v8567, 1e-05
        %v8600 = vadd.f32 %v8568, 1e-05
        %v8601 = vadd.f32 %v8569, 1e-05
        %v8602 = vadd.f32 %v8570, 1e-05
        %v8603 = vadd.f32 %v8571, 1e-05
        %v8604 = vadd.f32 %v8572, 1e-05
        %v8605 = vadd.f32 %v8573, 1e-05
        %v8606 = vadd.f32 %v8574, 1e-05
        %v8607 = vadd.f32 %v8575, 1e-05
        %v8608 = vadd.f32 %v8576, 1e-05
        %v8609 = vadd.f32 %v8577, 1e-05
        %v8610 = vrsqrt.pop %v8578
        %v8611 = vrsqrt.pop %v8579
        %v8612 = vrsqrt.pop %v8580
        %v8613 = vrsqrt.pop %v8581
        %v8614 = vrsqrt.pop %v8582
        %v8615 = vrsqrt.pop %v8583
        %v8616 = vrsqrt.pop %v8584
        %v8617 = vrsqrt.pop %v8585
        %v8618 = vrsqrt.pop %v8586
        %v8619 = vrsqrt.pop %v8587
        %v8620 = vrsqrt.pop %v8588
        %v8621 = vrsqrt.pop %v8589
        %v8622 = vrsqrt.pop %v8590
        %v8623 = vrsqrt.pop %v8591
        %v8624 = vrsqrt.pop %v8592
        %v8625 = vrsqrt.pop %v8593
        %v8626 = vrsqrt.pop %v8594
        %v8627 = vrsqrt.pop %v8595
        %v8628 = vrsqrt.pop %v8596
        %v8629 = vrsqrt.pop %v8597
        %v8630 = vrsqrt.pop %v8598
        %v8631 = vrsqrt.pop %v8599
        %v8632 = vrsqrt.pop %v8600
        %v8633 = vrsqrt.pop %v8601
        %v8634 = vrsqrt.pop %v8602
        %v8635 = vrsqrt.pop %v8603
        %v8636 = vrsqrt.pop %v8604
        %v8637 = vrsqrt.pop %v8605
        %v8638 = vrsqrt.pop %v8606
        %v8639 = vrsqrt.pop %v8607
        %v8640 = vrsqrt.pop %v8608
        %v8641 = vrsqrt.pop %v8609
        %v8642 = vmul.f32 %v8418, %v8610
        %v8643 = vmul.f32 %v8419, %v8611
        %v8644 = vmul.f32 %v8420, %v8612
        %v8645 = vmul.f32 %v8421, %v8613
        %v8646 = vmul.f32 %v8422, %v8614
        %v8647 = vmul.f32 %v8423, %v8615
        %v8648 = vmul.f32 %v8424, %v8616
        %v8649 = vmul.f32 %v8425, %v8617
        %v8650 = vmul.f32 %v8426, %v8618
        %v8651 = vmul.f32 %v8427, %v8619
        %v8652 = vmul.f32 %v8428, %v8620
        %v8653 = vmul.f32 %v8429, %v8621
        %v8654 = vmul.f32 %v8430, %v8622
        %v8655 = vmul.f32 %v8431, %v8623
        %v8656 = vmul.f32 %v8432, %v8624
        %v8657 = vmul.f32 %v8433, %v8625
        %v8658 = vmul.f32 %v8434, %v8626
        %v8659 = vmul.f32 %v8435, %v8627
        %v8660 = vmul.f32 %v8436, %v8628
        %v8661 = vmul.f32 %v8437, %v8629
        %v8662 = vmul.f32 %v8438, %v8630
        %v8663 = vmul.f32 %v8439, %v8631
        %v8664 = vmul.f32 %v8440, %v8632
        %v8665 = vmul.f32 %v8441, %v8633
        %v8666 = vmul.f32 %v8442, %v8634
        %v8667 = vmul.f32 %v8443, %v8635
        %v8668 = vmul.f32 %v8444, %v8636
        %v8669 = vmul.f32 %v8445, %v8637
        %v8670 = vmul.f32 %v8446, %v8638
        %v8671 = vmul.f32 %v8447, %v8639
        %v8672 = vmul.f32 %v8448, %v8640
        %v8673 = vmul.f32 %v8449, %v8641
        %v8675 = vlaneseq
        %v8676 = vshrl.u32 %v8675, 7
        %v8677 = vsub.s32 0, %v8676
        %v8678 = vrot.slane %v8320, %v8677
        %v8680 = vmul.f32 %v8642, %v8678
        %v8681 = vmul.f32 %v8643, %v8678
        %v8682 = vmul.f32 %v8644, %v8678
        %v8683 = vmul.f32 %v8645, %v8678
        %v8684 = vmul.f32 %v8646, %v8678
        %v8685 = vmul.f32 %v8647, %v8678
        %v8686 = vmul.f32 %v8648, %v8678
        %v8687 = vmul.f32 %v8649, %v8678
        %v8688 = vmul.f32 %v8650, %v8678
        %v8689 = vmul.f32 %v8651, %v8678
        %v8690 = vmul.f32 %v8652, %v8678
        %v8691 = vmul.f32 %v8653, %v8678
        %v8692 = vmul.f32 %v8654, %v8678
        %v8693 = vmul.f32 %v8655, %v8678
        %v8694 = vmul.f32 %v8656, %v8678
        %v8695 = vmul.f32 %v8657, %v8678
        %v8696 = vmul.f32 %v8658, %v8678
        %v8697 = vmul.f32 %v8659, %v8678
        %v8698 = vmul.f32 %v8660, %v8678
        %v8699 = vmul.f32 %v8661, %v8678
        %v8700 = vmul.f32 %v8662, %v8678
        %v8701 = vmul.f32 %v8663, %v8678
        %v8702 = vmul.f32 %v8664, %v8678
        %v8703 = vmul.f32 %v8665, %v8678
        %v8704 = vmul.f32 %v8666, %v8678
        %v8705 = vmul.f32 %v8667, %v8678
        %v8706 = vmul.f32 %v8668, %v8678
        %v8707 = vmul.f32 %v8669, %v8678
        %v8708 = vmul.f32 %v8670, %v8678
        %v8709 = vmul.f32 %v8671, %v8678
        %v8710 = vmul.f32 %v8672, %v8678
        %v8711 = vmul.f32 %v8673, %v8678
        %v8713 = vlaneseq
        %v8714 = vshrl.u32 %v8713, 7
        %v8715 = vsub.s32 0, %v8714
        %v8716 = vrot.slane %v8321, %v8715
        %v8718 = vadd.f32 %v8680, %v8716
        %v8719 = vadd.f32 %v8681, %v8716
        %v8720 = vadd.f32 %v8682, %v8716
        %v8721 = vadd.f32 %v8683, %v8716
        %v8722 = vadd.f32 %v8684, %v8716
        %v8723 = vadd.f32 %v8685, %v8716
        %v8724 = vadd.f32 %v8686, %v8716
        %v8725 = vadd.f32 %v8687, %v8716
        %v8726 = vadd.f32 %v8688, %v8716
        %v8727 = vadd.f32 %v8689, %v8716
        %v8728 = vadd.f32 %v8690, %v8716
        %v8729 = vadd.f32 %v8691, %v8716
        %v8730 = vadd.f32 %v8692, %v8716
        %v8731 = vadd.f32 %v8693, %v8716
        %v8732 = vadd.f32 %v8694, %v8716
        %v8733 = vadd.f32 %v8695, %v8716
        %v8734 = vadd.f32 %v8696, %v8716
        %v8735 = vadd.f32 %v8697, %v8716
        %v8736 = vadd.f32 %v8698, %v8716
        %v8737 = vadd.f32 %v8699, %v8716
        %v8738 = vadd.f32 %v8700, %v8716
        %v8739 = vadd.f32 %v8701, %v8716
        %v8740 = vadd.f32 %v8702, %v8716
        %v8741 = vadd.f32 %v8703, %v8716
        %v8742 = vadd.f32 %v8704, %v8716
        %v8743 = vadd.f32 %v8705, %v8716
        %v8744 = vadd.f32 %v8706, %v8716
        %v8745 = vadd.f32 %v8707, %v8716
        %v8746 = vadd.f32 %v8708, %v8716
        %v8747 = vadd.f32 %v8709, %v8716
        %v8748 = vadd.f32 %v8710, %v8716
        %v8749 = vadd.f32 %v8711, %v8716
        %8750 = vst [vmem:[%s696] sm:$0xff] %v8718
        %8751 = vst [vmem:[%s696 + $0x8] sm:$0xff] %v8719
        %8752 = vst [vmem:[%s696 + $0x10] sm:$0xff] %v8720
        %8753 = vst [vmem:[%s696 + $0x18] sm:$0xff] %v8721
        %8754 = vst [vmem:[%s696 + $0x20] sm:$0xff] %v8722
        %8755 = vst [vmem:[%s696 + $0x28] sm:$0xff] %v8723
        %8756 = vst [vmem:[%s696 + $0x30] sm:$0xff] %v8724
        %8757 = vst [vmem:[%s696 + $0x38] sm:$0xff] %v8725
        %8758 = vst [vmem:[%s696 + $0x40] sm:$0xff] %v8726
        %8759 = vst [vmem:[%s696 + $0x48] sm:$0xff] %v8727
        %8760 = vst [vmem:[%s696 + $0x50] sm:$0xff] %v8728
        %8761 = vst [vmem:[%s696 + $0x58] sm:$0xff] %v8729
        %8762 = vst [vmem:[%s696 + $0x60] sm:$0xff] %v8730
        %8763 = vst [vmem:[%s696 + $0x68] sm:$0xff] %v8731
        %8764 = vst [vmem:[%s696 + $0x70] sm:$0xff] %v8732
        %8765 = vst [vmem:[%s696 + $0x78] sm:$0xff] %v8733
        %8766 = vst [vmem:[%s696 + $0x80] sm:$0xff] %v8734
        %8767 = vst [vmem:[%s696 + $0x88] sm:$0xff] %v8735
        %8768 = vst [vmem:[%s696 + $0x90] sm:$0xff] %v8736
        %8769 = vst [vmem:[%s696 + $0x98] sm:$0xff] %v8737
        %8770 = vst [vmem:[%s696 + $0xa0] sm:$0xff] %v8738
        %8771 = vst [vmem:[%s696 + $0xa8] sm:$0xff] %v8739
        %8772 = vst [vmem:[%s696 + $0xb0] sm:$0xff] %v8740
        %8773 = vst [vmem:[%s696 + $0xb8] sm:$0xff] %v8741
        %8774 = vst [vmem:[%s696 + $0xc0] sm:$0xff] %v8742
        %8775 = vst [vmem:[%s696 + $0xc8] sm:$0xff] %v8743
        %8776 = vst [vmem:[%s696 + $0xd0] sm:$0xff] %v8744
        %8777 = vst [vmem:[%s696 + $0xd8] sm:$0xff] %v8745
        %8778 = vst [vmem:[%s696 + $0xe0] sm:$0xff] %v8746
        %8779 = vst [vmem:[%s696 + $0xe8] sm:$0xff] %v8747
        %8780 = vst [vmem:[%s696 + $0xf0] sm:$0xff] %v8748
        %8781 = vst [vmem:[%s696 + $0xf8] sm:$0xff] %v8749
        %s8782 = sand.u32 %s430, 1
        %s8783 = scalar_lea.sflag [#allocation4], %s8782
        %s8784 = sand.u32 %s430, 1
        %s8785 = smul.addr %s8784, 256
        %s8786 = scalar_lea.vmem [#allocation16], %s8785
        // Predicated region
        $region125: #{tpu_custom_call.1} parent=91 // pred_check
          %p8787 = pneg %p440
        $region126: #{tpu_custom_call.1} parent=91 // pred_check_branch
          %8789 = sbr.rel (%p8787) target = $region128
        $region127: #{tpu_custom_call.1} parent=91 // pred_region
          %s8790 = smul.u32 4, %s39
          %s8792 = ssub.s32 4096, 4096
          %8793 = vsyncadd %s8783, %s8792
          %s8794 = smul.addr %s8790, 8
          %s8795 = smul.addr %s8794, 128
          %s8796 = scalar_lea.hbm %s18, %s8795
          %s8797 = sshll.u32 %s8786, 4
          %s8798 = int_to_ptr.vmem [resolvable:$true] %s8797
          %8803 = dma.vmem_to_hbm [thread:$0]  %s8798, 4096, %s8796, %s8783, 128, 128, 8
        $region128: #{tpu_custom_call.1} parent=91 // pred_fallthru
          _
      $region92: #{tpu_custom_call.1} parent=5 // pred_fallthru
        _
      %p8804 = scmp.le.s32.totalorder 2, %s34
      // Predicated region
      $region129: #{tpu_custom_call.1} parent=5 // pred_check
        %p8805 = pneg %p8804
      $region130: #{tpu_custom_call.1} parent=5 // pred_check_branch
        %8807 = sbr.rel (%p8805) target = $region132
      $region131: #{tpu_custom_call.1} parent=5 // pred_region
        %s8808 = ssub.s32 %s34, 2
        // Predicated region
        $region133: #{tpu_custom_call.1} parent=131 // pred_check
          %p8809 = pneg %p446
        $region134: #{tpu_custom_call.1} parent=131 // pred_check_branch
          %8811 = sbr.rel (%p8809) target = $region136
        $region135: #{tpu_custom_call.1} parent=131 // pred_region
          %s8812 = sand.u32 %s431, 1
          %s8813 = scalar_lea.sflag [#allocation4], %s8812
          %s8814 = sand.u32 %s431, 1
          %s8815 = smul.addr %s8814, 256
          %s8816 = scalar_lea.vmem [#allocation16], %s8815
          %8817 = dma.done %s8813, 4096
        $region136: #{tpu_custom_call.1} parent=131 // pred_fallthru
          _
      $region132: #{tpu_custom_call.1} parent=5 // pred_fallthru
        _
    $region6: #{tpu_custom_call.1} parent=1 // loop_footer
      %s38 = sadd.s32 1, %s34
    $region7: #{tpu_custom_call.1} parent=1 // loop_footer_branch
      %33 = sbr.rel target = $region3
    $region8: #{tpu_custom_call.1} parent=1 // loop_exit
      _
    %8818 = vsyncpa [#allocation3], 1
    %s8819 = scalar_lea.sflag [#allocation3], 1
    %8820 = vsyncpa %s8819, 1
    %8821 = vsyncpa [#allocation6], 1
    %8822 = vsyncpa [#allocation9], 1
    %8823 = vsyncpa [#allocation12], 1
    %8824 = vsyncpa [#allocation15], 1
    %8825 = vsyncpa [#allocation4], 1
    %s8826 = scalar_lea.sflag [#allocation4], 1
    %8827 = vsyncpa %s8826, 1

</llo_original>
